<compile_context>
chip_gen: v7x
topology: tpu7x:2x2x1
jax: 0.10.0
libtpu: 0.0.40
codegen_flags: <defaults>
</compile_context>

<pallas_src>
import jax
import jax.numpy as jnp
from jax.experimental import pallas as pl
from jax.experimental.pallas import tpu as pltpu

num_classes = 7
num_heads = 8
F_DIM = num_heads * num_classes   # 56 features per node
N_NODES = num_heads               # 8 nodes (required by matmul(coeffs, x))


def gewa_kernel(x_ref, w_ref, bias_ref, out_ref):
    """Fused: per-head linear scores -> softmax over heads -> coeffs @ x."""
    x = x_ref[...]                        # [Bt, N, F] f32
    w = w_ref[...]                        # [F, H]     f32
    bias = bias_ref[...]                  # [1, H]     f32
    bt, n, f = x.shape
    h = w.shape[1]

    # attention_scores = cat([Linear_h(x) for h], dim=1)   -> [Bt, N, H]
    # One MXU matmul over the merged (Bt*N) row axis; bias is a single VPU add.
    scores = jnp.dot(
        x.reshape(bt * n, f), w, preferred_element_type=jnp.float32
    ) + bias                                               # broadcast [1, H]
    scores = scores.reshape(bt, n, h)

    # attention_coeffs = softmax(scores, dim=1)  (head axis)
    m = jnp.max(scores, axis=-1, keepdims=True)
    e = jnp.exp(scores - m)
    denom = jnp.sum(e, axis=-1, keepdims=True)
    coeffs = e * pl.reciprocal(denom, approx=False)        # [Bt, N, H]

    # output = coeffs @ x per instance                     -> [Bt, N, F]
    # The contraction axis is only H (= N = 8): unroll it as VPU
    # broadcast-FMAs instead of Bt tiny MXU matmuls (review item).
    acc = coeffs[:, :, 0:1] * x[:, 0:1, :]
    for k in range(1, h):
        acc = acc + coeffs[:, :, k:k + 1] * x[:, k:k + 1, :]
    out_ref[...] = acc


def gewa_forward(x, adjacency_matrix, w, bias, *, block_b=None):
    """Batched GEWA forward.

    x: [B, N, F] node features per instance.
    adjacency_matrix: [B, N, N] (unused by the reference forward; parity only).
    w: [F, H] per-head Linear(F, 1) weights stacked as columns.
    bias: [1, H] per-head biases.
    Returns [B, N, F].
    """
    del adjacency_matrix                  # unused, exactly like the reference
    B, n, f = x.shape
    h = w.shape[1]
    assert n == h, "matmul(coeffs, x) requires num_nodes == num_heads"

    # Scale the block with B; target >= 2 grid steps (keeps both v7x
    # TensorCores busy via the "parallel" batch axis) and cap the per-block
    # footprint (512 * 8 * 56 * 4 B ~= 0.9 MiB per operand, ~3.6 MiB
    # double-buffered -> fits every generation's scoped VMEM default).
    if block_b is None:
        block_b = max(1, min(512, pl.cdiv(B, 2)))
    block_b = min(block_b, B)
    b_pad = block_b * pl.cdiv(B, block_b)

    x_f32 = x.astype(jnp.float32)
    if b_pad != B:
        # Padding instances stay all-zero: uniform softmax times zero x -> 0.
        x_f32 = jnp.concatenate(
            [x_f32, jnp.zeros((b_pad - B, n, f), jnp.float32)], axis=0)

    out = pl.pallas_call(
        gewa_kernel,
        out_shape=jax.ShapeDtypeStruct((b_pad, n, f), jnp.float32),
        grid=(b_pad // block_b,),
        in_specs=[
            pl.BlockSpec((block_b, n, f), lambda i: (i, 0, 0)),
            pl.BlockSpec((f, h), lambda i: (0, 0)),     # resident across steps
            pl.BlockSpec((1, h), lambda i: (0, 0)),     # resident across steps
        ],
        out_specs=pl.BlockSpec((block_b, n, f), lambda i: (i, 0, 0)),
        compiler_params=pltpu.CompilerParams(
            dimension_semantics=("parallel",),   # megacore / v7x 2-TC split
        ),
    )(x_f32, w.astype(jnp.float32), bias.astype(jnp.float32))

    if b_pad != B:
        out = out[:B]
    return out


def reference_forward(x, w, bias):
    scores = jnp.einsum("bnf,fh->bnh", x, w) + bias       # [B, N, H]
    coeffs = jax.nn.softmax(scores, axis=-1)
    return jnp.einsum("bnk,bkf->bnf", coeffs, x)          # [B, N, F]


if __name__ == "__main__":
    key = jax.random.PRNGKey(0)
    kx, kw, kb, ka = jax.random.split(key, 4)

    B = 256                                # batched GEWA instances per call
    # Node features (output width of GEWA.feature_extraction): [B, N, F]
    x = jax.random.normal(kx, (B, N_NODES, F_DIM), dtype=jnp.float32)
    # Per-head Linear(F, 1) weights stacked as columns -> [F, H], biases [1, H]
    w = jax.random.normal(kw, (F_DIM, num_heads), dtype=jnp.float32) * 0.1
    bias = jax.random.normal(kb, (1, num_heads), dtype=jnp.float32) * 0.1
    # Adjacency argument (unused by the forward, kept for signature parity)
    adj = (jax.random.uniform(ka, (B, N_NODES, N_NODES)) > 0.5).astype(jnp.float32)

    out = jax.block_until_ready(gewa_forward(x, adj, w, bias))
    ref = reference_forward(x, w, bias)

    assert out.shape == (B, N_NODES, F_DIM)
    err = jnp.max(jnp.abs(out - ref))
    assert jnp.allclose(out, ref, atol=1e-5, rtol=1e-5), f"max err {err}"
    print("KERNEL_OK")
</pallas_src>

<mosaic_0001>
module attributes {stable_mosaic.version = 11 : i64} {
  func.func @gewa_kernel(%arg0: i32, %arg1: memref<128x8x56xf32, #tpu.memory_space<vmem>>, %arg2: memref<56x8xf32, #tpu.memory_space<vmem>>, %arg3: memref<1x8xf32, #tpu.memory_space<vmem>>, %arg4: memref<128x8x56xf32, #tpu.memory_space<vmem>>) attributes {dimension_semantics = [#tpu.dimension_semantics<parallel>], iteration_bounds = array<i64: 2>, scalar_prefetch = 0 : i64, scratch_operands = 0 : i64, tpu.core_type = #tpu.core_type<tc>, window_params = [{transform_indices = @transform_0, window_bounds = array<i64: 128, 8, 56>}, {pipeline_mode = #tpu.pipeline_mode<synchronous>, transform_indices = @transform_1, window_bounds = array<i64: 56, 8>}, {pipeline_mode = #tpu.pipeline_mode<synchronous>, transform_indices = @transform_2, window_bounds = array<i64: 1, 8>}, {transform_indices = @transform_3, window_bounds = array<i64: 128, 8, 56>}]} {
    %c0 = arith.constant 0 : index
    %c0_0 = arith.constant 0 : index
    %c0_1 = arith.constant 0 : index
    %0 = vector.load %arg1[%c0, %c0_0, %c0_1] : memref<128x8x56xf32, #tpu.memory_space<vmem>>, vector<128x8x56xf32>
    %c0_2 = arith.constant 0 : index
    %c0_3 = arith.constant 0 : index
    %1 = vector.load %arg2[%c0_2, %c0_3] : memref<56x8xf32, #tpu.memory_space<vmem>>, vector<56x8xf32>
    %c0_4 = arith.constant 0 : index
    %c0_5 = arith.constant 0 : index
    %2 = vector.load %arg3[%c0_4, %c0_5] : memref<1x8xf32, #tpu.memory_space<vmem>>, vector<1x8xf32>
    %3 = vector.shape_cast %0 : vector<128x8x56xf32> to vector<1024x56xf32>
    %cst = arith.constant dense<0.000000e+00> : vector<1024x8xf32>
    %4 = tpu.matmul %3, %1, %cst {dimension_numbers = #tpu.dot_dimension_numbers<[1], [0], [0], [1], [0, 0, 1, 1], [], []>} : vector<1024x56xf32>, vector<56x8xf32>, vector<1024x8xf32> -> vector<1024x8xf32>
    %5 = vector.broadcast %2 : vector<1x8xf32> to vector<1024x8xf32>
    %6 = arith.addf %4, %5 : vector<1024x8xf32>
    %7 = vector.shape_cast %6 : vector<1024x8xf32> to vector<128x8x8xf32>
    %cst_6 = arith.constant dense<0xFF800000> : vector<128x8xf32>
    %8 = vector.multi_reduction <maximumf>, %7, %cst_6 [2] : vector<128x8x8xf32> to vector<128x8xf32>
    %9 = vector.shape_cast %8 : vector<128x8xf32> to vector<128x8x1xf32>
    %10 = vector.broadcast %9 : vector<128x8x1xf32> to vector<128x8x8xf32>
    %11 = arith.subf %7, %10 : vector<128x8x8xf32>
    %12 = math.exp %11 : vector<128x8x8xf32>
    %cst_7 = arith.constant dense<0.000000e+00> : vector<128x8xf32>
    %13 = vector.multi_reduction <add>, %12, %cst_7 [2] : vector<128x8x8xf32> to vector<128x8xf32>
    %14 = vector.shape_cast %13 : vector<128x8xf32> to vector<128x8x1xf32>
    %15 = tpu.reciprocal %14 : vector<128x8x1xf32> -> vector<128x8x1xf32>
    %16 = vector.broadcast %15 : vector<128x8x1xf32> to vector<128x8x8xf32>
    %17 = arith.mulf %12, %16 : vector<128x8x8xf32>
    %18 = vector.extract_strided_slice %17 {offsets = [0, 0, 0], sizes = [128, 8, 1], strides = [1, 1, 1]} : vector<128x8x8xf32> to vector<128x8x1xf32>
    %19 = vector.extract_strided_slice %0 {offsets = [0, 0, 0], sizes = [128, 1, 56], strides = [1, 1, 1]} : vector<128x8x56xf32> to vector<128x1x56xf32>
    %20 = vector.broadcast %18 : vector<128x8x1xf32> to vector<128x8x56xf32>
    %21 = vector.broadcast %19 : vector<128x1x56xf32> to vector<128x8x56xf32>
    %22 = arith.mulf %20, %21 : vector<128x8x56xf32>
    %23 = vector.extract_strided_slice %17 {offsets = [0, 0, 1], sizes = [128, 8, 1], strides = [1, 1, 1]} : vector<128x8x8xf32> to vector<128x8x1xf32>
    %24 = vector.extract_strided_slice %0 {offsets = [0, 1, 0], sizes = [128, 1, 56], strides = [1, 1, 1]} : vector<128x8x56xf32> to vector<128x1x56xf32>
    %25 = vector.broadcast %23 : vector<128x8x1xf32> to vector<128x8x56xf32>
    %26 = vector.broadcast %24 : vector<128x1x56xf32> to vector<128x8x56xf32>
    %27 = arith.mulf %25, %26 : vector<128x8x56xf32>
    %28 = arith.addf %22, %27 : vector<128x8x56xf32>
    %29 = vector.extract_strided_slice %17 {offsets = [0, 0, 2], sizes = [128, 8, 1], strides = [1, 1, 1]} : vector<128x8x8xf32> to vector<128x8x1xf32>
    %30 = vector.extract_strided_slice %0 {offsets = [0, 2, 0], sizes = [128, 1, 56], strides = [1, 1, 1]} : vector<128x8x56xf32> to vector<128x1x56xf32>
    %31 = vector.broadcast %29 : vector<128x8x1xf32> to vector<128x8x56xf32>
    %32 = vector.broadcast %30 : vector<128x1x56xf32> to vector<128x8x56xf32>
    %33 = arith.mulf %31, %32 : vector<128x8x56xf32>
    %34 = arith.addf %28, %33 : vector<128x8x56xf32>
    %35 = vector.extract_strided_slice %17 {offsets = [0, 0, 3], sizes = [128, 8, 1], strides = [1, 1, 1]} : vector<128x8x8xf32> to vector<128x8x1xf32>
    %36 = vector.extract_strided_slice %0 {offsets = [0, 3, 0], sizes = [128, 1, 56], strides = [1, 1, 1]} : vector<128x8x56xf32> to vector<128x1x56xf32>
    %37 = vector.broadcast %35 : vector<128x8x1xf32> to vector<128x8x56xf32>
    %38 = vector.broadcast %36 : vector<128x1x56xf32> to vector<128x8x56xf32>
    %39 = arith.mulf %37, %38 : vector<128x8x56xf32>
    %40 = arith.addf %34, %39 : vector<128x8x56xf32>
    %41 = vector.extract_strided_slice %17 {offsets = [0, 0, 4], sizes = [128, 8, 1], strides = [1, 1, 1]} : vector<128x8x8xf32> to vector<128x8x1xf32>
    %42 = vector.extract_strided_slice %0 {offsets = [0, 4, 0], sizes = [128, 1, 56], strides = [1, 1, 1]} : vector<128x8x56xf32> to vector<128x1x56xf32>
    %43 = vector.broadcast %41 : vector<128x8x1xf32> to vector<128x8x56xf32>
    %44 = vector.broadcast %42 : vector<128x1x56xf32> to vector<128x8x56xf32>
    %45 = arith.mulf %43, %44 : vector<128x8x56xf32>
    %46 = arith.addf %40, %45 : vector<128x8x56xf32>
    %47 = vector.extract_strided_slice %17 {offsets = [0, 0, 5], sizes = [128, 8, 1], strides = [1, 1, 1]} : vector<128x8x8xf32> to vector<128x8x1xf32>
    %48 = vector.extract_strided_slice %0 {offsets = [0, 5, 0], sizes = [128, 1, 56], strides = [1, 1, 1]} : vector<128x8x56xf32> to vector<128x1x56xf32>
    %49 = vector.broadcast %47 : vector<128x8x1xf32> to vector<128x8x56xf32>
    %50 = vector.broadcast %48 : vector<128x1x56xf32> to vector<128x8x56xf32>
    %51 = arith.mulf %49, %50 : vector<128x8x56xf32>
    %52 = arith.addf %46, %51 : vector<128x8x56xf32>
    %53 = vector.extract_strided_slice %17 {offsets = [0, 0, 6], sizes = [128, 8, 1], strides = [1, 1, 1]} : vector<128x8x8xf32> to vector<128x8x1xf32>
    %54 = vector.extract_strided_slice %0 {offsets = [0, 6, 0], sizes = [128, 1, 56], strides = [1, 1, 1]} : vector<128x8x56xf32> to vector<128x1x56xf32>
    %55 = vector.broadcast %53 : vector<128x8x1xf32> to vector<128x8x56xf32>
    %56 = vector.broadcast %54 : vector<128x1x56xf32> to vector<128x8x56xf32>
    %57 = arith.mulf %55, %56 : vector<128x8x56xf32>
    %58 = arith.addf %52, %57 : vector<128x8x56xf32>
    %59 = vector.extract_strided_slice %17 {offsets = [0, 0, 7], sizes = [128, 8, 1], strides = [1, 1, 1]} : vector<128x8x8xf32> to vector<128x8x1xf32>
    %60 = vector.extract_strided_slice %0 {offsets = [0, 7, 0], sizes = [128, 1, 56], strides = [1, 1, 1]} : vector<128x8x56xf32> to vector<128x1x56xf32>
    %61 = vector.broadcast %59 : vector<128x8x1xf32> to vector<128x8x56xf32>
    %62 = vector.broadcast %60 : vector<128x1x56xf32> to vector<128x8x56xf32>
    %63 = arith.mulf %61, %62 : vector<128x8x56xf32>
    %64 = arith.addf %58, %63 : vector<128x8x56xf32>
    %c0_8 = arith.constant 0 : index
    %c0_9 = arith.constant 0 : index
    %c0_10 = arith.constant 0 : index
    %65 = vector.load %arg4[%c0_8, %c0_9, %c0_10] : memref<128x8x56xf32, #tpu.memory_space<vmem>>, vector<128x8x56xf32>
    tpu.vector_store %arg4[%c0_8, %c0_9, %c0_10], %64 {strides = array<i32>} : memref<128x8x56xf32, #tpu.memory_space<vmem>>, vector<128x8x56xf32>,
    return
  }
  func.func @transform_0(%arg0: i32) -> (i32, i32, i32) {
    %c0_i32 = arith.constant 0 : i32
    %c0_i32_0 = arith.constant 0 : i32
    %c0_i32_1 = arith.constant 0 : i32
    return %arg0, %c0_i32, %c0_i32_0 : i32, i32, i32
  }
  func.func @transform_1(%arg0: i32) -> (i32, i32) {
    %c0_i32 = arith.constant 0 : i32
    %c0_i32_0 = arith.constant 0 : i32
    %c0_i32_1 = arith.constant 0 : i32
    return %c0_i32, %c0_i32_0 : i32, i32
  }
  func.func @transform_2(%arg0: i32) -> (i32, i32) {
    %c0_i32 = arith.constant 0 : i32
    %c0_i32_0 = arith.constant 0 : i32
    %c0_i32_1 = arith.constant 0 : i32
    return %c0_i32, %c0_i32_0 : i32, i32
  }
  func.func @transform_3(%arg0: i32) -> (i32, i32, i32) {
    %c0_i32 = arith.constant 0 : i32
    %c0_i32_0 = arith.constant 0 : i32
    %c0_i32_1 = arith.constant 0 : i32
    return %arg0, %c0_i32, %c0_i32_0 : i32, i32, i32
  }
}

</mosaic_0001>

<llo_original>
// kernel: tpu_custom_call.1
$region0: #{tpu_custom_call.1}
  #allocation0 [shape = 'u32[]', space=smem, size = 0x4, offset = 0x4, fixed_abs, tag = 'smem constant byte address 0x4 - core index']
  #allocation1 [shape = 'u32[144,128]{1,0:T(1,128)}', space=vmem, size = 0x12000, scoped, tag = 'internal scratch']
  %s0 = inlined_call_operand.vmem [shape: f32[256,8,56], index: 0, kind: input, shape index: {}]
  %s1 = inlined_call_operand.vmem [shape: f32[56,8], index: 1, kind: input, shape index: {}]
  %s2 = inlined_call_operand.vmem [shape: f32[1,8], index: 2, kind: input, shape index: {}]
  %s3 = inlined_call_operand.vmem [shape: f32[256,8,56], index: 3, kind: output, shape index: {}]
  %s4 = sld [smem:[#allocation0]]
  $region45: #{tpu_custom_call.1} parent=0
    _
  %s6 = ssub.s32 1, %s4
  %s7 = scalar_select 0, %s6, %s4
  loop: start=0, step=1, limit=4
  $region2: #{tpu_custom_call.1} parent=0 // loop_pre_header
    _
  $region3: #{tpu_custom_call.1} parent=0 // loop_header
    %s9 = sphi 0, %s13
    %p10 = scmp.ge.s32.totalorder %s9, 4
    %s19 = sphi 0, %s21
    %s22 = sphi 0, %s19
    %s23 = sphi 0, %s22
    %s39 = sphi 0, %s23
    %s43 = sphi 0, %s43
    %s45 = sphi 0, %s43
    %s46 = sphi 0, %s45
    %s60 = sphi 0, %s46
    %s64 = sphi 0, %s64
    %s66 = sphi 0, %s64
    %s67 = sphi 0, %s66
    %s81 = sphi 0, %s67
    %s87 = sphi 0, %s89
    %s90 = sphi 0, %s87
    %s91 = sphi 0, %s90
    %s107 = sphi 0, %s91
  $region4: #{tpu_custom_call.1} parent=0 // loop_header_branch
    %12 = sbr.rel (%p10) target = $region8
  $region5: #{tpu_custom_call.1} parent=0 // loop_body
    %s14 = ssub.s32 %s9, 1
    %s15 = ssub.s32 %s9, 2
    %s16 = sadd.s32 %s9, 1
    %s17 = ssub.s32 %s9, %s16
    %p18 = scmp.eq.s32.totalorder %s17, 0
    %s20 = sadd.s32 %s19, 1
    %s21 = scalar_select %p18, %s19, %s20
    %p24 = pneg %p18
    %p25 = scmp.eq.s32.totalorder %s9, 1
    %p26 = por %p24, %p25
    %p27 = scmp.ne.s32.totalorder %s19, %s22
    %p28 = scmp.eq.s32.totalorder %s9, 0
    %p29 = por %p27, %p28
    %p30 = scmp.ne.s32.totalorder %s19, %s22
    %p31 = scmp.eq.s32.totalorder %s14, 1
    %p32 = por %p30, %p31
    %p33 = scmp.ne.s32.totalorder %s22, %s23
    %p34 = scmp.eq.s32.totalorder %s14, 0
    %p35 = por %p33, %p34
    %p36 = scmp.ne.s32.totalorder %s22, %s23
    %p37 = scmp.eq.s32.totalorder %s15, 1
    %p38 = por %p36, %p37
    %p40 = scmp.ne.s32.totalorder %s23, %s39
    %p41 = scmp.eq.s32.totalorder %s15, 0
    %p42 = por %p40, %p41
    %s44 = sadd.s32 %s43, 1
    %p47 = scmp.eq.s32.totalorder %s9, 1
    %p48 = scmp.ne.s32.totalorder %s43, %s45
    %p49 = scmp.eq.s32.totalorder %s9, 0
    %p50 = por %p48, %p49
    %p51 = scmp.ne.s32.totalorder %s43, %s45
    %p52 = scmp.eq.s32.totalorder %s14, 1
    %p53 = por %p51, %p52
    %p54 = scmp.ne.s32.totalorder %s45, %s46
    %p55 = scmp.eq.s32.totalorder %s14, 0
    %p56 = por %p54, %p55
    %p57 = scmp.ne.s32.totalorder %s45, %s46
    %p58 = scmp.eq.s32.totalorder %s15, 1
    %p59 = por %p57, %p58
    %p61 = scmp.ne.s32.totalorder %s46, %s60
    %p62 = scmp.eq.s32.totalorder %s15, 0
    %p63 = por %p61, %p62
    %s65 = sadd.s32 %s64, 1
    %p68 = scmp.eq.s32.totalorder %s9, 1
    %p69 = scmp.ne.s32.totalorder %s64, %s66
    %p70 = scmp.eq.s32.totalorder %s9, 0
    %p71 = por %p69, %p70
    %p72 = scmp.ne.s32.totalorder %s64, %s66
    %p73 = scmp.eq.s32.totalorder %s14, 1
    %p74 = por %p72, %p73
    %p75 = scmp.ne.s32.totalorder %s66, %s67
    %p76 = scmp.eq.s32.totalorder %s14, 0
    %p77 = por %p75, %p76
    %p78 = scmp.ne.s32.totalorder %s66, %s67
    %p79 = scmp.eq.s32.totalorder %s15, 1
    %p80 = por %p78, %p79
    %p82 = scmp.ne.s32.totalorder %s67, %s81
    %p83 = scmp.eq.s32.totalorder %s15, 0
    %p84 = por %p82, %p83
    %s85 = ssub.s32 %s9, %s16
    %p86 = scmp.eq.s32.totalorder %s85, 0
    %s88 = sadd.s32 %s87, 1
    %s89 = scalar_select %p86, %s87, %s88
    %p92 = pneg %p86
    %p93 = scmp.eq.s32.totalorder %s9, 1
    %p94 = por %p92, %p93
    %p95 = scmp.ne.s32.totalorder %s87, %s90
    %p96 = scmp.eq.s32.totalorder %s9, 0
    %p97 = por %p95, %p96
    %p98 = scmp.ne.s32.totalorder %s87, %s90
    %p99 = scmp.eq.s32.totalorder %s14, 1
    %p100 = por %p98, %p99
    %p101 = scmp.ne.s32.totalorder %s90, %s91
    %p102 = scmp.eq.s32.totalorder %s14, 0
    %p103 = por %p101, %p102
    %p104 = scmp.ne.s32.totalorder %s90, %s91
    %p105 = scmp.eq.s32.totalorder %s15, 1
    %p106 = por %p104, %p105
    %p108 = scmp.ne.s32.totalorder %s91, %s107
    %p109 = scmp.eq.s32.totalorder %s15, 0
    %p110 = por %p108, %p109
    %p111 = scmp.le.s32.totalorder 1, %s9
    %p112 = scmp.lt.s32.totalorder %s9, 3
    %p113 = pnand %p111, %p112
    %p114 = pneg %p113
    // Predicated region
    $region9: #{tpu_custom_call.1} parent=5 // pred_check
      _
    $region10: #{tpu_custom_call.1} parent=5 // pred_check_branch
      %116 = sbr.rel (%p113) target = $region12
    $region11: #{tpu_custom_call.1} parent=5 // pred_region
      %s117 = ssub.s32 %s9, 1
      // Predicated region
      $region13: #{tpu_custom_call.1} parent=11 // pred_check
        %p118 = pneg %p56
      $region14: #{tpu_custom_call.1} parent=11 // pred_check_branch
        %120 = sbr.rel (%p118) target = $region16
      $region15: #{tpu_custom_call.1} parent=11 // pred_region
        _
      $region16: #{tpu_custom_call.1} parent=11 // pred_fallthru
        _
      // Predicated region
      $region17: #{tpu_custom_call.1} parent=11 // pred_check
        %p121 = pneg %p77
      $region18: #{tpu_custom_call.1} parent=11 // pred_check_branch
        %123 = sbr.rel (%p121) target = $region20
      $region19: #{tpu_custom_call.1} parent=11 // pred_region
        _
      $region20: #{tpu_custom_call.1} parent=11 // pred_fallthru
        _
    $region12: #{tpu_custom_call.1} parent=5 // pred_fallthru
      _
    %p124 = scmp.lt.s32.totalorder %s9, 2
    // Predicated region
    $region21: #{tpu_custom_call.1} parent=5 // pred_check
      %p125 = pneg %p124
    $region22: #{tpu_custom_call.1} parent=5 // pred_check_branch
      %127 = sbr.rel (%p125) target = $region24
    $region23: #{tpu_custom_call.1} parent=5 // pred_region
      // Predicated region
      $region25: #{tpu_custom_call.1} parent=23 // pred_check
        %p128 = pneg %p29
      $region26: #{tpu_custom_call.1} parent=23 // pred_check_branch
        %130 = sbr.rel (%p128) target = $region28
      $region27: #{tpu_custom_call.1} parent=23 // pred_region
        %s131 = smul.u32 128, %s9
        %p132 = scmp.lt.s32.totalorder %s131, 255
        %s133 = scalar_select %p132, %s131, 255
        %s134 = smul.addr %s133, 8
        %s135 = scalar_lea.vmem %s0, %s134
        %s136 = smul.u32 128, %s9
      $region28: #{tpu_custom_call.1} parent=23 // pred_fallthru
        _
    $region24: #{tpu_custom_call.1} parent=5 // pred_fallthru
      _
    %p137 = scmp.le.s32.totalorder 1, %s9
    %p138 = scmp.lt.s32.totalorder %s9, 3
    %p139 = pnand %p137, %p138
    %p140 = pneg %p139
    // Predicated region
    $region29: #{tpu_custom_call.1} parent=5 // pred_check
      _
    $region30: #{tpu_custom_call.1} parent=5 // pred_check_branch
      %142 = sbr.rel (%p139) target = $region32
    $region31: #{tpu_custom_call.1} parent=5 // pred_region
      %s143 = ssub.s32 %s9, 1
      %s144 = smul.u32 128, %s14
      %p145 = scmp.lt.s32.totalorder %s144, 255
      %s146 = scalar_select %p145, %s144, 255
      %s147 = smul.addr %s146, 8
      %s148 = scalar_lea.vmem %s0, %s147
      %p149 = pneg %p35
      %p150 = pneg %p32
      %p151 = pneg %p56
      %p152 = pneg %p53
      %p153 = pneg %p77
      %p154 = pneg %p74
      %p155 = pneg %p103
      %p156 = pneg %p100
      %s157 = smul.u32 128, %s14
      %p158 = scmp.lt.s32.totalorder %s157, 255
      %s159 = scalar_select %p158, %s157, 255
      %s160 = smul.addr %s159, 8
      %s161 = scalar_lea.vmem %s3, %s160
      %s162 = smul.u32 128, %s14
      %p163 = scmp.lt.s32.totalorder %s162, 255
      %s164 = scalar_select %p163, %s162, 255
      %s165 = smul.addr %s164, 8
      %s166 = scalar_lea.vmem %s0, %s165
      %s167 = smul.u32 128, %s14
      %s168 = smul.u32 128, %s14
      %p169 = scmp.lt.s32.totalorder %s168, 255
      %s170 = scalar_select %p169, %s168, 255
      %s171 = smul.addr %s170, 8
      %s172 = scalar_lea.vmem %s3, %s171
      %s173 = smul.u32 128, %s14
      %v174 = vld [vmem:[%s166] sm:$0xff]
      %v175 = vld [vmem:[%s166 + $0x8] sm:$0xff]
      %v176 = vld [vmem:[%s166 + $0x10] sm:$0xff]
      %v177 = vld [vmem:[%s166 + $0x18] sm:$0xff]
      %v178 = vld [vmem:[%s166 + $0x20] sm:$0xff]
      %v179 = vld [vmem:[%s166 + $0x28] sm:$0xff]
      %v180 = vld [vmem:[%s166 + $0x30] sm:$0xff]
      %v181 = vld [vmem:[%s166 + $0x38] sm:$0xff]
      %v182 = vld [vmem:[%s166 + $0x40] sm:$0xff]
      %v183 = vld [vmem:[%s166 + $0x48] sm:$0xff]
      %v184 = vld [vmem:[%s166 + $0x50] sm:$0xff]
      %v185 = vld [vmem:[%s166 + $0x58] sm:$0xff]
      %v186 = vld [vmem:[%s166 + $0x60] sm:$0xff]
      %v187 = vld [vmem:[%s166 + $0x68] sm:$0xff]
      %v188 = vld [vmem:[%s166 + $0x70] sm:$0xff]
      %v189 = vld [vmem:[%s166 + $0x78] sm:$0xff]
      %v190 = vld [vmem:[%s166 + $0x80] sm:$0xff]
      %v191 = vld [vmem:[%s166 + $0x88] sm:$0xff]
      %v192 = vld [vmem:[%s166 + $0x90] sm:$0xff]
      %v193 = vld [vmem:[%s166 + $0x98] sm:$0xff]
      %v194 = vld [vmem:[%s166 + $0xa0] sm:$0xff]
      %v195 = vld [vmem:[%s166 + $0xa8] sm:$0xff]
      %v196 = vld [vmem:[%s166 + $0xb0] sm:$0xff]
      %v197 = vld [vmem:[%s166 + $0xb8] sm:$0xff]
      %v198 = vld [vmem:[%s166 + $0xc0] sm:$0xff]
      %v199 = vld [vmem:[%s166 + $0xc8] sm:$0xff]
      %v200 = vld [vmem:[%s166 + $0xd0] sm:$0xff]
      %v201 = vld [vmem:[%s166 + $0xd8] sm:$0xff]
      %v202 = vld [vmem:[%s166 + $0xe0] sm:$0xff]
      %v203 = vld [vmem:[%s166 + $0xe8] sm:$0xff]
      %v204 = vld [vmem:[%s166 + $0xf0] sm:$0xff]
      %v205 = vld [vmem:[%s166 + $0xf8] sm:$0xff]
      %v206 = vld [vmem:[%s166 + $0x100] sm:$0xff]
      %v207 = vld [vmem:[%s166 + $0x108] sm:$0xff]
      %v208 = vld [vmem:[%s166 + $0x110] sm:$0xff]
      %v209 = vld [vmem:[%s166 + $0x118] sm:$0xff]
      %v210 = vld [vmem:[%s166 + $0x120] sm:$0xff]
      %v211 = vld [vmem:[%s166 + $0x128] sm:$0xff]
      %v212 = vld [vmem:[%s166 + $0x130] sm:$0xff]
      %v213 = vld [vmem:[%s166 + $0x138] sm:$0xff]
      %v214 = vld [vmem:[%s166 + $0x140] sm:$0xff]
      %v215 = vld [vmem:[%s166 + $0x148] sm:$0xff]
      %v216 = vld [vmem:[%s166 + $0x150] sm:$0xff]
      %v217 = vld [vmem:[%s166 + $0x158] sm:$0xff]
      %v218 = vld [vmem:[%s166 + $0x160] sm:$0xff]
      %v219 = vld [vmem:[%s166 + $0x168] sm:$0xff]
      %v220 = vld [vmem:[%s166 + $0x170] sm:$0xff]
      %v221 = vld [vmem:[%s166 + $0x178] sm:$0xff]
      %v222 = vld [vmem:[%s166 + $0x180] sm:$0xff]
      %v223 = vld [vmem:[%s166 + $0x188] sm:$0xff]
      %v224 = vld [vmem:[%s166 + $0x190] sm:$0xff]
      %v225 = vld [vmem:[%s166 + $0x198] sm:$0xff]
      %v226 = vld [vmem:[%s166 + $0x1a0] sm:$0xff]
      %v227 = vld [vmem:[%s166 + $0x1a8] sm:$0xff]
      %v228 = vld [vmem:[%s166 + $0x1b0] sm:$0xff]
      %v229 = vld [vmem:[%s166 + $0x1b8] sm:$0xff]
      %v230 = vld [vmem:[%s166 + $0x1c0] sm:$0xff]
      %v231 = vld [vmem:[%s166 + $0x1c8] sm:$0xff]
      %v232 = vld [vmem:[%s166 + $0x1d0] sm:$0xff]
      %v233 = vld [vmem:[%s166 + $0x1d8] sm:$0xff]
      %v234 = vld [vmem:[%s166 + $0x1e0] sm:$0xff]
      %v235 = vld [vmem:[%s166 + $0x1e8] sm:$0xff]
      %v236 = vld [vmem:[%s166 + $0x1f0] sm:$0xff]
      %v237 = vld [vmem:[%s166 + $0x1f8] sm:$0xff]
      %v238 = vld [vmem:[%s166 + $0x200] sm:$0xff]
      %v239 = vld [vmem:[%s166 + $0x208] sm:$0xff]
      %v240 = vld [vmem:[%s166 + $0x210] sm:$0xff]
      %v241 = vld [vmem:[%s166 + $0x218] sm:$0xff]
      %v242 = vld [vmem:[%s166 + $0x220] sm:$0xff]
      %v243 = vld [vmem:[%s166 + $0x228] sm:$0xff]
      %v244 = vld [vmem:[%s166 + $0x230] sm:$0xff]
      %v245 = vld [vmem:[%s166 + $0x238] sm:$0xff]
      %v246 = vld [vmem:[%s166 + $0x240] sm:$0xff]
      %v247 = vld [vmem:[%s166 + $0x248] sm:$0xff]
      %v248 = vld [vmem:[%s166 + $0x250] sm:$0xff]
      %v249 = vld [vmem:[%s166 + $0x258] sm:$0xff]
      %v250 = vld [vmem:[%s166 + $0x260] sm:$0xff]
      %v251 = vld [vmem:[%s166 + $0x268] sm:$0xff]
      %v252 = vld [vmem:[%s166 + $0x270] sm:$0xff]
      %v253 = vld [vmem:[%s166 + $0x278] sm:$0xff]
      %v254 = vld [vmem:[%s166 + $0x280] sm:$0xff]
      %v255 = vld [vmem:[%s166 + $0x288] sm:$0xff]
      %v256 = vld [vmem:[%s166 + $0x290] sm:$0xff]
      %v257 = vld [vmem:[%s166 + $0x298] sm:$0xff]
      %v258 = vld [vmem:[%s166 + $0x2a0] sm:$0xff]
      %v259 = vld [vmem:[%s166 + $0x2a8] sm:$0xff]
      %v260 = vld [vmem:[%s166 + $0x2b0] sm:$0xff]
      %v261 = vld [vmem:[%s166 + $0x2b8] sm:$0xff]
      %v262 = vld [vmem:[%s166 + $0x2c0] sm:$0xff]
      %v263 = vld [vmem:[%s166 + $0x2c8] sm:$0xff]
      %v264 = vld [vmem:[%s166 + $0x2d0] sm:$0xff]
      %v265 = vld [vmem:[%s166 + $0x2d8] sm:$0xff]
      %v266 = vld [vmem:[%s166 + $0x2e0] sm:$0xff]
      %v267 = vld [vmem:[%s166 + $0x2e8] sm:$0xff]
      %v268 = vld [vmem:[%s166 + $0x2f0] sm:$0xff]
      %v269 = vld [vmem:[%s166 + $0x2f8] sm:$0xff]
      %v270 = vld [vmem:[%s166 + $0x300] sm:$0xff]
      %v271 = vld [vmem:[%s166 + $0x308] sm:$0xff]
      %v272 = vld [vmem:[%s166 + $0x310] sm:$0xff]
      %v273 = vld [vmem:[%s166 + $0x318] sm:$0xff]
      %v274 = vld [vmem:[%s166 + $0x320] sm:$0xff]
      %v275 = vld [vmem:[%s166 + $0x328] sm:$0xff]
      %v276 = vld [vmem:[%s166 + $0x330] sm:$0xff]
      %v277 = vld [vmem:[%s166 + $0x338] sm:$0xff]
      %v278 = vld [vmem:[%s166 + $0x340] sm:$0xff]
      %v279 = vld [vmem:[%s166 + $0x348] sm:$0xff]
      %v280 = vld [vmem:[%s166 + $0x350] sm:$0xff]
      %v281 = vld [vmem:[%s166 + $0x358] sm:$0xff]
      %v282 = vld [vmem:[%s166 + $0x360] sm:$0xff]
      %v283 = vld [vmem:[%s166 + $0x368] sm:$0xff]
      %v284 = vld [vmem:[%s166 + $0x370] sm:$0xff]
      %v285 = vld [vmem:[%s166 + $0x378] sm:$0xff]
      %v286 = vld [vmem:[%s166 + $0x380] sm:$0xff]
      %v287 = vld [vmem:[%s166 + $0x388] sm:$0xff]
      %v288 = vld [vmem:[%s166 + $0x390] sm:$0xff]
      %v289 = vld [vmem:[%s166 + $0x398] sm:$0xff]
      %v290 = vld [vmem:[%s166 + $0x3a0] sm:$0xff]
      %v291 = vld [vmem:[%s166 + $0x3a8] sm:$0xff]
      %v292 = vld [vmem:[%s166 + $0x3b0] sm:$0xff]
      %v293 = vld [vmem:[%s166 + $0x3b8] sm:$0xff]
      %v294 = vld [vmem:[%s166 + $0x3c0] sm:$0xff]
      %v295 = vld [vmem:[%s166 + $0x3c8] sm:$0xff]
      %v296 = vld [vmem:[%s166 + $0x3d0] sm:$0xff]
      %v297 = vld [vmem:[%s166 + $0x3d8] sm:$0xff]
      %v298 = vld [vmem:[%s166 + $0x3e0] sm:$0xff]
      %v299 = vld [vmem:[%s166 + $0x3e8] sm:$0xff]
      %v300 = vld [vmem:[%s166 + $0x3f0] sm:$0xff]
      %v301 = vld [vmem:[%s166 + $0x3f8] sm:$0xff]
      %v302 = vld [vmem:[%s1] sm:$0xff]
      %v303 = vld [vmem:[%s1 + $0x8] sm:$0xff]
      %v304 = vld [vmem:[%s1 + $0x10] sm:$0xff]
      %v305 = vld [vmem:[%s1 + $0x18] sm:$0xff]
      %v306 = vld [vmem:[%s1 + $0x20] sm:$0xff]
      %v307 = vld [vmem:[%s1 + $0x28] sm:$0xff]
      %v308 = vld [vmem:[%s1 + $0x30] sm:$0xff]
      %v309 = vld [vmem:[%s2] sm:$0x1]
      %v311 = vlaneseq
      %v312 = vshrl.u32 %v311, 7
      %v313 = vsub.s32 0, %v312
      %v314 = vrot.slane %v309, %v313
      %vm316 = vcmask 457728
      %v318 = vsel %vm316, %v174, 0
      %v321 = vsel %vm316, %v175, 0
      %v324 = vsel %vm316, %v176, 0
      %v327 = vsel %vm316, %v177, 0
      %v330 = vsel %vm316, %v178, 0
      %v333 = vsel %vm316, %v179, 0
      %v336 = vsel %vm316, %v180, 0
      %v339 = vsel %vm316, %v181, 0
      %v342 = vsel %vm316, %v182, 0
      %v345 = vsel %vm316, %v183, 0
      %v348 = vsel %vm316, %v184, 0
      %v351 = vsel %vm316, %v185, 0
      %v354 = vsel %vm316, %v186, 0
      %v357 = vsel %vm316, %v187, 0
      %v360 = vsel %vm316, %v188, 0
      %v363 = vsel %vm316, %v189, 0
      %v366 = vsel %vm316, %v190, 0
      %v369 = vsel %vm316, %v191, 0
      %v372 = vsel %vm316, %v192, 0
      %v375 = vsel %vm316, %v193, 0
      %v378 = vsel %vm316, %v194, 0
      %v381 = vsel %vm316, %v195, 0
      %v384 = vsel %vm316, %v196, 0
      %v387 = vsel %vm316, %v197, 0
      %v390 = vsel %vm316, %v198, 0
      %v393 = vsel %vm316, %v199, 0
      %v396 = vsel %vm316, %v200, 0
      %v399 = vsel %vm316, %v201, 0
      %v402 = vsel %vm316, %v202, 0
      %v405 = vsel %vm316, %v203, 0
      %v408 = vsel %vm316, %v204, 0
      %v411 = vsel %vm316, %v205, 0
      %v414 = vsel %vm316, %v206, 0
      %v417 = vsel %vm316, %v207, 0
      %v420 = vsel %vm316, %v208, 0
      %v423 = vsel %vm316, %v209, 0
      %v426 = vsel %vm316, %v210, 0
      %v429 = vsel %vm316, %v211, 0
      %v432 = vsel %vm316, %v212, 0
      %v435 = vsel %vm316, %v213, 0
      %v438 = vsel %vm316, %v214, 0
      %v441 = vsel %vm316, %v215, 0
      %v444 = vsel %vm316, %v216, 0
      %v447 = vsel %vm316, %v217, 0
      %v450 = vsel %vm316, %v218, 0
      %v453 = vsel %vm316, %v219, 0
      %v456 = vsel %vm316, %v220, 0
      %v459 = vsel %vm316, %v221, 0
      %v462 = vsel %vm316, %v222, 0
      %v465 = vsel %vm316, %v223, 0
      %v468 = vsel %vm316, %v224, 0
      %v471 = vsel %vm316, %v225, 0
      %v474 = vsel %vm316, %v226, 0
      %v477 = vsel %vm316, %v227, 0
      %v480 = vsel %vm316, %v228, 0
      %v483 = vsel %vm316, %v229, 0
      %v486 = vsel %vm316, %v230, 0
      %v489 = vsel %vm316, %v231, 0
      %v492 = vsel %vm316, %v232, 0
      %v495 = vsel %vm316, %v233, 0
      %v498 = vsel %vm316, %v234, 0
      %v501 = vsel %vm316, %v235, 0
      %v504 = vsel %vm316, %v236, 0
      %v507 = vsel %vm316, %v237, 0
      %v510 = vsel %vm316, %v238, 0
      %v513 = vsel %vm316, %v239, 0
      %v516 = vsel %vm316, %v240, 0
      %v519 = vsel %vm316, %v241, 0
      %v522 = vsel %vm316, %v242, 0
      %v525 = vsel %vm316, %v243, 0
      %v528 = vsel %vm316, %v244, 0
      %v531 = vsel %vm316, %v245, 0
      %v534 = vsel %vm316, %v246, 0
      %v537 = vsel %vm316, %v247, 0
      %v540 = vsel %vm316, %v248, 0
      %v543 = vsel %vm316, %v249, 0
      %v546 = vsel %vm316, %v250, 0
      %v549 = vsel %vm316, %v251, 0
      %v552 = vsel %vm316, %v252, 0
      %v555 = vsel %vm316, %v253, 0
      %v558 = vsel %vm316, %v254, 0
      %v561 = vsel %vm316, %v255, 0
      %v564 = vsel %vm316, %v256, 0
      %v567 = vsel %vm316, %v257, 0
      %v570 = vsel %vm316, %v258, 0
      %v573 = vsel %vm316, %v259, 0
      %v576 = vsel %vm316, %v260, 0
      %v579 = vsel %vm316, %v261, 0
      %v582 = vsel %vm316, %v262, 0
      %v585 = vsel %vm316, %v263, 0
      %v588 = vsel %vm316, %v264, 0
      %v591 = vsel %vm316, %v265, 0
      %v594 = vsel %vm316, %v266, 0
      %v597 = vsel %vm316, %v267, 0
      %v600 = vsel %vm316, %v268, 0
      %v603 = vsel %vm316, %v269, 0
      %v606 = vsel %vm316, %v270, 0
      %v609 = vsel %vm316, %v271, 0
      %v612 = vsel %vm316, %v272, 0
      %v615 = vsel %vm316, %v273, 0
      %v618 = vsel %vm316, %v274, 0
      %v621 = vsel %vm316, %v275, 0
      %v624 = vsel %vm316, %v276, 0
      %v627 = vsel %vm316, %v277, 0
      %v630 = vsel %vm316, %v278, 0
      %v633 = vsel %vm316, %v279, 0
      %v636 = vsel %vm316, %v280, 0
      %v639 = vsel %vm316, %v281, 0
      %v642 = vsel %vm316, %v282, 0
      %v645 = vsel %vm316, %v283, 0
      %v648 = vsel %vm316, %v284, 0
      %v651 = vsel %vm316, %v285, 0
      %v654 = vsel %vm316, %v286, 0
      %v657 = vsel %vm316, %v287, 0
      %v660 = vsel %vm316, %v288, 0
      %v663 = vsel %vm316, %v289, 0
      %v666 = vsel %vm316, %v290, 0
      %v669 = vsel %vm316, %v291, 0
      %v672 = vsel %vm316, %v292, 0
      %v675 = vsel %vm316, %v293, 0
      %v678 = vsel %vm316, %v294, 0
      %v681 = vsel %vm316, %v295, 0
      %v684 = vsel %vm316, %v296, 0
      %v687 = vsel %vm316, %v297, 0
      %v690 = vsel %vm316, %v298, 0
      %v693 = vsel %vm316, %v299, 0
      %v696 = vsel %vm316, %v300, 0
      %v699 = vsel %vm316, %v301, 0
      %701 = vmatprep.subr.mxu0 0.0
      %702 = vmatpush1.msra.mxu0 %v302
      %703 = vmatprep.subr.mxu0 0.0
      %704 = vmatpush1.msra.mxu0 %v303
      %705 = vmatprep.subr.mxu0 0.0
      %706 = vmatpush1.msra.mxu0 %v304
      %707 = vmatprep.subr.mxu0 0.0
      %708 = vmatpush1.msra.mxu0 %v305
      %709 = vmatprep.subr.mxu0 0.0
      %710 = vmatpush1.msra.mxu0 %v306
      %711 = vmatprep.subr.mxu0 0.0
      %712 = vmatpush1.msra.mxu0 %v307
      %713 = vmatprep.subr.mxu0 0.0
      %714 = vmatpush1.msra.mxu0 %v308
      %715 = vmatprep.subr.mxu0 0.0
      %716 = vmatpush1.msra.mxu0 0.0
      %717 = vmatprep.subr.mxu0 0.0
      %718 = vmatpush1.msra.mxu0 0.0
      %719 = vmatprep.subr.mxu0 0.0
      %720 = vmatpush1.msra.mxu0 0.0
      %721 = vmatprep.subr.mxu0 0.0
      %722 = vmatpush1.msra.mxu0 0.0
      %723 = vmatprep.subr.mxu0 0.0
      %724 = vmatpush1.msra.mxu0 0.0
      %725 = vmatprep.subr.mxu0 0.0
      %726 = vmatpush1.msra.mxu0 0.0
      %727 = vmatprep.subr.mxu0 0.0
      %728 = vmatpush1.msra.mxu0 0.0
      %729 = vmatprep.subr.mxu0 0.0
      %730 = vmatpush1.msra.mxu0 0.0
      %731 = vmatprep.subr.mxu0 0.0
      %732 = vmatpush1.msra.mxu0 0.0
      %733 = vmatprep.subr.mxu0 0.0
      %734 = vmatpush1.msra.mxu0 0.0
      %735 = vmatprep.subr.mxu0 0.0
      %736 = vmatpush1.msra.mxu0 0.0
      %737 = vmatprep.subr.mxu0 0.0
      %738 = vmatpush1.msra.mxu0 0.0
      %739 = vmatprep.subr.mxu0 0.0
      %740 = vmatpush1.msra.mxu0 0.0
      %741 = vmatprep.subr.mxu0 0.0
      %742 = vmatpush1.msra.mxu0 0.0
      %743 = vmatprep.subr.mxu0 0.0
      %744 = vmatpush1.msra.mxu0 0.0
      %745 = vmatprep.subr.mxu0 0.0
      %746 = vmatpush1.msra.mxu0 0.0
      %747 = vmatprep.subr.mxu0 0.0
      %748 = vmatpush1.msra.mxu0 0.0
      %749 = vmatprep.subr.mxu0 0.0
      %750 = vmatpush1.msra.mxu0 0.0
      %751 = vmatprep.subr.mxu0 0.0
      %752 = vmatpush1.msra.mxu0 0.0
      %753 = vmatprep.subr.mxu0 0.0
      %754 = vmatpush1.msra.mxu0 0.0
      %755 = vmatprep.subr.mxu0 0.0
      %756 = vmatpush1.msra.mxu0 0.0
      %757 = vmatprep.subr.mxu0 0.0
      %758 = vmatpush1.msra.mxu0 0.0
      %759 = vmatprep.subr.mxu0 0.0
      %760 = vmatpush1.msra.mxu0 0.0
      %761 = vmatprep.subr.mxu0 0.0
      %762 = vmatpush1.msra.mxu0 0.0
      %763 = vmatprep.subr.mxu0 0.0
      %764 = vmatpush1.msra.mxu0 0.0
      %765 = vmatprep.mubr.f32.mxu0 0.0
      %766 = vmatmul.mubr.f32.gmra.mrb[0].mxu0 %v318
      %v767 = vpop.f32.mrb[0].mxu0
      %v768 = vadd.f32 %v314, %v767
      %v769 = vpop.f32.mrb[0].mxu0
      %770 = vmatprep.mubr.f32.mxu0 0.0
      %771 = vmatmul.mubr.f32.gmra.mrb[0].mxu0 %v321
      %v772 = vpop.f32.mrb[0].mxu0
      %v773 = vadd.f32 %v314, %v772
      %v774 = vpop.f32.mrb[0].mxu0
      %775 = vmatprep.mubr.f32.mxu0 0.0
      %776 = vmatmul.mubr.f32.gmra.mrb[0].mxu0 %v324
      %v777 = vpop.f32.mrb[0].mxu0
      %v778 = vadd.f32 %v314, %v777
      %v779 = vpop.f32.mrb[0].mxu0
      %780 = vmatprep.mubr.f32.mxu0 0.0
      %781 = vmatmul.mubr.f32.gmra.mrb[0].mxu0 %v327
      %v782 = vpop.f32.mrb[0].mxu0
      %v783 = vadd.f32 %v314, %v782
      %v784 = vpop.f32.mrb[0].mxu0
      %785 = vmatprep.mubr.f32.mxu0 0.0
      %786 = vmatmul.mubr.f32.gmra.mrb[0].mxu0 %v330
      %v787 = vpop.f32.mrb[0].mxu0
      %v788 = vadd.f32 %v314, %v787
      %v789 = vpop.f32.mrb[0].mxu0
      %790 = vmatprep.mubr.f32.mxu0 0.0
      %791 = vmatmul.mubr.f32.gmra.mrb[0].mxu0 %v333
      %v792 = vpop.f32.mrb[0].mxu0
      %v793 = vadd.f32 %v314, %v792
      %v794 = vpop.f32.mrb[0].mxu0
      %795 = vmatprep.mubr.f32.mxu0 0.0
      %796 = vmatmul.mubr.f32.gmra.mrb[0].mxu0 %v336
      %v797 = vpop.f32.mrb[0].mxu0
      %v798 = vadd.f32 %v314, %v797
      %v799 = vpop.f32.mrb[0].mxu0
      %800 = vmatprep.mubr.f32.mxu0 0.0
      %801 = vmatmul.mubr.f32.gmra.mrb[0].mxu0 %v339
      %v802 = vpop.f32.mrb[0].mxu0
      %v803 = vadd.f32 %v314, %v802
      %v804 = vpop.f32.mrb[0].mxu0
      %805 = vmatprep.mubr.f32.mxu0 0.0
      %806 = vmatmul.mubr.f32.gmra.mrb[0].mxu0 %v342
      %v807 = vpop.f32.mrb[0].mxu0
      %v808 = vadd.f32 %v314, %v807
      %v809 = vpop.f32.mrb[0].mxu0
      %810 = vmatprep.mubr.f32.mxu0 0.0
      %811 = vmatmul.mubr.f32.gmra.mrb[0].mxu0 %v345
      %v812 = vpop.f32.mrb[0].mxu0
      %v813 = vadd.f32 %v314, %v812
      %v814 = vpop.f32.mrb[0].mxu0
      %815 = vmatprep.mubr.f32.mxu0 0.0
      %816 = vmatmul.mubr.f32.gmra.mrb[0].mxu0 %v348
      %v817 = vpop.f32.mrb[0].mxu0
      %v818 = vadd.f32 %v314, %v817
      %v819 = vpop.f32.mrb[0].mxu0
      %820 = vmatprep.mubr.f32.mxu0 0.0
      %821 = vmatmul.mubr.f32.gmra.mrb[0].mxu0 %v351
      %v822 = vpop.f32.mrb[0].mxu0
      %v823 = vadd.f32 %v314, %v822
      %v824 = vpop.f32.mrb[0].mxu0
      %825 = vmatprep.mubr.f32.mxu0 0.0
      %826 = vmatmul.mubr.f32.gmra.mrb[0].mxu0 %v354
      %v827 = vpop.f32.mrb[0].mxu0
      %v828 = vadd.f32 %v314, %v827
      %v829 = vpop.f32.mrb[0].mxu0
      %830 = vmatprep.mubr.f32.mxu0 0.0
      %831 = vmatmul.mubr.f32.gmra.mrb[0].mxu0 %v357
      %v832 = vpop.f32.mrb[0].mxu0
      %v833 = vadd.f32 %v314, %v832
      %v834 = vpop.f32.mrb[0].mxu0
      %835 = vmatprep.mubr.f32.mxu0 0.0
      %836 = vmatmul.mubr.f32.gmra.mrb[0].mxu0 %v360
      %v837 = vpop.f32.mrb[0].mxu0
      %v838 = vadd.f32 %v314, %v837
      %v839 = vpop.f32.mrb[0].mxu0
      %840 = vmatprep.mubr.f32.mxu0 0.0
      %841 = vmatmul.mubr.f32.gmra.mrb[0].mxu0 %v363
      %v842 = vpop.f32.mrb[0].mxu0
      %v843 = vadd.f32 %v314, %v842
      %v844 = vpop.f32.mrb[0].mxu0
      %845 = vmatprep.mubr.f32.mxu0 0.0
      %846 = vmatmul.mubr.f32.gmra.mrb[0].mxu0 %v366
      %v847 = vpop.f32.mrb[0].mxu0
      %v848 = vadd.f32 %v314, %v847
      %v849 = vpop.f32.mrb[0].mxu0
      %850 = vmatprep.mubr.f32.mxu0 0.0
      %851 = vmatmul.mubr.f32.gmra.mrb[0].mxu0 %v369
      %v852 = vpop.f32.mrb[0].mxu0
      %v853 = vadd.f32 %v314, %v852
      %v854 = vpop.f32.mrb[0].mxu0
      %855 = vmatprep.mubr.f32.mxu0 0.0
      %856 = vmatmul.mubr.f32.gmra.mrb[0].mxu0 %v372
      %v857 = vpop.f32.mrb[0].mxu0
      %v858 = vadd.f32 %v314, %v857
      %v859 = vpop.f32.mrb[0].mxu0
      %860 = vmatprep.mubr.f32.mxu0 0.0
      %861 = vmatmul.mubr.f32.gmra.mrb[0].mxu0 %v375
      %v862 = vpop.f32.mrb[0].mxu0
      %v863 = vadd.f32 %v314, %v862
      %v864 = vpop.f32.mrb[0].mxu0
      %865 = vmatprep.mubr.f32.mxu0 0.0
      %866 = vmatmul.mubr.f32.gmra.mrb[0].mxu0 %v378
      %v867 = vpop.f32.mrb[0].mxu0
      %v868 = vadd.f32 %v314, %v867
      %v869 = vpop.f32.mrb[0].mxu0
      %870 = vmatprep.mubr.f32.mxu0 0.0
      %871 = vmatmul.mubr.f32.gmra.mrb[0].mxu0 %v381
      %v872 = vpop.f32.mrb[0].mxu0
      %v873 = vadd.f32 %v314, %v872
      %v874 = vpop.f32.mrb[0].mxu0
      %875 = vmatprep.mubr.f32.mxu0 0.0
      %876 = vmatmul.mubr.f32.gmra.mrb[0].mxu0 %v384
      %v877 = vpop.f32.mrb[0].mxu0
      %v878 = vadd.f32 %v314, %v877
      %v879 = vpop.f32.mrb[0].mxu0
      %880 = vmatprep.mubr.f32.mxu0 0.0
      %881 = vmatmul.mubr.f32.gmra.mrb[0].mxu0 %v387
      %v882 = vpop.f32.mrb[0].mxu0
      %v883 = vadd.f32 %v314, %v882
      %v884 = vpop.f32.mrb[0].mxu0
      %885 = vmatprep.mubr.f32.mxu0 0.0
      %886 = vmatmul.mubr.f32.gmra.mrb[0].mxu0 %v390
      %v887 = vpop.f32.mrb[0].mxu0
      %v888 = vadd.f32 %v314, %v887
      %v889 = vpop.f32.mrb[0].mxu0
      %890 = vmatprep.mubr.f32.mxu0 0.0
      %891 = vmatmul.mubr.f32.gmra.mrb[0].mxu0 %v393
      %v892 = vpop.f32.mrb[0].mxu0
      %v893 = vadd.f32 %v314, %v892
      %v894 = vpop.f32.mrb[0].mxu0
      %895 = vmatprep.mubr.f32.mxu0 0.0
      %896 = vmatmul.mubr.f32.gmra.mrb[0].mxu0 %v396
      %v897 = vpop.f32.mrb[0].mxu0
      %v898 = vadd.f32 %v314, %v897
      %v899 = vpop.f32.mrb[0].mxu0
      %900 = vmatprep.mubr.f32.mxu0 0.0
      %901 = vmatmul.mubr.f32.gmra.mrb[0].mxu0 %v399
      %v902 = vpop.f32.mrb[0].mxu0
      %v903 = vadd.f32 %v314, %v902
      %v904 = vpop.f32.mrb[0].mxu0
      %905 = vmatprep.mubr.f32.mxu0 0.0
      %906 = vmatmul.mubr.f32.gmra.mrb[0].mxu0 %v402
      %v907 = vpop.f32.mrb[0].mxu0
      %v908 = vadd.f32 %v314, %v907
      %v909 = vpop.f32.mrb[0].mxu0
      %910 = vmatprep.mubr.f32.mxu0 0.0
      %911 = vmatmul.mubr.f32.gmra.mrb[0].mxu0 %v405
      %v912 = vpop.f32.mrb[0].mxu0
      %v913 = vadd.f32 %v314, %v912
      %v914 = vpop.f32.mrb[0].mxu0
      %915 = vmatprep.mubr.f32.mxu0 0.0
      %916 = vmatmul.mubr.f32.gmra.mrb[0].mxu0 %v408
      %v917 = vpop.f32.mrb[0].mxu0
      %v918 = vadd.f32 %v314, %v917
      %v919 = vpop.f32.mrb[0].mxu0
      %920 = vmatprep.mubr.f32.mxu0 0.0
      %921 = vmatmul.mubr.f32.gmra.mrb[0].mxu0 %v411
      %v922 = vpop.f32.mrb[0].mxu0
      %v923 = vadd.f32 %v314, %v922
      %v924 = vpop.f32.mrb[0].mxu0
      %925 = vmatprep.mubr.f32.mxu0 0.0
      %926 = vmatmul.mubr.f32.gmra.mrb[0].mxu0 %v414
      %v927 = vpop.f32.mrb[0].mxu0
      %v928 = vadd.f32 %v314, %v927
      %v929 = vpop.f32.mrb[0].mxu0
      %930 = vmatprep.mubr.f32.mxu0 0.0
      %931 = vmatmul.mubr.f32.gmra.mrb[0].mxu0 %v417
      %v932 = vpop.f32.mrb[0].mxu0
      %v933 = vadd.f32 %v314, %v932
      %v934 = vpop.f32.mrb[0].mxu0
      %935 = vmatprep.mubr.f32.mxu0 0.0
      %936 = vmatmul.mubr.f32.gmra.mrb[0].mxu0 %v420
      %v937 = vpop.f32.mrb[0].mxu0
      %v938 = vadd.f32 %v314, %v937
      %v939 = vpop.f32.mrb[0].mxu0
      %940 = vmatprep.mubr.f32.mxu0 0.0
      %941 = vmatmul.mubr.f32.gmra.mrb[0].mxu0 %v423
      %v942 = vpop.f32.mrb[0].mxu0
      %v943 = vadd.f32 %v314, %v942
      %v944 = vpop.f32.mrb[0].mxu0
      %945 = vmatprep.mubr.f32.mxu0 0.0
      %946 = vmatmul.mubr.f32.gmra.mrb[0].mxu0 %v426
      %v947 = vpop.f32.mrb[0].mxu0
      %v948 = vadd.f32 %v314, %v947
      %v949 = vpop.f32.mrb[0].mxu0
      %950 = vmatprep.mubr.f32.mxu0 0.0
      %951 = vmatmul.mubr.f32.gmra.mrb[0].mxu0 %v429
      %v952 = vpop.f32.mrb[0].mxu0
      %v953 = vadd.f32 %v314, %v952
      %v954 = vpop.f32.mrb[0].mxu0
      %955 = vmatprep.mubr.f32.mxu0 0.0
      %956 = vmatmul.mubr.f32.gmra.mrb[0].mxu0 %v432
      %v957 = vpop.f32.mrb[0].mxu0
      %v958 = vadd.f32 %v314, %v957
      %v959 = vpop.f32.mrb[0].mxu0
      %960 = vmatprep.mubr.f32.mxu0 0.0
      %961 = vmatmul.mubr.f32.gmra.mrb[0].mxu0 %v435
      %v962 = vpop.f32.mrb[0].mxu0
      %v963 = vadd.f32 %v314, %v962
      %v964 = vpop.f32.mrb[0].mxu0
      %965 = vmatprep.mubr.f32.mxu0 0.0
      %966 = vmatmul.mubr.f32.gmra.mrb[0].mxu0 %v438
      %v967 = vpop.f32.mrb[0].mxu0
      %v968 = vadd.f32 %v314, %v967
      %v969 = vpop.f32.mrb[0].mxu0
      %970 = vmatprep.mubr.f32.mxu0 0.0
      %971 = vmatmul.mubr.f32.gmra.mrb[0].mxu0 %v441
      %v972 = vpop.f32.mrb[0].mxu0
      %v973 = vadd.f32 %v314, %v972
      %v974 = vpop.f32.mrb[0].mxu0
      %975 = vmatprep.mubr.f32.mxu0 0.0
      %976 = vmatmul.mubr.f32.gmra.mrb[0].mxu0 %v444
      %v977 = vpop.f32.mrb[0].mxu0
      %v978 = vadd.f32 %v314, %v977
      %v979 = vpop.f32.mrb[0].mxu0
      %980 = vmatprep.mubr.f32.mxu0 0.0
      %981 = vmatmul.mubr.f32.gmra.mrb[0].mxu0 %v447
      %v982 = vpop.f32.mrb[0].mxu0
      %v983 = vadd.f32 %v314, %v982
      %v984 = vpop.f32.mrb[0].mxu0
      %985 = vmatprep.mubr.f32.mxu0 0.0
      %986 = vmatmul.mubr.f32.gmra.mrb[0].mxu0 %v450
      %v987 = vpop.f32.mrb[0].mxu0
      %v988 = vadd.f32 %v314, %v987
      %v989 = vpop.f32.mrb[0].mxu0
      %990 = vmatprep.mubr.f32.mxu0 0.0
      %991 = vmatmul.mubr.f32.gmra.mrb[0].mxu0 %v453
      %v992 = vpop.f32.mrb[0].mxu0
      %v993 = vadd.f32 %v314, %v992
      %v994 = vpop.f32.mrb[0].mxu0
      %995 = vmatprep.mubr.f32.mxu0 0.0
      %996 = vmatmul.mubr.f32.gmra.mrb[0].mxu0 %v456
      %v997 = vpop.f32.mrb[0].mxu0
      %v998 = vadd.f32 %v314, %v997
      %v999 = vpop.f32.mrb[0].mxu0
      %1000 = vmatprep.mubr.f32.mxu0 0.0
      %1001 = vmatmul.mubr.f32.gmra.mrb[0].mxu0 %v459
      %v1002 = vpop.f32.mrb[0].mxu0
      %v1003 = vadd.f32 %v314, %v1002
      %v1004 = vpop.f32.mrb[0].mxu0
      %1005 = vmatprep.mubr.f32.mxu0 0.0
      %1006 = vmatmul.mubr.f32.gmra.mrb[0].mxu0 %v462
      %v1007 = vpop.f32.mrb[0].mxu0
      %v1008 = vadd.f32 %v314, %v1007
      %v1009 = vpop.f32.mrb[0].mxu0
      %1010 = vmatprep.mubr.f32.mxu0 0.0
      %1011 = vmatmul.mubr.f32.gmra.mrb[0].mxu0 %v465
      %v1012 = vpop.f32.mrb[0].mxu0
      %v1013 = vadd.f32 %v314, %v1012
      %v1014 = vpop.f32.mrb[0].mxu0
      %1015 = vmatprep.mubr.f32.mxu0 0.0
      %1016 = vmatmul.mubr.f32.gmra.mrb[0].mxu0 %v468
      %v1017 = vpop.f32.mrb[0].mxu0
      %v1018 = vadd.f32 %v314, %v1017
      %v1019 = vpop.f32.mrb[0].mxu0
      %1020 = vmatprep.mubr.f32.mxu0 0.0
      %1021 = vmatmul.mubr.f32.gmra.mrb[0].mxu0 %v471
      %v1022 = vpop.f32.mrb[0].mxu0
      %v1023 = vadd.f32 %v314, %v1022
      %v1024 = vpop.f32.mrb[0].mxu0
      %1025 = vmatprep.mubr.f32.mxu0 0.0
      %1026 = vmatmul.mubr.f32.gmra.mrb[0].mxu0 %v474
      %v1027 = vpop.f32.mrb[0].mxu0
      %v1028 = vadd.f32 %v314, %v1027
      %v1029 = vpop.f32.mrb[0].mxu0
      %1030 = vmatprep.mubr.f32.mxu0 0.0
      %1031 = vmatmul.mubr.f32.gmra.mrb[0].mxu0 %v477
      %v1032 = vpop.f32.mrb[0].mxu0
      %v1033 = vadd.f32 %v314, %v1032
      %v1034 = vpop.f32.mrb[0].mxu0
      %1035 = vmatprep.mubr.f32.mxu0 0.0
      %1036 = vmatmul.mubr.f32.gmra.mrb[0].mxu0 %v480
      %v1037 = vpop.f32.mrb[0].mxu0
      %v1038 = vadd.f32 %v314, %v1037
      %v1039 = vpop.f32.mrb[0].mxu0
      %1040 = vmatprep.mubr.f32.mxu0 0.0
      %1041 = vmatmul.mubr.f32.gmra.mrb[0].mxu0 %v483
      %v1042 = vpop.f32.mrb[0].mxu0
      %v1043 = vadd.f32 %v314, %v1042
      %v1044 = vpop.f32.mrb[0].mxu0
      %1045 = vmatprep.mubr.f32.mxu0 0.0
      %1046 = vmatmul.mubr.f32.gmra.mrb[0].mxu0 %v486
      %v1047 = vpop.f32.mrb[0].mxu0
      %v1048 = vadd.f32 %v314, %v1047
      %v1049 = vpop.f32.mrb[0].mxu0
      %1050 = vmatprep.mubr.f32.mxu0 0.0
      %1051 = vmatmul.mubr.f32.gmra.mrb[0].mxu0 %v489
      %v1052 = vpop.f32.mrb[0].mxu0
      %v1053 = vadd.f32 %v314, %v1052
      %v1054 = vpop.f32.mrb[0].mxu0
      %1055 = vmatprep.mubr.f32.mxu0 0.0
      %1056 = vmatmul.mubr.f32.gmra.mrb[0].mxu0 %v492
      %v1057 = vpop.f32.mrb[0].mxu0
      %v1058 = vadd.f32 %v314, %v1057
      %v1059 = vpop.f32.mrb[0].mxu0
      %1060 = vmatprep.mubr.f32.mxu0 0.0
      %1061 = vmatmul.mubr.f32.gmra.mrb[0].mxu0 %v495
      %v1062 = vpop.f32.mrb[0].mxu0
      %v1063 = vadd.f32 %v314, %v1062
      %v1064 = vpop.f32.mrb[0].mxu0
      %1065 = vmatprep.mubr.f32.mxu0 0.0
      %1066 = vmatmul.mubr.f32.gmra.mrb[0].mxu0 %v498
      %v1067 = vpop.f32.mrb[0].mxu0
      %v1068 = vadd.f32 %v314, %v1067
      %v1069 = vpop.f32.mrb[0].mxu0
      %1070 = vmatprep.mubr.f32.mxu0 0.0
      %1071 = vmatmul.mubr.f32.gmra.mrb[0].mxu0 %v501
      %v1072 = vpop.f32.mrb[0].mxu0
      %v1073 = vadd.f32 %v314, %v1072
      %v1074 = vpop.f32.mrb[0].mxu0
      %1075 = vmatprep.mubr.f32.mxu0 0.0
      %1076 = vmatmul.mubr.f32.gmra.mrb[0].mxu0 %v504
      %v1077 = vpop.f32.mrb[0].mxu0
      %v1078 = vadd.f32 %v314, %v1077
      %v1079 = vpop.f32.mrb[0].mxu0
      %1080 = vmatprep.mubr.f32.mxu0 0.0
      %1081 = vmatmul.mubr.f32.gmra.mrb[0].mxu0 %v507
      %v1082 = vpop.f32.mrb[0].mxu0
      %v1083 = vadd.f32 %v314, %v1082
      %v1084 = vpop.f32.mrb[0].mxu0
      %1085 = vmatprep.mubr.f32.mxu0 0.0
      %1086 = vmatmul.mubr.f32.gmra.mrb[0].mxu0 %v510
      %v1087 = vpop.f32.mrb[0].mxu0
      %v1088 = vadd.f32 %v314, %v1087
      %v1089 = vpop.f32.mrb[0].mxu0
      %1090 = vmatprep.mubr.f32.mxu0 0.0
      %1091 = vmatmul.mubr.f32.gmra.mrb[0].mxu0 %v513
      %v1092 = vpop.f32.mrb[0].mxu0
      %v1093 = vadd.f32 %v314, %v1092
      %v1094 = vpop.f32.mrb[0].mxu0
      %1095 = vmatprep.mubr.f32.mxu0 0.0
      %1096 = vmatmul.mubr.f32.gmra.mrb[0].mxu0 %v516
      %v1097 = vpop.f32.mrb[0].mxu0
      %v1098 = vadd.f32 %v314, %v1097
      %v1099 = vpop.f32.mrb[0].mxu0
      %1100 = vmatprep.mubr.f32.mxu0 0.0
      %1101 = vmatmul.mubr.f32.gmra.mrb[0].mxu0 %v519
      %v1102 = vpop.f32.mrb[0].mxu0
      %v1103 = vadd.f32 %v314, %v1102
      %v1104 = vpop.f32.mrb[0].mxu0
      %1105 = vmatprep.mubr.f32.mxu0 0.0
      %1106 = vmatmul.mubr.f32.gmra.mrb[0].mxu0 %v522
      %v1107 = vpop.f32.mrb[0].mxu0
      %v1108 = vadd.f32 %v314, %v1107
      %v1109 = vpop.f32.mrb[0].mxu0
      %1110 = vmatprep.mubr.f32.mxu0 0.0
      %1111 = vmatmul.mubr.f32.gmra.mrb[0].mxu0 %v525
      %v1112 = vpop.f32.mrb[0].mxu0
      %v1113 = vadd.f32 %v314, %v1112
      %v1114 = vpop.f32.mrb[0].mxu0
      %1115 = vmatprep.mubr.f32.mxu0 0.0
      %1116 = vmatmul.mubr.f32.gmra.mrb[0].mxu0 %v528
      %v1117 = vpop.f32.mrb[0].mxu0
      %v1118 = vadd.f32 %v314, %v1117
      %v1119 = vpop.f32.mrb[0].mxu0
      %1120 = vmatprep.mubr.f32.mxu0 0.0
      %1121 = vmatmul.mubr.f32.gmra.mrb[0].mxu0 %v531
      %v1122 = vpop.f32.mrb[0].mxu0
      %v1123 = vadd.f32 %v314, %v1122
      %v1124 = vpop.f32.mrb[0].mxu0
      %1125 = vmatprep.mubr.f32.mxu0 0.0
      %1126 = vmatmul.mubr.f32.gmra.mrb[0].mxu0 %v534
      %v1127 = vpop.f32.mrb[0].mxu0
      %v1128 = vadd.f32 %v314, %v1127
      %v1129 = vpop.f32.mrb[0].mxu0
      %1130 = vmatprep.mubr.f32.mxu0 0.0
      %1131 = vmatmul.mubr.f32.gmra.mrb[0].mxu0 %v537
      %v1132 = vpop.f32.mrb[0].mxu0
      %v1133 = vadd.f32 %v314, %v1132
      %v1134 = vpop.f32.mrb[0].mxu0
      %1135 = vmatprep.mubr.f32.mxu0 0.0
      %1136 = vmatmul.mubr.f32.gmra.mrb[0].mxu0 %v540
      %v1137 = vpop.f32.mrb[0].mxu0
      %v1138 = vadd.f32 %v314, %v1137
      %v1139 = vpop.f32.mrb[0].mxu0
      %1140 = vmatprep.mubr.f32.mxu0 0.0
      %1141 = vmatmul.mubr.f32.gmra.mrb[0].mxu0 %v543
      %v1142 = vpop.f32.mrb[0].mxu0
      %v1143 = vadd.f32 %v314, %v1142
      %v1144 = vpop.f32.mrb[0].mxu0
      %1145 = vmatprep.mubr.f32.mxu0 0.0
      %1146 = vmatmul.mubr.f32.gmra.mrb[0].mxu0 %v546
      %v1147 = vpop.f32.mrb[0].mxu0
      %v1148 = vadd.f32 %v314, %v1147
      %v1149 = vpop.f32.mrb[0].mxu0
      %1150 = vmatprep.mubr.f32.mxu0 0.0
      %1151 = vmatmul.mubr.f32.gmra.mrb[0].mxu0 %v549
      %v1152 = vpop.f32.mrb[0].mxu0
      %v1153 = vadd.f32 %v314, %v1152
      %v1154 = vpop.f32.mrb[0].mxu0
      %1155 = vmatprep.mubr.f32.mxu0 0.0
      %1156 = vmatmul.mubr.f32.gmra.mrb[0].mxu0 %v552
      %v1157 = vpop.f32.mrb[0].mxu0
      %v1158 = vadd.f32 %v314, %v1157
      %v1159 = vpop.f32.mrb[0].mxu0
      %1160 = vmatprep.mubr.f32.mxu0 0.0
      %1161 = vmatmul.mubr.f32.gmra.mrb[0].mxu0 %v555
      %v1162 = vpop.f32.mrb[0].mxu0
      %v1163 = vadd.f32 %v314, %v1162
      %v1164 = vpop.f32.mrb[0].mxu0
      %1165 = vmatprep.mubr.f32.mxu0 0.0
      %1166 = vmatmul.mubr.f32.gmra.mrb[0].mxu0 %v558
      %v1167 = vpop.f32.mrb[0].mxu0
      %v1168 = vadd.f32 %v314, %v1167
      %v1169 = vpop.f32.mrb[0].mxu0
      %1170 = vmatprep.mubr.f32.mxu0 0.0
      %1171 = vmatmul.mubr.f32.gmra.mrb[0].mxu0 %v561
      %v1172 = vpop.f32.mrb[0].mxu0
      %v1173 = vadd.f32 %v314, %v1172
      %v1174 = vpop.f32.mrb[0].mxu0
      %1175 = vmatprep.mubr.f32.mxu0 0.0
      %1176 = vmatmul.mubr.f32.gmra.mrb[0].mxu0 %v564
      %v1177 = vpop.f32.mrb[0].mxu0
      %v1178 = vadd.f32 %v314, %v1177
      %v1179 = vpop.f32.mrb[0].mxu0
      %1180 = vmatprep.mubr.f32.mxu0 0.0
      %1181 = vmatmul.mubr.f32.gmra.mrb[0].mxu0 %v567
      %v1182 = vpop.f32.mrb[0].mxu0
      %v1183 = vadd.f32 %v314, %v1182
      %v1184 = vpop.f32.mrb[0].mxu0
      %1185 = vmatprep.mubr.f32.mxu0 0.0
      %1186 = vmatmul.mubr.f32.gmra.mrb[0].mxu0 %v570
      %v1187 = vpop.f32.mrb[0].mxu0
      %v1188 = vadd.f32 %v314, %v1187
      %v1189 = vpop.f32.mrb[0].mxu0
      %1190 = vmatprep.mubr.f32.mxu0 0.0
      %1191 = vmatmul.mubr.f32.gmra.mrb[0].mxu0 %v573
      %v1192 = vpop.f32.mrb[0].mxu0
      %v1193 = vadd.f32 %v314, %v1192
      %v1194 = vpop.f32.mrb[0].mxu0
      %1195 = vmatprep.mubr.f32.mxu0 0.0
      %1196 = vmatmul.mubr.f32.gmra.mrb[0].mxu0 %v576
      %v1197 = vpop.f32.mrb[0].mxu0
      %v1198 = vadd.f32 %v314, %v1197
      %v1199 = vpop.f32.mrb[0].mxu0
      %1200 = vmatprep.mubr.f32.mxu0 0.0
      %1201 = vmatmul.mubr.f32.gmra.mrb[0].mxu0 %v579
      %v1202 = vpop.f32.mrb[0].mxu0
      %v1203 = vadd.f32 %v314, %v1202
      %v1204 = vpop.f32.mrb[0].mxu0
      %1205 = vmatprep.mubr.f32.mxu0 0.0
      %1206 = vmatmul.mubr.f32.gmra.mrb[0].mxu0 %v582
      %v1207 = vpop.f32.mrb[0].mxu0
      %v1208 = vadd.f32 %v314, %v1207
      %v1209 = vpop.f32.mrb[0].mxu0
      %1210 = vmatprep.mubr.f32.mxu0 0.0
      %1211 = vmatmul.mubr.f32.gmra.mrb[0].mxu0 %v585
      %v1212 = vpop.f32.mrb[0].mxu0
      %v1213 = vadd.f32 %v314, %v1212
      %v1214 = vpop.f32.mrb[0].mxu0
      %1215 = vmatprep.mubr.f32.mxu0 0.0
      %1216 = vmatmul.mubr.f32.gmra.mrb[0].mxu0 %v588
      %v1217 = vpop.f32.mrb[0].mxu0
      %v1218 = vadd.f32 %v314, %v1217
      %v1219 = vpop.f32.mrb[0].mxu0
      %1220 = vmatprep.mubr.f32.mxu0 0.0
      %1221 = vmatmul.mubr.f32.gmra.mrb[0].mxu0 %v591
      %v1222 = vpop.f32.mrb[0].mxu0
      %v1223 = vadd.f32 %v314, %v1222
      %v1224 = vpop.f32.mrb[0].mxu0
      %1225 = vmatprep.mubr.f32.mxu0 0.0
      %1226 = vmatmul.mubr.f32.gmra.mrb[0].mxu0 %v594
      %v1227 = vpop.f32.mrb[0].mxu0
      %v1228 = vadd.f32 %v314, %v1227
      %v1229 = vpop.f32.mrb[0].mxu0
      %1230 = vmatprep.mubr.f32.mxu0 0.0
      %1231 = vmatmul.mubr.f32.gmra.mrb[0].mxu0 %v597
      %v1232 = vpop.f32.mrb[0].mxu0
      %v1233 = vadd.f32 %v314, %v1232
      %v1234 = vpop.f32.mrb[0].mxu0
      %1235 = vmatprep.mubr.f32.mxu0 0.0
      %1236 = vmatmul.mubr.f32.gmra.mrb[0].mxu0 %v600
      %v1237 = vpop.f32.mrb[0].mxu0
      %v1238 = vadd.f32 %v314, %v1237
      %v1239 = vpop.f32.mrb[0].mxu0
      %1240 = vmatprep.mubr.f32.mxu0 0.0
      %1241 = vmatmul.mubr.f32.gmra.mrb[0].mxu0 %v603
      %v1242 = vpop.f32.mrb[0].mxu0
      %v1243 = vadd.f32 %v314, %v1242
      %v1244 = vpop.f32.mrb[0].mxu0
      %1245 = vmatprep.mubr.f32.mxu0 0.0
      %1246 = vmatmul.mubr.f32.gmra.mrb[0].mxu0 %v606
      %v1247 = vpop.f32.mrb[0].mxu0
      %v1248 = vadd.f32 %v314, %v1247
      %v1249 = vpop.f32.mrb[0].mxu0
      %1250 = vmatprep.mubr.f32.mxu0 0.0
      %1251 = vmatmul.mubr.f32.gmra.mrb[0].mxu0 %v609
      %v1252 = vpop.f32.mrb[0].mxu0
      %v1253 = vadd.f32 %v314, %v1252
      %v1254 = vpop.f32.mrb[0].mxu0
      %1255 = vmatprep.mubr.f32.mxu0 0.0
      %1256 = vmatmul.mubr.f32.gmra.mrb[0].mxu0 %v612
      %v1257 = vpop.f32.mrb[0].mxu0
      %v1258 = vadd.f32 %v314, %v1257
      %v1259 = vpop.f32.mrb[0].mxu0
      %1260 = vmatprep.mubr.f32.mxu0 0.0
      %1261 = vmatmul.mubr.f32.gmra.mrb[0].mxu0 %v615
      %v1262 = vpop.f32.mrb[0].mxu0
      %v1263 = vadd.f32 %v314, %v1262
      %v1264 = vpop.f32.mrb[0].mxu0
      %1265 = vmatprep.mubr.f32.mxu0 0.0
      %1266 = vmatmul.mubr.f32.gmra.mrb[0].mxu0 %v618
      %v1267 = vpop.f32.mrb[0].mxu0
      %v1268 = vadd.f32 %v314, %v1267
      %v1269 = vpop.f32.mrb[0].mxu0
      %1270 = vmatprep.mubr.f32.mxu0 0.0
      %1271 = vmatmul.mubr.f32.gmra.mrb[0].mxu0 %v621
      %v1272 = vpop.f32.mrb[0].mxu0
      %v1273 = vadd.f32 %v314, %v1272
      %v1274 = vpop.f32.mrb[0].mxu0
      %1275 = vmatprep.mubr.f32.mxu0 0.0
      %1276 = vmatmul.mubr.f32.gmra.mrb[0].mxu0 %v624
      %v1277 = vpop.f32.mrb[0].mxu0
      %v1278 = vadd.f32 %v314, %v1277
      %v1279 = vpop.f32.mrb[0].mxu0
      %1280 = vmatprep.mubr.f32.mxu0 0.0
      %1281 = vmatmul.mubr.f32.gmra.mrb[0].mxu0 %v627
      %v1282 = vpop.f32.mrb[0].mxu0
      %v1283 = vadd.f32 %v314, %v1282
      %v1284 = vpop.f32.mrb[0].mxu0
      %1285 = vmatprep.mubr.f32.mxu0 0.0
      %1286 = vmatmul.mubr.f32.gmra.mrb[0].mxu0 %v630
      %v1287 = vpop.f32.mrb[0].mxu0
      %v1288 = vadd.f32 %v314, %v1287
      %v1289 = vpop.f32.mrb[0].mxu0
      %1290 = vmatprep.mubr.f32.mxu0 0.0
      %1291 = vmatmul.mubr.f32.gmra.mrb[0].mxu0 %v633
      %v1292 = vpop.f32.mrb[0].mxu0
      %v1293 = vadd.f32 %v314, %v1292
      %v1294 = vpop.f32.mrb[0].mxu0
      %1295 = vmatprep.mubr.f32.mxu0 0.0
      %1296 = vmatmul.mubr.f32.gmra.mrb[0].mxu0 %v636
      %v1297 = vpop.f32.mrb[0].mxu0
      %v1298 = vadd.f32 %v314, %v1297
      %v1299 = vpop.f32.mrb[0].mxu0
      %1300 = vmatprep.mubr.f32.mxu0 0.0
      %1301 = vmatmul.mubr.f32.gmra.mrb[0].mxu0 %v639
      %v1302 = vpop.f32.mrb[0].mxu0
      %v1303 = vadd.f32 %v314, %v1302
      %v1304 = vpop.f32.mrb[0].mxu0
      %1305 = vmatprep.mubr.f32.mxu0 0.0
      %1306 = vmatmul.mubr.f32.gmra.mrb[0].mxu0 %v642
      %v1307 = vpop.f32.mrb[0].mxu0
      %v1308 = vadd.f32 %v314, %v1307
      %v1309 = vpop.f32.mrb[0].mxu0
      %1310 = vmatprep.mubr.f32.mxu0 0.0
      %1311 = vmatmul.mubr.f32.gmra.mrb[0].mxu0 %v645
      %v1312 = vpop.f32.mrb[0].mxu0
      %v1313 = vadd.f32 %v314, %v1312
      %v1314 = vpop.f32.mrb[0].mxu0
      %1315 = vmatprep.mubr.f32.mxu0 0.0
      %1316 = vmatmul.mubr.f32.gmra.mrb[0].mxu0 %v648
      %v1317 = vpop.f32.mrb[0].mxu0
      %v1318 = vadd.f32 %v314, %v1317
      %v1319 = vpop.f32.mrb[0].mxu0
      %1320 = vmatprep.mubr.f32.mxu0 0.0
      %1321 = vmatmul.mubr.f32.gmra.mrb[0].mxu0 %v651
      %v1322 = vpop.f32.mrb[0].mxu0
      %v1323 = vadd.f32 %v314, %v1322
      %v1324 = vpop.f32.mrb[0].mxu0
      %1325 = vmatprep.mubr.f32.mxu0 0.0
      %1326 = vmatmul.mubr.f32.gmra.mrb[0].mxu0 %v654
      %v1327 = vpop.f32.mrb[0].mxu0
      %v1328 = vadd.f32 %v314, %v1327
      %v1329 = vpop.f32.mrb[0].mxu0
      %1330 = vmatprep.mubr.f32.mxu0 0.0
      %1331 = vmatmul.mubr.f32.gmra.mrb[0].mxu0 %v657
      %v1332 = vpop.f32.mrb[0].mxu0
      %v1333 = vadd.f32 %v314, %v1332
      %v1334 = vpop.f32.mrb[0].mxu0
      %1335 = vmatprep.mubr.f32.mxu0 0.0
      %1336 = vmatmul.mubr.f32.gmra.mrb[0].mxu0 %v660
      %v1337 = vpop.f32.mrb[0].mxu0
      %v1338 = vadd.f32 %v314, %v1337
      %v1339 = vpop.f32.mrb[0].mxu0
      %1340 = vmatprep.mubr.f32.mxu0 0.0
      %1341 = vmatmul.mubr.f32.gmra.mrb[0].mxu0 %v663
      %v1342 = vpop.f32.mrb[0].mxu0
      %v1343 = vadd.f32 %v314, %v1342
      %v1344 = vpop.f32.mrb[0].mxu0
      %1345 = vmatprep.mubr.f32.mxu0 0.0
      %1346 = vmatmul.mubr.f32.gmra.mrb[0].mxu0 %v666
      %v1347 = vpop.f32.mrb[0].mxu0
      %v1348 = vadd.f32 %v314, %v1347
      %v1349 = vpop.f32.mrb[0].mxu0
      %1350 = vmatprep.mubr.f32.mxu0 0.0
      %1351 = vmatmul.mubr.f32.gmra.mrb[0].mxu0 %v669
      %v1352 = vpop.f32.mrb[0].mxu0
      %v1353 = vadd.f32 %v314, %v1352
      %v1354 = vpop.f32.mrb[0].mxu0
      %1355 = vmatprep.mubr.f32.mxu0 0.0
      %1356 = vmatmul.mubr.f32.gmra.mrb[0].mxu0 %v672
      %v1357 = vpop.f32.mrb[0].mxu0
      %v1358 = vadd.f32 %v314, %v1357
      %v1359 = vpop.f32.mrb[0].mxu0
      %1360 = vmatprep.mubr.f32.mxu0 0.0
      %1361 = vmatmul.mubr.f32.gmra.mrb[0].mxu0 %v675
      %v1362 = vpop.f32.mrb[0].mxu0
      %v1363 = vadd.f32 %v314, %v1362
      %v1364 = vpop.f32.mrb[0].mxu0
      %1365 = vmatprep.mubr.f32.mxu0 0.0
      %1366 = vmatmul.mubr.f32.gmra.mrb[0].mxu0 %v678
      %v1367 = vpop.f32.mrb[0].mxu0
      %v1368 = vadd.f32 %v314, %v1367
      %v1369 = vpop.f32.mrb[0].mxu0
      %1370 = vmatprep.mubr.f32.mxu0 0.0
      %1371 = vmatmul.mubr.f32.gmra.mrb[0].mxu0 %v681
      %v1372 = vpop.f32.mrb[0].mxu0
      %v1373 = vadd.f32 %v314, %v1372
      %v1374 = vpop.f32.mrb[0].mxu0
      %1375 = vmatprep.mubr.f32.mxu0 0.0
      %1376 = vmatmul.mubr.f32.gmra.mrb[0].mxu0 %v684
      %v1377 = vpop.f32.mrb[0].mxu0
      %v1378 = vadd.f32 %v314, %v1377
      %v1379 = vpop.f32.mrb[0].mxu0
      %1380 = vmatprep.mubr.f32.mxu0 0.0
      %1381 = vmatmul.mubr.f32.gmra.mrb[0].mxu0 %v687
      %v1382 = vpop.f32.mrb[0].mxu0
      %v1383 = vadd.f32 %v314, %v1382
      %v1384 = vpop.f32.mrb[0].mxu0
      %1385 = vmatprep.mubr.f32.mxu0 0.0
      %1386 = vmatmul.mubr.f32.gmra.mrb[0].mxu0 %v690
      %v1387 = vpop.f32.mrb[0].mxu0
      %v1388 = vadd.f32 %v314, %v1387
      %v1389 = vpop.f32.mrb[0].mxu0
      %1390 = vmatprep.mubr.f32.mxu0 0.0
      %1391 = vmatmul.mubr.f32.gmra.mrb[0].mxu0 %v693
      %v1392 = vpop.f32.mrb[0].mxu0
      %v1393 = vadd.f32 %v314, %v1392
      %v1394 = vpop.f32.mrb[0].mxu0
      %1395 = vmatprep.mubr.f32.mxu0 0.0
      %1396 = vmatmul.mubr.f32.gmra.mrb[0].mxu0 %v696
      %v1397 = vpop.f32.mrb[0].mxu0
      %v1398 = vadd.f32 %v314, %v1397
      %v1399 = vpop.f32.mrb[0].mxu0
      %1400 = vmatprep.mubr.f32.mxu0 0.0
      %1401 = vmatmul.mubr.f32.gmra.mrb[0].mxu0 %v699
      %v1402 = vpop.f32.mrb[0].mxu0
      %v1403 = vadd.f32 %v314, %v1402
      %v1404 = vpop.f32.mrb[0].mxu0
      %1405 = vdwg.mxu0
      %vm1406 = vcmask 64512
      %v1407 = vsel %vm1406, %v768, -inf
      %1408 = vmax.xlane.f32.xlu0 %v1407
      %v1409 = vpop.xlane.xlu0 %1408
      %v1410 = vsel %vm1406, %v773, -inf
      %1411 = vmax.xlane.f32.xlu0 %v1410
      %v1412 = vpop.xlane.xlu0 %1411
      %v1413 = vsel %vm1406, %v778, -inf
      %1414 = vmax.xlane.f32.xlu0 %v1413
      %v1415 = vpop.xlane.xlu0 %1414
      %v1416 = vsel %vm1406, %v783, -inf
      %1417 = vmax.xlane.f32.xlu0 %v1416
      %v1418 = vpop.xlane.xlu0 %1417
      %v1419 = vsel %vm1406, %v788, -inf
      %1420 = vmax.xlane.f32.xlu0 %v1419
      %v1421 = vpop.xlane.xlu0 %1420
      %v1422 = vsel %vm1406, %v793, -inf
      %1423 = vmax.xlane.f32.xlu0 %v1422
      %v1424 = vpop.xlane.xlu0 %1423
      %v1425 = vsel %vm1406, %v798, -inf
      %1426 = vmax.xlane.f32.xlu0 %v1425
      %v1427 = vpop.xlane.xlu0 %1426
      %v1428 = vsel %vm1406, %v803, -inf
      %1429 = vmax.xlane.f32.xlu0 %v1428
      %v1430 = vpop.xlane.xlu0 %1429
      %v1431 = vsel %vm1406, %v808, -inf
      %1432 = vmax.xlane.f32.xlu0 %v1431
      %v1433 = vpop.xlane.xlu0 %1432
      %v1434 = vsel %vm1406, %v813, -inf
      %1435 = vmax.xlane.f32.xlu0 %v1434
      %v1436 = vpop.xlane.xlu0 %1435
      %v1437 = vsel %vm1406, %v818, -inf
      %1438 = vmax.xlane.f32.xlu0 %v1437
      %v1439 = vpop.xlane.xlu0 %1438
      %v1440 = vsel %vm1406, %v823, -inf
      %1441 = vmax.xlane.f32.xlu0 %v1440
      %v1442 = vpop.xlane.xlu0 %1441
      %v1443 = vsel %vm1406, %v828, -inf
      %1444 = vmax.xlane.f32.xlu0 %v1443
      %v1445 = vpop.xlane.xlu0 %1444
      %v1446 = vsel %vm1406, %v833, -inf
      %1447 = vmax.xlane.f32.xlu0 %v1446
      %v1448 = vpop.xlane.xlu0 %1447
      %v1449 = vsel %vm1406, %v838, -inf
      %1450 = vmax.xlane.f32.xlu0 %v1449
      %v1451 = vpop.xlane.xlu0 %1450
      %v1452 = vsel %vm1406, %v843, -inf
      %1453 = vmax.xlane.f32.xlu0 %v1452
      %v1454 = vpop.xlane.xlu0 %1453
      %v1455 = vsel %vm1406, %v848, -inf
      %1456 = vmax.xlane.f32.xlu0 %v1455
      %v1457 = vpop.xlane.xlu0 %1456
      %v1458 = vsel %vm1406, %v853, -inf
      %1459 = vmax.xlane.f32.xlu0 %v1458
      %v1460 = vpop.xlane.xlu0 %1459
      %v1461 = vsel %vm1406, %v858, -inf
      %1462 = vmax.xlane.f32.xlu0 %v1461
      %v1463 = vpop.xlane.xlu0 %1462
      %v1464 = vsel %vm1406, %v863, -inf
      %1465 = vmax.xlane.f32.xlu0 %v1464
      %v1466 = vpop.xlane.xlu0 %1465
      %v1467 = vsel %vm1406, %v868, -inf
      %1468 = vmax.xlane.f32.xlu0 %v1467
      %v1469 = vpop.xlane.xlu0 %1468
      %v1470 = vsel %vm1406, %v873, -inf
      %1471 = vmax.xlane.f32.xlu0 %v1470
      %v1472 = vpop.xlane.xlu0 %1471
      %v1473 = vsel %vm1406, %v878, -inf
      %1474 = vmax.xlane.f32.xlu0 %v1473
      %v1475 = vpop.xlane.xlu0 %1474
      %v1476 = vsel %vm1406, %v883, -inf
      %1477 = vmax.xlane.f32.xlu0 %v1476
      %v1478 = vpop.xlane.xlu0 %1477
      %v1479 = vsel %vm1406, %v888, -inf
      %1480 = vmax.xlane.f32.xlu0 %v1479
      %v1481 = vpop.xlane.xlu0 %1480
      %v1482 = vsel %vm1406, %v893, -inf
      %1483 = vmax.xlane.f32.xlu0 %v1482
      %v1484 = vpop.xlane.xlu0 %1483
      %v1485 = vsel %vm1406, %v898, -inf
      %1486 = vmax.xlane.f32.xlu0 %v1485
      %v1487 = vpop.xlane.xlu0 %1486
      %v1488 = vsel %vm1406, %v903, -inf
      %1489 = vmax.xlane.f32.xlu0 %v1488
      %v1490 = vpop.xlane.xlu0 %1489
      %v1491 = vsel %vm1406, %v908, -inf
      %1492 = vmax.xlane.f32.xlu0 %v1491
      %v1493 = vpop.xlane.xlu0 %1492
      %v1494 = vsel %vm1406, %v913, -inf
      %1495 = vmax.xlane.f32.xlu0 %v1494
      %v1496 = vpop.xlane.xlu0 %1495
      %v1497 = vsel %vm1406, %v918, -inf
      %1498 = vmax.xlane.f32.xlu0 %v1497
      %v1499 = vpop.xlane.xlu0 %1498
      %v1500 = vsel %vm1406, %v923, -inf
      %1501 = vmax.xlane.f32.xlu0 %v1500
      %v1502 = vpop.xlane.xlu0 %1501
      %v1503 = vsel %vm1406, %v928, -inf
      %1504 = vmax.xlane.f32.xlu0 %v1503
      %v1505 = vpop.xlane.xlu0 %1504
      %v1506 = vsel %vm1406, %v933, -inf
      %1507 = vmax.xlane.f32.xlu0 %v1506
      %v1508 = vpop.xlane.xlu0 %1507
      %v1509 = vsel %vm1406, %v938, -inf
      %1510 = vmax.xlane.f32.xlu0 %v1509
      %v1511 = vpop.xlane.xlu0 %1510
      %v1512 = vsel %vm1406, %v943, -inf
      %1513 = vmax.xlane.f32.xlu0 %v1512
      %v1514 = vpop.xlane.xlu0 %1513
      %v1515 = vsel %vm1406, %v948, -inf
      %1516 = vmax.xlane.f32.xlu0 %v1515
      %v1517 = vpop.xlane.xlu0 %1516
      %v1518 = vsel %vm1406, %v953, -inf
      %1519 = vmax.xlane.f32.xlu0 %v1518
      %v1520 = vpop.xlane.xlu0 %1519
      %v1521 = vsel %vm1406, %v958, -inf
      %1522 = vmax.xlane.f32.xlu0 %v1521
      %v1523 = vpop.xlane.xlu0 %1522
      %v1524 = vsel %vm1406, %v963, -inf
      %1525 = vmax.xlane.f32.xlu0 %v1524
      %v1526 = vpop.xlane.xlu0 %1525
      %v1527 = vsel %vm1406, %v968, -inf
      %1528 = vmax.xlane.f32.xlu0 %v1527
      %v1529 = vpop.xlane.xlu0 %1528
      %v1530 = vsel %vm1406, %v973, -inf
      %1531 = vmax.xlane.f32.xlu0 %v1530
      %v1532 = vpop.xlane.xlu0 %1531
      %v1533 = vsel %vm1406, %v978, -inf
      %1534 = vmax.xlane.f32.xlu0 %v1533
      %v1535 = vpop.xlane.xlu0 %1534
      %v1536 = vsel %vm1406, %v983, -inf
      %1537 = vmax.xlane.f32.xlu0 %v1536
      %v1538 = vpop.xlane.xlu0 %1537
      %v1539 = vsel %vm1406, %v988, -inf
      %1540 = vmax.xlane.f32.xlu0 %v1539
      %v1541 = vpop.xlane.xlu0 %1540
      %v1542 = vsel %vm1406, %v993, -inf
      %1543 = vmax.xlane.f32.xlu0 %v1542
      %v1544 = vpop.xlane.xlu0 %1543
      %v1545 = vsel %vm1406, %v998, -inf
      %1546 = vmax.xlane.f32.xlu0 %v1545
      %v1547 = vpop.xlane.xlu0 %1546
      %v1548 = vsel %vm1406, %v1003, -inf
      %1549 = vmax.xlane.f32.xlu0 %v1548
      %v1550 = vpop.xlane.xlu0 %1549
      %v1551 = vsel %vm1406, %v1008, -inf
      %1552 = vmax.xlane.f32.xlu0 %v1551
      %v1553 = vpop.xlane.xlu0 %1552
      %v1554 = vsel %vm1406, %v1013, -inf
      %1555 = vmax.xlane.f32.xlu0 %v1554
      %v1556 = vpop.xlane.xlu0 %1555
      %v1557 = vsel %vm1406, %v1018, -inf
      %1558 = vmax.xlane.f32.xlu0 %v1557
      %v1559 = vpop.xlane.xlu0 %1558
      %v1560 = vsel %vm1406, %v1023, -inf
      %1561 = vmax.xlane.f32.xlu0 %v1560
      %v1562 = vpop.xlane.xlu0 %1561
      %v1563 = vsel %vm1406, %v1028, -inf
      %1564 = vmax.xlane.f32.xlu0 %v1563
      %v1565 = vpop.xlane.xlu0 %1564
      %v1566 = vsel %vm1406, %v1033, -inf
      %1567 = vmax.xlane.f32.xlu0 %v1566
      %v1568 = vpop.xlane.xlu0 %1567
      %v1569 = vsel %vm1406, %v1038, -inf
      %1570 = vmax.xlane.f32.xlu0 %v1569
      %v1571 = vpop.xlane.xlu0 %1570
      %v1572 = vsel %vm1406, %v1043, -inf
      %1573 = vmax.xlane.f32.xlu0 %v1572
      %v1574 = vpop.xlane.xlu0 %1573
      %v1575 = vsel %vm1406, %v1048, -inf
      %1576 = vmax.xlane.f32.xlu0 %v1575
      %v1577 = vpop.xlane.xlu0 %1576
      %v1578 = vsel %vm1406, %v1053, -inf
      %1579 = vmax.xlane.f32.xlu0 %v1578
      %v1580 = vpop.xlane.xlu0 %1579
      %v1581 = vsel %vm1406, %v1058, -inf
      %1582 = vmax.xlane.f32.xlu0 %v1581
      %v1583 = vpop.xlane.xlu0 %1582
      %v1584 = vsel %vm1406, %v1063, -inf
      %1585 = vmax.xlane.f32.xlu0 %v1584
      %v1586 = vpop.xlane.xlu0 %1585
      %v1587 = vsel %vm1406, %v1068, -inf
      %1588 = vmax.xlane.f32.xlu0 %v1587
      %v1589 = vpop.xlane.xlu0 %1588
      %v1590 = vsel %vm1406, %v1073, -inf
      %1591 = vmax.xlane.f32.xlu0 %v1590
      %v1592 = vpop.xlane.xlu0 %1591
      %v1593 = vsel %vm1406, %v1078, -inf
      %1594 = vmax.xlane.f32.xlu0 %v1593
      %v1595 = vpop.xlane.xlu0 %1594
      %v1596 = vsel %vm1406, %v1083, -inf
      %1597 = vmax.xlane.f32.xlu0 %v1596
      %v1598 = vpop.xlane.xlu0 %1597
      %v1599 = vsel %vm1406, %v1088, -inf
      %1600 = vmax.xlane.f32.xlu0 %v1599
      %v1601 = vpop.xlane.xlu0 %1600
      %v1602 = vsel %vm1406, %v1093, -inf
      %1603 = vmax.xlane.f32.xlu0 %v1602
      %v1604 = vpop.xlane.xlu0 %1603
      %v1605 = vsel %vm1406, %v1098, -inf
      %1606 = vmax.xlane.f32.xlu0 %v1605
      %v1607 = vpop.xlane.xlu0 %1606
      %v1608 = vsel %vm1406, %v1103, -inf
      %1609 = vmax.xlane.f32.xlu0 %v1608
      %v1610 = vpop.xlane.xlu0 %1609
      %v1611 = vsel %vm1406, %v1108, -inf
      %1612 = vmax.xlane.f32.xlu0 %v1611
      %v1613 = vpop.xlane.xlu0 %1612
      %v1614 = vsel %vm1406, %v1113, -inf
      %1615 = vmax.xlane.f32.xlu0 %v1614
      %v1616 = vpop.xlane.xlu0 %1615
      %v1617 = vsel %vm1406, %v1118, -inf
      %1618 = vmax.xlane.f32.xlu0 %v1617
      %v1619 = vpop.xlane.xlu0 %1618
      %v1620 = vsel %vm1406, %v1123, -inf
      %1621 = vmax.xlane.f32.xlu0 %v1620
      %v1622 = vpop.xlane.xlu0 %1621
      %v1623 = vsel %vm1406, %v1128, -inf
      %1624 = vmax.xlane.f32.xlu0 %v1623
      %v1625 = vpop.xlane.xlu0 %1624
      %v1626 = vsel %vm1406, %v1133, -inf
      %1627 = vmax.xlane.f32.xlu0 %v1626
      %v1628 = vpop.xlane.xlu0 %1627
      %v1629 = vsel %vm1406, %v1138, -inf
      %1630 = vmax.xlane.f32.xlu0 %v1629
      %v1631 = vpop.xlane.xlu0 %1630
      %v1632 = vsel %vm1406, %v1143, -inf
      %1633 = vmax.xlane.f32.xlu0 %v1632
      %v1634 = vpop.xlane.xlu0 %1633
      %v1635 = vsel %vm1406, %v1148, -inf
      %1636 = vmax.xlane.f32.xlu0 %v1635
      %v1637 = vpop.xlane.xlu0 %1636
      %v1638 = vsel %vm1406, %v1153, -inf
      %1639 = vmax.xlane.f32.xlu0 %v1638
      %v1640 = vpop.xlane.xlu0 %1639
      %v1641 = vsel %vm1406, %v1158, -inf
      %1642 = vmax.xlane.f32.xlu0 %v1641
      %v1643 = vpop.xlane.xlu0 %1642
      %v1644 = vsel %vm1406, %v1163, -inf
      %1645 = vmax.xlane.f32.xlu0 %v1644
      %v1646 = vpop.xlane.xlu0 %1645
      %v1647 = vsel %vm1406, %v1168, -inf
      %1648 = vmax.xlane.f32.xlu0 %v1647
      %v1649 = vpop.xlane.xlu0 %1648
      %v1650 = vsel %vm1406, %v1173, -inf
      %1651 = vmax.xlane.f32.xlu0 %v1650
      %v1652 = vpop.xlane.xlu0 %1651
      %v1653 = vsel %vm1406, %v1178, -inf
      %1654 = vmax.xlane.f32.xlu0 %v1653
      %v1655 = vpop.xlane.xlu0 %1654
      %v1656 = vsel %vm1406, %v1183, -inf
      %1657 = vmax.xlane.f32.xlu0 %v1656
      %v1658 = vpop.xlane.xlu0 %1657
      %v1659 = vsel %vm1406, %v1188, -inf
      %1660 = vmax.xlane.f32.xlu0 %v1659
      %v1661 = vpop.xlane.xlu0 %1660
      %v1662 = vsel %vm1406, %v1193, -inf
      %1663 = vmax.xlane.f32.xlu0 %v1662
      %v1664 = vpop.xlane.xlu0 %1663
      %v1665 = vsel %vm1406, %v1198, -inf
      %1666 = vmax.xlane.f32.xlu0 %v1665
      %v1667 = vpop.xlane.xlu0 %1666
      %v1668 = vsel %vm1406, %v1203, -inf
      %1669 = vmax.xlane.f32.xlu0 %v1668
      %v1670 = vpop.xlane.xlu0 %1669
      %v1671 = vsel %vm1406, %v1208, -inf
      %1672 = vmax.xlane.f32.xlu0 %v1671
      %v1673 = vpop.xlane.xlu0 %1672
      %v1674 = vsel %vm1406, %v1213, -inf
      %1675 = vmax.xlane.f32.xlu0 %v1674
      %v1676 = vpop.xlane.xlu0 %1675
      %v1677 = vsel %vm1406, %v1218, -inf
      %1678 = vmax.xlane.f32.xlu0 %v1677
      %v1679 = vpop.xlane.xlu0 %1678
      %v1680 = vsel %vm1406, %v1223, -inf
      %1681 = vmax.xlane.f32.xlu0 %v1680
      %v1682 = vpop.xlane.xlu0 %1681
      %v1683 = vsel %vm1406, %v1228, -inf
      %1684 = vmax.xlane.f32.xlu0 %v1683
      %v1685 = vpop.xlane.xlu0 %1684
      %v1686 = vsel %vm1406, %v1233, -inf
      %1687 = vmax.xlane.f32.xlu0 %v1686
      %v1688 = vpop.xlane.xlu0 %1687
      %v1689 = vsel %vm1406, %v1238, -inf
      %1690 = vmax.xlane.f32.xlu0 %v1689
      %v1691 = vpop.xlane.xlu0 %1690
      %v1692 = vsel %vm1406, %v1243, -inf
      %1693 = vmax.xlane.f32.xlu0 %v1692
      %v1694 = vpop.xlane.xlu0 %1693
      %v1695 = vsel %vm1406, %v1248, -inf
      %1696 = vmax.xlane.f32.xlu0 %v1695
      %v1697 = vpop.xlane.xlu0 %1696
      %v1698 = vsel %vm1406, %v1253, -inf
      %1699 = vmax.xlane.f32.xlu0 %v1698
      %v1700 = vpop.xlane.xlu0 %1699
      %v1701 = vsel %vm1406, %v1258, -inf
      %1702 = vmax.xlane.f32.xlu0 %v1701
      %v1703 = vpop.xlane.xlu0 %1702
      %v1704 = vsel %vm1406, %v1263, -inf
      %1705 = vmax.xlane.f32.xlu0 %v1704
      %v1706 = vpop.xlane.xlu0 %1705
      %v1707 = vsel %vm1406, %v1268, -inf
      %1708 = vmax.xlane.f32.xlu0 %v1707
      %v1709 = vpop.xlane.xlu0 %1708
      %v1710 = vsel %vm1406, %v1273, -inf
      %1711 = vmax.xlane.f32.xlu0 %v1710
      %v1712 = vpop.xlane.xlu0 %1711
      %v1713 = vsel %vm1406, %v1278, -inf
      %1714 = vmax.xlane.f32.xlu0 %v1713
      %v1715 = vpop.xlane.xlu0 %1714
      %v1716 = vsel %vm1406, %v1283, -inf
      %1717 = vmax.xlane.f32.xlu0 %v1716
      %v1718 = vpop.xlane.xlu0 %1717
      %v1719 = vsel %vm1406, %v1288, -inf
      %1720 = vmax.xlane.f32.xlu0 %v1719
      %v1721 = vpop.xlane.xlu0 %1720
      %v1722 = vsel %vm1406, %v1293, -inf
      %1723 = vmax.xlane.f32.xlu0 %v1722
      %v1724 = vpop.xlane.xlu0 %1723
      %v1725 = vsel %vm1406, %v1298, -inf
      %1726 = vmax.xlane.f32.xlu0 %v1725
      %v1727 = vpop.xlane.xlu0 %1726
      %v1728 = vsel %vm1406, %v1303, -inf
      %1729 = vmax.xlane.f32.xlu0 %v1728
      %v1730 = vpop.xlane.xlu0 %1729
      %v1731 = vsel %vm1406, %v1308, -inf
      %1732 = vmax.xlane.f32.xlu0 %v1731
      %v1733 = vpop.xlane.xlu0 %1732
      %v1734 = vsel %vm1406, %v1313, -inf
      %1735 = vmax.xlane.f32.xlu0 %v1734
      %v1736 = vpop.xlane.xlu0 %1735
      %v1737 = vsel %vm1406, %v1318, -inf
      %1738 = vmax.xlane.f32.xlu0 %v1737
      %v1739 = vpop.xlane.xlu0 %1738
      %v1740 = vsel %vm1406, %v1323, -inf
      %1741 = vmax.xlane.f32.xlu0 %v1740
      %v1742 = vpop.xlane.xlu0 %1741
      %v1743 = vsel %vm1406, %v1328, -inf
      %1744 = vmax.xlane.f32.xlu0 %v1743
      %v1745 = vpop.xlane.xlu0 %1744
      %v1746 = vsel %vm1406, %v1333, -inf
      %1747 = vmax.xlane.f32.xlu0 %v1746
      %v1748 = vpop.xlane.xlu0 %1747
      %v1749 = vsel %vm1406, %v1338, -inf
      %1750 = vmax.xlane.f32.xlu0 %v1749
      %v1751 = vpop.xlane.xlu0 %1750
      %v1752 = vsel %vm1406, %v1343, -inf
      %1753 = vmax.xlane.f32.xlu0 %v1752
      %v1754 = vpop.xlane.xlu0 %1753
      %v1755 = vsel %vm1406, %v1348, -inf
      %1756 = vmax.xlane.f32.xlu0 %v1755
      %v1757 = vpop.xlane.xlu0 %1756
      %v1758 = vsel %vm1406, %v1353, -inf
      %1759 = vmax.xlane.f32.xlu0 %v1758
      %v1760 = vpop.xlane.xlu0 %1759
      %v1761 = vsel %vm1406, %v1358, -inf
      %1762 = vmax.xlane.f32.xlu0 %v1761
      %v1763 = vpop.xlane.xlu0 %1762
      %v1764 = vsel %vm1406, %v1363, -inf
      %1765 = vmax.xlane.f32.xlu0 %v1764
      %v1766 = vpop.xlane.xlu0 %1765
      %v1767 = vsel %vm1406, %v1368, -inf
      %1768 = vmax.xlane.f32.xlu0 %v1767
      %v1769 = vpop.xlane.xlu0 %1768
      %v1770 = vsel %vm1406, %v1373, -inf
      %1771 = vmax.xlane.f32.xlu0 %v1770
      %v1772 = vpop.xlane.xlu0 %1771
      %v1773 = vsel %vm1406, %v1378, -inf
      %1774 = vmax.xlane.f32.xlu0 %v1773
      %v1775 = vpop.xlane.xlu0 %1774
      %v1776 = vsel %vm1406, %v1383, -inf
      %1777 = vmax.xlane.f32.xlu0 %v1776
      %v1778 = vpop.xlane.xlu0 %1777
      %v1779 = vsel %vm1406, %v1388, -inf
      %1780 = vmax.xlane.f32.xlu0 %v1779
      %v1781 = vpop.xlane.xlu0 %1780
      %v1782 = vsel %vm1406, %v1393, -inf
      %1783 = vmax.xlane.f32.xlu0 %v1782
      %v1784 = vpop.xlane.xlu0 %1783
      %v1785 = vsel %vm1406, %v1398, -inf
      %1786 = vmax.xlane.f32.xlu0 %v1785
      %v1787 = vpop.xlane.xlu0 %1786
      %v1788 = vsel %vm1406, %v1403, -inf
      %1789 = vmax.xlane.f32.xlu0 %v1788
      %v1790 = vpop.xlane.xlu0 %1789
      %v1791 = vsub.f32 %v768, %v1409
      %v1792 = vsub.f32 %v773, %v1412
      %v1793 = vsub.f32 %v778, %v1415
      %v1794 = vsub.f32 %v783, %v1418
      %v1795 = vsub.f32 %v788, %v1421
      %v1796 = vsub.f32 %v793, %v1424
      %v1797 = vsub.f32 %v798, %v1427
      %v1798 = vsub.f32 %v803, %v1430
      %v1799 = vsub.f32 %v808, %v1433
      %v1800 = vsub.f32 %v813, %v1436
      %v1801 = vsub.f32 %v818, %v1439
      %v1802 = vsub.f32 %v823, %v1442
      %v1803 = vsub.f32 %v828, %v1445
      %v1804 = vsub.f32 %v833, %v1448
      %v1805 = vsub.f32 %v838, %v1451
      %v1806 = vsub.f32 %v843, %v1454
      %v1807 = vsub.f32 %v848, %v1457
      %v1808 = vsub.f32 %v853, %v1460
      %v1809 = vsub.f32 %v858, %v1463
      %v1810 = vsub.f32 %v863, %v1466
      %v1811 = vsub.f32 %v868, %v1469
      %v1812 = vsub.f32 %v873, %v1472
      %v1813 = vsub.f32 %v878, %v1475
      %v1814 = vsub.f32 %v883, %v1478
      %v1815 = vsub.f32 %v888, %v1481
      %v1816 = vsub.f32 %v893, %v1484
      %v1817 = vsub.f32 %v898, %v1487
      %v1818 = vsub.f32 %v903, %v1490
      %v1819 = vsub.f32 %v908, %v1493
      %v1820 = vsub.f32 %v913, %v1496
      %v1821 = vsub.f32 %v918, %v1499
      %v1822 = vsub.f32 %v923, %v1502
      %v1823 = vsub.f32 %v928, %v1505
      %v1824 = vsub.f32 %v933, %v1508
      %v1825 = vsub.f32 %v938, %v1511
      %v1826 = vsub.f32 %v943, %v1514
      %v1827 = vsub.f32 %v948, %v1517
      %v1828 = vsub.f32 %v953, %v1520
      %v1829 = vsub.f32 %v958, %v1523
      %v1830 = vsub.f32 %v963, %v1526
      %v1831 = vsub.f32 %v968, %v1529
      %v1832 = vsub.f32 %v973, %v1532
      %v1833 = vsub.f32 %v978, %v1535
      %v1834 = vsub.f32 %v983, %v1538
      %v1835 = vsub.f32 %v988, %v1541
      %v1836 = vsub.f32 %v993, %v1544
      %v1837 = vsub.f32 %v998, %v1547
      %v1838 = vsub.f32 %v1003, %v1550
      %v1839 = vsub.f32 %v1008, %v1553
      %v1840 = vsub.f32 %v1013, %v1556
      %v1841 = vsub.f32 %v1018, %v1559
      %v1842 = vsub.f32 %v1023, %v1562
      %v1843 = vsub.f32 %v1028, %v1565
      %v1844 = vsub.f32 %v1033, %v1568
      %v1845 = vsub.f32 %v1038, %v1571
      %v1846 = vsub.f32 %v1043, %v1574
      %v1847 = vsub.f32 %v1048, %v1577
      %v1848 = vsub.f32 %v1053, %v1580
      %v1849 = vsub.f32 %v1058, %v1583
      %v1850 = vsub.f32 %v1063, %v1586
      %v1851 = vsub.f32 %v1068, %v1589
      %v1852 = vsub.f32 %v1073, %v1592
      %v1853 = vsub.f32 %v1078, %v1595
      %v1854 = vsub.f32 %v1083, %v1598
      %v1855 = vsub.f32 %v1088, %v1601
      %v1856 = vsub.f32 %v1093, %v1604
      %v1857 = vsub.f32 %v1098, %v1607
      %v1858 = vsub.f32 %v1103, %v1610
      %v1859 = vsub.f32 %v1108, %v1613
      %v1860 = vsub.f32 %v1113, %v1616
      %v1861 = vsub.f32 %v1118, %v1619
      %v1862 = vsub.f32 %v1123, %v1622
      %v1863 = vsub.f32 %v1128, %v1625
      %v1864 = vsub.f32 %v1133, %v1628
      %v1865 = vsub.f32 %v1138, %v1631
      %v1866 = vsub.f32 %v1143, %v1634
      %v1867 = vsub.f32 %v1148, %v1637
      %v1868 = vsub.f32 %v1153, %v1640
      %v1869 = vsub.f32 %v1158, %v1643
      %v1870 = vsub.f32 %v1163, %v1646
      %v1871 = vsub.f32 %v1168, %v1649
      %v1872 = vsub.f32 %v1173, %v1652
      %v1873 = vsub.f32 %v1178, %v1655
      %v1874 = vsub.f32 %v1183, %v1658
      %v1875 = vsub.f32 %v1188, %v1661
      %v1876 = vsub.f32 %v1193, %v1664
      %v1877 = vsub.f32 %v1198, %v1667
      %v1878 = vsub.f32 %v1203, %v1670
      %v1879 = vsub.f32 %v1208, %v1673
      %v1880 = vsub.f32 %v1213, %v1676
      %v1881 = vsub.f32 %v1218, %v1679
      %v1882 = vsub.f32 %v1223, %v1682
      %v1883 = vsub.f32 %v1228, %v1685
      %v1884 = vsub.f32 %v1233, %v1688
      %v1885 = vsub.f32 %v1238, %v1691
      %v1886 = vsub.f32 %v1243, %v1694
      %v1887 = vsub.f32 %v1248, %v1697
      %v1888 = vsub.f32 %v1253, %v1700
      %v1889 = vsub.f32 %v1258, %v1703
      %v1890 = vsub.f32 %v1263, %v1706
      %v1891 = vsub.f32 %v1268, %v1709
      %v1892 = vsub.f32 %v1273, %v1712
      %v1893 = vsub.f32 %v1278, %v1715
      %v1894 = vsub.f32 %v1283, %v1718
      %v1895 = vsub.f32 %v1288, %v1721
      %v1896 = vsub.f32 %v1293, %v1724
      %v1897 = vsub.f32 %v1298, %v1727
      %v1898 = vsub.f32 %v1303, %v1730
      %v1899 = vsub.f32 %v1308, %v1733
      %v1900 = vsub.f32 %v1313, %v1736
      %v1901 = vsub.f32 %v1318, %v1739
      %v1902 = vsub.f32 %v1323, %v1742
      %v1903 = vsub.f32 %v1328, %v1745
      %v1904 = vsub.f32 %v1333, %v1748
      %v1905 = vsub.f32 %v1338, %v1751
      %v1906 = vsub.f32 %v1343, %v1754
      %v1907 = vsub.f32 %v1348, %v1757
      %v1908 = vsub.f32 %v1353, %v1760
      %v1909 = vsub.f32 %v1358, %v1763
      %v1910 = vsub.f32 %v1363, %v1766
      %v1911 = vsub.f32 %v1368, %v1769
      %v1912 = vsub.f32 %v1373, %v1772
      %v1913 = vsub.f32 %v1378, %v1775
      %v1914 = vsub.f32 %v1383, %v1778
      %v1915 = vsub.f32 %v1388, %v1781
      %v1916 = vsub.f32 %v1393, %v1784
      %v1917 = vsub.f32 %v1398, %v1787
      %v1918 = vsub.f32 %v1403, %v1790
      %v1919 = vmul.f32 %v1791, 1.442695
      %v1920 = vpow.pop %v1919
      %v1921 = vmul.f32 %v1792, 1.442695
      %v1922 = vpow.pop %v1921
      %v1923 = vmul.f32 %v1793, 1.442695
      %v1924 = vpow.pop %v1923
      %v1925 = vmul.f32 %v1794, 1.442695
      %v1926 = vpow.pop %v1925
      %v1927 = vmul.f32 %v1795, 1.442695
      %v1928 = vpow.pop %v1927
      %v1929 = vmul.f32 %v1796, 1.442695
      %v1930 = vpow.pop %v1929
      %v1931 = vmul.f32 %v1797, 1.442695
      %v1932 = vpow.pop %v1931
      %v1933 = vmul.f32 %v1798, 1.442695
      %v1934 = vpow.pop %v1933
      %v1935 = vmul.f32 %v1799, 1.442695
      %v1936 = vpow.pop %v1935
      %v1937 = vmul.f32 %v1800, 1.442695
      %v1938 = vpow.pop %v1937
      %v1939 = vmul.f32 %v1801, 1.442695
      %v1940 = vpow.pop %v1939
      %v1941 = vmul.f32 %v1802, 1.442695
      %v1942 = vpow.pop %v1941
      %v1943 = vmul.f32 %v1803, 1.442695
      %v1944 = vpow.pop %v1943
      %v1945 = vmul.f32 %v1804, 1.442695
      %v1946 = vpow.pop %v1945
      %v1947 = vmul.f32 %v1805, 1.442695
      %v1948 = vpow.pop %v1947
      %v1949 = vmul.f32 %v1806, 1.442695
      %v1950 = vpow.pop %v1949
      %v1951 = vmul.f32 %v1807, 1.442695
      %v1952 = vpow.pop %v1951
      %v1953 = vmul.f32 %v1808, 1.442695
      %v1954 = vpow.pop %v1953
      %v1955 = vmul.f32 %v1809, 1.442695
      %v1956 = vpow.pop %v1955
      %v1957 = vmul.f32 %v1810, 1.442695
      %v1958 = vpow.pop %v1957
      %v1959 = vmul.f32 %v1811, 1.442695
      %v1960 = vpow.pop %v1959
      %v1961 = vmul.f32 %v1812, 1.442695
      %v1962 = vpow.pop %v1961
      %v1963 = vmul.f32 %v1813, 1.442695
      %v1964 = vpow.pop %v1963
      %v1965 = vmul.f32 %v1814, 1.442695
      %v1966 = vpow.pop %v1965
      %v1967 = vmul.f32 %v1815, 1.442695
      %v1968 = vpow.pop %v1967
      %v1969 = vmul.f32 %v1816, 1.442695
      %v1970 = vpow.pop %v1969
      %v1971 = vmul.f32 %v1817, 1.442695
      %v1972 = vpow.pop %v1971
      %v1973 = vmul.f32 %v1818, 1.442695
      %v1974 = vpow.pop %v1973
      %v1975 = vmul.f32 %v1819, 1.442695
      %v1976 = vpow.pop %v1975
      %v1977 = vmul.f32 %v1820, 1.442695
      %v1978 = vpow.pop %v1977
      %v1979 = vmul.f32 %v1821, 1.442695
      %v1980 = vpow.pop %v1979
      %v1981 = vmul.f32 %v1822, 1.442695
      %v1982 = vpow.pop %v1981
      %v1983 = vmul.f32 %v1823, 1.442695
      %v1984 = vpow.pop %v1983
      %v1985 = vmul.f32 %v1824, 1.442695
      %v1986 = vpow.pop %v1985
      %v1987 = vmul.f32 %v1825, 1.442695
      %v1988 = vpow.pop %v1987
      %v1989 = vmul.f32 %v1826, 1.442695
      %v1990 = vpow.pop %v1989
      %v1991 = vmul.f32 %v1827, 1.442695
      %v1992 = vpow.pop %v1991
      %v1993 = vmul.f32 %v1828, 1.442695
      %v1994 = vpow.pop %v1993
      %v1995 = vmul.f32 %v1829, 1.442695
      %v1996 = vpow.pop %v1995
      %v1997 = vmul.f32 %v1830, 1.442695
      %v1998 = vpow.pop %v1997
      %v1999 = vmul.f32 %v1831, 1.442695
      %v2000 = vpow.pop %v1999
      %v2001 = vmul.f32 %v1832, 1.442695
      %v2002 = vpow.pop %v2001
      %v2003 = vmul.f32 %v1833, 1.442695
      %v2004 = vpow.pop %v2003
      %v2005 = vmul.f32 %v1834, 1.442695
      %v2006 = vpow.pop %v2005
      %v2007 = vmul.f32 %v1835, 1.442695
      %v2008 = vpow.pop %v2007
      %v2009 = vmul.f32 %v1836, 1.442695
      %v2010 = vpow.pop %v2009
      %v2011 = vmul.f32 %v1837, 1.442695
      %v2012 = vpow.pop %v2011
      %v2013 = vmul.f32 %v1838, 1.442695
      %v2014 = vpow.pop %v2013
      %v2015 = vmul.f32 %v1839, 1.442695
      %v2016 = vpow.pop %v2015
      %v2017 = vmul.f32 %v1840, 1.442695
      %v2018 = vpow.pop %v2017
      %v2019 = vmul.f32 %v1841, 1.442695
      %v2020 = vpow.pop %v2019
      %v2021 = vmul.f32 %v1842, 1.442695
      %v2022 = vpow.pop %v2021
      %v2023 = vmul.f32 %v1843, 1.442695
      %v2024 = vpow.pop %v2023
      %v2025 = vmul.f32 %v1844, 1.442695
      %v2026 = vpow.pop %v2025
      %v2027 = vmul.f32 %v1845, 1.442695
      %v2028 = vpow.pop %v2027
      %v2029 = vmul.f32 %v1846, 1.442695
      %v2030 = vpow.pop %v2029
      %v2031 = vmul.f32 %v1847, 1.442695
      %v2032 = vpow.pop %v2031
      %v2033 = vmul.f32 %v1848, 1.442695
      %v2034 = vpow.pop %v2033
      %v2035 = vmul.f32 %v1849, 1.442695
      %v2036 = vpow.pop %v2035
      %v2037 = vmul.f32 %v1850, 1.442695
      %v2038 = vpow.pop %v2037
      %v2039 = vmul.f32 %v1851, 1.442695
      %v2040 = vpow.pop %v2039
      %v2041 = vmul.f32 %v1852, 1.442695
      %v2042 = vpow.pop %v2041
      %v2043 = vmul.f32 %v1853, 1.442695
      %v2044 = vpow.pop %v2043
      %v2045 = vmul.f32 %v1854, 1.442695
      %v2046 = vpow.pop %v2045
      %v2047 = vmul.f32 %v1855, 1.442695
      %v2048 = vpow.pop %v2047
      %v2049 = vmul.f32 %v1856, 1.442695
      %v2050 = vpow.pop %v2049
      %v2051 = vmul.f32 %v1857, 1.442695
      %v2052 = vpow.pop %v2051
      %v2053 = vmul.f32 %v1858, 1.442695
      %v2054 = vpow.pop %v2053
      %v2055 = vmul.f32 %v1859, 1.442695
      %v2056 = vpow.pop %v2055
      %v2057 = vmul.f32 %v1860, 1.442695
      %v2058 = vpow.pop %v2057
      %v2059 = vmul.f32 %v1861, 1.442695
      %v2060 = vpow.pop %v2059
      %v2061 = vmul.f32 %v1862, 1.442695
      %v2062 = vpow.pop %v2061
      %v2063 = vmul.f32 %v1863, 1.442695
      %v2064 = vpow.pop %v2063
      %v2065 = vmul.f32 %v1864, 1.442695
      %v2066 = vpow.pop %v2065
      %v2067 = vmul.f32 %v1865, 1.442695
      %v2068 = vpow.pop %v2067
      %v2069 = vmul.f32 %v1866, 1.442695
      %v2070 = vpow.pop %v2069
      %v2071 = vmul.f32 %v1867, 1.442695
      %v2072 = vpow.pop %v2071
      %v2073 = vmul.f32 %v1868, 1.442695
      %v2074 = vpow.pop %v2073
      %v2075 = vmul.f32 %v1869, 1.442695
      %v2076 = vpow.pop %v2075
      %v2077 = vmul.f32 %v1870, 1.442695
      %v2078 = vpow.pop %v2077
      %v2079 = vmul.f32 %v1871, 1.442695
      %v2080 = vpow.pop %v2079
      %v2081 = vmul.f32 %v1872, 1.442695
      %v2082 = vpow.pop %v2081
      %v2083 = vmul.f32 %v1873, 1.442695
      %v2084 = vpow.pop %v2083
      %v2085 = vmul.f32 %v1874, 1.442695
      %v2086 = vpow.pop %v2085
      %v2087 = vmul.f32 %v1875, 1.442695
      %v2088 = vpow.pop %v2087
      %v2089 = vmul.f32 %v1876, 1.442695
      %v2090 = vpow.pop %v2089
      %v2091 = vmul.f32 %v1877, 1.442695
      %v2092 = vpow.pop %v2091
      %v2093 = vmul.f32 %v1878, 1.442695
      %v2094 = vpow.pop %v2093
      %v2095 = vmul.f32 %v1879, 1.442695
      %v2096 = vpow.pop %v2095
      %v2097 = vmul.f32 %v1880, 1.442695
      %v2098 = vpow.pop %v2097
      %v2099 = vmul.f32 %v1881, 1.442695
      %v2100 = vpow.pop %v2099
      %v2101 = vmul.f32 %v1882, 1.442695
      %v2102 = vpow.pop %v2101
      %v2103 = vmul.f32 %v1883, 1.442695
      %v2104 = vpow.pop %v2103
      %v2105 = vmul.f32 %v1884, 1.442695
      %v2106 = vpow.pop %v2105
      %v2107 = vmul.f32 %v1885, 1.442695
      %v2108 = vpow.pop %v2107
      %v2109 = vmul.f32 %v1886, 1.442695
      %v2110 = vpow.pop %v2109
      %v2111 = vmul.f32 %v1887, 1.442695
      %v2112 = vpow.pop %v2111
      %v2113 = vmul.f32 %v1888, 1.442695
      %v2114 = vpow.pop %v2113
      %v2115 = vmul.f32 %v1889, 1.442695
      %v2116 = vpow.pop %v2115
      %v2117 = vmul.f32 %v1890, 1.442695
      %v2118 = vpow.pop %v2117
      %v2119 = vmul.f32 %v1891, 1.442695
      %v2120 = vpow.pop %v2119
      %v2121 = vmul.f32 %v1892, 1.442695
      %v2122 = vpow.pop %v2121
      %v2123 = vmul.f32 %v1893, 1.442695
      %v2124 = vpow.pop %v2123
      %v2125 = vmul.f32 %v1894, 1.442695
      %v2126 = vpow.pop %v2125
      %v2127 = vmul.f32 %v1895, 1.442695
      %v2128 = vpow.pop %v2127
      %v2129 = vmul.f32 %v1896, 1.442695
      %v2130 = vpow.pop %v2129
      %v2131 = vmul.f32 %v1897, 1.442695
      %v2132 = vpow.pop %v2131
      %v2133 = vmul.f32 %v1898, 1.442695
      %v2134 = vpow.pop %v2133
      %v2135 = vmul.f32 %v1899, 1.442695
      %v2136 = vpow.pop %v2135
      %v2137 = vmul.f32 %v1900, 1.442695
      %v2138 = vpow.pop %v2137
      %v2139 = vmul.f32 %v1901, 1.442695
      %v2140 = vpow.pop %v2139
      %v2141 = vmul.f32 %v1902, 1.442695
      %v2142 = vpow.pop %v2141
      %v2143 = vmul.f32 %v1903, 1.442695
      %v2144 = vpow.pop %v2143
      %v2145 = vmul.f32 %v1904, 1.442695
      %v2146 = vpow.pop %v2145
      %v2147 = vmul.f32 %v1905, 1.442695
      %v2148 = vpow.pop %v2147
      %v2149 = vmul.f32 %v1906, 1.442695
      %v2150 = vpow.pop %v2149
      %v2151 = vmul.f32 %v1907, 1.442695
      %v2152 = vpow.pop %v2151
      %v2153 = vmul.f32 %v1908, 1.442695
      %v2154 = vpow.pop %v2153
      %v2155 = vmul.f32 %v1909, 1.442695
      %v2156 = vpow.pop %v2155
      %v2157 = vmul.f32 %v1910, 1.442695
      %v2158 = vpow.pop %v2157
      %v2159 = vmul.f32 %v1911, 1.442695
      %v2160 = vpow.pop %v2159
      %v2161 = vmul.f32 %v1912, 1.442695
      %v2162 = vpow.pop %v2161
      %v2163 = vmul.f32 %v1913, 1.442695
      %v2164 = vpow.pop %v2163
      %v2165 = vmul.f32 %v1914, 1.442695
      %v2166 = vpow.pop %v2165
      %v2167 = vmul.f32 %v1915, 1.442695
      %v2168 = vpow.pop %v2167
      %v2169 = vmul.f32 %v1916, 1.442695
      %v2170 = vpow.pop %v2169
      %v2171 = vmul.f32 %v1917, 1.442695
      %v2172 = vpow.pop %v2171
      %v2173 = vmul.f32 %v1918, 1.442695
      %v2174 = vpow.pop %v2173
      %v2175 = vsel %vm1406, %v1920, 0.0
      %2176 = vadd.xlane.f32.xlu0 %v2175
      %v2177 = vpop.xlane.xlu0 %2176
      %v2178 = vsel %vm1406, %v1922, 0.0
      %2179 = vadd.xlane.f32.xlu0 %v2178
      %v2180 = vpop.xlane.xlu0 %2179
      %v2181 = vsel %vm1406, %v1924, 0.0
      %2182 = vadd.xlane.f32.xlu0 %v2181
      %v2183 = vpop.xlane.xlu0 %2182
      %v2184 = vsel %vm1406, %v1926, 0.0
      %2185 = vadd.xlane.f32.xlu0 %v2184
      %v2186 = vpop.xlane.xlu0 %2185
      %v2187 = vsel %vm1406, %v1928, 0.0
      %2188 = vadd.xlane.f32.xlu0 %v2187
      %v2189 = vpop.xlane.xlu0 %2188
      %v2190 = vsel %vm1406, %v1930, 0.0
      %2191 = vadd.xlane.f32.xlu0 %v2190
      %v2192 = vpop.xlane.xlu0 %2191
      %v2193 = vsel %vm1406, %v1932, 0.0
      %2194 = vadd.xlane.f32.xlu0 %v2193
      %v2195 = vpop.xlane.xlu0 %2194
      %v2196 = vsel %vm1406, %v1934, 0.0
      %2197 = vadd.xlane.f32.xlu0 %v2196
      %v2198 = vpop.xlane.xlu0 %2197
      %v2199 = vsel %vm1406, %v1936, 0.0
      %2200 = vadd.xlane.f32.xlu0 %v2199
      %v2201 = vpop.xlane.xlu0 %2200
      %v2202 = vsel %vm1406, %v1938, 0.0
      %2203 = vadd.xlane.f32.xlu0 %v2202
      %v2204 = vpop.xlane.xlu0 %2203
      %v2205 = vsel %vm1406, %v1940, 0.0
      %2206 = vadd.xlane.f32.xlu0 %v2205
      %v2207 = vpop.xlane.xlu0 %2206
      %v2208 = vsel %vm1406, %v1942, 0.0
      %2209 = vadd.xlane.f32.xlu0 %v2208
      %v2210 = vpop.xlane.xlu0 %2209
      %v2211 = vsel %vm1406, %v1944, 0.0
      %2212 = vadd.xlane.f32.xlu0 %v2211
      %v2213 = vpop.xlane.xlu0 %2212
      %v2214 = vsel %vm1406, %v1946, 0.0
      %2215 = vadd.xlane.f32.xlu0 %v2214
      %v2216 = vpop.xlane.xlu0 %2215
      %v2217 = vsel %vm1406, %v1948, 0.0
      %2218 = vadd.xlane.f32.xlu0 %v2217
      %v2219 = vpop.xlane.xlu0 %2218
      %v2220 = vsel %vm1406, %v1950, 0.0
      %2221 = vadd.xlane.f32.xlu0 %v2220
      %v2222 = vpop.xlane.xlu0 %2221
      %v2223 = vsel %vm1406, %v1952, 0.0
      %2224 = vadd.xlane.f32.xlu0 %v2223
      %v2225 = vpop.xlane.xlu0 %2224
      %v2226 = vsel %vm1406, %v1954, 0.0
      %2227 = vadd.xlane.f32.xlu0 %v2226
      %v2228 = vpop.xlane.xlu0 %2227
      %v2229 = vsel %vm1406, %v1956, 0.0
      %2230 = vadd.xlane.f32.xlu0 %v2229
      %v2231 = vpop.xlane.xlu0 %2230
      %v2232 = vsel %vm1406, %v1958, 0.0
      %2233 = vadd.xlane.f32.xlu0 %v2232
      %v2234 = vpop.xlane.xlu0 %2233
      %v2235 = vsel %vm1406, %v1960, 0.0
      %2236 = vadd.xlane.f32.xlu0 %v2235
      %v2237 = vpop.xlane.xlu0 %2236
      %v2238 = vsel %vm1406, %v1962, 0.0
      %2239 = vadd.xlane.f32.xlu0 %v2238
      %v2240 = vpop.xlane.xlu0 %2239
      %v2241 = vsel %vm1406, %v1964, 0.0
      %2242 = vadd.xlane.f32.xlu0 %v2241
      %v2243 = vpop.xlane.xlu0 %2242
      %v2244 = vsel %vm1406, %v1966, 0.0
      %2245 = vadd.xlane.f32.xlu0 %v2244
      %v2246 = vpop.xlane.xlu0 %2245
      %v2247 = vsel %vm1406, %v1968, 0.0
      %2248 = vadd.xlane.f32.xlu0 %v2247
      %v2249 = vpop.xlane.xlu0 %2248
      %v2250 = vsel %vm1406, %v1970, 0.0
      %2251 = vadd.xlane.f32.xlu0 %v2250
      %v2252 = vpop.xlane.xlu0 %2251
      %v2253 = vsel %vm1406, %v1972, 0.0
      %2254 = vadd.xlane.f32.xlu0 %v2253
      %v2255 = vpop.xlane.xlu0 %2254
      %v2256 = vsel %vm1406, %v1974, 0.0
      %2257 = vadd.xlane.f32.xlu0 %v2256
      %v2258 = vpop.xlane.xlu0 %2257
      %v2259 = vsel %vm1406, %v1976, 0.0
      %2260 = vadd.xlane.f32.xlu0 %v2259
      %v2261 = vpop.xlane.xlu0 %2260
      %v2262 = vsel %vm1406, %v1978, 0.0
      %2263 = vadd.xlane.f32.xlu0 %v2262
      %v2264 = vpop.xlane.xlu0 %2263
      %v2265 = vsel %vm1406, %v1980, 0.0
      %2266 = vadd.xlane.f32.xlu0 %v2265
      %v2267 = vpop.xlane.xlu0 %2266
      %v2268 = vsel %vm1406, %v1982, 0.0
      %2269 = vadd.xlane.f32.xlu0 %v2268
      %v2270 = vpop.xlane.xlu0 %2269
      %v2271 = vsel %vm1406, %v1984, 0.0
      %2272 = vadd.xlane.f32.xlu0 %v2271
      %v2273 = vpop.xlane.xlu0 %2272
      %v2274 = vsel %vm1406, %v1986, 0.0
      %2275 = vadd.xlane.f32.xlu0 %v2274
      %v2276 = vpop.xlane.xlu0 %2275
      %v2277 = vsel %vm1406, %v1988, 0.0
      %2278 = vadd.xlane.f32.xlu0 %v2277
      %v2279 = vpop.xlane.xlu0 %2278
      %v2280 = vsel %vm1406, %v1990, 0.0
      %2281 = vadd.xlane.f32.xlu0 %v2280
      %v2282 = vpop.xlane.xlu0 %2281
      %v2283 = vsel %vm1406, %v1992, 0.0
      %2284 = vadd.xlane.f32.xlu0 %v2283
      %v2285 = vpop.xlane.xlu0 %2284
      %v2286 = vsel %vm1406, %v1994, 0.0
      %2287 = vadd.xlane.f32.xlu0 %v2286
      %v2288 = vpop.xlane.xlu0 %2287
      %v2289 = vsel %vm1406, %v1996, 0.0
      %2290 = vadd.xlane.f32.xlu0 %v2289
      %v2291 = vpop.xlane.xlu0 %2290
      %v2292 = vsel %vm1406, %v1998, 0.0
      %2293 = vadd.xlane.f32.xlu0 %v2292
      %v2294 = vpop.xlane.xlu0 %2293
      %v2295 = vsel %vm1406, %v2000, 0.0
      %2296 = vadd.xlane.f32.xlu0 %v2295
      %v2297 = vpop.xlane.xlu0 %2296
      %v2298 = vsel %vm1406, %v2002, 0.0
      %2299 = vadd.xlane.f32.xlu0 %v2298
      %v2300 = vpop.xlane.xlu0 %2299
      %v2301 = vsel %vm1406, %v2004, 0.0
      %2302 = vadd.xlane.f32.xlu0 %v2301
      %v2303 = vpop.xlane.xlu0 %2302
      %v2304 = vsel %vm1406, %v2006, 0.0
      %2305 = vadd.xlane.f32.xlu0 %v2304
      %v2306 = vpop.xlane.xlu0 %2305
      %v2307 = vsel %vm1406, %v2008, 0.0
      %2308 = vadd.xlane.f32.xlu0 %v2307
      %v2309 = vpop.xlane.xlu0 %2308
      %v2310 = vsel %vm1406, %v2010, 0.0
      %2311 = vadd.xlane.f32.xlu0 %v2310
      %v2312 = vpop.xlane.xlu0 %2311
      %v2313 = vsel %vm1406, %v2012, 0.0
      %2314 = vadd.xlane.f32.xlu0 %v2313
      %v2315 = vpop.xlane.xlu0 %2314
      %v2316 = vsel %vm1406, %v2014, 0.0
      %2317 = vadd.xlane.f32.xlu0 %v2316
      %v2318 = vpop.xlane.xlu0 %2317
      %v2319 = vsel %vm1406, %v2016, 0.0
      %2320 = vadd.xlane.f32.xlu0 %v2319
      %v2321 = vpop.xlane.xlu0 %2320
      %v2322 = vsel %vm1406, %v2018, 0.0
      %2323 = vadd.xlane.f32.xlu0 %v2322
      %v2324 = vpop.xlane.xlu0 %2323
      %v2325 = vsel %vm1406, %v2020, 0.0
      %2326 = vadd.xlane.f32.xlu0 %v2325
      %v2327 = vpop.xlane.xlu0 %2326
      %v2328 = vsel %vm1406, %v2022, 0.0
      %2329 = vadd.xlane.f32.xlu0 %v2328
      %v2330 = vpop.xlane.xlu0 %2329
      %v2331 = vsel %vm1406, %v2024, 0.0
      %2332 = vadd.xlane.f32.xlu0 %v2331
      %v2333 = vpop.xlane.xlu0 %2332
      %v2334 = vsel %vm1406, %v2026, 0.0
      %2335 = vadd.xlane.f32.xlu0 %v2334
      %v2336 = vpop.xlane.xlu0 %2335
      %v2337 = vsel %vm1406, %v2028, 0.0
      %2338 = vadd.xlane.f32.xlu0 %v2337
      %v2339 = vpop.xlane.xlu0 %2338
      %v2340 = vsel %vm1406, %v2030, 0.0
      %2341 = vadd.xlane.f32.xlu0 %v2340
      %v2342 = vpop.xlane.xlu0 %2341
      %v2343 = vsel %vm1406, %v2032, 0.0
      %2344 = vadd.xlane.f32.xlu0 %v2343
      %v2345 = vpop.xlane.xlu0 %2344
      %v2346 = vsel %vm1406, %v2034, 0.0
      %2347 = vadd.xlane.f32.xlu0 %v2346
      %v2348 = vpop.xlane.xlu0 %2347
      %v2349 = vsel %vm1406, %v2036, 0.0
      %2350 = vadd.xlane.f32.xlu0 %v2349
      %v2351 = vpop.xlane.xlu0 %2350
      %v2352 = vsel %vm1406, %v2038, 0.0
      %2353 = vadd.xlane.f32.xlu0 %v2352
      %v2354 = vpop.xlane.xlu0 %2353
      %v2355 = vsel %vm1406, %v2040, 0.0
      %2356 = vadd.xlane.f32.xlu0 %v2355
      %v2357 = vpop.xlane.xlu0 %2356
      %v2358 = vsel %vm1406, %v2042, 0.0
      %2359 = vadd.xlane.f32.xlu0 %v2358
      %v2360 = vpop.xlane.xlu0 %2359
      %v2361 = vsel %vm1406, %v2044, 0.0
      %2362 = vadd.xlane.f32.xlu0 %v2361
      %v2363 = vpop.xlane.xlu0 %2362
      %v2364 = vsel %vm1406, %v2046, 0.0
      %2365 = vadd.xlane.f32.xlu0 %v2364
      %v2366 = vpop.xlane.xlu0 %2365
      %v2367 = vsel %vm1406, %v2048, 0.0
      %2368 = vadd.xlane.f32.xlu0 %v2367
      %v2369 = vpop.xlane.xlu0 %2368
      %v2370 = vsel %vm1406, %v2050, 0.0
      %2371 = vadd.xlane.f32.xlu0 %v2370
      %v2372 = vpop.xlane.xlu0 %2371
      %v2373 = vsel %vm1406, %v2052, 0.0
      %2374 = vadd.xlane.f32.xlu0 %v2373
      %v2375 = vpop.xlane.xlu0 %2374
      %v2376 = vsel %vm1406, %v2054, 0.0
      %2377 = vadd.xlane.f32.xlu0 %v2376
      %v2378 = vpop.xlane.xlu0 %2377
      %v2379 = vsel %vm1406, %v2056, 0.0
      %2380 = vadd.xlane.f32.xlu0 %v2379
      %v2381 = vpop.xlane.xlu0 %2380
      %v2382 = vsel %vm1406, %v2058, 0.0
      %2383 = vadd.xlane.f32.xlu0 %v2382
      %v2384 = vpop.xlane.xlu0 %2383
      %v2385 = vsel %vm1406, %v2060, 0.0
      %2386 = vadd.xlane.f32.xlu0 %v2385
      %v2387 = vpop.xlane.xlu0 %2386
      %v2388 = vsel %vm1406, %v2062, 0.0
      %2389 = vadd.xlane.f32.xlu0 %v2388
      %v2390 = vpop.xlane.xlu0 %2389
      %v2391 = vsel %vm1406, %v2064, 0.0
      %2392 = vadd.xlane.f32.xlu0 %v2391
      %v2393 = vpop.xlane.xlu0 %2392
      %v2394 = vsel %vm1406, %v2066, 0.0
      %2395 = vadd.xlane.f32.xlu0 %v2394
      %v2396 = vpop.xlane.xlu0 %2395
      %v2397 = vsel %vm1406, %v2068, 0.0
      %2398 = vadd.xlane.f32.xlu0 %v2397
      %v2399 = vpop.xlane.xlu0 %2398
      %v2400 = vsel %vm1406, %v2070, 0.0
      %2401 = vadd.xlane.f32.xlu0 %v2400
      %v2402 = vpop.xlane.xlu0 %2401
      %v2403 = vsel %vm1406, %v2072, 0.0
      %2404 = vadd.xlane.f32.xlu0 %v2403
      %v2405 = vpop.xlane.xlu0 %2404
      %v2406 = vsel %vm1406, %v2074, 0.0
      %2407 = vadd.xlane.f32.xlu0 %v2406
      %v2408 = vpop.xlane.xlu0 %2407
      %v2409 = vsel %vm1406, %v2076, 0.0
      %2410 = vadd.xlane.f32.xlu0 %v2409
      %v2411 = vpop.xlane.xlu0 %2410
      %v2412 = vsel %vm1406, %v2078, 0.0
      %2413 = vadd.xlane.f32.xlu0 %v2412
      %v2414 = vpop.xlane.xlu0 %2413
      %v2415 = vsel %vm1406, %v2080, 0.0
      %2416 = vadd.xlane.f32.xlu0 %v2415
      %v2417 = vpop.xlane.xlu0 %2416
      %v2418 = vsel %vm1406, %v2082, 0.0
      %2419 = vadd.xlane.f32.xlu0 %v2418
      %v2420 = vpop.xlane.xlu0 %2419
      %v2421 = vsel %vm1406, %v2084, 0.0
      %2422 = vadd.xlane.f32.xlu0 %v2421
      %v2423 = vpop.xlane.xlu0 %2422
      %v2424 = vsel %vm1406, %v2086, 0.0
      %2425 = vadd.xlane.f32.xlu0 %v2424
      %v2426 = vpop.xlane.xlu0 %2425
      %v2427 = vsel %vm1406, %v2088, 0.0
      %2428 = vadd.xlane.f32.xlu0 %v2427
      %v2429 = vpop.xlane.xlu0 %2428
      %v2430 = vsel %vm1406, %v2090, 0.0
      %2431 = vadd.xlane.f32.xlu0 %v2430
      %v2432 = vpop.xlane.xlu0 %2431
      %v2433 = vsel %vm1406, %v2092, 0.0
      %2434 = vadd.xlane.f32.xlu0 %v2433
      %v2435 = vpop.xlane.xlu0 %2434
      %v2436 = vsel %vm1406, %v2094, 0.0
      %2437 = vadd.xlane.f32.xlu0 %v2436
      %v2438 = vpop.xlane.xlu0 %2437
      %v2439 = vsel %vm1406, %v2096, 0.0
      %2440 = vadd.xlane.f32.xlu0 %v2439
      %v2441 = vpop.xlane.xlu0 %2440
      %v2442 = vsel %vm1406, %v2098, 0.0
      %2443 = vadd.xlane.f32.xlu0 %v2442
      %v2444 = vpop.xlane.xlu0 %2443
      %v2445 = vsel %vm1406, %v2100, 0.0
      %2446 = vadd.xlane.f32.xlu0 %v2445
      %v2447 = vpop.xlane.xlu0 %2446
      %v2448 = vsel %vm1406, %v2102, 0.0
      %2449 = vadd.xlane.f32.xlu0 %v2448
      %v2450 = vpop.xlane.xlu0 %2449
      %v2451 = vsel %vm1406, %v2104, 0.0
      %2452 = vadd.xlane.f32.xlu0 %v2451
      %v2453 = vpop.xlane.xlu0 %2452
      %v2454 = vsel %vm1406, %v2106, 0.0
      %2455 = vadd.xlane.f32.xlu0 %v2454
      %v2456 = vpop.xlane.xlu0 %2455
      %v2457 = vsel %vm1406, %v2108, 0.0
      %2458 = vadd.xlane.f32.xlu0 %v2457
      %v2459 = vpop.xlane.xlu0 %2458
      %v2460 = vsel %vm1406, %v2110, 0.0
      %2461 = vadd.xlane.f32.xlu0 %v2460
      %v2462 = vpop.xlane.xlu0 %2461
      %v2463 = vsel %vm1406, %v2112, 0.0
      %2464 = vadd.xlane.f32.xlu0 %v2463
      %v2465 = vpop.xlane.xlu0 %2464
      %v2466 = vsel %vm1406, %v2114, 0.0
      %2467 = vadd.xlane.f32.xlu0 %v2466
      %v2468 = vpop.xlane.xlu0 %2467
      %v2469 = vsel %vm1406, %v2116, 0.0
      %2470 = vadd.xlane.f32.xlu0 %v2469
      %v2471 = vpop.xlane.xlu0 %2470
      %v2472 = vsel %vm1406, %v2118, 0.0
      %2473 = vadd.xlane.f32.xlu0 %v2472
      %v2474 = vpop.xlane.xlu0 %2473
      %v2475 = vsel %vm1406, %v2120, 0.0
      %2476 = vadd.xlane.f32.xlu0 %v2475
      %v2477 = vpop.xlane.xlu0 %2476
      %v2478 = vsel %vm1406, %v2122, 0.0
      %2479 = vadd.xlane.f32.xlu0 %v2478
      %v2480 = vpop.xlane.xlu0 %2479
      %v2481 = vsel %vm1406, %v2124, 0.0
      %2482 = vadd.xlane.f32.xlu0 %v2481
      %v2483 = vpop.xlane.xlu0 %2482
      %v2484 = vsel %vm1406, %v2126, 0.0
      %2485 = vadd.xlane.f32.xlu0 %v2484
      %v2486 = vpop.xlane.xlu0 %2485
      %v2487 = vsel %vm1406, %v2128, 0.0
      %2488 = vadd.xlane.f32.xlu0 %v2487
      %v2489 = vpop.xlane.xlu0 %2488
      %v2490 = vsel %vm1406, %v2130, 0.0
      %2491 = vadd.xlane.f32.xlu0 %v2490
      %v2492 = vpop.xlane.xlu0 %2491
      %v2493 = vsel %vm1406, %v2132, 0.0
      %2494 = vadd.xlane.f32.xlu0 %v2493
      %v2495 = vpop.xlane.xlu0 %2494
      %v2496 = vsel %vm1406, %v2134, 0.0
      %2497 = vadd.xlane.f32.xlu0 %v2496
      %v2498 = vpop.xlane.xlu0 %2497
      %v2499 = vsel %vm1406, %v2136, 0.0
      %2500 = vadd.xlane.f32.xlu0 %v2499
      %v2501 = vpop.xlane.xlu0 %2500
      %v2502 = vsel %vm1406, %v2138, 0.0
      %2503 = vadd.xlane.f32.xlu0 %v2502
      %v2504 = vpop.xlane.xlu0 %2503
      %v2505 = vsel %vm1406, %v2140, 0.0
      %2506 = vadd.xlane.f32.xlu0 %v2505
      %v2507 = vpop.xlane.xlu0 %2506
      %v2508 = vsel %vm1406, %v2142, 0.0
      %2509 = vadd.xlane.f32.xlu0 %v2508
      %v2510 = vpop.xlane.xlu0 %2509
      %v2511 = vsel %vm1406, %v2144, 0.0
      %2512 = vadd.xlane.f32.xlu0 %v2511
      %v2513 = vpop.xlane.xlu0 %2512
      %v2514 = vsel %vm1406, %v2146, 0.0
      %2515 = vadd.xlane.f32.xlu0 %v2514
      %v2516 = vpop.xlane.xlu0 %2515
      %v2517 = vsel %vm1406, %v2148, 0.0
      %2518 = vadd.xlane.f32.xlu0 %v2517
      %v2519 = vpop.xlane.xlu0 %2518
      %v2520 = vsel %vm1406, %v2150, 0.0
      %2521 = vadd.xlane.f32.xlu0 %v2520
      %v2522 = vpop.xlane.xlu0 %2521
      %v2523 = vsel %vm1406, %v2152, 0.0
      %2524 = vadd.xlane.f32.xlu0 %v2523
      %v2525 = vpop.xlane.xlu0 %2524
      %v2526 = vsel %vm1406, %v2154, 0.0
      %2527 = vadd.xlane.f32.xlu0 %v2526
      %v2528 = vpop.xlane.xlu0 %2527
      %v2529 = vsel %vm1406, %v2156, 0.0
      %2530 = vadd.xlane.f32.xlu0 %v2529
      %v2531 = vpop.xlane.xlu0 %2530
      %v2532 = vsel %vm1406, %v2158, 0.0
      %2533 = vadd.xlane.f32.xlu0 %v2532
      %v2534 = vpop.xlane.xlu0 %2533
      %v2535 = vsel %vm1406, %v2160, 0.0
      %2536 = vadd.xlane.f32.xlu0 %v2535
      %v2537 = vpop.xlane.xlu0 %2536
      %v2538 = vsel %vm1406, %v2162, 0.0
      %2539 = vadd.xlane.f32.xlu0 %v2538
      %v2540 = vpop.xlane.xlu0 %2539
      %v2541 = vsel %vm1406, %v2164, 0.0
      %2542 = vadd.xlane.f32.xlu0 %v2541
      %v2543 = vpop.xlane.xlu0 %2542
      %v2544 = vsel %vm1406, %v2166, 0.0
      %2545 = vadd.xlane.f32.xlu0 %v2544
      %v2546 = vpop.xlane.xlu0 %2545
      %v2547 = vsel %vm1406, %v2168, 0.0
      %2548 = vadd.xlane.f32.xlu0 %v2547
      %v2549 = vpop.xlane.xlu0 %2548
      %v2550 = vsel %vm1406, %v2170, 0.0
      %2551 = vadd.xlane.f32.xlu0 %v2550
      %v2552 = vpop.xlane.xlu0 %2551
      %v2553 = vsel %vm1406, %v2172, 0.0
      %2554 = vadd.xlane.f32.xlu0 %v2553
      %v2555 = vpop.xlane.xlu0 %2554
      %v2556 = vsel %vm1406, %v2174, 0.0
      %2557 = vadd.xlane.f32.xlu0 %v2556
      %v2558 = vpop.xlane.xlu0 %2557
      %v2559 = vrcp.pop %v2177
      %v2560 = vrcp.pop %v2180
      %v2561 = vrcp.pop %v2183
      %v2562 = vrcp.pop %v2186
      %v2563 = vrcp.pop %v2189
      %v2564 = vrcp.pop %v2192
      %v2565 = vrcp.pop %v2195
      %v2566 = vrcp.pop %v2198
      %v2567 = vrcp.pop %v2201
      %v2568 = vrcp.pop %v2204
      %v2569 = vrcp.pop %v2207
      %v2570 = vrcp.pop %v2210
      %v2571 = vrcp.pop %v2213
      %v2572 = vrcp.pop %v2216
      %v2573 = vrcp.pop %v2219
      %v2574 = vrcp.pop %v2222
      %v2575 = vrcp.pop %v2225
      %v2576 = vrcp.pop %v2228
      %v2577 = vrcp.pop %v2231
      %v2578 = vrcp.pop %v2234
      %v2579 = vrcp.pop %v2237
      %v2580 = vrcp.pop %v2240
      %v2581 = vrcp.pop %v2243
      %v2582 = vrcp.pop %v2246
      %v2583 = vrcp.pop %v2249
      %v2584 = vrcp.pop %v2252
      %v2585 = vrcp.pop %v2255
      %v2586 = vrcp.pop %v2258
      %v2587 = vrcp.pop %v2261
      %v2588 = vrcp.pop %v2264
      %v2589 = vrcp.pop %v2267
      %v2590 = vrcp.pop %v2270
      %v2591 = vrcp.pop %v2273
      %v2592 = vrcp.pop %v2276
      %v2593 = vrcp.pop %v2279
      %v2594 = vrcp.pop %v2282
      %v2595 = vrcp.pop %v2285
      %v2596 = vrcp.pop %v2288
      %v2597 = vrcp.pop %v2291
      %v2598 = vrcp.pop %v2294
      %v2599 = vrcp.pop %v2297
      %v2600 = vrcp.pop %v2300
      %v2601 = vrcp.pop %v2303
      %v2602 = vrcp.pop %v2306
      %v2603 = vrcp.pop %v2309
      %v2604 = vrcp.pop %v2312
      %v2605 = vrcp.pop %v2315
      %v2606 = vrcp.pop %v2318
      %v2607 = vrcp.pop %v2321
      %v2608 = vrcp.pop %v2324
      %v2609 = vrcp.pop %v2327
      %v2610 = vrcp.pop %v2330
      %v2611 = vrcp.pop %v2333
      %v2612 = vrcp.pop %v2336
      %v2613 = vrcp.pop %v2339
      %v2614 = vrcp.pop %v2342
      %v2615 = vrcp.pop %v2345
      %v2616 = vrcp.pop %v2348
      %v2617 = vrcp.pop %v2351
      %v2618 = vrcp.pop %v2354
      %v2619 = vrcp.pop %v2357
      %v2620 = vrcp.pop %v2360
      %v2621 = vrcp.pop %v2363
      %v2622 = vrcp.pop %v2366
      %v2623 = vrcp.pop %v2369
      %v2624 = vrcp.pop %v2372
      %v2625 = vrcp.pop %v2375
      %v2626 = vrcp.pop %v2378
      %v2627 = vrcp.pop %v2381
      %v2628 = vrcp.pop %v2384
      %v2629 = vrcp.pop %v2387
      %v2630 = vrcp.pop %v2390
      %v2631 = vrcp.pop %v2393
      %v2632 = vrcp.pop %v2396
      %v2633 = vrcp.pop %v2399
      %v2634 = vrcp.pop %v2402
      %v2635 = vrcp.pop %v2405
      %v2636 = vrcp.pop %v2408
      %v2637 = vrcp.pop %v2411
      %v2638 = vrcp.pop %v2414
      %v2639 = vrcp.pop %v2417
      %v2640 = vrcp.pop %v2420
      %v2641 = vrcp.pop %v2423
      %v2642 = vrcp.pop %v2426
      %v2643 = vrcp.pop %v2429
      %v2644 = vrcp.pop %v2432
      %v2645 = vrcp.pop %v2435
      %v2646 = vrcp.pop %v2438
      %v2647 = vrcp.pop %v2441
      %v2648 = vrcp.pop %v2444
      %v2649 = vrcp.pop %v2447
      %v2650 = vrcp.pop %v2450
      %v2651 = vrcp.pop %v2453
      %v2652 = vrcp.pop %v2456
      %v2653 = vrcp.pop %v2459
      %v2654 = vrcp.pop %v2462
      %v2655 = vrcp.pop %v2465
      %v2656 = vrcp.pop %v2468
      %v2657 = vrcp.pop %v2471
      %v2658 = vrcp.pop %v2474
      %v2659 = vrcp.pop %v2477
      %v2660 = vrcp.pop %v2480
      %v2661 = vrcp.pop %v2483
      %v2662 = vrcp.pop %v2486
      %v2663 = vrcp.pop %v2489
      %v2664 = vrcp.pop %v2492
      %v2665 = vrcp.pop %v2495
      %v2666 = vrcp.pop %v2498
      %v2667 = vrcp.pop %v2501
      %v2668 = vrcp.pop %v2504
      %v2669 = vrcp.pop %v2507
      %v2670 = vrcp.pop %v2510
      %v2671 = vrcp.pop %v2513
      %v2672 = vrcp.pop %v2516
      %v2673 = vrcp.pop %v2519
      %v2674 = vrcp.pop %v2522
      %v2675 = vrcp.pop %v2525
      %v2676 = vrcp.pop %v2528
      %v2677 = vrcp.pop %v2531
      %v2678 = vrcp.pop %v2534
      %v2679 = vrcp.pop %v2537
      %v2680 = vrcp.pop %v2540
      %v2681 = vrcp.pop %v2543
      %v2682 = vrcp.pop %v2546
      %v2683 = vrcp.pop %v2549
      %v2684 = vrcp.pop %v2552
      %v2685 = vrcp.pop %v2555
      %v2686 = vrcp.pop %v2558
      %v2687 = vmul.f32 %v1920, %v2559
      %v2688 = vmul.f32 %v1922, %v2560
      %v2689 = vmul.f32 %v1924, %v2561
      %v2690 = vmul.f32 %v1926, %v2562
      %v2691 = vmul.f32 %v1928, %v2563
      %v2692 = vmul.f32 %v1930, %v2564
      %v2693 = vmul.f32 %v1932, %v2565
      %v2694 = vmul.f32 %v1934, %v2566
      %v2695 = vmul.f32 %v1936, %v2567
      %v2696 = vmul.f32 %v1938, %v2568
      %v2697 = vmul.f32 %v1940, %v2569
      %v2698 = vmul.f32 %v1942, %v2570
      %v2699 = vmul.f32 %v1944, %v2571
      %v2700 = vmul.f32 %v1946, %v2572
      %v2701 = vmul.f32 %v1948, %v2573
      %v2702 = vmul.f32 %v1950, %v2574
      %v2703 = vmul.f32 %v1952, %v2575
      %v2704 = vmul.f32 %v1954, %v2576
      %v2705 = vmul.f32 %v1956, %v2577
      %v2706 = vmul.f32 %v1958, %v2578
      %v2707 = vmul.f32 %v1960, %v2579
      %v2708 = vmul.f32 %v1962, %v2580
      %v2709 = vmul.f32 %v1964, %v2581
      %v2710 = vmul.f32 %v1966, %v2582
      %v2711 = vmul.f32 %v1968, %v2583
      %v2712 = vmul.f32 %v1970, %v2584
      %v2713 = vmul.f32 %v1972, %v2585
      %v2714 = vmul.f32 %v1974, %v2586
      %v2715 = vmul.f32 %v1976, %v2587
      %v2716 = vmul.f32 %v1978, %v2588
      %v2717 = vmul.f32 %v1980, %v2589
      %v2718 = vmul.f32 %v1982, %v2590
      %v2719 = vmul.f32 %v1984, %v2591
      %v2720 = vmul.f32 %v1986, %v2592
      %v2721 = vmul.f32 %v1988, %v2593
      %v2722 = vmul.f32 %v1990, %v2594
      %v2723 = vmul.f32 %v1992, %v2595
      %v2724 = vmul.f32 %v1994, %v2596
      %v2725 = vmul.f32 %v1996, %v2597
      %v2726 = vmul.f32 %v1998, %v2598
      %v2727 = vmul.f32 %v2000, %v2599
      %v2728 = vmul.f32 %v2002, %v2600
      %v2729 = vmul.f32 %v2004, %v2601
      %v2730 = vmul.f32 %v2006, %v2602
      %v2731 = vmul.f32 %v2008, %v2603
      %v2732 = vmul.f32 %v2010, %v2604
      %v2733 = vmul.f32 %v2012, %v2605
      %v2734 = vmul.f32 %v2014, %v2606
      %v2735 = vmul.f32 %v2016, %v2607
      %v2736 = vmul.f32 %v2018, %v2608
      %v2737 = vmul.f32 %v2020, %v2609
      %v2738 = vmul.f32 %v2022, %v2610
      %v2739 = vmul.f32 %v2024, %v2611
      %v2740 = vmul.f32 %v2026, %v2612
      %v2741 = vmul.f32 %v2028, %v2613
      %v2742 = vmul.f32 %v2030, %v2614
      %v2743 = vmul.f32 %v2032, %v2615
      %v2744 = vmul.f32 %v2034, %v2616
      %v2745 = vmul.f32 %v2036, %v2617
      %v2746 = vmul.f32 %v2038, %v2618
      %v2747 = vmul.f32 %v2040, %v2619
      %v2748 = vmul.f32 %v2042, %v2620
      %v2749 = vmul.f32 %v2044, %v2621
      %v2750 = vmul.f32 %v2046, %v2622
      %v2751 = vmul.f32 %v2048, %v2623
      %v2752 = vmul.f32 %v2050, %v2624
      %v2753 = vmul.f32 %v2052, %v2625
      %v2754 = vmul.f32 %v2054, %v2626
      %v2755 = vmul.f32 %v2056, %v2627
      %v2756 = vmul.f32 %v2058, %v2628
      %v2757 = vmul.f32 %v2060, %v2629
      %v2758 = vmul.f32 %v2062, %v2630
      %v2759 = vmul.f32 %v2064, %v2631
      %v2760 = vmul.f32 %v2066, %v2632
      %v2761 = vmul.f32 %v2068, %v2633
      %v2762 = vmul.f32 %v2070, %v2634
      %v2763 = vmul.f32 %v2072, %v2635
      %v2764 = vmul.f32 %v2074, %v2636
      %v2765 = vmul.f32 %v2076, %v2637
      %v2766 = vmul.f32 %v2078, %v2638
      %v2767 = vmul.f32 %v2080, %v2639
      %v2768 = vmul.f32 %v2082, %v2640
      %v2769 = vmul.f32 %v2084, %v2641
      %v2770 = vmul.f32 %v2086, %v2642
      %v2771 = vmul.f32 %v2088, %v2643
      %v2772 = vmul.f32 %v2090, %v2644
      %v2773 = vmul.f32 %v2092, %v2645
      %v2774 = vmul.f32 %v2094, %v2646
      %v2775 = vmul.f32 %v2096, %v2647
      %v2776 = vmul.f32 %v2098, %v2648
      %v2777 = vmul.f32 %v2100, %v2649
      %v2778 = vmul.f32 %v2102, %v2650
      %v2779 = vmul.f32 %v2104, %v2651
      %v2780 = vmul.f32 %v2106, %v2652
      %v2781 = vmul.f32 %v2108, %v2653
      %v2782 = vmul.f32 %v2110, %v2654
      %v2783 = vmul.f32 %v2112, %v2655
      %v2784 = vmul.f32 %v2114, %v2656
      %v2785 = vmul.f32 %v2116, %v2657
      %v2786 = vmul.f32 %v2118, %v2658
      %v2787 = vmul.f32 %v2120, %v2659
      %v2788 = vmul.f32 %v2122, %v2660
      %v2789 = vmul.f32 %v2124, %v2661
      %v2790 = vmul.f32 %v2126, %v2662
      %v2791 = vmul.f32 %v2128, %v2663
      %v2792 = vmul.f32 %v2130, %v2664
      %v2793 = vmul.f32 %v2132, %v2665
      %v2794 = vmul.f32 %v2134, %v2666
      %v2795 = vmul.f32 %v2136, %v2667
      %v2796 = vmul.f32 %v2138, %v2668
      %v2797 = vmul.f32 %v2140, %v2669
      %v2798 = vmul.f32 %v2142, %v2670
      %v2799 = vmul.f32 %v2144, %v2671
      %v2800 = vmul.f32 %v2146, %v2672
      %v2801 = vmul.f32 %v2148, %v2673
      %v2802 = vmul.f32 %v2150, %v2674
      %v2803 = vmul.f32 %v2152, %v2675
      %v2804 = vmul.f32 %v2154, %v2676
      %v2805 = vmul.f32 %v2156, %v2677
      %v2806 = vmul.f32 %v2158, %v2678
      %v2807 = vmul.f32 %v2160, %v2679
      %v2808 = vmul.f32 %v2162, %v2680
      %v2809 = vmul.f32 %v2164, %v2681
      %v2810 = vmul.f32 %v2166, %v2682
      %v2811 = vmul.f32 %v2168, %v2683
      %v2812 = vmul.f32 %v2170, %v2684
      %v2813 = vmul.f32 %v2172, %v2685
      %v2814 = vmul.f32 %v2174, %v2686
      %2816 = vset.pattern.permute.xlu0 0
      %2817 = vperm.xlu0 %2816, %v2687
      %v2818 = vpop.permute.xlu0 %2817
      %2821 = vset.pattern.permute.xlu0 0
      %2822 = vperm.xlu0 %2821, %v2688
      %v2823 = vpop.permute.xlu0 %2822
      %2826 = vset.pattern.permute.xlu0 0
      %2827 = vperm.xlu0 %2826, %v2689
      %v2828 = vpop.permute.xlu0 %2827
      %2831 = vset.pattern.permute.xlu0 0
      %2832 = vperm.xlu0 %2831, %v2690
      %v2833 = vpop.permute.xlu0 %2832
      %2836 = vset.pattern.permute.xlu0 0
      %2837 = vperm.xlu0 %2836, %v2691
      %v2838 = vpop.permute.xlu0 %2837
      %2841 = vset.pattern.permute.xlu0 0
      %2842 = vperm.xlu0 %2841, %v2692
      %v2843 = vpop.permute.xlu0 %2842
      %2846 = vset.pattern.permute.xlu0 0
      %2847 = vperm.xlu0 %2846, %v2693
      %v2848 = vpop.permute.xlu0 %2847
      %2851 = vset.pattern.permute.xlu0 0
      %2852 = vperm.xlu0 %2851, %v2694
      %v2853 = vpop.permute.xlu0 %2852
      %2856 = vset.pattern.permute.xlu0 0
      %2857 = vperm.xlu0 %2856, %v2695
      %v2858 = vpop.permute.xlu0 %2857
      %2861 = vset.pattern.permute.xlu0 0
      %2862 = vperm.xlu0 %2861, %v2696
      %v2863 = vpop.permute.xlu0 %2862
      %2866 = vset.pattern.permute.xlu0 0
      %2867 = vperm.xlu0 %2866, %v2697
      %v2868 = vpop.permute.xlu0 %2867
      %2871 = vset.pattern.permute.xlu0 0
      %2872 = vperm.xlu0 %2871, %v2698
      %v2873 = vpop.permute.xlu0 %2872
      %2876 = vset.pattern.permute.xlu0 0
      %2877 = vperm.xlu0 %2876, %v2699
      %v2878 = vpop.permute.xlu0 %2877
      %2881 = vset.pattern.permute.xlu0 0
      %2882 = vperm.xlu0 %2881, %v2700
      %v2883 = vpop.permute.xlu0 %2882
      %2886 = vset.pattern.permute.xlu0 0
      %2887 = vperm.xlu0 %2886, %v2701
      %v2888 = vpop.permute.xlu0 %2887
      %2891 = vset.pattern.permute.xlu0 0
      %2892 = vperm.xlu0 %2891, %v2702
      %v2893 = vpop.permute.xlu0 %2892
      %2896 = vset.pattern.permute.xlu0 0
      %2897 = vperm.xlu0 %2896, %v2703
      %v2898 = vpop.permute.xlu0 %2897
      %2901 = vset.pattern.permute.xlu0 0
      %2902 = vperm.xlu0 %2901, %v2704
      %v2903 = vpop.permute.xlu0 %2902
      %2906 = vset.pattern.permute.xlu0 0
      %2907 = vperm.xlu0 %2906, %v2705
      %v2908 = vpop.permute.xlu0 %2907
      %2911 = vset.pattern.permute.xlu0 0
      %2912 = vperm.xlu0 %2911, %v2706
      %v2913 = vpop.permute.xlu0 %2912
      %2916 = vset.pattern.permute.xlu0 0
      %2917 = vperm.xlu0 %2916, %v2707
      %v2918 = vpop.permute.xlu0 %2917
      %2921 = vset.pattern.permute.xlu0 0
      %2922 = vperm.xlu0 %2921, %v2708
      %v2923 = vpop.permute.xlu0 %2922
      %2926 = vset.pattern.permute.xlu0 0
      %2927 = vperm.xlu0 %2926, %v2709
      %v2928 = vpop.permute.xlu0 %2927
      %2931 = vset.pattern.permute.xlu0 0
      %2932 = vperm.xlu0 %2931, %v2710
      %v2933 = vpop.permute.xlu0 %2932
      %2936 = vset.pattern.permute.xlu0 0
      %2937 = vperm.xlu0 %2936, %v2711
      %v2938 = vpop.permute.xlu0 %2937
      %2941 = vset.pattern.permute.xlu0 0
      %2942 = vperm.xlu0 %2941, %v2712
      %v2943 = vpop.permute.xlu0 %2942
      %2946 = vset.pattern.permute.xlu0 0
      %2947 = vperm.xlu0 %2946, %v2713
      %v2948 = vpop.permute.xlu0 %2947
      %2951 = vset.pattern.permute.xlu0 0
      %2952 = vperm.xlu0 %2951, %v2714
      %v2953 = vpop.permute.xlu0 %2952
      %2956 = vset.pattern.permute.xlu0 0
      %2957 = vperm.xlu0 %2956, %v2715
      %v2958 = vpop.permute.xlu0 %2957
      %2961 = vset.pattern.permute.xlu0 0
      %2962 = vperm.xlu0 %2961, %v2716
      %v2963 = vpop.permute.xlu0 %2962
      %2966 = vset.pattern.permute.xlu0 0
      %2967 = vperm.xlu0 %2966, %v2717
      %v2968 = vpop.permute.xlu0 %2967
      %2971 = vset.pattern.permute.xlu0 0
      %2972 = vperm.xlu0 %2971, %v2718
      %v2973 = vpop.permute.xlu0 %2972
      %2976 = vset.pattern.permute.xlu0 0
      %2977 = vperm.xlu0 %2976, %v2719
      %v2978 = vpop.permute.xlu0 %2977
      %2981 = vset.pattern.permute.xlu0 0
      %2982 = vperm.xlu0 %2981, %v2720
      %v2983 = vpop.permute.xlu0 %2982
      %2986 = vset.pattern.permute.xlu0 0
      %2987 = vperm.xlu0 %2986, %v2721
      %v2988 = vpop.permute.xlu0 %2987
      %2991 = vset.pattern.permute.xlu0 0
      %2992 = vperm.xlu0 %2991, %v2722
      %v2993 = vpop.permute.xlu0 %2992
      %2996 = vset.pattern.permute.xlu0 0
      %2997 = vperm.xlu0 %2996, %v2723
      %v2998 = vpop.permute.xlu0 %2997
      %3001 = vset.pattern.permute.xlu0 0
      %3002 = vperm.xlu0 %3001, %v2724
      %v3003 = vpop.permute.xlu0 %3002
      %3006 = vset.pattern.permute.xlu0 0
      %3007 = vperm.xlu0 %3006, %v2725
      %v3008 = vpop.permute.xlu0 %3007
      %3011 = vset.pattern.permute.xlu0 0
      %3012 = vperm.xlu0 %3011, %v2726
      %v3013 = vpop.permute.xlu0 %3012
      %3016 = vset.pattern.permute.xlu0 0
      %3017 = vperm.xlu0 %3016, %v2727
      %v3018 = vpop.permute.xlu0 %3017
      %3021 = vset.pattern.permute.xlu0 0
      %3022 = vperm.xlu0 %3021, %v2728
      %v3023 = vpop.permute.xlu0 %3022
      %3026 = vset.pattern.permute.xlu0 0
      %3027 = vperm.xlu0 %3026, %v2729
      %v3028 = vpop.permute.xlu0 %3027
      %3031 = vset.pattern.permute.xlu0 0
      %3032 = vperm.xlu0 %3031, %v2730
      %v3033 = vpop.permute.xlu0 %3032
      %3036 = vset.pattern.permute.xlu0 0
      %3037 = vperm.xlu0 %3036, %v2731
      %v3038 = vpop.permute.xlu0 %3037
      %3041 = vset.pattern.permute.xlu0 0
      %3042 = vperm.xlu0 %3041, %v2732
      %v3043 = vpop.permute.xlu0 %3042
      %3046 = vset.pattern.permute.xlu0 0
      %3047 = vperm.xlu0 %3046, %v2733
      %v3048 = vpop.permute.xlu0 %3047
      %3051 = vset.pattern.permute.xlu0 0
      %3052 = vperm.xlu0 %3051, %v2734
      %v3053 = vpop.permute.xlu0 %3052
      %3056 = vset.pattern.permute.xlu0 0
      %3057 = vperm.xlu0 %3056, %v2735
      %v3058 = vpop.permute.xlu0 %3057
      %3061 = vset.pattern.permute.xlu0 0
      %3062 = vperm.xlu0 %3061, %v2736
      %v3063 = vpop.permute.xlu0 %3062
      %3066 = vset.pattern.permute.xlu0 0
      %3067 = vperm.xlu0 %3066, %v2737
      %v3068 = vpop.permute.xlu0 %3067
      %3071 = vset.pattern.permute.xlu0 0
      %3072 = vperm.xlu0 %3071, %v2738
      %v3073 = vpop.permute.xlu0 %3072
      %3076 = vset.pattern.permute.xlu0 0
      %3077 = vperm.xlu0 %3076, %v2739
      %v3078 = vpop.permute.xlu0 %3077
      %3081 = vset.pattern.permute.xlu0 0
      %3082 = vperm.xlu0 %3081, %v2740
      %v3083 = vpop.permute.xlu0 %3082
      %3086 = vset.pattern.permute.xlu0 0
      %3087 = vperm.xlu0 %3086, %v2741
      %v3088 = vpop.permute.xlu0 %3087
      %3091 = vset.pattern.permute.xlu0 0
      %3092 = vperm.xlu0 %3091, %v2742
      %v3093 = vpop.permute.xlu0 %3092
      %3096 = vset.pattern.permute.xlu0 0
      %3097 = vperm.xlu0 %3096, %v2743
      %v3098 = vpop.permute.xlu0 %3097
      %3101 = vset.pattern.permute.xlu0 0
      %3102 = vperm.xlu0 %3101, %v2744
      %v3103 = vpop.permute.xlu0 %3102
      %3106 = vset.pattern.permute.xlu0 0
      %3107 = vperm.xlu0 %3106, %v2745
      %v3108 = vpop.permute.xlu0 %3107
      %3111 = vset.pattern.permute.xlu0 0
      %3112 = vperm.xlu0 %3111, %v2746
      %v3113 = vpop.permute.xlu0 %3112
      %3116 = vset.pattern.permute.xlu0 0
      %3117 = vperm.xlu0 %3116, %v2747
      %v3118 = vpop.permute.xlu0 %3117
      %3121 = vset.pattern.permute.xlu0 0
      %3122 = vperm.xlu0 %3121, %v2748
      %v3123 = vpop.permute.xlu0 %3122
      %3126 = vset.pattern.permute.xlu0 0
      %3127 = vperm.xlu0 %3126, %v2749
      %v3128 = vpop.permute.xlu0 %3127
      %3131 = vset.pattern.permute.xlu0 0
      %3132 = vperm.xlu0 %3131, %v2750
      %v3133 = vpop.permute.xlu0 %3132
      %3136 = vset.pattern.permute.xlu0 0
      %3137 = vperm.xlu0 %3136, %v2751
      %v3138 = vpop.permute.xlu0 %3137
      %3141 = vset.pattern.permute.xlu0 0
      %3142 = vperm.xlu0 %3141, %v2752
      %v3143 = vpop.permute.xlu0 %3142
      %3146 = vset.pattern.permute.xlu0 0
      %3147 = vperm.xlu0 %3146, %v2753
      %v3148 = vpop.permute.xlu0 %3147
      %3151 = vset.pattern.permute.xlu0 0
      %3152 = vperm.xlu0 %3151, %v2754
      %v3153 = vpop.permute.xlu0 %3152
      %3156 = vset.pattern.permute.xlu0 0
      %3157 = vperm.xlu0 %3156, %v2755
      %v3158 = vpop.permute.xlu0 %3157
      %3161 = vset.pattern.permute.xlu0 0
      %3162 = vperm.xlu0 %3161, %v2756
      %v3163 = vpop.permute.xlu0 %3162
      %3166 = vset.pattern.permute.xlu0 0
      %3167 = vperm.xlu0 %3166, %v2757
      %v3168 = vpop.permute.xlu0 %3167
      %3171 = vset.pattern.permute.xlu0 0
      %3172 = vperm.xlu0 %3171, %v2758
      %v3173 = vpop.permute.xlu0 %3172
      %3176 = vset.pattern.permute.xlu0 0
      %3177 = vperm.xlu0 %3176, %v2759
      %v3178 = vpop.permute.xlu0 %3177
      %3181 = vset.pattern.permute.xlu0 0
      %3182 = vperm.xlu0 %3181, %v2760
      %v3183 = vpop.permute.xlu0 %3182
      %3186 = vset.pattern.permute.xlu0 0
      %3187 = vperm.xlu0 %3186, %v2761
      %v3188 = vpop.permute.xlu0 %3187
      %3191 = vset.pattern.permute.xlu0 0
      %3192 = vperm.xlu0 %3191, %v2762
      %v3193 = vpop.permute.xlu0 %3192
      %3196 = vset.pattern.permute.xlu0 0
      %3197 = vperm.xlu0 %3196, %v2763
      %v3198 = vpop.permute.xlu0 %3197
      %3201 = vset.pattern.permute.xlu0 0
      %3202 = vperm.xlu0 %3201, %v2764
      %v3203 = vpop.permute.xlu0 %3202
      %3206 = vset.pattern.permute.xlu0 0
      %3207 = vperm.xlu0 %3206, %v2765
      %v3208 = vpop.permute.xlu0 %3207
      %3211 = vset.pattern.permute.xlu0 0
      %3212 = vperm.xlu0 %3211, %v2766
      %v3213 = vpop.permute.xlu0 %3212
      %3216 = vset.pattern.permute.xlu0 0
      %3217 = vperm.xlu0 %3216, %v2767
      %v3218 = vpop.permute.xlu0 %3217
      %3221 = vset.pattern.permute.xlu0 0
      %3222 = vperm.xlu0 %3221, %v2768
      %v3223 = vpop.permute.xlu0 %3222
      %3226 = vset.pattern.permute.xlu0 0
      %3227 = vperm.xlu0 %3226, %v2769
      %v3228 = vpop.permute.xlu0 %3227
      %3231 = vset.pattern.permute.xlu0 0
      %3232 = vperm.xlu0 %3231, %v2770
      %v3233 = vpop.permute.xlu0 %3232
      %3236 = vset.pattern.permute.xlu0 0
      %3237 = vperm.xlu0 %3236, %v2771
      %v3238 = vpop.permute.xlu0 %3237
      %3241 = vset.pattern.permute.xlu0 0
      %3242 = vperm.xlu0 %3241, %v2772
      %v3243 = vpop.permute.xlu0 %3242
      %3246 = vset.pattern.permute.xlu0 0
      %3247 = vperm.xlu0 %3246, %v2773
      %v3248 = vpop.permute.xlu0 %3247
      %3251 = vset.pattern.permute.xlu0 0
      %3252 = vperm.xlu0 %3251, %v2774
      %v3253 = vpop.permute.xlu0 %3252
      %3256 = vset.pattern.permute.xlu0 0
      %3257 = vperm.xlu0 %3256, %v2775
      %v3258 = vpop.permute.xlu0 %3257
      %3261 = vset.pattern.permute.xlu0 0
      %3262 = vperm.xlu0 %3261, %v2776
      %v3263 = vpop.permute.xlu0 %3262
      %3266 = vset.pattern.permute.xlu0 0
      %3267 = vperm.xlu0 %3266, %v2777
      %v3268 = vpop.permute.xlu0 %3267
      %3271 = vset.pattern.permute.xlu0 0
      %3272 = vperm.xlu0 %3271, %v2778
      %v3273 = vpop.permute.xlu0 %3272
      %3276 = vset.pattern.permute.xlu0 0
      %3277 = vperm.xlu0 %3276, %v2779
      %v3278 = vpop.permute.xlu0 %3277
      %3281 = vset.pattern.permute.xlu0 0
      %3282 = vperm.xlu0 %3281, %v2780
      %v3283 = vpop.permute.xlu0 %3282
      %3286 = vset.pattern.permute.xlu0 0
      %3287 = vperm.xlu0 %3286, %v2781
      %v3288 = vpop.permute.xlu0 %3287
      %3291 = vset.pattern.permute.xlu0 0
      %3292 = vperm.xlu0 %3291, %v2782
      %v3293 = vpop.permute.xlu0 %3292
      %3296 = vset.pattern.permute.xlu0 0
      %3297 = vperm.xlu0 %3296, %v2783
      %v3298 = vpop.permute.xlu0 %3297
      %3301 = vset.pattern.permute.xlu0 0
      %3302 = vperm.xlu0 %3301, %v2784
      %v3303 = vpop.permute.xlu0 %3302
      %3306 = vset.pattern.permute.xlu0 0
      %3307 = vperm.xlu0 %3306, %v2785
      %v3308 = vpop.permute.xlu0 %3307
      %3311 = vset.pattern.permute.xlu0 0
      %3312 = vperm.xlu0 %3311, %v2786
      %v3313 = vpop.permute.xlu0 %3312
      %3316 = vset.pattern.permute.xlu0 0
      %3317 = vperm.xlu0 %3316, %v2787
      %v3318 = vpop.permute.xlu0 %3317
      %3321 = vset.pattern.permute.xlu0 0
      %3322 = vperm.xlu0 %3321, %v2788
      %v3323 = vpop.permute.xlu0 %3322
      %3326 = vset.pattern.permute.xlu0 0
      %3327 = vperm.xlu0 %3326, %v2789
      %v3328 = vpop.permute.xlu0 %3327
      %3331 = vset.pattern.permute.xlu0 0
      %3332 = vperm.xlu0 %3331, %v2790
      %v3333 = vpop.permute.xlu0 %3332
      %3336 = vset.pattern.permute.xlu0 0
      %3337 = vperm.xlu0 %3336, %v2791
      %v3338 = vpop.permute.xlu0 %3337
      %3341 = vset.pattern.permute.xlu0 0
      %3342 = vperm.xlu0 %3341, %v2792
      %v3343 = vpop.permute.xlu0 %3342
      %3346 = vset.pattern.permute.xlu0 0
      %3347 = vperm.xlu0 %3346, %v2793
      %v3348 = vpop.permute.xlu0 %3347
      %3351 = vset.pattern.permute.xlu0 0
      %3352 = vperm.xlu0 %3351, %v2794
      %v3353 = vpop.permute.xlu0 %3352
      %3356 = vset.pattern.permute.xlu0 0
      %3357 = vperm.xlu0 %3356, %v2795
      %v3358 = vpop.permute.xlu0 %3357
      %3361 = vset.pattern.permute.xlu0 0
      %3362 = vperm.xlu0 %3361, %v2796
      %v3363 = vpop.permute.xlu0 %3362
      %3366 = vset.pattern.permute.xlu0 0
      %3367 = vperm.xlu0 %3366, %v2797
      %v3368 = vpop.permute.xlu0 %3367
      %3371 = vset.pattern.permute.xlu0 0
      %3372 = vperm.xlu0 %3371, %v2798
      %v3373 = vpop.permute.xlu0 %3372
      %3376 = vset.pattern.permute.xlu0 0
      %3377 = vperm.xlu0 %3376, %v2799
      %v3378 = vpop.permute.xlu0 %3377
      %3381 = vset.pattern.permute.xlu0 0
      %3382 = vperm.xlu0 %3381, %v2800
      %v3383 = vpop.permute.xlu0 %3382
      %3386 = vset.pattern.permute.xlu0 0
      %3387 = vperm.xlu0 %3386, %v2801
      %v3388 = vpop.permute.xlu0 %3387
      %3391 = vset.pattern.permute.xlu0 0
      %3392 = vperm.xlu0 %3391, %v2802
      %v3393 = vpop.permute.xlu0 %3392
      %3396 = vset.pattern.permute.xlu0 0
      %3397 = vperm.xlu0 %3396, %v2803
      %v3398 = vpop.permute.xlu0 %3397
      %3401 = vset.pattern.permute.xlu0 0
      %3402 = vperm.xlu0 %3401, %v2804
      %v3403 = vpop.permute.xlu0 %3402
      %3406 = vset.pattern.permute.xlu0 0
      %3407 = vperm.xlu0 %3406, %v2805
      %v3408 = vpop.permute.xlu0 %3407
      %3411 = vset.pattern.permute.xlu0 0
      %3412 = vperm.xlu0 %3411, %v2806
      %v3413 = vpop.permute.xlu0 %3412
      %3416 = vset.pattern.permute.xlu0 0
      %3417 = vperm.xlu0 %3416, %v2807
      %v3418 = vpop.permute.xlu0 %3417
      %3421 = vset.pattern.permute.xlu0 0
      %3422 = vperm.xlu0 %3421, %v2808
      %v3423 = vpop.permute.xlu0 %3422
      %3426 = vset.pattern.permute.xlu0 0
      %3427 = vperm.xlu0 %3426, %v2809
      %v3428 = vpop.permute.xlu0 %3427
      %3431 = vset.pattern.permute.xlu0 0
      %3432 = vperm.xlu0 %3431, %v2810
      %v3433 = vpop.permute.xlu0 %3432
      %3436 = vset.pattern.permute.xlu0 0
      %3437 = vperm.xlu0 %3436, %v2811
      %v3438 = vpop.permute.xlu0 %3437
      %3441 = vset.pattern.permute.xlu0 0
      %3442 = vperm.xlu0 %3441, %v2812
      %v3443 = vpop.permute.xlu0 %3442
      %3446 = vset.pattern.permute.xlu0 0
      %3447 = vperm.xlu0 %3446, %v2813
      %v3448 = vpop.permute.xlu0 %3447
      %3451 = vset.pattern.permute.xlu0 0
      %3452 = vperm.xlu0 %3451, %v2814
      %v3453 = vpop.permute.xlu0 %3452
      %v3455 = vlaneseq
      %v3456 = vshrl.u32 %v3455, 7
      %v3457 = vsub.s32 0, %v3456
      %v3458 = vrot.slane %v174, %v3457
      %v3459 = vlaneseq
      %v3460 = vshrl.u32 %v3459, 7
      %v3461 = vsub.s32 0, %v3460
      %v3462 = vrot.slane %v175, %v3461
      %v3463 = vlaneseq
      %v3464 = vshrl.u32 %v3463, 7
      %v3465 = vsub.s32 0, %v3464
      %v3466 = vrot.slane %v176, %v3465
      %v3467 = vlaneseq
      %v3468 = vshrl.u32 %v3467, 7
      %v3469 = vsub.s32 0, %v3468
      %v3470 = vrot.slane %v177, %v3469
      %v3471 = vlaneseq
      %v3472 = vshrl.u32 %v3471, 7
      %v3473 = vsub.s32 0, %v3472
      %v3474 = vrot.slane %v178, %v3473
      %v3475 = vlaneseq
      %v3476 = vshrl.u32 %v3475, 7
      %v3477 = vsub.s32 0, %v3476
      %v3478 = vrot.slane %v179, %v3477
      %v3479 = vlaneseq
      %v3480 = vshrl.u32 %v3479, 7
      %v3481 = vsub.s32 0, %v3480
      %v3482 = vrot.slane %v180, %v3481
      %v3483 = vlaneseq
      %v3484 = vshrl.u32 %v3483, 7
      %v3485 = vsub.s32 0, %v3484
      %v3486 = vrot.slane %v181, %v3485
      %v3487 = vlaneseq
      %v3488 = vshrl.u32 %v3487, 7
      %v3489 = vsub.s32 0, %v3488
      %v3490 = vrot.slane %v182, %v3489
      %v3491 = vlaneseq
      %v3492 = vshrl.u32 %v3491, 7
      %v3493 = vsub.s32 0, %v3492
      %v3494 = vrot.slane %v183, %v3493
      %v3495 = vlaneseq
      %v3496 = vshrl.u32 %v3495, 7
      %v3497 = vsub.s32 0, %v3496
      %v3498 = vrot.slane %v184, %v3497
      %v3499 = vlaneseq
      %v3500 = vshrl.u32 %v3499, 7
      %v3501 = vsub.s32 0, %v3500
      %v3502 = vrot.slane %v185, %v3501
      %v3503 = vlaneseq
      %v3504 = vshrl.u32 %v3503, 7
      %v3505 = vsub.s32 0, %v3504
      %v3506 = vrot.slane %v186, %v3505
      %v3507 = vlaneseq
      %v3508 = vshrl.u32 %v3507, 7
      %v3509 = vsub.s32 0, %v3508
      %v3510 = vrot.slane %v187, %v3509
      %v3511 = vlaneseq
      %v3512 = vshrl.u32 %v3511, 7
      %v3513 = vsub.s32 0, %v3512
      %v3514 = vrot.slane %v188, %v3513
      %v3515 = vlaneseq
      %v3516 = vshrl.u32 %v3515, 7
      %v3517 = vsub.s32 0, %v3516
      %v3518 = vrot.slane %v189, %v3517
      %v3519 = vlaneseq
      %v3520 = vshrl.u32 %v3519, 7
      %v3521 = vsub.s32 0, %v3520
      %v3522 = vrot.slane %v190, %v3521
      %v3523 = vlaneseq
      %v3524 = vshrl.u32 %v3523, 7
      %v3525 = vsub.s32 0, %v3524
      %v3526 = vrot.slane %v191, %v3525
      %v3527 = vlaneseq
      %v3528 = vshrl.u32 %v3527, 7
      %v3529 = vsub.s32 0, %v3528
      %v3530 = vrot.slane %v192, %v3529
      %v3531 = vlaneseq
      %v3532 = vshrl.u32 %v3531, 7
      %v3533 = vsub.s32 0, %v3532
      %v3534 = vrot.slane %v193, %v3533
      %v3535 = vlaneseq
      %v3536 = vshrl.u32 %v3535, 7
      %v3537 = vsub.s32 0, %v3536
      %v3538 = vrot.slane %v194, %v3537
      %v3539 = vlaneseq
      %v3540 = vshrl.u32 %v3539, 7
      %v3541 = vsub.s32 0, %v3540
      %v3542 = vrot.slane %v195, %v3541
      %v3543 = vlaneseq
      %v3544 = vshrl.u32 %v3543, 7
      %v3545 = vsub.s32 0, %v3544
      %v3546 = vrot.slane %v196, %v3545
      %v3547 = vlaneseq
      %v3548 = vshrl.u32 %v3547, 7
      %v3549 = vsub.s32 0, %v3548
      %v3550 = vrot.slane %v197, %v3549
      %v3551 = vlaneseq
      %v3552 = vshrl.u32 %v3551, 7
      %v3553 = vsub.s32 0, %v3552
      %v3554 = vrot.slane %v198, %v3553
      %v3555 = vlaneseq
      %v3556 = vshrl.u32 %v3555, 7
      %v3557 = vsub.s32 0, %v3556
      %v3558 = vrot.slane %v199, %v3557
      %v3559 = vlaneseq
      %v3560 = vshrl.u32 %v3559, 7
      %v3561 = vsub.s32 0, %v3560
      %v3562 = vrot.slane %v200, %v3561
      %v3563 = vlaneseq
      %v3564 = vshrl.u32 %v3563, 7
      %v3565 = vsub.s32 0, %v3564
      %v3566 = vrot.slane %v201, %v3565
      %v3567 = vlaneseq
      %v3568 = vshrl.u32 %v3567, 7
      %v3569 = vsub.s32 0, %v3568
      %v3570 = vrot.slane %v202, %v3569
      %v3571 = vlaneseq
      %v3572 = vshrl.u32 %v3571, 7
      %v3573 = vsub.s32 0, %v3572
      %v3574 = vrot.slane %v203, %v3573
      %v3575 = vlaneseq
      %v3576 = vshrl.u32 %v3575, 7
      %v3577 = vsub.s32 0, %v3576
      %v3578 = vrot.slane %v204, %v3577
      %v3579 = vlaneseq
      %v3580 = vshrl.u32 %v3579, 7
      %v3581 = vsub.s32 0, %v3580
      %v3582 = vrot.slane %v205, %v3581
      %v3583 = vlaneseq
      %v3584 = vshrl.u32 %v3583, 7
      %v3585 = vsub.s32 0, %v3584
      %v3586 = vrot.slane %v206, %v3585
      %v3587 = vlaneseq
      %v3588 = vshrl.u32 %v3587, 7
      %v3589 = vsub.s32 0, %v3588
      %v3590 = vrot.slane %v207, %v3589
      %v3591 = vlaneseq
      %v3592 = vshrl.u32 %v3591, 7
      %v3593 = vsub.s32 0, %v3592
      %v3594 = vrot.slane %v208, %v3593
      %v3595 = vlaneseq
      %v3596 = vshrl.u32 %v3595, 7
      %v3597 = vsub.s32 0, %v3596
      %v3598 = vrot.slane %v209, %v3597
      %v3599 = vlaneseq
      %v3600 = vshrl.u32 %v3599, 7
      %v3601 = vsub.s32 0, %v3600
      %v3602 = vrot.slane %v210, %v3601
      %v3603 = vlaneseq
      %v3604 = vshrl.u32 %v3603, 7
      %v3605 = vsub.s32 0, %v3604
      %v3606 = vrot.slane %v211, %v3605
      %v3607 = vlaneseq
      %v3608 = vshrl.u32 %v3607, 7
      %v3609 = vsub.s32 0, %v3608
      %v3610 = vrot.slane %v212, %v3609
      %v3611 = vlaneseq
      %v3612 = vshrl.u32 %v3611, 7
      %v3613 = vsub.s32 0, %v3612
      %v3614 = vrot.slane %v213, %v3613
      %v3615 = vlaneseq
      %v3616 = vshrl.u32 %v3615, 7
      %v3617 = vsub.s32 0, %v3616
      %v3618 = vrot.slane %v214, %v3617
      %v3619 = vlaneseq
      %v3620 = vshrl.u32 %v3619, 7
      %v3621 = vsub.s32 0, %v3620
      %v3622 = vrot.slane %v215, %v3621
      %v3623 = vlaneseq
      %v3624 = vshrl.u32 %v3623, 7
      %v3625 = vsub.s32 0, %v3624
      %v3626 = vrot.slane %v216, %v3625
      %v3627 = vlaneseq
      %v3628 = vshrl.u32 %v3627, 7
      %v3629 = vsub.s32 0, %v3628
      %v3630 = vrot.slane %v217, %v3629
      %v3631 = vlaneseq
      %v3632 = vshrl.u32 %v3631, 7
      %v3633 = vsub.s32 0, %v3632
      %v3634 = vrot.slane %v218, %v3633
      %v3635 = vlaneseq
      %v3636 = vshrl.u32 %v3635, 7
      %v3637 = vsub.s32 0, %v3636
      %v3638 = vrot.slane %v219, %v3637
      %v3639 = vlaneseq
      %v3640 = vshrl.u32 %v3639, 7
      %v3641 = vsub.s32 0, %v3640
      %v3642 = vrot.slane %v220, %v3641
      %v3643 = vlaneseq
      %v3644 = vshrl.u32 %v3643, 7
      %v3645 = vsub.s32 0, %v3644
      %v3646 = vrot.slane %v221, %v3645
      %v3647 = vlaneseq
      %v3648 = vshrl.u32 %v3647, 7
      %v3649 = vsub.s32 0, %v3648
      %v3650 = vrot.slane %v222, %v3649
      %v3651 = vlaneseq
      %v3652 = vshrl.u32 %v3651, 7
      %v3653 = vsub.s32 0, %v3652
      %v3654 = vrot.slane %v223, %v3653
      %v3655 = vlaneseq
      %v3656 = vshrl.u32 %v3655, 7
      %v3657 = vsub.s32 0, %v3656
      %v3658 = vrot.slane %v224, %v3657
      %v3659 = vlaneseq
      %v3660 = vshrl.u32 %v3659, 7
      %v3661 = vsub.s32 0, %v3660
      %v3662 = vrot.slane %v225, %v3661
      %v3663 = vlaneseq
      %v3664 = vshrl.u32 %v3663, 7
      %v3665 = vsub.s32 0, %v3664
      %v3666 = vrot.slane %v226, %v3665
      %v3667 = vlaneseq
      %v3668 = vshrl.u32 %v3667, 7
      %v3669 = vsub.s32 0, %v3668
      %v3670 = vrot.slane %v227, %v3669
      %v3671 = vlaneseq
      %v3672 = vshrl.u32 %v3671, 7
      %v3673 = vsub.s32 0, %v3672
      %v3674 = vrot.slane %v228, %v3673
      %v3675 = vlaneseq
      %v3676 = vshrl.u32 %v3675, 7
      %v3677 = vsub.s32 0, %v3676
      %v3678 = vrot.slane %v229, %v3677
      %v3679 = vlaneseq
      %v3680 = vshrl.u32 %v3679, 7
      %v3681 = vsub.s32 0, %v3680
      %v3682 = vrot.slane %v230, %v3681
      %v3683 = vlaneseq
      %v3684 = vshrl.u32 %v3683, 7
      %v3685 = vsub.s32 0, %v3684
      %v3686 = vrot.slane %v231, %v3685
      %v3687 = vlaneseq
      %v3688 = vshrl.u32 %v3687, 7
      %v3689 = vsub.s32 0, %v3688
      %v3690 = vrot.slane %v232, %v3689
      %v3691 = vlaneseq
      %v3692 = vshrl.u32 %v3691, 7
      %v3693 = vsub.s32 0, %v3692
      %v3694 = vrot.slane %v233, %v3693
      %v3695 = vlaneseq
      %v3696 = vshrl.u32 %v3695, 7
      %v3697 = vsub.s32 0, %v3696
      %v3698 = vrot.slane %v234, %v3697
      %v3699 = vlaneseq
      %v3700 = vshrl.u32 %v3699, 7
      %v3701 = vsub.s32 0, %v3700
      %v3702 = vrot.slane %v235, %v3701
      %v3703 = vlaneseq
      %v3704 = vshrl.u32 %v3703, 7
      %v3705 = vsub.s32 0, %v3704
      %v3706 = vrot.slane %v236, %v3705
      %v3707 = vlaneseq
      %v3708 = vshrl.u32 %v3707, 7
      %v3709 = vsub.s32 0, %v3708
      %v3710 = vrot.slane %v237, %v3709
      %v3711 = vlaneseq
      %v3712 = vshrl.u32 %v3711, 7
      %v3713 = vsub.s32 0, %v3712
      %v3714 = vrot.slane %v238, %v3713
      %v3715 = vlaneseq
      %v3716 = vshrl.u32 %v3715, 7
      %v3717 = vsub.s32 0, %v3716
      %v3718 = vrot.slane %v239, %v3717
      %v3719 = vlaneseq
      %v3720 = vshrl.u32 %v3719, 7
      %v3721 = vsub.s32 0, %v3720
      %v3722 = vrot.slane %v240, %v3721
      %v3723 = vlaneseq
      %v3724 = vshrl.u32 %v3723, 7
      %v3725 = vsub.s32 0, %v3724
      %v3726 = vrot.slane %v241, %v3725
      %v3727 = vlaneseq
      %v3728 = vshrl.u32 %v3727, 7
      %v3729 = vsub.s32 0, %v3728
      %v3730 = vrot.slane %v242, %v3729
      %v3731 = vlaneseq
      %v3732 = vshrl.u32 %v3731, 7
      %v3733 = vsub.s32 0, %v3732
      %v3734 = vrot.slane %v243, %v3733
      %v3735 = vlaneseq
      %v3736 = vshrl.u32 %v3735, 7
      %v3737 = vsub.s32 0, %v3736
      %v3738 = vrot.slane %v244, %v3737
      %v3739 = vlaneseq
      %v3740 = vshrl.u32 %v3739, 7
      %v3741 = vsub.s32 0, %v3740
      %v3742 = vrot.slane %v245, %v3741
      %v3743 = vlaneseq
      %v3744 = vshrl.u32 %v3743, 7
      %v3745 = vsub.s32 0, %v3744
      %v3746 = vrot.slane %v246, %v3745
      %v3747 = vlaneseq
      %v3748 = vshrl.u32 %v3747, 7
      %v3749 = vsub.s32 0, %v3748
      %v3750 = vrot.slane %v247, %v3749
      %v3751 = vlaneseq
      %v3752 = vshrl.u32 %v3751, 7
      %v3753 = vsub.s32 0, %v3752
      %v3754 = vrot.slane %v248, %v3753
      %v3755 = vlaneseq
      %v3756 = vshrl.u32 %v3755, 7
      %v3757 = vsub.s32 0, %v3756
      %v3758 = vrot.slane %v249, %v3757
      %v3759 = vlaneseq
      %v3760 = vshrl.u32 %v3759, 7
      %v3761 = vsub.s32 0, %v3760
      %v3762 = vrot.slane %v250, %v3761
      %v3763 = vlaneseq
      %v3764 = vshrl.u32 %v3763, 7
      %v3765 = vsub.s32 0, %v3764
      %v3766 = vrot.slane %v251, %v3765
      %v3767 = vlaneseq
      %v3768 = vshrl.u32 %v3767, 7
      %v3769 = vsub.s32 0, %v3768
      %v3770 = vrot.slane %v252, %v3769
      %v3771 = vlaneseq
      %v3772 = vshrl.u32 %v3771, 7
      %v3773 = vsub.s32 0, %v3772
      %v3774 = vrot.slane %v253, %v3773
      %v3775 = vlaneseq
      %v3776 = vshrl.u32 %v3775, 7
      %v3777 = vsub.s32 0, %v3776
      %v3778 = vrot.slane %v254, %v3777
      %v3779 = vlaneseq
      %v3780 = vshrl.u32 %v3779, 7
      %v3781 = vsub.s32 0, %v3780
      %v3782 = vrot.slane %v255, %v3781
      %v3783 = vlaneseq
      %v3784 = vshrl.u32 %v3783, 7
      %v3785 = vsub.s32 0, %v3784
      %v3786 = vrot.slane %v256, %v3785
      %v3787 = vlaneseq
      %v3788 = vshrl.u32 %v3787, 7
      %v3789 = vsub.s32 0, %v3788
      %v3790 = vrot.slane %v257, %v3789
      %v3791 = vlaneseq
      %v3792 = vshrl.u32 %v3791, 7
      %v3793 = vsub.s32 0, %v3792
      %v3794 = vrot.slane %v258, %v3793
      %v3795 = vlaneseq
      %v3796 = vshrl.u32 %v3795, 7
      %v3797 = vsub.s32 0, %v3796
      %v3798 = vrot.slane %v259, %v3797
      %v3799 = vlaneseq
      %v3800 = vshrl.u32 %v3799, 7
      %v3801 = vsub.s32 0, %v3800
      %v3802 = vrot.slane %v260, %v3801
      %v3803 = vlaneseq
      %v3804 = vshrl.u32 %v3803, 7
      %v3805 = vsub.s32 0, %v3804
      %v3806 = vrot.slane %v261, %v3805
      %v3807 = vlaneseq
      %v3808 = vshrl.u32 %v3807, 7
      %v3809 = vsub.s32 0, %v3808
      %v3810 = vrot.slane %v262, %v3809
      %v3811 = vlaneseq
      %v3812 = vshrl.u32 %v3811, 7
      %v3813 = vsub.s32 0, %v3812
      %v3814 = vrot.slane %v263, %v3813
      %v3815 = vlaneseq
      %v3816 = vshrl.u32 %v3815, 7
      %v3817 = vsub.s32 0, %v3816
      %v3818 = vrot.slane %v264, %v3817
      %v3819 = vlaneseq
      %v3820 = vshrl.u32 %v3819, 7
      %v3821 = vsub.s32 0, %v3820
      %v3822 = vrot.slane %v265, %v3821
      %v3823 = vlaneseq
      %v3824 = vshrl.u32 %v3823, 7
      %v3825 = vsub.s32 0, %v3824
      %v3826 = vrot.slane %v266, %v3825
      %v3827 = vlaneseq
      %v3828 = vshrl.u32 %v3827, 7
      %v3829 = vsub.s32 0, %v3828
      %v3830 = vrot.slane %v267, %v3829
      %v3831 = vlaneseq
      %v3832 = vshrl.u32 %v3831, 7
      %v3833 = vsub.s32 0, %v3832
      %v3834 = vrot.slane %v268, %v3833
      %v3835 = vlaneseq
      %v3836 = vshrl.u32 %v3835, 7
      %v3837 = vsub.s32 0, %v3836
      %v3838 = vrot.slane %v269, %v3837
      %v3839 = vlaneseq
      %v3840 = vshrl.u32 %v3839, 7
      %v3841 = vsub.s32 0, %v3840
      %v3842 = vrot.slane %v270, %v3841
      %v3843 = vlaneseq
      %v3844 = vshrl.u32 %v3843, 7
      %v3845 = vsub.s32 0, %v3844
      %v3846 = vrot.slane %v271, %v3845
      %v3847 = vlaneseq
      %v3848 = vshrl.u32 %v3847, 7
      %v3849 = vsub.s32 0, %v3848
      %v3850 = vrot.slane %v272, %v3849
      %v3851 = vlaneseq
      %v3852 = vshrl.u32 %v3851, 7
      %v3853 = vsub.s32 0, %v3852
      %v3854 = vrot.slane %v273, %v3853
      %v3855 = vlaneseq
      %v3856 = vshrl.u32 %v3855, 7
      %v3857 = vsub.s32 0, %v3856
      %v3858 = vrot.slane %v274, %v3857
      %v3859 = vlaneseq
      %v3860 = vshrl.u32 %v3859, 7
      %v3861 = vsub.s32 0, %v3860
      %v3862 = vrot.slane %v275, %v3861
      %v3863 = vlaneseq
      %v3864 = vshrl.u32 %v3863, 7
      %v3865 = vsub.s32 0, %v3864
      %v3866 = vrot.slane %v276, %v3865
      %v3867 = vlaneseq
      %v3868 = vshrl.u32 %v3867, 7
      %v3869 = vsub.s32 0, %v3868
      %v3870 = vrot.slane %v277, %v3869
      %v3871 = vlaneseq
      %v3872 = vshrl.u32 %v3871, 7
      %v3873 = vsub.s32 0, %v3872
      %v3874 = vrot.slane %v278, %v3873
      %v3875 = vlaneseq
      %v3876 = vshrl.u32 %v3875, 7
      %v3877 = vsub.s32 0, %v3876
      %v3878 = vrot.slane %v279, %v3877
      %v3879 = vlaneseq
      %v3880 = vshrl.u32 %v3879, 7
      %v3881 = vsub.s32 0, %v3880
      %v3882 = vrot.slane %v280, %v3881
      %v3883 = vlaneseq
      %v3884 = vshrl.u32 %v3883, 7
      %v3885 = vsub.s32 0, %v3884
      %v3886 = vrot.slane %v281, %v3885
      %v3887 = vlaneseq
      %v3888 = vshrl.u32 %v3887, 7
      %v3889 = vsub.s32 0, %v3888
      %v3890 = vrot.slane %v282, %v3889
      %v3891 = vlaneseq
      %v3892 = vshrl.u32 %v3891, 7
      %v3893 = vsub.s32 0, %v3892
      %v3894 = vrot.slane %v283, %v3893
      %v3895 = vlaneseq
      %v3896 = vshrl.u32 %v3895, 7
      %v3897 = vsub.s32 0, %v3896
      %v3898 = vrot.slane %v284, %v3897
      %v3899 = vlaneseq
      %v3900 = vshrl.u32 %v3899, 7
      %v3901 = vsub.s32 0, %v3900
      %v3902 = vrot.slane %v285, %v3901
      %v3903 = vlaneseq
      %v3904 = vshrl.u32 %v3903, 7
      %v3905 = vsub.s32 0, %v3904
      %v3906 = vrot.slane %v286, %v3905
      %v3907 = vlaneseq
      %v3908 = vshrl.u32 %v3907, 7
      %v3909 = vsub.s32 0, %v3908
      %v3910 = vrot.slane %v287, %v3909
      %v3911 = vlaneseq
      %v3912 = vshrl.u32 %v3911, 7
      %v3913 = vsub.s32 0, %v3912
      %v3914 = vrot.slane %v288, %v3913
      %v3915 = vlaneseq
      %v3916 = vshrl.u32 %v3915, 7
      %v3917 = vsub.s32 0, %v3916
      %v3918 = vrot.slane %v289, %v3917
      %v3919 = vlaneseq
      %v3920 = vshrl.u32 %v3919, 7
      %v3921 = vsub.s32 0, %v3920
      %v3922 = vrot.slane %v290, %v3921
      %v3923 = vlaneseq
      %v3924 = vshrl.u32 %v3923, 7
      %v3925 = vsub.s32 0, %v3924
      %v3926 = vrot.slane %v291, %v3925
      %v3927 = vlaneseq
      %v3928 = vshrl.u32 %v3927, 7
      %v3929 = vsub.s32 0, %v3928
      %v3930 = vrot.slane %v292, %v3929
      %v3931 = vlaneseq
      %v3932 = vshrl.u32 %v3931, 7
      %v3933 = vsub.s32 0, %v3932
      %v3934 = vrot.slane %v293, %v3933
      %v3935 = vlaneseq
      %v3936 = vshrl.u32 %v3935, 7
      %v3937 = vsub.s32 0, %v3936
      %v3938 = vrot.slane %v294, %v3937
      %v3939 = vlaneseq
      %v3940 = vshrl.u32 %v3939, 7
      %v3941 = vsub.s32 0, %v3940
      %v3942 = vrot.slane %v295, %v3941
      %v3943 = vlaneseq
      %v3944 = vshrl.u32 %v3943, 7
      %v3945 = vsub.s32 0, %v3944
      %v3946 = vrot.slane %v296, %v3945
      %v3947 = vlaneseq
      %v3948 = vshrl.u32 %v3947, 7
      %v3949 = vsub.s32 0, %v3948
      %v3950 = vrot.slane %v297, %v3949
      %v3951 = vlaneseq
      %v3952 = vshrl.u32 %v3951, 7
      %v3953 = vsub.s32 0, %v3952
      %v3954 = vrot.slane %v298, %v3953
      %v3955 = vlaneseq
      %v3956 = vshrl.u32 %v3955, 7
      %v3957 = vsub.s32 0, %v3956
      %v3958 = vrot.slane %v299, %v3957
      %v3959 = vlaneseq
      %v3960 = vshrl.u32 %v3959, 7
      %v3961 = vsub.s32 0, %v3960
      %v3962 = vrot.slane %v300, %v3961
      %v3963 = vlaneseq
      %v3964 = vshrl.u32 %v3963, 7
      %v3965 = vsub.s32 0, %v3964
      %v3966 = vrot.slane %v301, %v3965
      %v3967 = vmul.f32 %v2818, %v3458
      %v3968 = vmul.f32 %v2823, %v3462
      %v3969 = vmul.f32 %v2828, %v3466
      %v3970 = vmul.f32 %v2833, %v3470
      %v3971 = vmul.f32 %v2838, %v3474
      %v3972 = vmul.f32 %v2843, %v3478
      %v3973 = vmul.f32 %v2848, %v3482
      %v3974 = vmul.f32 %v2853, %v3486
      %v3975 = vmul.f32 %v2858, %v3490
      %v3976 = vmul.f32 %v2863, %v3494
      %v3977 = vmul.f32 %v2868, %v3498
      %v3978 = vmul.f32 %v2873, %v3502
      %v3979 = vmul.f32 %v2878, %v3506
      %v3980 = vmul.f32 %v2883, %v3510
      %v3981 = vmul.f32 %v2888, %v3514
      %v3982 = vmul.f32 %v2893, %v3518
      %v3983 = vmul.f32 %v2898, %v3522
      %v3984 = vmul.f32 %v2903, %v3526
      %v3985 = vmul.f32 %v2908, %v3530
      %v3986 = vmul.f32 %v2913, %v3534
      %v3987 = vmul.f32 %v2918, %v3538
      %v3988 = vmul.f32 %v2923, %v3542
      %v3989 = vmul.f32 %v2928, %v3546
      %v3990 = vmul.f32 %v2933, %v3550
      %v3991 = vmul.f32 %v2938, %v3554
      %v3992 = vmul.f32 %v2943, %v3558
      %v3993 = vmul.f32 %v2948, %v3562
      %v3994 = vmul.f32 %v2953, %v3566
      %v3995 = vmul.f32 %v2958, %v3570
      %v3996 = vmul.f32 %v2963, %v3574
      %v3997 = vmul.f32 %v2968, %v3578
      %v3998 = vmul.f32 %v2973, %v3582
      %v3999 = vmul.f32 %v2978, %v3586
      %v4000 = vmul.f32 %v2983, %v3590
      %v4001 = vmul.f32 %v2988, %v3594
      %v4002 = vmul.f32 %v2993, %v3598
      %v4003 = vmul.f32 %v2998, %v3602
      %v4004 = vmul.f32 %v3003, %v3606
      %v4005 = vmul.f32 %v3008, %v3610
      %v4006 = vmul.f32 %v3013, %v3614
      %v4007 = vmul.f32 %v3018, %v3618
      %v4008 = vmul.f32 %v3023, %v3622
      %v4009 = vmul.f32 %v3028, %v3626
      %v4010 = vmul.f32 %v3033, %v3630
      %v4011 = vmul.f32 %v3038, %v3634
      %v4012 = vmul.f32 %v3043, %v3638
      %v4013 = vmul.f32 %v3048, %v3642
      %v4014 = vmul.f32 %v3053, %v3646
      %v4015 = vmul.f32 %v3058, %v3650
      %v4016 = vmul.f32 %v3063, %v3654
      %v4017 = vmul.f32 %v3068, %v3658
      %v4018 = vmul.f32 %v3073, %v3662
      %v4019 = vmul.f32 %v3078, %v3666
      %v4020 = vmul.f32 %v3083, %v3670
      %v4021 = vmul.f32 %v3088, %v3674
      %v4022 = vmul.f32 %v3093, %v3678
      %v4023 = vmul.f32 %v3098, %v3682
      %v4024 = vmul.f32 %v3103, %v3686
      %v4025 = vmul.f32 %v3108, %v3690
      %v4026 = vmul.f32 %v3113, %v3694
      %v4027 = vmul.f32 %v3118, %v3698
      %v4028 = vmul.f32 %v3123, %v3702
      %v4029 = vmul.f32 %v3128, %v3706
      %v4030 = vmul.f32 %v3133, %v3710
      %v4031 = vmul.f32 %v3138, %v3714
      %v4032 = vmul.f32 %v3143, %v3718
      %v4033 = vmul.f32 %v3148, %v3722
      %v4034 = vmul.f32 %v3153, %v3726
      %v4035 = vmul.f32 %v3158, %v3730
      %v4036 = vmul.f32 %v3163, %v3734
      %v4037 = vmul.f32 %v3168, %v3738
      %v4038 = vmul.f32 %v3173, %v3742
      %v4039 = vmul.f32 %v3178, %v3746
      %v4040 = vmul.f32 %v3183, %v3750
      %v4041 = vmul.f32 %v3188, %v3754
      %v4042 = vmul.f32 %v3193, %v3758
      %v4043 = vmul.f32 %v3198, %v3762
      %v4044 = vmul.f32 %v3203, %v3766
      %v4045 = vmul.f32 %v3208, %v3770
      %v4046 = vmul.f32 %v3213, %v3774
      %v4047 = vmul.f32 %v3218, %v3778
      %v4048 = vmul.f32 %v3223, %v3782
      %v4049 = vmul.f32 %v3228, %v3786
      %v4050 = vmul.f32 %v3233, %v3790
      %v4051 = vmul.f32 %v3238, %v3794
      %v4052 = vmul.f32 %v3243, %v3798
      %v4053 = vmul.f32 %v3248, %v3802
      %v4054 = vmul.f32 %v3253, %v3806
      %v4055 = vmul.f32 %v3258, %v3810
      %v4056 = vmul.f32 %v3263, %v3814
      %v4057 = vmul.f32 %v3268, %v3818
      %v4058 = vmul.f32 %v3273, %v3822
      %v4059 = vmul.f32 %v3278, %v3826
      %v4060 = vmul.f32 %v3283, %v3830
      %v4061 = vmul.f32 %v3288, %v3834
      %v4062 = vmul.f32 %v3293, %v3838
      %v4063 = vmul.f32 %v3298, %v3842
      %v4064 = vmul.f32 %v3303, %v3846
      %v4065 = vmul.f32 %v3308, %v3850
      %v4066 = vmul.f32 %v3313, %v3854
      %v4067 = vmul.f32 %v3318, %v3858
      %v4068 = vmul.f32 %v3323, %v3862
      %v4069 = vmul.f32 %v3328, %v3866
      %v4070 = vmul.f32 %v3333, %v3870
      %v4071 = vmul.f32 %v3338, %v3874
      %v4072 = vmul.f32 %v3343, %v3878
      %v4073 = vmul.f32 %v3348, %v3882
      %v4074 = vmul.f32 %v3353, %v3886
      %v4075 = vmul.f32 %v3358, %v3890
      %v4076 = vmul.f32 %v3363, %v3894
      %v4077 = vmul.f32 %v3368, %v3898
      %v4078 = vmul.f32 %v3373, %v3902
      %v4079 = vmul.f32 %v3378, %v3906
      %v4080 = vmul.f32 %v3383, %v3910
      %v4081 = vmul.f32 %v3388, %v3914
      %v4082 = vmul.f32 %v3393, %v3918
      %v4083 = vmul.f32 %v3398, %v3922
      %v4084 = vmul.f32 %v3403, %v3926
      %v4085 = vmul.f32 %v3408, %v3930
      %v4086 = vmul.f32 %v3413, %v3934
      %v4087 = vmul.f32 %v3418, %v3938
      %v4088 = vmul.f32 %v3423, %v3942
      %v4089 = vmul.f32 %v3428, %v3946
      %v4090 = vmul.f32 %v3433, %v3950
      %v4091 = vmul.f32 %v3438, %v3954
      %v4092 = vmul.f32 %v3443, %v3958
      %v4093 = vmul.f32 %v3448, %v3962
      %v4094 = vmul.f32 %v3453, %v3966
      %4095 = vset.pattern.permute.xlu0 1
      %4096 = vperm.xlu0 %4095, %v2687
      %v4097 = vpop.permute.xlu0 %4096
      %4099 = vset.pattern.permute.xlu0 1
      %4100 = vperm.xlu0 %4099, %v2688
      %v4101 = vpop.permute.xlu0 %4100
      %4103 = vset.pattern.permute.xlu0 1
      %4104 = vperm.xlu0 %4103, %v2689
      %v4105 = vpop.permute.xlu0 %4104
      %4107 = vset.pattern.permute.xlu0 1
      %4108 = vperm.xlu0 %4107, %v2690
      %v4109 = vpop.permute.xlu0 %4108
      %4111 = vset.pattern.permute.xlu0 1
      %4112 = vperm.xlu0 %4111, %v2691
      %v4113 = vpop.permute.xlu0 %4112
      %4115 = vset.pattern.permute.xlu0 1
      %4116 = vperm.xlu0 %4115, %v2692
      %v4117 = vpop.permute.xlu0 %4116
      %4119 = vset.pattern.permute.xlu0 1
      %4120 = vperm.xlu0 %4119, %v2693
      %v4121 = vpop.permute.xlu0 %4120
      %4123 = vset.pattern.permute.xlu0 1
      %4124 = vperm.xlu0 %4123, %v2694
      %v4125 = vpop.permute.xlu0 %4124
      %4127 = vset.pattern.permute.xlu0 1
      %4128 = vperm.xlu0 %4127, %v2695
      %v4129 = vpop.permute.xlu0 %4128
      %4131 = vset.pattern.permute.xlu0 1
      %4132 = vperm.xlu0 %4131, %v2696
      %v4133 = vpop.permute.xlu0 %4132
      %4135 = vset.pattern.permute.xlu0 1
      %4136 = vperm.xlu0 %4135, %v2697
      %v4137 = vpop.permute.xlu0 %4136
      %4139 = vset.pattern.permute.xlu0 1
      %4140 = vperm.xlu0 %4139, %v2698
      %v4141 = vpop.permute.xlu0 %4140
      %4143 = vset.pattern.permute.xlu0 1
      %4144 = vperm.xlu0 %4143, %v2699
      %v4145 = vpop.permute.xlu0 %4144
      %4147 = vset.pattern.permute.xlu0 1
      %4148 = vperm.xlu0 %4147, %v2700
      %v4149 = vpop.permute.xlu0 %4148
      %4151 = vset.pattern.permute.xlu0 1
      %4152 = vperm.xlu0 %4151, %v2701
      %v4153 = vpop.permute.xlu0 %4152
      %4155 = vset.pattern.permute.xlu0 1
      %4156 = vperm.xlu0 %4155, %v2702
      %v4157 = vpop.permute.xlu0 %4156
      %4159 = vset.pattern.permute.xlu0 1
      %4160 = vperm.xlu0 %4159, %v2703
      %v4161 = vpop.permute.xlu0 %4160
      %4163 = vset.pattern.permute.xlu0 1
      %4164 = vperm.xlu0 %4163, %v2704
      %v4165 = vpop.permute.xlu0 %4164
      %4167 = vset.pattern.permute.xlu0 1
      %4168 = vperm.xlu0 %4167, %v2705
      %v4169 = vpop.permute.xlu0 %4168
      %4171 = vset.pattern.permute.xlu0 1
      %4172 = vperm.xlu0 %4171, %v2706
      %v4173 = vpop.permute.xlu0 %4172
      %4175 = vset.pattern.permute.xlu0 1
      %4176 = vperm.xlu0 %4175, %v2707
      %v4177 = vpop.permute.xlu0 %4176
      %4179 = vset.pattern.permute.xlu0 1
      %4180 = vperm.xlu0 %4179, %v2708
      %v4181 = vpop.permute.xlu0 %4180
      %4183 = vset.pattern.permute.xlu0 1
      %4184 = vperm.xlu0 %4183, %v2709
      %v4185 = vpop.permute.xlu0 %4184
      %4187 = vset.pattern.permute.xlu0 1
      %4188 = vperm.xlu0 %4187, %v2710
      %v4189 = vpop.permute.xlu0 %4188
      %4191 = vset.pattern.permute.xlu0 1
      %4192 = vperm.xlu0 %4191, %v2711
      %v4193 = vpop.permute.xlu0 %4192
      %4195 = vset.pattern.permute.xlu0 1
      %4196 = vperm.xlu0 %4195, %v2712
      %v4197 = vpop.permute.xlu0 %4196
      %4199 = vset.pattern.permute.xlu0 1
      %4200 = vperm.xlu0 %4199, %v2713
      %v4201 = vpop.permute.xlu0 %4200
      %4203 = vset.pattern.permute.xlu0 1
      %4204 = vperm.xlu0 %4203, %v2714
      %v4205 = vpop.permute.xlu0 %4204
      %4207 = vset.pattern.permute.xlu0 1
      %4208 = vperm.xlu0 %4207, %v2715
      %v4209 = vpop.permute.xlu0 %4208
      %4211 = vset.pattern.permute.xlu0 1
      %4212 = vperm.xlu0 %4211, %v2716
      %v4213 = vpop.permute.xlu0 %4212
      %4215 = vset.pattern.permute.xlu0 1
      %4216 = vperm.xlu0 %4215, %v2717
      %v4217 = vpop.permute.xlu0 %4216
      %4219 = vset.pattern.permute.xlu0 1
      %4220 = vperm.xlu0 %4219, %v2718
      %v4221 = vpop.permute.xlu0 %4220
      %4223 = vset.pattern.permute.xlu0 1
      %4224 = vperm.xlu0 %4223, %v2719
      %v4225 = vpop.permute.xlu0 %4224
      %4227 = vset.pattern.permute.xlu0 1
      %4228 = vperm.xlu0 %4227, %v2720
      %v4229 = vpop.permute.xlu0 %4228
      %4231 = vset.pattern.permute.xlu0 1
      %4232 = vperm.xlu0 %4231, %v2721
      %v4233 = vpop.permute.xlu0 %4232
      %4235 = vset.pattern.permute.xlu0 1
      %4236 = vperm.xlu0 %4235, %v2722
      %v4237 = vpop.permute.xlu0 %4236
      %4239 = vset.pattern.permute.xlu0 1
      %4240 = vperm.xlu0 %4239, %v2723
      %v4241 = vpop.permute.xlu0 %4240
      %4243 = vset.pattern.permute.xlu0 1
      %4244 = vperm.xlu0 %4243, %v2724
      %v4245 = vpop.permute.xlu0 %4244
      %4247 = vset.pattern.permute.xlu0 1
      %4248 = vperm.xlu0 %4247, %v2725
      %v4249 = vpop.permute.xlu0 %4248
      %4251 = vset.pattern.permute.xlu0 1
      %4252 = vperm.xlu0 %4251, %v2726
      %v4253 = vpop.permute.xlu0 %4252
      %4255 = vset.pattern.permute.xlu0 1
      %4256 = vperm.xlu0 %4255, %v2727
      %v4257 = vpop.permute.xlu0 %4256
      %4259 = vset.pattern.permute.xlu0 1
      %4260 = vperm.xlu0 %4259, %v2728
      %v4261 = vpop.permute.xlu0 %4260
      %4263 = vset.pattern.permute.xlu0 1
      %4264 = vperm.xlu0 %4263, %v2729
      %v4265 = vpop.permute.xlu0 %4264
      %4267 = vset.pattern.permute.xlu0 1
      %4268 = vperm.xlu0 %4267, %v2730
      %v4269 = vpop.permute.xlu0 %4268
      %4271 = vset.pattern.permute.xlu0 1
      %4272 = vperm.xlu0 %4271, %v2731
      %v4273 = vpop.permute.xlu0 %4272
      %4275 = vset.pattern.permute.xlu0 1
      %4276 = vperm.xlu0 %4275, %v2732
      %v4277 = vpop.permute.xlu0 %4276
      %4279 = vset.pattern.permute.xlu0 1
      %4280 = vperm.xlu0 %4279, %v2733
      %v4281 = vpop.permute.xlu0 %4280
      %4283 = vset.pattern.permute.xlu0 1
      %4284 = vperm.xlu0 %4283, %v2734
      %v4285 = vpop.permute.xlu0 %4284
      %4287 = vset.pattern.permute.xlu0 1
      %4288 = vperm.xlu0 %4287, %v2735
      %v4289 = vpop.permute.xlu0 %4288
      %4291 = vset.pattern.permute.xlu0 1
      %4292 = vperm.xlu0 %4291, %v2736
      %v4293 = vpop.permute.xlu0 %4292
      %4295 = vset.pattern.permute.xlu0 1
      %4296 = vperm.xlu0 %4295, %v2737
      %v4297 = vpop.permute.xlu0 %4296
      %4299 = vset.pattern.permute.xlu0 1
      %4300 = vperm.xlu0 %4299, %v2738
      %v4301 = vpop.permute.xlu0 %4300
      %4303 = vset.pattern.permute.xlu0 1
      %4304 = vperm.xlu0 %4303, %v2739
      %v4305 = vpop.permute.xlu0 %4304
      %4307 = vset.pattern.permute.xlu0 1
      %4308 = vperm.xlu0 %4307, %v2740
      %v4309 = vpop.permute.xlu0 %4308
      %4311 = vset.pattern.permute.xlu0 1
      %4312 = vperm.xlu0 %4311, %v2741
      %v4313 = vpop.permute.xlu0 %4312
      %4315 = vset.pattern.permute.xlu0 1
      %4316 = vperm.xlu0 %4315, %v2742
      %v4317 = vpop.permute.xlu0 %4316
      %4319 = vset.pattern.permute.xlu0 1
      %4320 = vperm.xlu0 %4319, %v2743
      %v4321 = vpop.permute.xlu0 %4320
      %4323 = vset.pattern.permute.xlu0 1
      %4324 = vperm.xlu0 %4323, %v2744
      %v4325 = vpop.permute.xlu0 %4324
      %4327 = vset.pattern.permute.xlu0 1
      %4328 = vperm.xlu0 %4327, %v2745
      %v4329 = vpop.permute.xlu0 %4328
      %4331 = vset.pattern.permute.xlu0 1
      %4332 = vperm.xlu0 %4331, %v2746
      %v4333 = vpop.permute.xlu0 %4332
      %4335 = vset.pattern.permute.xlu0 1
      %4336 = vperm.xlu0 %4335, %v2747
      %v4337 = vpop.permute.xlu0 %4336
      %4339 = vset.pattern.permute.xlu0 1
      %4340 = vperm.xlu0 %4339, %v2748
      %v4341 = vpop.permute.xlu0 %4340
      %4343 = vset.pattern.permute.xlu0 1
      %4344 = vperm.xlu0 %4343, %v2749
      %v4345 = vpop.permute.xlu0 %4344
      %4347 = vset.pattern.permute.xlu0 1
      %4348 = vperm.xlu0 %4347, %v2750
      %v4349 = vpop.permute.xlu0 %4348
      %4351 = vset.pattern.permute.xlu0 1
      %4352 = vperm.xlu0 %4351, %v2751
      %v4353 = vpop.permute.xlu0 %4352
      %4355 = vset.pattern.permute.xlu0 1
      %4356 = vperm.xlu0 %4355, %v2752
      %v4357 = vpop.permute.xlu0 %4356
      %4359 = vset.pattern.permute.xlu0 1
      %4360 = vperm.xlu0 %4359, %v2753
      %v4361 = vpop.permute.xlu0 %4360
      %4363 = vset.pattern.permute.xlu0 1
      %4364 = vperm.xlu0 %4363, %v2754
      %v4365 = vpop.permute.xlu0 %4364
      %4367 = vset.pattern.permute.xlu0 1
      %4368 = vperm.xlu0 %4367, %v2755
      %v4369 = vpop.permute.xlu0 %4368
      %4371 = vset.pattern.permute.xlu0 1
      %4372 = vperm.xlu0 %4371, %v2756
      %v4373 = vpop.permute.xlu0 %4372
      %4375 = vset.pattern.permute.xlu0 1
      %4376 = vperm.xlu0 %4375, %v2757
      %v4377 = vpop.permute.xlu0 %4376
      %4379 = vset.pattern.permute.xlu0 1
      %4380 = vperm.xlu0 %4379, %v2758
      %v4381 = vpop.permute.xlu0 %4380
      %4383 = vset.pattern.permute.xlu0 1
      %4384 = vperm.xlu0 %4383, %v2759
      %v4385 = vpop.permute.xlu0 %4384
      %4387 = vset.pattern.permute.xlu0 1
      %4388 = vperm.xlu0 %4387, %v2760
      %v4389 = vpop.permute.xlu0 %4388
      %4391 = vset.pattern.permute.xlu0 1
      %4392 = vperm.xlu0 %4391, %v2761
      %v4393 = vpop.permute.xlu0 %4392
      %4395 = vset.pattern.permute.xlu0 1
      %4396 = vperm.xlu0 %4395, %v2762
      %v4397 = vpop.permute.xlu0 %4396
      %4399 = vset.pattern.permute.xlu0 1
      %4400 = vperm.xlu0 %4399, %v2763
      %v4401 = vpop.permute.xlu0 %4400
      %4403 = vset.pattern.permute.xlu0 1
      %4404 = vperm.xlu0 %4403, %v2764
      %v4405 = vpop.permute.xlu0 %4404
      %4407 = vset.pattern.permute.xlu0 1
      %4408 = vperm.xlu0 %4407, %v2765
      %v4409 = vpop.permute.xlu0 %4408
      %4411 = vset.pattern.permute.xlu0 1
      %4412 = vperm.xlu0 %4411, %v2766
      %v4413 = vpop.permute.xlu0 %4412
      %4415 = vset.pattern.permute.xlu0 1
      %4416 = vperm.xlu0 %4415, %v2767
      %v4417 = vpop.permute.xlu0 %4416
      %4419 = vset.pattern.permute.xlu0 1
      %4420 = vperm.xlu0 %4419, %v2768
      %v4421 = vpop.permute.xlu0 %4420
      %4423 = vset.pattern.permute.xlu0 1
      %4424 = vperm.xlu0 %4423, %v2769
      %v4425 = vpop.permute.xlu0 %4424
      %4427 = vset.pattern.permute.xlu0 1
      %4428 = vperm.xlu0 %4427, %v2770
      %v4429 = vpop.permute.xlu0 %4428
      %4431 = vset.pattern.permute.xlu0 1
      %4432 = vperm.xlu0 %4431, %v2771
      %v4433 = vpop.permute.xlu0 %4432
      %4435 = vset.pattern.permute.xlu0 1
      %4436 = vperm.xlu0 %4435, %v2772
      %v4437 = vpop.permute.xlu0 %4436
      %4439 = vset.pattern.permute.xlu0 1
      %4440 = vperm.xlu0 %4439, %v2773
      %v4441 = vpop.permute.xlu0 %4440
      %4443 = vset.pattern.permute.xlu0 1
      %4444 = vperm.xlu0 %4443, %v2774
      %v4445 = vpop.permute.xlu0 %4444
      %4447 = vset.pattern.permute.xlu0 1
      %4448 = vperm.xlu0 %4447, %v2775
      %v4449 = vpop.permute.xlu0 %4448
      %4451 = vset.pattern.permute.xlu0 1
      %4452 = vperm.xlu0 %4451, %v2776
      %v4453 = vpop.permute.xlu0 %4452
      %4455 = vset.pattern.permute.xlu0 1
      %4456 = vperm.xlu0 %4455, %v2777
      %v4457 = vpop.permute.xlu0 %4456
      %4459 = vset.pattern.permute.xlu0 1
      %4460 = vperm.xlu0 %4459, %v2778
      %v4461 = vpop.permute.xlu0 %4460
      %4463 = vset.pattern.permute.xlu0 1
      %4464 = vperm.xlu0 %4463, %v2779
      %v4465 = vpop.permute.xlu0 %4464
      %4467 = vset.pattern.permute.xlu0 1
      %4468 = vperm.xlu0 %4467, %v2780
      %v4469 = vpop.permute.xlu0 %4468
      %4471 = vset.pattern.permute.xlu0 1
      %4472 = vperm.xlu0 %4471, %v2781
      %v4473 = vpop.permute.xlu0 %4472
      %4475 = vset.pattern.permute.xlu0 1
      %4476 = vperm.xlu0 %4475, %v2782
      %v4477 = vpop.permute.xlu0 %4476
      %4479 = vset.pattern.permute.xlu0 1
      %4480 = vperm.xlu0 %4479, %v2783
      %v4481 = vpop.permute.xlu0 %4480
      %4483 = vset.pattern.permute.xlu0 1
      %4484 = vperm.xlu0 %4483, %v2784
      %v4485 = vpop.permute.xlu0 %4484
      %4487 = vset.pattern.permute.xlu0 1
      %4488 = vperm.xlu0 %4487, %v2785
      %v4489 = vpop.permute.xlu0 %4488
      %4491 = vset.pattern.permute.xlu0 1
      %4492 = vperm.xlu0 %4491, %v2786
      %v4493 = vpop.permute.xlu0 %4492
      %4495 = vset.pattern.permute.xlu0 1
      %4496 = vperm.xlu0 %4495, %v2787
      %v4497 = vpop.permute.xlu0 %4496
      %4499 = vset.pattern.permute.xlu0 1
      %4500 = vperm.xlu0 %4499, %v2788
      %v4501 = vpop.permute.xlu0 %4500
      %4503 = vset.pattern.permute.xlu0 1
      %4504 = vperm.xlu0 %4503, %v2789
      %v4505 = vpop.permute.xlu0 %4504
      %4507 = vset.pattern.permute.xlu0 1
      %4508 = vperm.xlu0 %4507, %v2790
      %v4509 = vpop.permute.xlu0 %4508
      %4511 = vset.pattern.permute.xlu0 1
      %4512 = vperm.xlu0 %4511, %v2791
      %v4513 = vpop.permute.xlu0 %4512
      %4515 = vset.pattern.permute.xlu0 1
      %4516 = vperm.xlu0 %4515, %v2792
      %v4517 = vpop.permute.xlu0 %4516
      %4519 = vset.pattern.permute.xlu0 1
      %4520 = vperm.xlu0 %4519, %v2793
      %v4521 = vpop.permute.xlu0 %4520
      %4523 = vset.pattern.permute.xlu0 1
      %4524 = vperm.xlu0 %4523, %v2794
      %v4525 = vpop.permute.xlu0 %4524
      %4527 = vset.pattern.permute.xlu0 1
      %4528 = vperm.xlu0 %4527, %v2795
      %v4529 = vpop.permute.xlu0 %4528
      %4531 = vset.pattern.permute.xlu0 1
      %4532 = vperm.xlu0 %4531, %v2796
      %v4533 = vpop.permute.xlu0 %4532
      %4535 = vset.pattern.permute.xlu0 1
      %4536 = vperm.xlu0 %4535, %v2797
      %v4537 = vpop.permute.xlu0 %4536
      %4539 = vset.pattern.permute.xlu0 1
      %4540 = vperm.xlu0 %4539, %v2798
      %v4541 = vpop.permute.xlu0 %4540
      %4543 = vset.pattern.permute.xlu0 1
      %4544 = vperm.xlu0 %4543, %v2799
      %v4545 = vpop.permute.xlu0 %4544
      %4547 = vset.pattern.permute.xlu0 1
      %4548 = vperm.xlu0 %4547, %v2800
      %v4549 = vpop.permute.xlu0 %4548
      %4551 = vset.pattern.permute.xlu0 1
      %4552 = vperm.xlu0 %4551, %v2801
      %v4553 = vpop.permute.xlu0 %4552
      %4555 = vset.pattern.permute.xlu0 1
      %4556 = vperm.xlu0 %4555, %v2802
      %v4557 = vpop.permute.xlu0 %4556
      %4559 = vset.pattern.permute.xlu0 1
      %4560 = vperm.xlu0 %4559, %v2803
      %v4561 = vpop.permute.xlu0 %4560
      %4563 = vset.pattern.permute.xlu0 1
      %4564 = vperm.xlu0 %4563, %v2804
      %v4565 = vpop.permute.xlu0 %4564
      %4567 = vset.pattern.permute.xlu0 1
      %4568 = vperm.xlu0 %4567, %v2805
      %v4569 = vpop.permute.xlu0 %4568
      %4571 = vset.pattern.permute.xlu0 1
      %4572 = vperm.xlu0 %4571, %v2806
      %v4573 = vpop.permute.xlu0 %4572
      %4575 = vset.pattern.permute.xlu0 1
      %4576 = vperm.xlu0 %4575, %v2807
      %v4577 = vpop.permute.xlu0 %4576
      %4579 = vset.pattern.permute.xlu0 1
      %4580 = vperm.xlu0 %4579, %v2808
      %v4581 = vpop.permute.xlu0 %4580
      %4583 = vset.pattern.permute.xlu0 1
      %4584 = vperm.xlu0 %4583, %v2809
      %v4585 = vpop.permute.xlu0 %4584
      %4587 = vset.pattern.permute.xlu0 1
      %4588 = vperm.xlu0 %4587, %v2810
      %v4589 = vpop.permute.xlu0 %4588
      %4591 = vset.pattern.permute.xlu0 1
      %4592 = vperm.xlu0 %4591, %v2811
      %v4593 = vpop.permute.xlu0 %4592
      %4595 = vset.pattern.permute.xlu0 1
      %4596 = vperm.xlu0 %4595, %v2812
      %v4597 = vpop.permute.xlu0 %4596
      %4599 = vset.pattern.permute.xlu0 1
      %4600 = vperm.xlu0 %4599, %v2813
      %v4601 = vpop.permute.xlu0 %4600
      %4603 = vset.pattern.permute.xlu0 1
      %4604 = vperm.xlu0 %4603, %v2814
      %v4605 = vpop.permute.xlu0 %4604
      %v4607 = vlaneseq
      %v4608 = vshrl.u32 %v4607, 7
      %v4609 = vsub.s32 1, %v4608
      %v4610 = vrot.slane %v174, %v4609
      %v4611 = vlaneseq
      %v4612 = vshrl.u32 %v4611, 7
      %v4613 = vsub.s32 1, %v4612
      %v4614 = vrot.slane %v175, %v4613
      %v4615 = vlaneseq
      %v4616 = vshrl.u32 %v4615, 7
      %v4617 = vsub.s32 1, %v4616
      %v4618 = vrot.slane %v176, %v4617
      %v4619 = vlaneseq
      %v4620 = vshrl.u32 %v4619, 7
      %v4621 = vsub.s32 1, %v4620
      %v4622 = vrot.slane %v177, %v4621
      %v4623 = vlaneseq
      %v4624 = vshrl.u32 %v4623, 7
      %v4625 = vsub.s32 1, %v4624
      %v4626 = vrot.slane %v178, %v4625
      %v4627 = vlaneseq
      %v4628 = vshrl.u32 %v4627, 7
      %v4629 = vsub.s32 1, %v4628
      %v4630 = vrot.slane %v179, %v4629
      %v4631 = vlaneseq
      %v4632 = vshrl.u32 %v4631, 7
      %v4633 = vsub.s32 1, %v4632
      %v4634 = vrot.slane %v180, %v4633
      %v4635 = vlaneseq
      %v4636 = vshrl.u32 %v4635, 7
      %v4637 = vsub.s32 1, %v4636
      %v4638 = vrot.slane %v181, %v4637
      %v4639 = vlaneseq
      %v4640 = vshrl.u32 %v4639, 7
      %v4641 = vsub.s32 1, %v4640
      %v4642 = vrot.slane %v182, %v4641
      %v4643 = vlaneseq
      %v4644 = vshrl.u32 %v4643, 7
      %v4645 = vsub.s32 1, %v4644
      %v4646 = vrot.slane %v183, %v4645
      %v4647 = vlaneseq
      %v4648 = vshrl.u32 %v4647, 7
      %v4649 = vsub.s32 1, %v4648
      %v4650 = vrot.slane %v184, %v4649
      %v4651 = vlaneseq
      %v4652 = vshrl.u32 %v4651, 7
      %v4653 = vsub.s32 1, %v4652
      %v4654 = vrot.slane %v185, %v4653
      %v4655 = vlaneseq
      %v4656 = vshrl.u32 %v4655, 7
      %v4657 = vsub.s32 1, %v4656
      %v4658 = vrot.slane %v186, %v4657
      %v4659 = vlaneseq
      %v4660 = vshrl.u32 %v4659, 7
      %v4661 = vsub.s32 1, %v4660
      %v4662 = vrot.slane %v187, %v4661
      %v4663 = vlaneseq
      %v4664 = vshrl.u32 %v4663, 7
      %v4665 = vsub.s32 1, %v4664
      %v4666 = vrot.slane %v188, %v4665
      %v4667 = vlaneseq
      %v4668 = vshrl.u32 %v4667, 7
      %v4669 = vsub.s32 1, %v4668
      %v4670 = vrot.slane %v189, %v4669
      %v4671 = vlaneseq
      %v4672 = vshrl.u32 %v4671, 7
      %v4673 = vsub.s32 1, %v4672
      %v4674 = vrot.slane %v190, %v4673
      %v4675 = vlaneseq
      %v4676 = vshrl.u32 %v4675, 7
      %v4677 = vsub.s32 1, %v4676
      %v4678 = vrot.slane %v191, %v4677
      %v4679 = vlaneseq
      %v4680 = vshrl.u32 %v4679, 7
      %v4681 = vsub.s32 1, %v4680
      %v4682 = vrot.slane %v192, %v4681
      %v4683 = vlaneseq
      %v4684 = vshrl.u32 %v4683, 7
      %v4685 = vsub.s32 1, %v4684
      %v4686 = vrot.slane %v193, %v4685
      %v4687 = vlaneseq
      %v4688 = vshrl.u32 %v4687, 7
      %v4689 = vsub.s32 1, %v4688
      %v4690 = vrot.slane %v194, %v4689
      %v4691 = vlaneseq
      %v4692 = vshrl.u32 %v4691, 7
      %v4693 = vsub.s32 1, %v4692
      %v4694 = vrot.slane %v195, %v4693
      %v4695 = vlaneseq
      %v4696 = vshrl.u32 %v4695, 7
      %v4697 = vsub.s32 1, %v4696
      %v4698 = vrot.slane %v196, %v4697
      %v4699 = vlaneseq
      %v4700 = vshrl.u32 %v4699, 7
      %v4701 = vsub.s32 1, %v4700
      %v4702 = vrot.slane %v197, %v4701
      %v4703 = vlaneseq
      %v4704 = vshrl.u32 %v4703, 7
      %v4705 = vsub.s32 1, %v4704
      %v4706 = vrot.slane %v198, %v4705
      %v4707 = vlaneseq
      %v4708 = vshrl.u32 %v4707, 7
      %v4709 = vsub.s32 1, %v4708
      %v4710 = vrot.slane %v199, %v4709
      %v4711 = vlaneseq
      %v4712 = vshrl.u32 %v4711, 7
      %v4713 = vsub.s32 1, %v4712
      %v4714 = vrot.slane %v200, %v4713
      %v4715 = vlaneseq
      %v4716 = vshrl.u32 %v4715, 7
      %v4717 = vsub.s32 1, %v4716
      %v4718 = vrot.slane %v201, %v4717
      %v4719 = vlaneseq
      %v4720 = vshrl.u32 %v4719, 7
      %v4721 = vsub.s32 1, %v4720
      %v4722 = vrot.slane %v202, %v4721
      %v4723 = vlaneseq
      %v4724 = vshrl.u32 %v4723, 7
      %v4725 = vsub.s32 1, %v4724
      %v4726 = vrot.slane %v203, %v4725
      %v4727 = vlaneseq
      %v4728 = vshrl.u32 %v4727, 7
      %v4729 = vsub.s32 1, %v4728
      %v4730 = vrot.slane %v204, %v4729
      %v4731 = vlaneseq
      %v4732 = vshrl.u32 %v4731, 7
      %v4733 = vsub.s32 1, %v4732
      %v4734 = vrot.slane %v205, %v4733
      %v4735 = vlaneseq
      %v4736 = vshrl.u32 %v4735, 7
      %v4737 = vsub.s32 1, %v4736
      %v4738 = vrot.slane %v206, %v4737
      %v4739 = vlaneseq
      %v4740 = vshrl.u32 %v4739, 7
      %v4741 = vsub.s32 1, %v4740
      %v4742 = vrot.slane %v207, %v4741
      %v4743 = vlaneseq
      %v4744 = vshrl.u32 %v4743, 7
      %v4745 = vsub.s32 1, %v4744
      %v4746 = vrot.slane %v208, %v4745
      %v4747 = vlaneseq
      %v4748 = vshrl.u32 %v4747, 7
      %v4749 = vsub.s32 1, %v4748
      %v4750 = vrot.slane %v209, %v4749
      %v4751 = vlaneseq
      %v4752 = vshrl.u32 %v4751, 7
      %v4753 = vsub.s32 1, %v4752
      %v4754 = vrot.slane %v210, %v4753
      %v4755 = vlaneseq
      %v4756 = vshrl.u32 %v4755, 7
      %v4757 = vsub.s32 1, %v4756
      %v4758 = vrot.slane %v211, %v4757
      %v4759 = vlaneseq
      %v4760 = vshrl.u32 %v4759, 7
      %v4761 = vsub.s32 1, %v4760
      %v4762 = vrot.slane %v212, %v4761
      %v4763 = vlaneseq
      %v4764 = vshrl.u32 %v4763, 7
      %v4765 = vsub.s32 1, %v4764
      %v4766 = vrot.slane %v213, %v4765
      %v4767 = vlaneseq
      %v4768 = vshrl.u32 %v4767, 7
      %v4769 = vsub.s32 1, %v4768
      %v4770 = vrot.slane %v214, %v4769
      %v4771 = vlaneseq
      %v4772 = vshrl.u32 %v4771, 7
      %v4773 = vsub.s32 1, %v4772
      %v4774 = vrot.slane %v215, %v4773
      %v4775 = vlaneseq
      %v4776 = vshrl.u32 %v4775, 7
      %v4777 = vsub.s32 1, %v4776
      %v4778 = vrot.slane %v216, %v4777
      %v4779 = vlaneseq
      %v4780 = vshrl.u32 %v4779, 7
      %v4781 = vsub.s32 1, %v4780
      %v4782 = vrot.slane %v217, %v4781
      %v4783 = vlaneseq
      %v4784 = vshrl.u32 %v4783, 7
      %v4785 = vsub.s32 1, %v4784
      %v4786 = vrot.slane %v218, %v4785
      %v4787 = vlaneseq
      %v4788 = vshrl.u32 %v4787, 7
      %v4789 = vsub.s32 1, %v4788
      %v4790 = vrot.slane %v219, %v4789
      %v4791 = vlaneseq
      %v4792 = vshrl.u32 %v4791, 7
      %v4793 = vsub.s32 1, %v4792
      %v4794 = vrot.slane %v220, %v4793
      %v4795 = vlaneseq
      %v4796 = vshrl.u32 %v4795, 7
      %v4797 = vsub.s32 1, %v4796
      %v4798 = vrot.slane %v221, %v4797
      %v4799 = vlaneseq
      %v4800 = vshrl.u32 %v4799, 7
      %v4801 = vsub.s32 1, %v4800
      %v4802 = vrot.slane %v222, %v4801
      %v4803 = vlaneseq
      %v4804 = vshrl.u32 %v4803, 7
      %v4805 = vsub.s32 1, %v4804
      %v4806 = vrot.slane %v223, %v4805
      %v4807 = vlaneseq
      %v4808 = vshrl.u32 %v4807, 7
      %v4809 = vsub.s32 1, %v4808
      %v4810 = vrot.slane %v224, %v4809
      %v4811 = vlaneseq
      %v4812 = vshrl.u32 %v4811, 7
      %v4813 = vsub.s32 1, %v4812
      %v4814 = vrot.slane %v225, %v4813
      %v4815 = vlaneseq
      %v4816 = vshrl.u32 %v4815, 7
      %v4817 = vsub.s32 1, %v4816
      %v4818 = vrot.slane %v226, %v4817
      %v4819 = vlaneseq
      %v4820 = vshrl.u32 %v4819, 7
      %v4821 = vsub.s32 1, %v4820
      %v4822 = vrot.slane %v227, %v4821
      %v4823 = vlaneseq
      %v4824 = vshrl.u32 %v4823, 7
      %v4825 = vsub.s32 1, %v4824
      %v4826 = vrot.slane %v228, %v4825
      %v4827 = vlaneseq
      %v4828 = vshrl.u32 %v4827, 7
      %v4829 = vsub.s32 1, %v4828
      %v4830 = vrot.slane %v229, %v4829
      %v4831 = vlaneseq
      %v4832 = vshrl.u32 %v4831, 7
      %v4833 = vsub.s32 1, %v4832
      %v4834 = vrot.slane %v230, %v4833
      %v4835 = vlaneseq
      %v4836 = vshrl.u32 %v4835, 7
      %v4837 = vsub.s32 1, %v4836
      %v4838 = vrot.slane %v231, %v4837
      %v4839 = vlaneseq
      %v4840 = vshrl.u32 %v4839, 7
      %v4841 = vsub.s32 1, %v4840
      %v4842 = vrot.slane %v232, %v4841
      %v4843 = vlaneseq
      %v4844 = vshrl.u32 %v4843, 7
      %v4845 = vsub.s32 1, %v4844
      %v4846 = vrot.slane %v233, %v4845
      %v4847 = vlaneseq
      %v4848 = vshrl.u32 %v4847, 7
      %v4849 = vsub.s32 1, %v4848
      %v4850 = vrot.slane %v234, %v4849
      %v4851 = vlaneseq
      %v4852 = vshrl.u32 %v4851, 7
      %v4853 = vsub.s32 1, %v4852
      %v4854 = vrot.slane %v235, %v4853
      %v4855 = vlaneseq
      %v4856 = vshrl.u32 %v4855, 7
      %v4857 = vsub.s32 1, %v4856
      %v4858 = vrot.slane %v236, %v4857
      %v4859 = vlaneseq
      %v4860 = vshrl.u32 %v4859, 7
      %v4861 = vsub.s32 1, %v4860
      %v4862 = vrot.slane %v237, %v4861
      %v4863 = vlaneseq
      %v4864 = vshrl.u32 %v4863, 7
      %v4865 = vsub.s32 1, %v4864
      %v4866 = vrot.slane %v238, %v4865
      %v4867 = vlaneseq
      %v4868 = vshrl.u32 %v4867, 7
      %v4869 = vsub.s32 1, %v4868
      %v4870 = vrot.slane %v239, %v4869
      %v4871 = vlaneseq
      %v4872 = vshrl.u32 %v4871, 7
      %v4873 = vsub.s32 1, %v4872
      %v4874 = vrot.slane %v240, %v4873
      %v4875 = vlaneseq
      %v4876 = vshrl.u32 %v4875, 7
      %v4877 = vsub.s32 1, %v4876
      %v4878 = vrot.slane %v241, %v4877
      %v4879 = vlaneseq
      %v4880 = vshrl.u32 %v4879, 7
      %v4881 = vsub.s32 1, %v4880
      %v4882 = vrot.slane %v242, %v4881
      %v4883 = vlaneseq
      %v4884 = vshrl.u32 %v4883, 7
      %v4885 = vsub.s32 1, %v4884
      %v4886 = vrot.slane %v243, %v4885
      %v4887 = vlaneseq
      %v4888 = vshrl.u32 %v4887, 7
      %v4889 = vsub.s32 1, %v4888
      %v4890 = vrot.slane %v244, %v4889
      %v4891 = vlaneseq
      %v4892 = vshrl.u32 %v4891, 7
      %v4893 = vsub.s32 1, %v4892
      %v4894 = vrot.slane %v245, %v4893
      %v4895 = vlaneseq
      %v4896 = vshrl.u32 %v4895, 7
      %v4897 = vsub.s32 1, %v4896
      %v4898 = vrot.slane %v246, %v4897
      %v4899 = vlaneseq
      %v4900 = vshrl.u32 %v4899, 7
      %v4901 = vsub.s32 1, %v4900
      %v4902 = vrot.slane %v247, %v4901
      %v4903 = vlaneseq
      %v4904 = vshrl.u32 %v4903, 7
      %v4905 = vsub.s32 1, %v4904
      %v4906 = vrot.slane %v248, %v4905
      %v4907 = vlaneseq
      %v4908 = vshrl.u32 %v4907, 7
      %v4909 = vsub.s32 1, %v4908
      %v4910 = vrot.slane %v249, %v4909
      %v4911 = vlaneseq
      %v4912 = vshrl.u32 %v4911, 7
      %v4913 = vsub.s32 1, %v4912
      %v4914 = vrot.slane %v250, %v4913
      %v4915 = vlaneseq
      %v4916 = vshrl.u32 %v4915, 7
      %v4917 = vsub.s32 1, %v4916
      %v4918 = vrot.slane %v251, %v4917
      %v4919 = vlaneseq
      %v4920 = vshrl.u32 %v4919, 7
      %v4921 = vsub.s32 1, %v4920
      %v4922 = vrot.slane %v252, %v4921
      %v4923 = vlaneseq
      %v4924 = vshrl.u32 %v4923, 7
      %v4925 = vsub.s32 1, %v4924
      %v4926 = vrot.slane %v253, %v4925
      %v4927 = vlaneseq
      %v4928 = vshrl.u32 %v4927, 7
      %v4929 = vsub.s32 1, %v4928
      %v4930 = vrot.slane %v254, %v4929
      %v4931 = vlaneseq
      %v4932 = vshrl.u32 %v4931, 7
      %v4933 = vsub.s32 1, %v4932
      %v4934 = vrot.slane %v255, %v4933
      %v4935 = vlaneseq
      %v4936 = vshrl.u32 %v4935, 7
      %v4937 = vsub.s32 1, %v4936
      %v4938 = vrot.slane %v256, %v4937
      %v4939 = vlaneseq
      %v4940 = vshrl.u32 %v4939, 7
      %v4941 = vsub.s32 1, %v4940
      %v4942 = vrot.slane %v257, %v4941
      %v4943 = vlaneseq
      %v4944 = vshrl.u32 %v4943, 7
      %v4945 = vsub.s32 1, %v4944
      %v4946 = vrot.slane %v258, %v4945
      %v4947 = vlaneseq
      %v4948 = vshrl.u32 %v4947, 7
      %v4949 = vsub.s32 1, %v4948
      %v4950 = vrot.slane %v259, %v4949
      %v4951 = vlaneseq
      %v4952 = vshrl.u32 %v4951, 7
      %v4953 = vsub.s32 1, %v4952
      %v4954 = vrot.slane %v260, %v4953
      %v4955 = vlaneseq
      %v4956 = vshrl.u32 %v4955, 7
      %v4957 = vsub.s32 1, %v4956
      %v4958 = vrot.slane %v261, %v4957
      %v4959 = vlaneseq
      %v4960 = vshrl.u32 %v4959, 7
      %v4961 = vsub.s32 1, %v4960
      %v4962 = vrot.slane %v262, %v4961
      %v4963 = vlaneseq
      %v4964 = vshrl.u32 %v4963, 7
      %v4965 = vsub.s32 1, %v4964
      %v4966 = vrot.slane %v263, %v4965
      %v4967 = vlaneseq
      %v4968 = vshrl.u32 %v4967, 7
      %v4969 = vsub.s32 1, %v4968
      %v4970 = vrot.slane %v264, %v4969
      %v4971 = vlaneseq
      %v4972 = vshrl.u32 %v4971, 7
      %v4973 = vsub.s32 1, %v4972
      %v4974 = vrot.slane %v265, %v4973
      %v4975 = vlaneseq
      %v4976 = vshrl.u32 %v4975, 7
      %v4977 = vsub.s32 1, %v4976
      %v4978 = vrot.slane %v266, %v4977
      %v4979 = vlaneseq
      %v4980 = vshrl.u32 %v4979, 7
      %v4981 = vsub.s32 1, %v4980
      %v4982 = vrot.slane %v267, %v4981
      %v4983 = vlaneseq
      %v4984 = vshrl.u32 %v4983, 7
      %v4985 = vsub.s32 1, %v4984
      %v4986 = vrot.slane %v268, %v4985
      %v4987 = vlaneseq
      %v4988 = vshrl.u32 %v4987, 7
      %v4989 = vsub.s32 1, %v4988
      %v4990 = vrot.slane %v269, %v4989
      %v4991 = vlaneseq
      %v4992 = vshrl.u32 %v4991, 7
      %v4993 = vsub.s32 1, %v4992
      %v4994 = vrot.slane %v270, %v4993
      %v4995 = vlaneseq
      %v4996 = vshrl.u32 %v4995, 7
      %v4997 = vsub.s32 1, %v4996
      %v4998 = vrot.slane %v271, %v4997
      %v4999 = vlaneseq
      %v5000 = vshrl.u32 %v4999, 7
      %v5001 = vsub.s32 1, %v5000
      %v5002 = vrot.slane %v272, %v5001
      %v5003 = vlaneseq
      %v5004 = vshrl.u32 %v5003, 7
      %v5005 = vsub.s32 1, %v5004
      %v5006 = vrot.slane %v273, %v5005
      %v5007 = vlaneseq
      %v5008 = vshrl.u32 %v5007, 7
      %v5009 = vsub.s32 1, %v5008
      %v5010 = vrot.slane %v274, %v5009
      %v5011 = vlaneseq
      %v5012 = vshrl.u32 %v5011, 7
      %v5013 = vsub.s32 1, %v5012
      %v5014 = vrot.slane %v275, %v5013
      %v5015 = vlaneseq
      %v5016 = vshrl.u32 %v5015, 7
      %v5017 = vsub.s32 1, %v5016
      %v5018 = vrot.slane %v276, %v5017
      %v5019 = vlaneseq
      %v5020 = vshrl.u32 %v5019, 7
      %v5021 = vsub.s32 1, %v5020
      %v5022 = vrot.slane %v277, %v5021
      %v5023 = vlaneseq
      %v5024 = vshrl.u32 %v5023, 7
      %v5025 = vsub.s32 1, %v5024
      %v5026 = vrot.slane %v278, %v5025
      %v5027 = vlaneseq
      %v5028 = vshrl.u32 %v5027, 7
      %v5029 = vsub.s32 1, %v5028
      %v5030 = vrot.slane %v279, %v5029
      %v5031 = vlaneseq
      %v5032 = vshrl.u32 %v5031, 7
      %v5033 = vsub.s32 1, %v5032
      %v5034 = vrot.slane %v280, %v5033
      %v5035 = vlaneseq
      %v5036 = vshrl.u32 %v5035, 7
      %v5037 = vsub.s32 1, %v5036
      %v5038 = vrot.slane %v281, %v5037
      %v5039 = vlaneseq
      %v5040 = vshrl.u32 %v5039, 7
      %v5041 = vsub.s32 1, %v5040
      %v5042 = vrot.slane %v282, %v5041
      %v5043 = vlaneseq
      %v5044 = vshrl.u32 %v5043, 7
      %v5045 = vsub.s32 1, %v5044
      %v5046 = vrot.slane %v283, %v5045
      %v5047 = vlaneseq
      %v5048 = vshrl.u32 %v5047, 7
      %v5049 = vsub.s32 1, %v5048
      %v5050 = vrot.slane %v284, %v5049
      %v5051 = vlaneseq
      %v5052 = vshrl.u32 %v5051, 7
      %v5053 = vsub.s32 1, %v5052
      %v5054 = vrot.slane %v285, %v5053
      %v5055 = vlaneseq
      %v5056 = vshrl.u32 %v5055, 7
      %v5057 = vsub.s32 1, %v5056
      %v5058 = vrot.slane %v286, %v5057
      %v5059 = vlaneseq
      %v5060 = vshrl.u32 %v5059, 7
      %v5061 = vsub.s32 1, %v5060
      %v5062 = vrot.slane %v287, %v5061
      %v5063 = vlaneseq
      %v5064 = vshrl.u32 %v5063, 7
      %v5065 = vsub.s32 1, %v5064
      %v5066 = vrot.slane %v288, %v5065
      %v5067 = vlaneseq
      %v5068 = vshrl.u32 %v5067, 7
      %v5069 = vsub.s32 1, %v5068
      %v5070 = vrot.slane %v289, %v5069
      %v5071 = vlaneseq
      %v5072 = vshrl.u32 %v5071, 7
      %v5073 = vsub.s32 1, %v5072
      %v5074 = vrot.slane %v290, %v5073
      %v5075 = vlaneseq
      %v5076 = vshrl.u32 %v5075, 7
      %v5077 = vsub.s32 1, %v5076
      %v5078 = vrot.slane %v291, %v5077
      %v5079 = vlaneseq
      %v5080 = vshrl.u32 %v5079, 7
      %v5081 = vsub.s32 1, %v5080
      %v5082 = vrot.slane %v292, %v5081
      %v5083 = vlaneseq
      %v5084 = vshrl.u32 %v5083, 7
      %v5085 = vsub.s32 1, %v5084
      %v5086 = vrot.slane %v293, %v5085
      %v5087 = vlaneseq
      %v5088 = vshrl.u32 %v5087, 7
      %v5089 = vsub.s32 1, %v5088
      %v5090 = vrot.slane %v294, %v5089
      %v5091 = vlaneseq
      %v5092 = vshrl.u32 %v5091, 7
      %v5093 = vsub.s32 1, %v5092
      %v5094 = vrot.slane %v295, %v5093
      %v5095 = vlaneseq
      %v5096 = vshrl.u32 %v5095, 7
      %v5097 = vsub.s32 1, %v5096
      %v5098 = vrot.slane %v296, %v5097
      %v5099 = vlaneseq
      %v5100 = vshrl.u32 %v5099, 7
      %v5101 = vsub.s32 1, %v5100
      %v5102 = vrot.slane %v297, %v5101
      %v5103 = vlaneseq
      %v5104 = vshrl.u32 %v5103, 7
      %v5105 = vsub.s32 1, %v5104
      %v5106 = vrot.slane %v298, %v5105
      %v5107 = vlaneseq
      %v5108 = vshrl.u32 %v5107, 7
      %v5109 = vsub.s32 1, %v5108
      %v5110 = vrot.slane %v299, %v5109
      %v5111 = vlaneseq
      %v5112 = vshrl.u32 %v5111, 7
      %v5113 = vsub.s32 1, %v5112
      %v5114 = vrot.slane %v300, %v5113
      %v5115 = vlaneseq
      %v5116 = vshrl.u32 %v5115, 7
      %v5117 = vsub.s32 1, %v5116
      %v5118 = vrot.slane %v301, %v5117
      %v5119 = vmul.f32 %v4097, %v4610
      %v5120 = vmul.f32 %v4101, %v4614
      %v5121 = vmul.f32 %v4105, %v4618
      %v5122 = vmul.f32 %v4109, %v4622
      %v5123 = vmul.f32 %v4113, %v4626
      %v5124 = vmul.f32 %v4117, %v4630
      %v5125 = vmul.f32 %v4121, %v4634
      %v5126 = vmul.f32 %v4125, %v4638
      %v5127 = vmul.f32 %v4129, %v4642
      %v5128 = vmul.f32 %v4133, %v4646
      %v5129 = vmul.f32 %v4137, %v4650
      %v5130 = vmul.f32 %v4141, %v4654
      %v5131 = vmul.f32 %v4145, %v4658
      %v5132 = vmul.f32 %v4149, %v4662
      %v5133 = vmul.f32 %v4153, %v4666
      %v5134 = vmul.f32 %v4157, %v4670
      %v5135 = vmul.f32 %v4161, %v4674
      %v5136 = vmul.f32 %v4165, %v4678
      %v5137 = vmul.f32 %v4169, %v4682
      %v5138 = vmul.f32 %v4173, %v4686
      %v5139 = vmul.f32 %v4177, %v4690
      %v5140 = vmul.f32 %v4181, %v4694
      %v5141 = vmul.f32 %v4185, %v4698
      %v5142 = vmul.f32 %v4189, %v4702
      %v5143 = vmul.f32 %v4193, %v4706
      %v5144 = vmul.f32 %v4197, %v4710
      %v5145 = vmul.f32 %v4201, %v4714
      %v5146 = vmul.f32 %v4205, %v4718
      %v5147 = vmul.f32 %v4209, %v4722
      %v5148 = vmul.f32 %v4213, %v4726
      %v5149 = vmul.f32 %v4217, %v4730
      %v5150 = vmul.f32 %v4221, %v4734
      %v5151 = vmul.f32 %v4225, %v4738
      %v5152 = vmul.f32 %v4229, %v4742
      %v5153 = vmul.f32 %v4233, %v4746
      %v5154 = vmul.f32 %v4237, %v4750
      %v5155 = vmul.f32 %v4241, %v4754
      %v5156 = vmul.f32 %v4245, %v4758
      %v5157 = vmul.f32 %v4249, %v4762
      %v5158 = vmul.f32 %v4253, %v4766
      %v5159 = vmul.f32 %v4257, %v4770
      %v5160 = vmul.f32 %v4261, %v4774
      %v5161 = vmul.f32 %v4265, %v4778
      %v5162 = vmul.f32 %v4269, %v4782
      %v5163 = vmul.f32 %v4273, %v4786
      %v5164 = vmul.f32 %v4277, %v4790
      %v5165 = vmul.f32 %v4281, %v4794
      %v5166 = vmul.f32 %v4285, %v4798
      %v5167 = vmul.f32 %v4289, %v4802
      %v5168 = vmul.f32 %v4293, %v4806
      %v5169 = vmul.f32 %v4297, %v4810
      %v5170 = vmul.f32 %v4301, %v4814
      %v5171 = vmul.f32 %v4305, %v4818
      %v5172 = vmul.f32 %v4309, %v4822
      %v5173 = vmul.f32 %v4313, %v4826
      %v5174 = vmul.f32 %v4317, %v4830
      %v5175 = vmul.f32 %v4321, %v4834
      %v5176 = vmul.f32 %v4325, %v4838
      %v5177 = vmul.f32 %v4329, %v4842
      %v5178 = vmul.f32 %v4333, %v4846
      %v5179 = vmul.f32 %v4337, %v4850
      %v5180 = vmul.f32 %v4341, %v4854
      %v5181 = vmul.f32 %v4345, %v4858
      %v5182 = vmul.f32 %v4349, %v4862
      %v5183 = vmul.f32 %v4353, %v4866
      %v5184 = vmul.f32 %v4357, %v4870
      %v5185 = vmul.f32 %v4361, %v4874
      %v5186 = vmul.f32 %v4365, %v4878
      %v5187 = vmul.f32 %v4369, %v4882
      %v5188 = vmul.f32 %v4373, %v4886
      %v5189 = vmul.f32 %v4377, %v4890
      %v5190 = vmul.f32 %v4381, %v4894
      %v5191 = vmul.f32 %v4385, %v4898
      %v5192 = vmul.f32 %v4389, %v4902
      %v5193 = vmul.f32 %v4393, %v4906
      %v5194 = vmul.f32 %v4397, %v4910
      %v5195 = vmul.f32 %v4401, %v4914
      %v5196 = vmul.f32 %v4405, %v4918
      %v5197 = vmul.f32 %v4409, %v4922
      %v5198 = vmul.f32 %v4413, %v4926
      %v5199 = vmul.f32 %v4417, %v4930
      %v5200 = vmul.f32 %v4421, %v4934
      %v5201 = vmul.f32 %v4425, %v4938
      %v5202 = vmul.f32 %v4429, %v4942
      %v5203 = vmul.f32 %v4433, %v4946
      %v5204 = vmul.f32 %v4437, %v4950
      %v5205 = vmul.f32 %v4441, %v4954
      %v5206 = vmul.f32 %v4445, %v4958
      %v5207 = vmul.f32 %v4449, %v4962
      %v5208 = vmul.f32 %v4453, %v4966
      %v5209 = vmul.f32 %v4457, %v4970
      %v5210 = vmul.f32 %v4461, %v4974
      %v5211 = vmul.f32 %v4465, %v4978
      %v5212 = vmul.f32 %v4469, %v4982
      %v5213 = vmul.f32 %v4473, %v4986
      %v5214 = vmul.f32 %v4477, %v4990
      %v5215 = vmul.f32 %v4481, %v4994
      %v5216 = vmul.f32 %v4485, %v4998
      %v5217 = vmul.f32 %v4489, %v5002
      %v5218 = vmul.f32 %v4493, %v5006
      %v5219 = vmul.f32 %v4497, %v5010
      %v5220 = vmul.f32 %v4501, %v5014
      %v5221 = vmul.f32 %v4505, %v5018
      %v5222 = vmul.f32 %v4509, %v5022
      %v5223 = vmul.f32 %v4513, %v5026
      %v5224 = vmul.f32 %v4517, %v5030
      %v5225 = vmul.f32 %v4521, %v5034
      %v5226 = vmul.f32 %v4525, %v5038
      %v5227 = vmul.f32 %v4529, %v5042
      %v5228 = vmul.f32 %v4533, %v5046
      %v5229 = vmul.f32 %v4537, %v5050
      %v5230 = vmul.f32 %v4541, %v5054
      %v5231 = vmul.f32 %v4545, %v5058
      %v5232 = vmul.f32 %v4549, %v5062
      %v5233 = vmul.f32 %v4553, %v5066
      %v5234 = vmul.f32 %v4557, %v5070
      %v5235 = vmul.f32 %v4561, %v5074
      %v5236 = vmul.f32 %v4565, %v5078
      %v5237 = vmul.f32 %v4569, %v5082
      %v5238 = vmul.f32 %v4573, %v5086
      %v5239 = vmul.f32 %v4577, %v5090
      %v5240 = vmul.f32 %v4581, %v5094
      %v5241 = vmul.f32 %v4585, %v5098
      %v5242 = vmul.f32 %v4589, %v5102
      %v5243 = vmul.f32 %v4593, %v5106
      %v5244 = vmul.f32 %v4597, %v5110
      %v5245 = vmul.f32 %v4601, %v5114
      %v5246 = vmul.f32 %v4605, %v5118
      %v5247 = vadd.f32 %v3967, %v5119
      %v5248 = vadd.f32 %v3968, %v5120
      %v5249 = vadd.f32 %v3969, %v5121
      %v5250 = vadd.f32 %v3970, %v5122
      %v5251 = vadd.f32 %v3971, %v5123
      %v5252 = vadd.f32 %v3972, %v5124
      %v5253 = vadd.f32 %v3973, %v5125
      %v5254 = vadd.f32 %v3974, %v5126
      %v5255 = vadd.f32 %v3975, %v5127
      %v5256 = vadd.f32 %v3976, %v5128
      %v5257 = vadd.f32 %v3977, %v5129
      %v5258 = vadd.f32 %v3978, %v5130
      %v5259 = vadd.f32 %v3979, %v5131
      %v5260 = vadd.f32 %v3980, %v5132
      %v5261 = vadd.f32 %v3981, %v5133
      %v5262 = vadd.f32 %v3982, %v5134
      %v5263 = vadd.f32 %v3983, %v5135
      %v5264 = vadd.f32 %v3984, %v5136
      %v5265 = vadd.f32 %v3985, %v5137
      %v5266 = vadd.f32 %v3986, %v5138
      %v5267 = vadd.f32 %v3987, %v5139
      %v5268 = vadd.f32 %v3988, %v5140
      %v5269 = vadd.f32 %v3989, %v5141
      %v5270 = vadd.f32 %v3990, %v5142
      %v5271 = vadd.f32 %v3991, %v5143
      %v5272 = vadd.f32 %v3992, %v5144
      %v5273 = vadd.f32 %v3993, %v5145
      %v5274 = vadd.f32 %v3994, %v5146
      %v5275 = vadd.f32 %v3995, %v5147
      %v5276 = vadd.f32 %v3996, %v5148
      %v5277 = vadd.f32 %v3997, %v5149
      %v5278 = vadd.f32 %v3998, %v5150
      %v5279 = vadd.f32 %v3999, %v5151
      %v5280 = vadd.f32 %v4000, %v5152
      %v5281 = vadd.f32 %v4001, %v5153
      %v5282 = vadd.f32 %v4002, %v5154
      %v5283 = vadd.f32 %v4003, %v5155
      %v5284 = vadd.f32 %v4004, %v5156
      %v5285 = vadd.f32 %v4005, %v5157
      %v5286 = vadd.f32 %v4006, %v5158
      %v5287 = vadd.f32 %v4007, %v5159
      %v5288 = vadd.f32 %v4008, %v5160
      %v5289 = vadd.f32 %v4009, %v5161
      %v5290 = vadd.f32 %v4010, %v5162
      %v5291 = vadd.f32 %v4011, %v5163
      %v5292 = vadd.f32 %v4012, %v5164
      %v5293 = vadd.f32 %v4013, %v5165
      %v5294 = vadd.f32 %v4014, %v5166
      %v5295 = vadd.f32 %v4015, %v5167
      %v5296 = vadd.f32 %v4016, %v5168
      %v5297 = vadd.f32 %v4017, %v5169
      %v5298 = vadd.f32 %v4018, %v5170
      %v5299 = vadd.f32 %v4019, %v5171
      %v5300 = vadd.f32 %v4020, %v5172
      %v5301 = vadd.f32 %v4021, %v5173
      %v5302 = vadd.f32 %v4022, %v5174
      %v5303 = vadd.f32 %v4023, %v5175
      %v5304 = vadd.f32 %v4024, %v5176
      %v5305 = vadd.f32 %v4025, %v5177
      %v5306 = vadd.f32 %v4026, %v5178
      %v5307 = vadd.f32 %v4027, %v5179
      %v5308 = vadd.f32 %v4028, %v5180
      %v5309 = vadd.f32 %v4029, %v5181
      %v5310 = vadd.f32 %v4030, %v5182
      %v5311 = vadd.f32 %v4031, %v5183
      %v5312 = vadd.f32 %v4032, %v5184
      %v5313 = vadd.f32 %v4033, %v5185
      %v5314 = vadd.f32 %v4034, %v5186
      %v5315 = vadd.f32 %v4035, %v5187
      %v5316 = vadd.f32 %v4036, %v5188
      %v5317 = vadd.f32 %v4037, %v5189
      %v5318 = vadd.f32 %v4038, %v5190
      %v5319 = vadd.f32 %v4039, %v5191
      %v5320 = vadd.f32 %v4040, %v5192
      %v5321 = vadd.f32 %v4041, %v5193
      %v5322 = vadd.f32 %v4042, %v5194
      %v5323 = vadd.f32 %v4043, %v5195
      %v5324 = vadd.f32 %v4044, %v5196
      %v5325 = vadd.f32 %v4045, %v5197
      %v5326 = vadd.f32 %v4046, %v5198
      %v5327 = vadd.f32 %v4047, %v5199
      %v5328 = vadd.f32 %v4048, %v5200
      %v5329 = vadd.f32 %v4049, %v5201
      %v5330 = vadd.f32 %v4050, %v5202
      %v5331 = vadd.f32 %v4051, %v5203
      %v5332 = vadd.f32 %v4052, %v5204
      %v5333 = vadd.f32 %v4053, %v5205
      %v5334 = vadd.f32 %v4054, %v5206
      %v5335 = vadd.f32 %v4055, %v5207
      %v5336 = vadd.f32 %v4056, %v5208
      %v5337 = vadd.f32 %v4057, %v5209
      %v5338 = vadd.f32 %v4058, %v5210
      %v5339 = vadd.f32 %v4059, %v5211
      %v5340 = vadd.f32 %v4060, %v5212
      %v5341 = vadd.f32 %v4061, %v5213
      %v5342 = vadd.f32 %v4062, %v5214
      %v5343 = vadd.f32 %v4063, %v5215
      %v5344 = vadd.f32 %v4064, %v5216
      %v5345 = vadd.f32 %v4065, %v5217
      %v5346 = vadd.f32 %v4066, %v5218
      %v5347 = vadd.f32 %v4067, %v5219
      %v5348 = vadd.f32 %v4068, %v5220
      %v5349 = vadd.f32 %v4069, %v5221
      %v5350 = vadd.f32 %v4070, %v5222
      %v5351 = vadd.f32 %v4071, %v5223
      %v5352 = vadd.f32 %v4072, %v5224
      %v5353 = vadd.f32 %v4073, %v5225
      %v5354 = vadd.f32 %v4074, %v5226
      %v5355 = vadd.f32 %v4075, %v5227
      %v5356 = vadd.f32 %v4076, %v5228
      %v5357 = vadd.f32 %v4077, %v5229
      %v5358 = vadd.f32 %v4078, %v5230
      %v5359 = vadd.f32 %v4079, %v5231
      %v5360 = vadd.f32 %v4080, %v5232
      %v5361 = vadd.f32 %v4081, %v5233
      %v5362 = vadd.f32 %v4082, %v5234
      %v5363 = vadd.f32 %v4083, %v5235
      %v5364 = vadd.f32 %v4084, %v5236
      %v5365 = vadd.f32 %v4085, %v5237
      %v5366 = vadd.f32 %v4086, %v5238
      %v5367 = vadd.f32 %v4087, %v5239
      %v5368 = vadd.f32 %v4088, %v5240
      %v5369 = vadd.f32 %v4089, %v5241
      %v5370 = vadd.f32 %v4090, %v5242
      %v5371 = vadd.f32 %v4091, %v5243
      %v5372 = vadd.f32 %v4092, %v5244
      %v5373 = vadd.f32 %v4093, %v5245
      %v5374 = vadd.f32 %v4094, %v5246
      %5375 = vset.pattern.permute.xlu0 2
      %5376 = vperm.xlu0 %5375, %v2687
      %v5377 = vpop.permute.xlu0 %5376
      %5379 = vset.pattern.permute.xlu0 2
      %5380 = vperm.xlu0 %5379, %v2688
      %v5381 = vpop.permute.xlu0 %5380
      %5383 = vset.pattern.permute.xlu0 2
      %5384 = vperm.xlu0 %5383, %v2689
      %v5385 = vpop.permute.xlu0 %5384
      %5387 = vset.pattern.permute.xlu0 2
      %5388 = vperm.xlu0 %5387, %v2690
      %v5389 = vpop.permute.xlu0 %5388
      %5391 = vset.pattern.permute.xlu0 2
      %5392 = vperm.xlu0 %5391, %v2691
      %v5393 = vpop.permute.xlu0 %5392
      %5395 = vset.pattern.permute.xlu0 2
      %5396 = vperm.xlu0 %5395, %v2692
      %v5397 = vpop.permute.xlu0 %5396
      %5399 = vset.pattern.permute.xlu0 2
      %5400 = vperm.xlu0 %5399, %v2693
      %v5401 = vpop.permute.xlu0 %5400
      %5403 = vset.pattern.permute.xlu0 2
      %5404 = vperm.xlu0 %5403, %v2694
      %v5405 = vpop.permute.xlu0 %5404
      %5407 = vset.pattern.permute.xlu0 2
      %5408 = vperm.xlu0 %5407, %v2695
      %v5409 = vpop.permute.xlu0 %5408
      %5411 = vset.pattern.permute.xlu0 2
      %5412 = vperm.xlu0 %5411, %v2696
      %v5413 = vpop.permute.xlu0 %5412
      %5415 = vset.pattern.permute.xlu0 2
      %5416 = vperm.xlu0 %5415, %v2697
      %v5417 = vpop.permute.xlu0 %5416
      %5419 = vset.pattern.permute.xlu0 2
      %5420 = vperm.xlu0 %5419, %v2698
      %v5421 = vpop.permute.xlu0 %5420
      %5423 = vset.pattern.permute.xlu0 2
      %5424 = vperm.xlu0 %5423, %v2699
      %v5425 = vpop.permute.xlu0 %5424
      %5427 = vset.pattern.permute.xlu0 2
      %5428 = vperm.xlu0 %5427, %v2700
      %v5429 = vpop.permute.xlu0 %5428
      %5431 = vset.pattern.permute.xlu0 2
      %5432 = vperm.xlu0 %5431, %v2701
      %v5433 = vpop.permute.xlu0 %5432
      %5435 = vset.pattern.permute.xlu0 2
      %5436 = vperm.xlu0 %5435, %v2702
      %v5437 = vpop.permute.xlu0 %5436
      %5439 = vset.pattern.permute.xlu0 2
      %5440 = vperm.xlu0 %5439, %v2703
      %v5441 = vpop.permute.xlu0 %5440
      %5443 = vset.pattern.permute.xlu0 2
      %5444 = vperm.xlu0 %5443, %v2704
      %v5445 = vpop.permute.xlu0 %5444
      %5447 = vset.pattern.permute.xlu0 2
      %5448 = vperm.xlu0 %5447, %v2705
      %v5449 = vpop.permute.xlu0 %5448
      %5451 = vset.pattern.permute.xlu0 2
      %5452 = vperm.xlu0 %5451, %v2706
      %v5453 = vpop.permute.xlu0 %5452
      %5455 = vset.pattern.permute.xlu0 2
      %5456 = vperm.xlu0 %5455, %v2707
      %v5457 = vpop.permute.xlu0 %5456
      %5459 = vset.pattern.permute.xlu0 2
      %5460 = vperm.xlu0 %5459, %v2708
      %v5461 = vpop.permute.xlu0 %5460
      %5463 = vset.pattern.permute.xlu0 2
      %5464 = vperm.xlu0 %5463, %v2709
      %v5465 = vpop.permute.xlu0 %5464
      %5467 = vset.pattern.permute.xlu0 2
      %5468 = vperm.xlu0 %5467, %v2710
      %v5469 = vpop.permute.xlu0 %5468
      %5471 = vset.pattern.permute.xlu0 2
      %5472 = vperm.xlu0 %5471, %v2711
      %v5473 = vpop.permute.xlu0 %5472
      %5475 = vset.pattern.permute.xlu0 2
      %5476 = vperm.xlu0 %5475, %v2712
      %v5477 = vpop.permute.xlu0 %5476
      %5479 = vset.pattern.permute.xlu0 2
      %5480 = vperm.xlu0 %5479, %v2713
      %v5481 = vpop.permute.xlu0 %5480
      %5483 = vset.pattern.permute.xlu0 2
      %5484 = vperm.xlu0 %5483, %v2714
      %v5485 = vpop.permute.xlu0 %5484
      %5487 = vset.pattern.permute.xlu0 2
      %5488 = vperm.xlu0 %5487, %v2715
      %v5489 = vpop.permute.xlu0 %5488
      %5491 = vset.pattern.permute.xlu0 2
      %5492 = vperm.xlu0 %5491, %v2716
      %v5493 = vpop.permute.xlu0 %5492
      %5495 = vset.pattern.permute.xlu0 2
      %5496 = vperm.xlu0 %5495, %v2717
      %v5497 = vpop.permute.xlu0 %5496
      %5499 = vset.pattern.permute.xlu0 2
      %5500 = vperm.xlu0 %5499, %v2718
      %v5501 = vpop.permute.xlu0 %5500
      %5503 = vset.pattern.permute.xlu0 2
      %5504 = vperm.xlu0 %5503, %v2719
      %v5505 = vpop.permute.xlu0 %5504
      %5507 = vset.pattern.permute.xlu0 2
      %5508 = vperm.xlu0 %5507, %v2720
      %v5509 = vpop.permute.xlu0 %5508
      %5511 = vset.pattern.permute.xlu0 2
      %5512 = vperm.xlu0 %5511, %v2721
      %v5513 = vpop.permute.xlu0 %5512
      %5515 = vset.pattern.permute.xlu0 2
      %5516 = vperm.xlu0 %5515, %v2722
      %v5517 = vpop.permute.xlu0 %5516
      %5519 = vset.pattern.permute.xlu0 2
      %5520 = vperm.xlu0 %5519, %v2723
      %v5521 = vpop.permute.xlu0 %5520
      %5523 = vset.pattern.permute.xlu0 2
      %5524 = vperm.xlu0 %5523, %v2724
      %v5525 = vpop.permute.xlu0 %5524
      %5527 = vset.pattern.permute.xlu0 2
      %5528 = vperm.xlu0 %5527, %v2725
      %v5529 = vpop.permute.xlu0 %5528
      %5531 = vset.pattern.permute.xlu0 2
      %5532 = vperm.xlu0 %5531, %v2726
      %v5533 = vpop.permute.xlu0 %5532
      %5535 = vset.pattern.permute.xlu0 2
      %5536 = vperm.xlu0 %5535, %v2727
      %v5537 = vpop.permute.xlu0 %5536
      %5539 = vset.pattern.permute.xlu0 2
      %5540 = vperm.xlu0 %5539, %v2728
      %v5541 = vpop.permute.xlu0 %5540
      %5543 = vset.pattern.permute.xlu0 2
      %5544 = vperm.xlu0 %5543, %v2729
      %v5545 = vpop.permute.xlu0 %5544
      %5547 = vset.pattern.permute.xlu0 2
      %5548 = vperm.xlu0 %5547, %v2730
      %v5549 = vpop.permute.xlu0 %5548
      %5551 = vset.pattern.permute.xlu0 2
      %5552 = vperm.xlu0 %5551, %v2731
      %v5553 = vpop.permute.xlu0 %5552
      %5555 = vset.pattern.permute.xlu0 2
      %5556 = vperm.xlu0 %5555, %v2732
      %v5557 = vpop.permute.xlu0 %5556
      %5559 = vset.pattern.permute.xlu0 2
      %5560 = vperm.xlu0 %5559, %v2733
      %v5561 = vpop.permute.xlu0 %5560
      %5563 = vset.pattern.permute.xlu0 2
      %5564 = vperm.xlu0 %5563, %v2734
      %v5565 = vpop.permute.xlu0 %5564
      %5567 = vset.pattern.permute.xlu0 2
      %5568 = vperm.xlu0 %5567, %v2735
      %v5569 = vpop.permute.xlu0 %5568
      %5571 = vset.pattern.permute.xlu0 2
      %5572 = vperm.xlu0 %5571, %v2736
      %v5573 = vpop.permute.xlu0 %5572
      %5575 = vset.pattern.permute.xlu0 2
      %5576 = vperm.xlu0 %5575, %v2737
      %v5577 = vpop.permute.xlu0 %5576
      %5579 = vset.pattern.permute.xlu0 2
      %5580 = vperm.xlu0 %5579, %v2738
      %v5581 = vpop.permute.xlu0 %5580
      %5583 = vset.pattern.permute.xlu0 2
      %5584 = vperm.xlu0 %5583, %v2739
      %v5585 = vpop.permute.xlu0 %5584
      %5587 = vset.pattern.permute.xlu0 2
      %5588 = vperm.xlu0 %5587, %v2740
      %v5589 = vpop.permute.xlu0 %5588
      %5591 = vset.pattern.permute.xlu0 2
      %5592 = vperm.xlu0 %5591, %v2741
      %v5593 = vpop.permute.xlu0 %5592
      %5595 = vset.pattern.permute.xlu0 2
      %5596 = vperm.xlu0 %5595, %v2742
      %v5597 = vpop.permute.xlu0 %5596
      %5599 = vset.pattern.permute.xlu0 2
      %5600 = vperm.xlu0 %5599, %v2743
      %v5601 = vpop.permute.xlu0 %5600
      %5603 = vset.pattern.permute.xlu0 2
      %5604 = vperm.xlu0 %5603, %v2744
      %v5605 = vpop.permute.xlu0 %5604
      %5607 = vset.pattern.permute.xlu0 2
      %5608 = vperm.xlu0 %5607, %v2745
      %v5609 = vpop.permute.xlu0 %5608
      %5611 = vset.pattern.permute.xlu0 2
      %5612 = vperm.xlu0 %5611, %v2746
      %v5613 = vpop.permute.xlu0 %5612
      %5615 = vset.pattern.permute.xlu0 2
      %5616 = vperm.xlu0 %5615, %v2747
      %v5617 = vpop.permute.xlu0 %5616
      %5619 = vset.pattern.permute.xlu0 2
      %5620 = vperm.xlu0 %5619, %v2748
      %v5621 = vpop.permute.xlu0 %5620
      %5623 = vset.pattern.permute.xlu0 2
      %5624 = vperm.xlu0 %5623, %v2749
      %v5625 = vpop.permute.xlu0 %5624
      %5627 = vset.pattern.permute.xlu0 2
      %5628 = vperm.xlu0 %5627, %v2750
      %v5629 = vpop.permute.xlu0 %5628
      %5631 = vset.pattern.permute.xlu0 2
      %5632 = vperm.xlu0 %5631, %v2751
      %v5633 = vpop.permute.xlu0 %5632
      %5635 = vset.pattern.permute.xlu0 2
      %5636 = vperm.xlu0 %5635, %v2752
      %v5637 = vpop.permute.xlu0 %5636
      %5639 = vset.pattern.permute.xlu0 2
      %5640 = vperm.xlu0 %5639, %v2753
      %v5641 = vpop.permute.xlu0 %5640
      %5643 = vset.pattern.permute.xlu0 2
      %5644 = vperm.xlu0 %5643, %v2754
      %v5645 = vpop.permute.xlu0 %5644
      %5647 = vset.pattern.permute.xlu0 2
      %5648 = vperm.xlu0 %5647, %v2755
      %v5649 = vpop.permute.xlu0 %5648
      %5651 = vset.pattern.permute.xlu0 2
      %5652 = vperm.xlu0 %5651, %v2756
      %v5653 = vpop.permute.xlu0 %5652
      %5655 = vset.pattern.permute.xlu0 2
      %5656 = vperm.xlu0 %5655, %v2757
      %v5657 = vpop.permute.xlu0 %5656
      %5659 = vset.pattern.permute.xlu0 2
      %5660 = vperm.xlu0 %5659, %v2758
      %v5661 = vpop.permute.xlu0 %5660
      %5663 = vset.pattern.permute.xlu0 2
      %5664 = vperm.xlu0 %5663, %v2759
      %v5665 = vpop.permute.xlu0 %5664
      %5667 = vset.pattern.permute.xlu0 2
      %5668 = vperm.xlu0 %5667, %v2760
      %v5669 = vpop.permute.xlu0 %5668
      %5671 = vset.pattern.permute.xlu0 2
      %5672 = vperm.xlu0 %5671, %v2761
      %v5673 = vpop.permute.xlu0 %5672
      %5675 = vset.pattern.permute.xlu0 2
      %5676 = vperm.xlu0 %5675, %v2762
      %v5677 = vpop.permute.xlu0 %5676
      %5679 = vset.pattern.permute.xlu0 2
      %5680 = vperm.xlu0 %5679, %v2763
      %v5681 = vpop.permute.xlu0 %5680
      %5683 = vset.pattern.permute.xlu0 2
      %5684 = vperm.xlu0 %5683, %v2764
      %v5685 = vpop.permute.xlu0 %5684
      %5687 = vset.pattern.permute.xlu0 2
      %5688 = vperm.xlu0 %5687, %v2765
      %v5689 = vpop.permute.xlu0 %5688
      %5691 = vset.pattern.permute.xlu0 2
      %5692 = vperm.xlu0 %5691, %v2766
      %v5693 = vpop.permute.xlu0 %5692
      %5695 = vset.pattern.permute.xlu0 2
      %5696 = vperm.xlu0 %5695, %v2767
      %v5697 = vpop.permute.xlu0 %5696
      %5699 = vset.pattern.permute.xlu0 2
      %5700 = vperm.xlu0 %5699, %v2768
      %v5701 = vpop.permute.xlu0 %5700
      %5703 = vset.pattern.permute.xlu0 2
      %5704 = vperm.xlu0 %5703, %v2769
      %v5705 = vpop.permute.xlu0 %5704
      %5707 = vset.pattern.permute.xlu0 2
      %5708 = vperm.xlu0 %5707, %v2770
      %v5709 = vpop.permute.xlu0 %5708
      %5711 = vset.pattern.permute.xlu0 2
      %5712 = vperm.xlu0 %5711, %v2771
      %v5713 = vpop.permute.xlu0 %5712
      %5715 = vset.pattern.permute.xlu0 2
      %5716 = vperm.xlu0 %5715, %v2772
      %v5717 = vpop.permute.xlu0 %5716
      %5719 = vset.pattern.permute.xlu0 2
      %5720 = vperm.xlu0 %5719, %v2773
      %v5721 = vpop.permute.xlu0 %5720
      %5723 = vset.pattern.permute.xlu0 2
      %5724 = vperm.xlu0 %5723, %v2774
      %v5725 = vpop.permute.xlu0 %5724
      %5727 = vset.pattern.permute.xlu0 2
      %5728 = vperm.xlu0 %5727, %v2775
      %v5729 = vpop.permute.xlu0 %5728
      %5731 = vset.pattern.permute.xlu0 2
      %5732 = vperm.xlu0 %5731, %v2776
      %v5733 = vpop.permute.xlu0 %5732
      %5735 = vset.pattern.permute.xlu0 2
      %5736 = vperm.xlu0 %5735, %v2777
      %v5737 = vpop.permute.xlu0 %5736
      %5739 = vset.pattern.permute.xlu0 2
      %5740 = vperm.xlu0 %5739, %v2778
      %v5741 = vpop.permute.xlu0 %5740
      %5743 = vset.pattern.permute.xlu0 2
      %5744 = vperm.xlu0 %5743, %v2779
      %v5745 = vpop.permute.xlu0 %5744
      %5747 = vset.pattern.permute.xlu0 2
      %5748 = vperm.xlu0 %5747, %v2780
      %v5749 = vpop.permute.xlu0 %5748
      %5751 = vset.pattern.permute.xlu0 2
      %5752 = vperm.xlu0 %5751, %v2781
      %v5753 = vpop.permute.xlu0 %5752
      %5755 = vset.pattern.permute.xlu0 2
      %5756 = vperm.xlu0 %5755, %v2782
      %v5757 = vpop.permute.xlu0 %5756
      %5759 = vset.pattern.permute.xlu0 2
      %5760 = vperm.xlu0 %5759, %v2783
      %v5761 = vpop.permute.xlu0 %5760
      %5763 = vset.pattern.permute.xlu0 2
      %5764 = vperm.xlu0 %5763, %v2784
      %v5765 = vpop.permute.xlu0 %5764
      %5767 = vset.pattern.permute.xlu0 2
      %5768 = vperm.xlu0 %5767, %v2785
      %v5769 = vpop.permute.xlu0 %5768
      %5771 = vset.pattern.permute.xlu0 2
      %5772 = vperm.xlu0 %5771, %v2786
      %v5773 = vpop.permute.xlu0 %5772
      %5775 = vset.pattern.permute.xlu0 2
      %5776 = vperm.xlu0 %5775, %v2787
      %v5777 = vpop.permute.xlu0 %5776
      %5779 = vset.pattern.permute.xlu0 2
      %5780 = vperm.xlu0 %5779, %v2788
      %v5781 = vpop.permute.xlu0 %5780
      %5783 = vset.pattern.permute.xlu0 2
      %5784 = vperm.xlu0 %5783, %v2789
      %v5785 = vpop.permute.xlu0 %5784
      %5787 = vset.pattern.permute.xlu0 2
      %5788 = vperm.xlu0 %5787, %v2790
      %v5789 = vpop.permute.xlu0 %5788
      %5791 = vset.pattern.permute.xlu0 2
      %5792 = vperm.xlu0 %5791, %v2791
      %v5793 = vpop.permute.xlu0 %5792
      %5795 = vset.pattern.permute.xlu0 2
      %5796 = vperm.xlu0 %5795, %v2792
      %v5797 = vpop.permute.xlu0 %5796
      %5799 = vset.pattern.permute.xlu0 2
      %5800 = vperm.xlu0 %5799, %v2793
      %v5801 = vpop.permute.xlu0 %5800
      %5803 = vset.pattern.permute.xlu0 2
      %5804 = vperm.xlu0 %5803, %v2794
      %v5805 = vpop.permute.xlu0 %5804
      %5807 = vset.pattern.permute.xlu0 2
      %5808 = vperm.xlu0 %5807, %v2795
      %v5809 = vpop.permute.xlu0 %5808
      %5811 = vset.pattern.permute.xlu0 2
      %5812 = vperm.xlu0 %5811, %v2796
      %v5813 = vpop.permute.xlu0 %5812
      %5815 = vset.pattern.permute.xlu0 2
      %5816 = vperm.xlu0 %5815, %v2797
      %v5817 = vpop.permute.xlu0 %5816
      %5819 = vset.pattern.permute.xlu0 2
      %5820 = vperm.xlu0 %5819, %v2798
      %v5821 = vpop.permute.xlu0 %5820
      %5823 = vset.pattern.permute.xlu0 2
      %5824 = vperm.xlu0 %5823, %v2799
      %v5825 = vpop.permute.xlu0 %5824
      %5827 = vset.pattern.permute.xlu0 2
      %5828 = vperm.xlu0 %5827, %v2800
      %v5829 = vpop.permute.xlu0 %5828
      %5831 = vset.pattern.permute.xlu0 2
      %5832 = vperm.xlu0 %5831, %v2801
      %v5833 = vpop.permute.xlu0 %5832
      %5835 = vset.pattern.permute.xlu0 2
      %5836 = vperm.xlu0 %5835, %v2802
      %v5837 = vpop.permute.xlu0 %5836
      %5839 = vset.pattern.permute.xlu0 2
      %5840 = vperm.xlu0 %5839, %v2803
      %v5841 = vpop.permute.xlu0 %5840
      %5843 = vset.pattern.permute.xlu0 2
      %5844 = vperm.xlu0 %5843, %v2804
      %v5845 = vpop.permute.xlu0 %5844
      %5847 = vset.pattern.permute.xlu0 2
      %5848 = vperm.xlu0 %5847, %v2805
      %v5849 = vpop.permute.xlu0 %5848
      %5851 = vset.pattern.permute.xlu0 2
      %5852 = vperm.xlu0 %5851, %v2806
      %v5853 = vpop.permute.xlu0 %5852
      %5855 = vset.pattern.permute.xlu0 2
      %5856 = vperm.xlu0 %5855, %v2807
      %v5857 = vpop.permute.xlu0 %5856
      %5859 = vset.pattern.permute.xlu0 2
      %5860 = vperm.xlu0 %5859, %v2808
      %v5861 = vpop.permute.xlu0 %5860
      %5863 = vset.pattern.permute.xlu0 2
      %5864 = vperm.xlu0 %5863, %v2809
      %v5865 = vpop.permute.xlu0 %5864
      %5867 = vset.pattern.permute.xlu0 2
      %5868 = vperm.xlu0 %5867, %v2810
      %v5869 = vpop.permute.xlu0 %5868
      %5871 = vset.pattern.permute.xlu0 2
      %5872 = vperm.xlu0 %5871, %v2811
      %v5873 = vpop.permute.xlu0 %5872
      %5875 = vset.pattern.permute.xlu0 2
      %5876 = vperm.xlu0 %5875, %v2812
      %v5877 = vpop.permute.xlu0 %5876
      %5879 = vset.pattern.permute.xlu0 2
      %5880 = vperm.xlu0 %5879, %v2813
      %v5881 = vpop.permute.xlu0 %5880
      %5883 = vset.pattern.permute.xlu0 2
      %5884 = vperm.xlu0 %5883, %v2814
      %v5885 = vpop.permute.xlu0 %5884
      %v5887 = vlaneseq
      %v5888 = vshrl.u32 %v5887, 7
      %v5889 = vsub.s32 2, %v5888
      %v5890 = vrot.slane %v174, %v5889
      %v5891 = vlaneseq
      %v5892 = vshrl.u32 %v5891, 7
      %v5893 = vsub.s32 2, %v5892
      %v5894 = vrot.slane %v175, %v5893
      %v5895 = vlaneseq
      %v5896 = vshrl.u32 %v5895, 7
      %v5897 = vsub.s32 2, %v5896
      %v5898 = vrot.slane %v176, %v5897
      %v5899 = vlaneseq
      %v5900 = vshrl.u32 %v5899, 7
      %v5901 = vsub.s32 2, %v5900
      %v5902 = vrot.slane %v177, %v5901
      %v5903 = vlaneseq
      %v5904 = vshrl.u32 %v5903, 7
      %v5905 = vsub.s32 2, %v5904
      %v5906 = vrot.slane %v178, %v5905
      %v5907 = vlaneseq
      %v5908 = vshrl.u32 %v5907, 7
      %v5909 = vsub.s32 2, %v5908
      %v5910 = vrot.slane %v179, %v5909
      %v5911 = vlaneseq
      %v5912 = vshrl.u32 %v5911, 7
      %v5913 = vsub.s32 2, %v5912
      %v5914 = vrot.slane %v180, %v5913
      %v5915 = vlaneseq
      %v5916 = vshrl.u32 %v5915, 7
      %v5917 = vsub.s32 2, %v5916
      %v5918 = vrot.slane %v181, %v5917
      %v5919 = vlaneseq
      %v5920 = vshrl.u32 %v5919, 7
      %v5921 = vsub.s32 2, %v5920
      %v5922 = vrot.slane %v182, %v5921
      %v5923 = vlaneseq
      %v5924 = vshrl.u32 %v5923, 7
      %v5925 = vsub.s32 2, %v5924
      %v5926 = vrot.slane %v183, %v5925
      %v5927 = vlaneseq
      %v5928 = vshrl.u32 %v5927, 7
      %v5929 = vsub.s32 2, %v5928
      %v5930 = vrot.slane %v184, %v5929
      %v5931 = vlaneseq
      %v5932 = vshrl.u32 %v5931, 7
      %v5933 = vsub.s32 2, %v5932
      %v5934 = vrot.slane %v185, %v5933
      %v5935 = vlaneseq
      %v5936 = vshrl.u32 %v5935, 7
      %v5937 = vsub.s32 2, %v5936
      %v5938 = vrot.slane %v186, %v5937
      %v5939 = vlaneseq
      %v5940 = vshrl.u32 %v5939, 7
      %v5941 = vsub.s32 2, %v5940
      %v5942 = vrot.slane %v187, %v5941
      %v5943 = vlaneseq
      %v5944 = vshrl.u32 %v5943, 7
      %v5945 = vsub.s32 2, %v5944
      %v5946 = vrot.slane %v188, %v5945
      %v5947 = vlaneseq
      %v5948 = vshrl.u32 %v5947, 7
      %v5949 = vsub.s32 2, %v5948
      %v5950 = vrot.slane %v189, %v5949
      %v5951 = vlaneseq
      %v5952 = vshrl.u32 %v5951, 7
      %v5953 = vsub.s32 2, %v5952
      %v5954 = vrot.slane %v190, %v5953
      %v5955 = vlaneseq
      %v5956 = vshrl.u32 %v5955, 7
      %v5957 = vsub.s32 2, %v5956
      %v5958 = vrot.slane %v191, %v5957
      %v5959 = vlaneseq
      %v5960 = vshrl.u32 %v5959, 7
      %v5961 = vsub.s32 2, %v5960
      %v5962 = vrot.slane %v192, %v5961
      %v5963 = vlaneseq
      %v5964 = vshrl.u32 %v5963, 7
      %v5965 = vsub.s32 2, %v5964
      %v5966 = vrot.slane %v193, %v5965
      %v5967 = vlaneseq
      %v5968 = vshrl.u32 %v5967, 7
      %v5969 = vsub.s32 2, %v5968
      %v5970 = vrot.slane %v194, %v5969
      %v5971 = vlaneseq
      %v5972 = vshrl.u32 %v5971, 7
      %v5973 = vsub.s32 2, %v5972
      %v5974 = vrot.slane %v195, %v5973
      %v5975 = vlaneseq
      %v5976 = vshrl.u32 %v5975, 7
      %v5977 = vsub.s32 2, %v5976
      %v5978 = vrot.slane %v196, %v5977
      %v5979 = vlaneseq
      %v5980 = vshrl.u32 %v5979, 7
      %v5981 = vsub.s32 2, %v5980
      %v5982 = vrot.slane %v197, %v5981
      %v5983 = vlaneseq
      %v5984 = vshrl.u32 %v5983, 7
      %v5985 = vsub.s32 2, %v5984
      %v5986 = vrot.slane %v198, %v5985
      %v5987 = vlaneseq
      %v5988 = vshrl.u32 %v5987, 7
      %v5989 = vsub.s32 2, %v5988
      %v5990 = vrot.slane %v199, %v5989
      %v5991 = vlaneseq
      %v5992 = vshrl.u32 %v5991, 7
      %v5993 = vsub.s32 2, %v5992
      %v5994 = vrot.slane %v200, %v5993
      %v5995 = vlaneseq
      %v5996 = vshrl.u32 %v5995, 7
      %v5997 = vsub.s32 2, %v5996
      %v5998 = vrot.slane %v201, %v5997
      %v5999 = vlaneseq
      %v6000 = vshrl.u32 %v5999, 7
      %v6001 = vsub.s32 2, %v6000
      %v6002 = vrot.slane %v202, %v6001
      %v6003 = vlaneseq
      %v6004 = vshrl.u32 %v6003, 7
      %v6005 = vsub.s32 2, %v6004
      %v6006 = vrot.slane %v203, %v6005
      %v6007 = vlaneseq
      %v6008 = vshrl.u32 %v6007, 7
      %v6009 = vsub.s32 2, %v6008
      %v6010 = vrot.slane %v204, %v6009
      %v6011 = vlaneseq
      %v6012 = vshrl.u32 %v6011, 7
      %v6013 = vsub.s32 2, %v6012
      %v6014 = vrot.slane %v205, %v6013
      %v6015 = vlaneseq
      %v6016 = vshrl.u32 %v6015, 7
      %v6017 = vsub.s32 2, %v6016
      %v6018 = vrot.slane %v206, %v6017
      %v6019 = vlaneseq
      %v6020 = vshrl.u32 %v6019, 7
      %v6021 = vsub.s32 2, %v6020
      %v6022 = vrot.slane %v207, %v6021
      %v6023 = vlaneseq
      %v6024 = vshrl.u32 %v6023, 7
      %v6025 = vsub.s32 2, %v6024
      %v6026 = vrot.slane %v208, %v6025
      %v6027 = vlaneseq
      %v6028 = vshrl.u32 %v6027, 7
      %v6029 = vsub.s32 2, %v6028
      %v6030 = vrot.slane %v209, %v6029
      %v6031 = vlaneseq
      %v6032 = vshrl.u32 %v6031, 7
      %v6033 = vsub.s32 2, %v6032
      %v6034 = vrot.slane %v210, %v6033
      %v6035 = vlaneseq
      %v6036 = vshrl.u32 %v6035, 7
      %v6037 = vsub.s32 2, %v6036
      %v6038 = vrot.slane %v211, %v6037
      %v6039 = vlaneseq
      %v6040 = vshrl.u32 %v6039, 7
      %v6041 = vsub.s32 2, %v6040
      %v6042 = vrot.slane %v212, %v6041
      %v6043 = vlaneseq
      %v6044 = vshrl.u32 %v6043, 7
      %v6045 = vsub.s32 2, %v6044
      %v6046 = vrot.slane %v213, %v6045
      %v6047 = vlaneseq
      %v6048 = vshrl.u32 %v6047, 7
      %v6049 = vsub.s32 2, %v6048
      %v6050 = vrot.slane %v214, %v6049
      %v6051 = vlaneseq
      %v6052 = vshrl.u32 %v6051, 7
      %v6053 = vsub.s32 2, %v6052
      %v6054 = vrot.slane %v215, %v6053
      %v6055 = vlaneseq
      %v6056 = vshrl.u32 %v6055, 7
      %v6057 = vsub.s32 2, %v6056
      %v6058 = vrot.slane %v216, %v6057
      %v6059 = vlaneseq
      %v6060 = vshrl.u32 %v6059, 7
      %v6061 = vsub.s32 2, %v6060
      %v6062 = vrot.slane %v217, %v6061
      %v6063 = vlaneseq
      %v6064 = vshrl.u32 %v6063, 7
      %v6065 = vsub.s32 2, %v6064
      %v6066 = vrot.slane %v218, %v6065
      %v6067 = vlaneseq
      %v6068 = vshrl.u32 %v6067, 7
      %v6069 = vsub.s32 2, %v6068
      %v6070 = vrot.slane %v219, %v6069
      %v6071 = vlaneseq
      %v6072 = vshrl.u32 %v6071, 7
      %v6073 = vsub.s32 2, %v6072
      %v6074 = vrot.slane %v220, %v6073
      %v6075 = vlaneseq
      %v6076 = vshrl.u32 %v6075, 7
      %v6077 = vsub.s32 2, %v6076
      %v6078 = vrot.slane %v221, %v6077
      %v6079 = vlaneseq
      %v6080 = vshrl.u32 %v6079, 7
      %v6081 = vsub.s32 2, %v6080
      %v6082 = vrot.slane %v222, %v6081
      %v6083 = vlaneseq
      %v6084 = vshrl.u32 %v6083, 7
      %v6085 = vsub.s32 2, %v6084
      %v6086 = vrot.slane %v223, %v6085
      %v6087 = vlaneseq
      %v6088 = vshrl.u32 %v6087, 7
      %v6089 = vsub.s32 2, %v6088
      %v6090 = vrot.slane %v224, %v6089
      %v6091 = vlaneseq
      %v6092 = vshrl.u32 %v6091, 7
      %v6093 = vsub.s32 2, %v6092
      %v6094 = vrot.slane %v225, %v6093
      %v6095 = vlaneseq
      %v6096 = vshrl.u32 %v6095, 7
      %v6097 = vsub.s32 2, %v6096
      %v6098 = vrot.slane %v226, %v6097
      %v6099 = vlaneseq
      %v6100 = vshrl.u32 %v6099, 7
      %v6101 = vsub.s32 2, %v6100
      %v6102 = vrot.slane %v227, %v6101
      %v6103 = vlaneseq
      %v6104 = vshrl.u32 %v6103, 7
      %v6105 = vsub.s32 2, %v6104
      %v6106 = vrot.slane %v228, %v6105
      %v6107 = vlaneseq
      %v6108 = vshrl.u32 %v6107, 7
      %v6109 = vsub.s32 2, %v6108
      %v6110 = vrot.slane %v229, %v6109
      %v6111 = vlaneseq
      %v6112 = vshrl.u32 %v6111, 7
      %v6113 = vsub.s32 2, %v6112
      %v6114 = vrot.slane %v230, %v6113
      %v6115 = vlaneseq
      %v6116 = vshrl.u32 %v6115, 7
      %v6117 = vsub.s32 2, %v6116
      %v6118 = vrot.slane %v231, %v6117
      %v6119 = vlaneseq
      %v6120 = vshrl.u32 %v6119, 7
      %v6121 = vsub.s32 2, %v6120
      %v6122 = vrot.slane %v232, %v6121
      %v6123 = vlaneseq
      %v6124 = vshrl.u32 %v6123, 7
      %v6125 = vsub.s32 2, %v6124
      %v6126 = vrot.slane %v233, %v6125
      %v6127 = vlaneseq
      %v6128 = vshrl.u32 %v6127, 7
      %v6129 = vsub.s32 2, %v6128
      %v6130 = vrot.slane %v234, %v6129
      %v6131 = vlaneseq
      %v6132 = vshrl.u32 %v6131, 7
      %v6133 = vsub.s32 2, %v6132
      %v6134 = vrot.slane %v235, %v6133
      %v6135 = vlaneseq
      %v6136 = vshrl.u32 %v6135, 7
      %v6137 = vsub.s32 2, %v6136
      %v6138 = vrot.slane %v236, %v6137
      %v6139 = vlaneseq
      %v6140 = vshrl.u32 %v6139, 7
      %v6141 = vsub.s32 2, %v6140
      %v6142 = vrot.slane %v237, %v6141
      %v6143 = vlaneseq
      %v6144 = vshrl.u32 %v6143, 7
      %v6145 = vsub.s32 2, %v6144
      %v6146 = vrot.slane %v238, %v6145
      %v6147 = vlaneseq
      %v6148 = vshrl.u32 %v6147, 7
      %v6149 = vsub.s32 2, %v6148
      %v6150 = vrot.slane %v239, %v6149
      %v6151 = vlaneseq
      %v6152 = vshrl.u32 %v6151, 7
      %v6153 = vsub.s32 2, %v6152
      %v6154 = vrot.slane %v240, %v6153
      %v6155 = vlaneseq
      %v6156 = vshrl.u32 %v6155, 7
      %v6157 = vsub.s32 2, %v6156
      %v6158 = vrot.slane %v241, %v6157
      %v6159 = vlaneseq
      %v6160 = vshrl.u32 %v6159, 7
      %v6161 = vsub.s32 2, %v6160
      %v6162 = vrot.slane %v242, %v6161
      %v6163 = vlaneseq
      %v6164 = vshrl.u32 %v6163, 7
      %v6165 = vsub.s32 2, %v6164
      %v6166 = vrot.slane %v243, %v6165
      %v6167 = vlaneseq
      %v6168 = vshrl.u32 %v6167, 7
      %v6169 = vsub.s32 2, %v6168
      %v6170 = vrot.slane %v244, %v6169
      %v6171 = vlaneseq
      %v6172 = vshrl.u32 %v6171, 7
      %v6173 = vsub.s32 2, %v6172
      %v6174 = vrot.slane %v245, %v6173
      %v6175 = vlaneseq
      %v6176 = vshrl.u32 %v6175, 7
      %v6177 = vsub.s32 2, %v6176
      %v6178 = vrot.slane %v246, %v6177
      %v6179 = vlaneseq
      %v6180 = vshrl.u32 %v6179, 7
      %v6181 = vsub.s32 2, %v6180
      %v6182 = vrot.slane %v247, %v6181
      %v6183 = vlaneseq
      %v6184 = vshrl.u32 %v6183, 7
      %v6185 = vsub.s32 2, %v6184
      %v6186 = vrot.slane %v248, %v6185
      %v6187 = vlaneseq
      %v6188 = vshrl.u32 %v6187, 7
      %v6189 = vsub.s32 2, %v6188
      %v6190 = vrot.slane %v249, %v6189
      %v6191 = vlaneseq
      %v6192 = vshrl.u32 %v6191, 7
      %v6193 = vsub.s32 2, %v6192
      %v6194 = vrot.slane %v250, %v6193
      %v6195 = vlaneseq
      %v6196 = vshrl.u32 %v6195, 7
      %v6197 = vsub.s32 2, %v6196
      %v6198 = vrot.slane %v251, %v6197
      %v6199 = vlaneseq
      %v6200 = vshrl.u32 %v6199, 7
      %v6201 = vsub.s32 2, %v6200
      %v6202 = vrot.slane %v252, %v6201
      %v6203 = vlaneseq
      %v6204 = vshrl.u32 %v6203, 7
      %v6205 = vsub.s32 2, %v6204
      %v6206 = vrot.slane %v253, %v6205
      %v6207 = vlaneseq
      %v6208 = vshrl.u32 %v6207, 7
      %v6209 = vsub.s32 2, %v6208
      %v6210 = vrot.slane %v254, %v6209
      %v6211 = vlaneseq
      %v6212 = vshrl.u32 %v6211, 7
      %v6213 = vsub.s32 2, %v6212
      %v6214 = vrot.slane %v255, %v6213
      %v6215 = vlaneseq
      %v6216 = vshrl.u32 %v6215, 7
      %v6217 = vsub.s32 2, %v6216
      %v6218 = vrot.slane %v256, %v6217
      %v6219 = vlaneseq
      %v6220 = vshrl.u32 %v6219, 7
      %v6221 = vsub.s32 2, %v6220
      %v6222 = vrot.slane %v257, %v6221
      %v6223 = vlaneseq
      %v6224 = vshrl.u32 %v6223, 7
      %v6225 = vsub.s32 2, %v6224
      %v6226 = vrot.slane %v258, %v6225
      %v6227 = vlaneseq
      %v6228 = vshrl.u32 %v6227, 7
      %v6229 = vsub.s32 2, %v6228
      %v6230 = vrot.slane %v259, %v6229
      %v6231 = vlaneseq
      %v6232 = vshrl.u32 %v6231, 7
      %v6233 = vsub.s32 2, %v6232
      %v6234 = vrot.slane %v260, %v6233
      %v6235 = vlaneseq
      %v6236 = vshrl.u32 %v6235, 7
      %v6237 = vsub.s32 2, %v6236
      %v6238 = vrot.slane %v261, %v6237
      %v6239 = vlaneseq
      %v6240 = vshrl.u32 %v6239, 7
      %v6241 = vsub.s32 2, %v6240
      %v6242 = vrot.slane %v262, %v6241
      %v6243 = vlaneseq
      %v6244 = vshrl.u32 %v6243, 7
      %v6245 = vsub.s32 2, %v6244
      %v6246 = vrot.slane %v263, %v6245
      %v6247 = vlaneseq
      %v6248 = vshrl.u32 %v6247, 7
      %v6249 = vsub.s32 2, %v6248
      %v6250 = vrot.slane %v264, %v6249
      %v6251 = vlaneseq
      %v6252 = vshrl.u32 %v6251, 7
      %v6253 = vsub.s32 2, %v6252
      %v6254 = vrot.slane %v265, %v6253
      %v6255 = vlaneseq
      %v6256 = vshrl.u32 %v6255, 7
      %v6257 = vsub.s32 2, %v6256
      %v6258 = vrot.slane %v266, %v6257
      %v6259 = vlaneseq
      %v6260 = vshrl.u32 %v6259, 7
      %v6261 = vsub.s32 2, %v6260
      %v6262 = vrot.slane %v267, %v6261
      %v6263 = vlaneseq
      %v6264 = vshrl.u32 %v6263, 7
      %v6265 = vsub.s32 2, %v6264
      %v6266 = vrot.slane %v268, %v6265
      %v6267 = vlaneseq
      %v6268 = vshrl.u32 %v6267, 7
      %v6269 = vsub.s32 2, %v6268
      %v6270 = vrot.slane %v269, %v6269
      %v6271 = vlaneseq
      %v6272 = vshrl.u32 %v6271, 7
      %v6273 = vsub.s32 2, %v6272
      %v6274 = vrot.slane %v270, %v6273
      %v6275 = vlaneseq
      %v6276 = vshrl.u32 %v6275, 7
      %v6277 = vsub.s32 2, %v6276
      %v6278 = vrot.slane %v271, %v6277
      %v6279 = vlaneseq
      %v6280 = vshrl.u32 %v6279, 7
      %v6281 = vsub.s32 2, %v6280
      %v6282 = vrot.slane %v272, %v6281
      %v6283 = vlaneseq
      %v6284 = vshrl.u32 %v6283, 7
      %v6285 = vsub.s32 2, %v6284
      %v6286 = vrot.slane %v273, %v6285
      %v6287 = vlaneseq
      %v6288 = vshrl.u32 %v6287, 7
      %v6289 = vsub.s32 2, %v6288
      %v6290 = vrot.slane %v274, %v6289
      %v6291 = vlaneseq
      %v6292 = vshrl.u32 %v6291, 7
      %v6293 = vsub.s32 2, %v6292
      %v6294 = vrot.slane %v275, %v6293
      %v6295 = vlaneseq
      %v6296 = vshrl.u32 %v6295, 7
      %v6297 = vsub.s32 2, %v6296
      %v6298 = vrot.slane %v276, %v6297
      %v6299 = vlaneseq
      %v6300 = vshrl.u32 %v6299, 7
      %v6301 = vsub.s32 2, %v6300
      %v6302 = vrot.slane %v277, %v6301
      %v6303 = vlaneseq
      %v6304 = vshrl.u32 %v6303, 7
      %v6305 = vsub.s32 2, %v6304
      %v6306 = vrot.slane %v278, %v6305
      %v6307 = vlaneseq
      %v6308 = vshrl.u32 %v6307, 7
      %v6309 = vsub.s32 2, %v6308
      %v6310 = vrot.slane %v279, %v6309
      %v6311 = vlaneseq
      %v6312 = vshrl.u32 %v6311, 7
      %v6313 = vsub.s32 2, %v6312
      %v6314 = vrot.slane %v280, %v6313
      %v6315 = vlaneseq
      %v6316 = vshrl.u32 %v6315, 7
      %v6317 = vsub.s32 2, %v6316
      %v6318 = vrot.slane %v281, %v6317
      %v6319 = vlaneseq
      %v6320 = vshrl.u32 %v6319, 7
      %v6321 = vsub.s32 2, %v6320
      %v6322 = vrot.slane %v282, %v6321
      %v6323 = vlaneseq
      %v6324 = vshrl.u32 %v6323, 7
      %v6325 = vsub.s32 2, %v6324
      %v6326 = vrot.slane %v283, %v6325
      %v6327 = vlaneseq
      %v6328 = vshrl.u32 %v6327, 7
      %v6329 = vsub.s32 2, %v6328
      %v6330 = vrot.slane %v284, %v6329
      %v6331 = vlaneseq
      %v6332 = vshrl.u32 %v6331, 7
      %v6333 = vsub.s32 2, %v6332
      %v6334 = vrot.slane %v285, %v6333
      %v6335 = vlaneseq
      %v6336 = vshrl.u32 %v6335, 7
      %v6337 = vsub.s32 2, %v6336
      %v6338 = vrot.slane %v286, %v6337
      %v6339 = vlaneseq
      %v6340 = vshrl.u32 %v6339, 7
      %v6341 = vsub.s32 2, %v6340
      %v6342 = vrot.slane %v287, %v6341
      %v6343 = vlaneseq
      %v6344 = vshrl.u32 %v6343, 7
      %v6345 = vsub.s32 2, %v6344
      %v6346 = vrot.slane %v288, %v6345
      %v6347 = vlaneseq
      %v6348 = vshrl.u32 %v6347, 7
      %v6349 = vsub.s32 2, %v6348
      %v6350 = vrot.slane %v289, %v6349
      %v6351 = vlaneseq
      %v6352 = vshrl.u32 %v6351, 7
      %v6353 = vsub.s32 2, %v6352
      %v6354 = vrot.slane %v290, %v6353
      %v6355 = vlaneseq
      %v6356 = vshrl.u32 %v6355, 7
      %v6357 = vsub.s32 2, %v6356
      %v6358 = vrot.slane %v291, %v6357
      %v6359 = vlaneseq
      %v6360 = vshrl.u32 %v6359, 7
      %v6361 = vsub.s32 2, %v6360
      %v6362 = vrot.slane %v292, %v6361
      %v6363 = vlaneseq
      %v6364 = vshrl.u32 %v6363, 7
      %v6365 = vsub.s32 2, %v6364
      %v6366 = vrot.slane %v293, %v6365
      %v6367 = vlaneseq
      %v6368 = vshrl.u32 %v6367, 7
      %v6369 = vsub.s32 2, %v6368
      %v6370 = vrot.slane %v294, %v6369
      %v6371 = vlaneseq
      %v6372 = vshrl.u32 %v6371, 7
      %v6373 = vsub.s32 2, %v6372
      %v6374 = vrot.slane %v295, %v6373
      %v6375 = vlaneseq
      %v6376 = vshrl.u32 %v6375, 7
      %v6377 = vsub.s32 2, %v6376
      %v6378 = vrot.slane %v296, %v6377
      %v6379 = vlaneseq
      %v6380 = vshrl.u32 %v6379, 7
      %v6381 = vsub.s32 2, %v6380
      %v6382 = vrot.slane %v297, %v6381
      %v6383 = vlaneseq
      %v6384 = vshrl.u32 %v6383, 7
      %v6385 = vsub.s32 2, %v6384
      %v6386 = vrot.slane %v298, %v6385
      %v6387 = vlaneseq
      %v6388 = vshrl.u32 %v6387, 7
      %v6389 = vsub.s32 2, %v6388
      %v6390 = vrot.slane %v299, %v6389
      %v6391 = vlaneseq
      %v6392 = vshrl.u32 %v6391, 7
      %v6393 = vsub.s32 2, %v6392
      %v6394 = vrot.slane %v300, %v6393
      %v6395 = vlaneseq
      %v6396 = vshrl.u32 %v6395, 7
      %v6397 = vsub.s32 2, %v6396
      %v6398 = vrot.slane %v301, %v6397
      %v6399 = vmul.f32 %v5377, %v5890
      %v6400 = vmul.f32 %v5381, %v5894
      %v6401 = vmul.f32 %v5385, %v5898
      %v6402 = vmul.f32 %v5389, %v5902
      %v6403 = vmul.f32 %v5393, %v5906
      %v6404 = vmul.f32 %v5397, %v5910
      %v6405 = vmul.f32 %v5401, %v5914
      %v6406 = vmul.f32 %v5405, %v5918
      %v6407 = vmul.f32 %v5409, %v5922
      %v6408 = vmul.f32 %v5413, %v5926
      %v6409 = vmul.f32 %v5417, %v5930
      %v6410 = vmul.f32 %v5421, %v5934
      %v6411 = vmul.f32 %v5425, %v5938
      %v6412 = vmul.f32 %v5429, %v5942
      %v6413 = vmul.f32 %v5433, %v5946
      %v6414 = vmul.f32 %v5437, %v5950
      %v6415 = vmul.f32 %v5441, %v5954
      %v6416 = vmul.f32 %v5445, %v5958
      %v6417 = vmul.f32 %v5449, %v5962
      %v6418 = vmul.f32 %v5453, %v5966
      %v6419 = vmul.f32 %v5457, %v5970
      %v6420 = vmul.f32 %v5461, %v5974
      %v6421 = vmul.f32 %v5465, %v5978
      %v6422 = vmul.f32 %v5469, %v5982
      %v6423 = vmul.f32 %v5473, %v5986
      %v6424 = vmul.f32 %v5477, %v5990
      %v6425 = vmul.f32 %v5481, %v5994
      %v6426 = vmul.f32 %v5485, %v5998
      %v6427 = vmul.f32 %v5489, %v6002
      %v6428 = vmul.f32 %v5493, %v6006
      %v6429 = vmul.f32 %v5497, %v6010
      %v6430 = vmul.f32 %v5501, %v6014
      %v6431 = vmul.f32 %v5505, %v6018
      %v6432 = vmul.f32 %v5509, %v6022
      %v6433 = vmul.f32 %v5513, %v6026
      %v6434 = vmul.f32 %v5517, %v6030
      %v6435 = vmul.f32 %v5521, %v6034
      %v6436 = vmul.f32 %v5525, %v6038
      %v6437 = vmul.f32 %v5529, %v6042
      %v6438 = vmul.f32 %v5533, %v6046
      %v6439 = vmul.f32 %v5537, %v6050
      %v6440 = vmul.f32 %v5541, %v6054
      %v6441 = vmul.f32 %v5545, %v6058
      %v6442 = vmul.f32 %v5549, %v6062
      %v6443 = vmul.f32 %v5553, %v6066
      %v6444 = vmul.f32 %v5557, %v6070
      %v6445 = vmul.f32 %v5561, %v6074
      %v6446 = vmul.f32 %v5565, %v6078
      %v6447 = vmul.f32 %v5569, %v6082
      %v6448 = vmul.f32 %v5573, %v6086
      %v6449 = vmul.f32 %v5577, %v6090
      %v6450 = vmul.f32 %v5581, %v6094
      %v6451 = vmul.f32 %v5585, %v6098
      %v6452 = vmul.f32 %v5589, %v6102
      %v6453 = vmul.f32 %v5593, %v6106
      %v6454 = vmul.f32 %v5597, %v6110
      %v6455 = vmul.f32 %v5601, %v6114
      %v6456 = vmul.f32 %v5605, %v6118
      %v6457 = vmul.f32 %v5609, %v6122
      %v6458 = vmul.f32 %v5613, %v6126
      %v6459 = vmul.f32 %v5617, %v6130
      %v6460 = vmul.f32 %v5621, %v6134
      %v6461 = vmul.f32 %v5625, %v6138
      %v6462 = vmul.f32 %v5629, %v6142
      %v6463 = vmul.f32 %v5633, %v6146
      %v6464 = vmul.f32 %v5637, %v6150
      %v6465 = vmul.f32 %v5641, %v6154
      %v6466 = vmul.f32 %v5645, %v6158
      %v6467 = vmul.f32 %v5649, %v6162
      %v6468 = vmul.f32 %v5653, %v6166
      %v6469 = vmul.f32 %v5657, %v6170
      %v6470 = vmul.f32 %v5661, %v6174
      %v6471 = vmul.f32 %v5665, %v6178
      %v6472 = vmul.f32 %v5669, %v6182
      %v6473 = vmul.f32 %v5673, %v6186
      %v6474 = vmul.f32 %v5677, %v6190
      %v6475 = vmul.f32 %v5681, %v6194
      %v6476 = vmul.f32 %v5685, %v6198
      %v6477 = vmul.f32 %v5689, %v6202
      %v6478 = vmul.f32 %v5693, %v6206
      %v6479 = vmul.f32 %v5697, %v6210
      %v6480 = vmul.f32 %v5701, %v6214
      %v6481 = vmul.f32 %v5705, %v6218
      %v6482 = vmul.f32 %v5709, %v6222
      %v6483 = vmul.f32 %v5713, %v6226
      %v6484 = vmul.f32 %v5717, %v6230
      %v6485 = vmul.f32 %v5721, %v6234
      %v6486 = vmul.f32 %v5725, %v6238
      %v6487 = vmul.f32 %v5729, %v6242
      %v6488 = vmul.f32 %v5733, %v6246
      %v6489 = vmul.f32 %v5737, %v6250
      %v6490 = vmul.f32 %v5741, %v6254
      %v6491 = vmul.f32 %v5745, %v6258
      %v6492 = vmul.f32 %v5749, %v6262
      %v6493 = vmul.f32 %v5753, %v6266
      %v6494 = vmul.f32 %v5757, %v6270
      %v6495 = vmul.f32 %v5761, %v6274
      %v6496 = vmul.f32 %v5765, %v6278
      %v6497 = vmul.f32 %v5769, %v6282
      %v6498 = vmul.f32 %v5773, %v6286
      %v6499 = vmul.f32 %v5777, %v6290
      %v6500 = vmul.f32 %v5781, %v6294
      %v6501 = vmul.f32 %v5785, %v6298
      %v6502 = vmul.f32 %v5789, %v6302
      %v6503 = vmul.f32 %v5793, %v6306
      %v6504 = vmul.f32 %v5797, %v6310
      %v6505 = vmul.f32 %v5801, %v6314
      %v6506 = vmul.f32 %v5805, %v6318
      %v6507 = vmul.f32 %v5809, %v6322
      %v6508 = vmul.f32 %v5813, %v6326
      %v6509 = vmul.f32 %v5817, %v6330
      %v6510 = vmul.f32 %v5821, %v6334
      %v6511 = vmul.f32 %v5825, %v6338
      %v6512 = vmul.f32 %v5829, %v6342
      %v6513 = vmul.f32 %v5833, %v6346
      %v6514 = vmul.f32 %v5837, %v6350
      %v6515 = vmul.f32 %v5841, %v6354
      %v6516 = vmul.f32 %v5845, %v6358
      %v6517 = vmul.f32 %v5849, %v6362
      %v6518 = vmul.f32 %v5853, %v6366
      %v6519 = vmul.f32 %v5857, %v6370
      %v6520 = vmul.f32 %v5861, %v6374
      %v6521 = vmul.f32 %v5865, %v6378
      %v6522 = vmul.f32 %v5869, %v6382
      %v6523 = vmul.f32 %v5873, %v6386
      %v6524 = vmul.f32 %v5877, %v6390
      %v6525 = vmul.f32 %v5881, %v6394
      %v6526 = vmul.f32 %v5885, %v6398
      %v6527 = vadd.f32 %v5247, %v6399
      %v6528 = vadd.f32 %v5248, %v6400
      %v6529 = vadd.f32 %v5249, %v6401
      %v6530 = vadd.f32 %v5250, %v6402
      %v6531 = vadd.f32 %v5251, %v6403
      %v6532 = vadd.f32 %v5252, %v6404
      %v6533 = vadd.f32 %v5253, %v6405
      %v6534 = vadd.f32 %v5254, %v6406
      %v6535 = vadd.f32 %v5255, %v6407
      %v6536 = vadd.f32 %v5256, %v6408
      %v6537 = vadd.f32 %v5257, %v6409
      %v6538 = vadd.f32 %v5258, %v6410
      %v6539 = vadd.f32 %v5259, %v6411
      %v6540 = vadd.f32 %v5260, %v6412
      %v6541 = vadd.f32 %v5261, %v6413
      %v6542 = vadd.f32 %v5262, %v6414
      %v6543 = vadd.f32 %v5263, %v6415
      %v6544 = vadd.f32 %v5264, %v6416
      %v6545 = vadd.f32 %v5265, %v6417
      %v6546 = vadd.f32 %v5266, %v6418
      %v6547 = vadd.f32 %v5267, %v6419
      %v6548 = vadd.f32 %v5268, %v6420
      %v6549 = vadd.f32 %v5269, %v6421
      %v6550 = vadd.f32 %v5270, %v6422
      %v6551 = vadd.f32 %v5271, %v6423
      %v6552 = vadd.f32 %v5272, %v6424
      %v6553 = vadd.f32 %v5273, %v6425
      %v6554 = vadd.f32 %v5274, %v6426
      %v6555 = vadd.f32 %v5275, %v6427
      %v6556 = vadd.f32 %v5276, %v6428
      %v6557 = vadd.f32 %v5277, %v6429
      %v6558 = vadd.f32 %v5278, %v6430
      %v6559 = vadd.f32 %v5279, %v6431
      %v6560 = vadd.f32 %v5280, %v6432
      %v6561 = vadd.f32 %v5281, %v6433
      %v6562 = vadd.f32 %v5282, %v6434
      %v6563 = vadd.f32 %v5283, %v6435
      %v6564 = vadd.f32 %v5284, %v6436
      %v6565 = vadd.f32 %v5285, %v6437
      %v6566 = vadd.f32 %v5286, %v6438
      %v6567 = vadd.f32 %v5287, %v6439
      %v6568 = vadd.f32 %v5288, %v6440
      %v6569 = vadd.f32 %v5289, %v6441
      %v6570 = vadd.f32 %v5290, %v6442
      %v6571 = vadd.f32 %v5291, %v6443
      %v6572 = vadd.f32 %v5292, %v6444
      %v6573 = vadd.f32 %v5293, %v6445
      %v6574 = vadd.f32 %v5294, %v6446
      %v6575 = vadd.f32 %v5295, %v6447
      %v6576 = vadd.f32 %v5296, %v6448
      %v6577 = vadd.f32 %v5297, %v6449
      %v6578 = vadd.f32 %v5298, %v6450
      %v6579 = vadd.f32 %v5299, %v6451
      %v6580 = vadd.f32 %v5300, %v6452
      %v6581 = vadd.f32 %v5301, %v6453
      %v6582 = vadd.f32 %v5302, %v6454
      %v6583 = vadd.f32 %v5303, %v6455
      %v6584 = vadd.f32 %v5304, %v6456
      %v6585 = vadd.f32 %v5305, %v6457
      %v6586 = vadd.f32 %v5306, %v6458
      %v6587 = vadd.f32 %v5307, %v6459
      %v6588 = vadd.f32 %v5308, %v6460
      %v6589 = vadd.f32 %v5309, %v6461
      %v6590 = vadd.f32 %v5310, %v6462
      %v6591 = vadd.f32 %v5311, %v6463
      %v6592 = vadd.f32 %v5312, %v6464
      %v6593 = vadd.f32 %v5313, %v6465
      %v6594 = vadd.f32 %v5314, %v6466
      %v6595 = vadd.f32 %v5315, %v6467
      %v6596 = vadd.f32 %v5316, %v6468
      %v6597 = vadd.f32 %v5317, %v6469
      %v6598 = vadd.f32 %v5318, %v6470
      %v6599 = vadd.f32 %v5319, %v6471
      %v6600 = vadd.f32 %v5320, %v6472
      %v6601 = vadd.f32 %v5321, %v6473
      %v6602 = vadd.f32 %v5322, %v6474
      %v6603 = vadd.f32 %v5323, %v6475
      %v6604 = vadd.f32 %v5324, %v6476
      %v6605 = vadd.f32 %v5325, %v6477
      %v6606 = vadd.f32 %v5326, %v6478
      %v6607 = vadd.f32 %v5327, %v6479
      %v6608 = vadd.f32 %v5328, %v6480
      %v6609 = vadd.f32 %v5329, %v6481
      %v6610 = vadd.f32 %v5330, %v6482
      %v6611 = vadd.f32 %v5331, %v6483
      %v6612 = vadd.f32 %v5332, %v6484
      %v6613 = vadd.f32 %v5333, %v6485
      %v6614 = vadd.f32 %v5334, %v6486
      %v6615 = vadd.f32 %v5335, %v6487
      %v6616 = vadd.f32 %v5336, %v6488
      %v6617 = vadd.f32 %v5337, %v6489
      %v6618 = vadd.f32 %v5338, %v6490
      %v6619 = vadd.f32 %v5339, %v6491
      %v6620 = vadd.f32 %v5340, %v6492
      %v6621 = vadd.f32 %v5341, %v6493
      %v6622 = vadd.f32 %v5342, %v6494
      %v6623 = vadd.f32 %v5343, %v6495
      %v6624 = vadd.f32 %v5344, %v6496
      %v6625 = vadd.f32 %v5345, %v6497
      %v6626 = vadd.f32 %v5346, %v6498
      %v6627 = vadd.f32 %v5347, %v6499
      %v6628 = vadd.f32 %v5348, %v6500
      %v6629 = vadd.f32 %v5349, %v6501
      %v6630 = vadd.f32 %v5350, %v6502
      %v6631 = vadd.f32 %v5351, %v6503
      %v6632 = vadd.f32 %v5352, %v6504
      %v6633 = vadd.f32 %v5353, %v6505
      %v6634 = vadd.f32 %v5354, %v6506
      %v6635 = vadd.f32 %v5355, %v6507
      %v6636 = vadd.f32 %v5356, %v6508
      %v6637 = vadd.f32 %v5357, %v6509
      %v6638 = vadd.f32 %v5358, %v6510
      %v6639 = vadd.f32 %v5359, %v6511
      %v6640 = vadd.f32 %v5360, %v6512
      %v6641 = vadd.f32 %v5361, %v6513
      %v6642 = vadd.f32 %v5362, %v6514
      %v6643 = vadd.f32 %v5363, %v6515
      %v6644 = vadd.f32 %v5364, %v6516
      %v6645 = vadd.f32 %v5365, %v6517
      %v6646 = vadd.f32 %v5366, %v6518
      %v6647 = vadd.f32 %v5367, %v6519
      %v6648 = vadd.f32 %v5368, %v6520
      %v6649 = vadd.f32 %v5369, %v6521
      %v6650 = vadd.f32 %v5370, %v6522
      %v6651 = vadd.f32 %v5371, %v6523
      %v6652 = vadd.f32 %v5372, %v6524
      %v6653 = vadd.f32 %v5373, %v6525
      %v6654 = vadd.f32 %v5374, %v6526
      %6655 = vset.pattern.permute.xlu0 3
      %6656 = vperm.xlu0 %6655, %v2687
      %v6657 = vpop.permute.xlu0 %6656
      %6659 = vset.pattern.permute.xlu0 3
      %6660 = vperm.xlu0 %6659, %v2688
      %v6661 = vpop.permute.xlu0 %6660
      %6663 = vset.pattern.permute.xlu0 3
      %6664 = vperm.xlu0 %6663, %v2689
      %v6665 = vpop.permute.xlu0 %6664
      %6667 = vset.pattern.permute.xlu0 3
      %6668 = vperm.xlu0 %6667, %v2690
      %v6669 = vpop.permute.xlu0 %6668
      %6671 = vset.pattern.permute.xlu0 3
      %6672 = vperm.xlu0 %6671, %v2691
      %v6673 = vpop.permute.xlu0 %6672
      %6675 = vset.pattern.permute.xlu0 3
      %6676 = vperm.xlu0 %6675, %v2692
      %v6677 = vpop.permute.xlu0 %6676
      %6679 = vset.pattern.permute.xlu0 3
      %6680 = vperm.xlu0 %6679, %v2693
      %v6681 = vpop.permute.xlu0 %6680
      %6683 = vset.pattern.permute.xlu0 3
      %6684 = vperm.xlu0 %6683, %v2694
      %v6685 = vpop.permute.xlu0 %6684
      %6687 = vset.pattern.permute.xlu0 3
      %6688 = vperm.xlu0 %6687, %v2695
      %v6689 = vpop.permute.xlu0 %6688
      %6691 = vset.pattern.permute.xlu0 3
      %6692 = vperm.xlu0 %6691, %v2696
      %v6693 = vpop.permute.xlu0 %6692
      %6695 = vset.pattern.permute.xlu0 3
      %6696 = vperm.xlu0 %6695, %v2697
      %v6697 = vpop.permute.xlu0 %6696
      %6699 = vset.pattern.permute.xlu0 3
      %6700 = vperm.xlu0 %6699, %v2698
      %v6701 = vpop.permute.xlu0 %6700
      %6703 = vset.pattern.permute.xlu0 3
      %6704 = vperm.xlu0 %6703, %v2699
      %v6705 = vpop.permute.xlu0 %6704
      %6707 = vset.pattern.permute.xlu0 3
      %6708 = vperm.xlu0 %6707, %v2700
      %v6709 = vpop.permute.xlu0 %6708
      %6711 = vset.pattern.permute.xlu0 3
      %6712 = vperm.xlu0 %6711, %v2701
      %v6713 = vpop.permute.xlu0 %6712
      %6715 = vset.pattern.permute.xlu0 3
      %6716 = vperm.xlu0 %6715, %v2702
      %v6717 = vpop.permute.xlu0 %6716
      %6719 = vset.pattern.permute.xlu0 3
      %6720 = vperm.xlu0 %6719, %v2703
      %v6721 = vpop.permute.xlu0 %6720
      %6723 = vset.pattern.permute.xlu0 3
      %6724 = vperm.xlu0 %6723, %v2704
      %v6725 = vpop.permute.xlu0 %6724
      %6727 = vset.pattern.permute.xlu0 3
      %6728 = vperm.xlu0 %6727, %v2705
      %v6729 = vpop.permute.xlu0 %6728
      %6731 = vset.pattern.permute.xlu0 3
      %6732 = vperm.xlu0 %6731, %v2706
      %v6733 = vpop.permute.xlu0 %6732
      %6735 = vset.pattern.permute.xlu0 3
      %6736 = vperm.xlu0 %6735, %v2707
      %v6737 = vpop.permute.xlu0 %6736
      %6739 = vset.pattern.permute.xlu0 3
      %6740 = vperm.xlu0 %6739, %v2708
      %v6741 = vpop.permute.xlu0 %6740
      %6743 = vset.pattern.permute.xlu0 3
      %6744 = vperm.xlu0 %6743, %v2709
      %v6745 = vpop.permute.xlu0 %6744
      %6747 = vset.pattern.permute.xlu0 3
      %6748 = vperm.xlu0 %6747, %v2710
      %v6749 = vpop.permute.xlu0 %6748
      %6751 = vset.pattern.permute.xlu0 3
      %6752 = vperm.xlu0 %6751, %v2711
      %v6753 = vpop.permute.xlu0 %6752
      %6755 = vset.pattern.permute.xlu0 3
      %6756 = vperm.xlu0 %6755, %v2712
      %v6757 = vpop.permute.xlu0 %6756
      %6759 = vset.pattern.permute.xlu0 3
      %6760 = vperm.xlu0 %6759, %v2713
      %v6761 = vpop.permute.xlu0 %6760
      %6763 = vset.pattern.permute.xlu0 3
      %6764 = vperm.xlu0 %6763, %v2714
      %v6765 = vpop.permute.xlu0 %6764
      %6767 = vset.pattern.permute.xlu0 3
      %6768 = vperm.xlu0 %6767, %v2715
      %v6769 = vpop.permute.xlu0 %6768
      %6771 = vset.pattern.permute.xlu0 3
      %6772 = vperm.xlu0 %6771, %v2716
      %v6773 = vpop.permute.xlu0 %6772
      %6775 = vset.pattern.permute.xlu0 3
      %6776 = vperm.xlu0 %6775, %v2717
      %v6777 = vpop.permute.xlu0 %6776
      %6779 = vset.pattern.permute.xlu0 3
      %6780 = vperm.xlu0 %6779, %v2718
      %v6781 = vpop.permute.xlu0 %6780
      %6783 = vset.pattern.permute.xlu0 3
      %6784 = vperm.xlu0 %6783, %v2719
      %v6785 = vpop.permute.xlu0 %6784
      %6787 = vset.pattern.permute.xlu0 3
      %6788 = vperm.xlu0 %6787, %v2720
      %v6789 = vpop.permute.xlu0 %6788
      %6791 = vset.pattern.permute.xlu0 3
      %6792 = vperm.xlu0 %6791, %v2721
      %v6793 = vpop.permute.xlu0 %6792
      %6795 = vset.pattern.permute.xlu0 3
      %6796 = vperm.xlu0 %6795, %v2722
      %v6797 = vpop.permute.xlu0 %6796
      %6799 = vset.pattern.permute.xlu0 3
      %6800 = vperm.xlu0 %6799, %v2723
      %v6801 = vpop.permute.xlu0 %6800
      %6803 = vset.pattern.permute.xlu0 3
      %6804 = vperm.xlu0 %6803, %v2724
      %v6805 = vpop.permute.xlu0 %6804
      %6807 = vset.pattern.permute.xlu0 3
      %6808 = vperm.xlu0 %6807, %v2725
      %v6809 = vpop.permute.xlu0 %6808
      %6811 = vset.pattern.permute.xlu0 3
      %6812 = vperm.xlu0 %6811, %v2726
      %v6813 = vpop.permute.xlu0 %6812
      %6815 = vset.pattern.permute.xlu0 3
      %6816 = vperm.xlu0 %6815, %v2727
      %v6817 = vpop.permute.xlu0 %6816
      %6819 = vset.pattern.permute.xlu0 3
      %6820 = vperm.xlu0 %6819, %v2728
      %v6821 = vpop.permute.xlu0 %6820
      %6823 = vset.pattern.permute.xlu0 3
      %6824 = vperm.xlu0 %6823, %v2729
      %v6825 = vpop.permute.xlu0 %6824
      %6827 = vset.pattern.permute.xlu0 3
      %6828 = vperm.xlu0 %6827, %v2730
      %v6829 = vpop.permute.xlu0 %6828
      %6831 = vset.pattern.permute.xlu0 3
      %6832 = vperm.xlu0 %6831, %v2731
      %v6833 = vpop.permute.xlu0 %6832
      %6835 = vset.pattern.permute.xlu0 3
      %6836 = vperm.xlu0 %6835, %v2732
      %v6837 = vpop.permute.xlu0 %6836
      %6839 = vset.pattern.permute.xlu0 3
      %6840 = vperm.xlu0 %6839, %v2733
      %v6841 = vpop.permute.xlu0 %6840
      %6843 = vset.pattern.permute.xlu0 3
      %6844 = vperm.xlu0 %6843, %v2734
      %v6845 = vpop.permute.xlu0 %6844
      %6847 = vset.pattern.permute.xlu0 3
      %6848 = vperm.xlu0 %6847, %v2735
      %v6849 = vpop.permute.xlu0 %6848
      %6851 = vset.pattern.permute.xlu0 3
      %6852 = vperm.xlu0 %6851, %v2736
      %v6853 = vpop.permute.xlu0 %6852
      %6855 = vset.pattern.permute.xlu0 3
      %6856 = vperm.xlu0 %6855, %v2737
      %v6857 = vpop.permute.xlu0 %6856
      %6859 = vset.pattern.permute.xlu0 3
      %6860 = vperm.xlu0 %6859, %v2738
      %v6861 = vpop.permute.xlu0 %6860
      %6863 = vset.pattern.permute.xlu0 3
      %6864 = vperm.xlu0 %6863, %v2739
      %v6865 = vpop.permute.xlu0 %6864
      %6867 = vset.pattern.permute.xlu0 3
      %6868 = vperm.xlu0 %6867, %v2740
      %v6869 = vpop.permute.xlu0 %6868
      %6871 = vset.pattern.permute.xlu0 3
      %6872 = vperm.xlu0 %6871, %v2741
      %v6873 = vpop.permute.xlu0 %6872
      %6875 = vset.pattern.permute.xlu0 3
      %6876 = vperm.xlu0 %6875, %v2742
      %v6877 = vpop.permute.xlu0 %6876
      %6879 = vset.pattern.permute.xlu0 3
      %6880 = vperm.xlu0 %6879, %v2743
      %v6881 = vpop.permute.xlu0 %6880
      %6883 = vset.pattern.permute.xlu0 3
      %6884 = vperm.xlu0 %6883, %v2744
      %v6885 = vpop.permute.xlu0 %6884
      %6887 = vset.pattern.permute.xlu0 3
      %6888 = vperm.xlu0 %6887, %v2745
      %v6889 = vpop.permute.xlu0 %6888
      %6891 = vset.pattern.permute.xlu0 3
      %6892 = vperm.xlu0 %6891, %v2746
      %v6893 = vpop.permute.xlu0 %6892
      %6895 = vset.pattern.permute.xlu0 3
      %6896 = vperm.xlu0 %6895, %v2747
      %v6897 = vpop.permute.xlu0 %6896
      %6899 = vset.pattern.permute.xlu0 3
      %6900 = vperm.xlu0 %6899, %v2748
      %v6901 = vpop.permute.xlu0 %6900
      %6903 = vset.pattern.permute.xlu0 3
      %6904 = vperm.xlu0 %6903, %v2749
      %v6905 = vpop.permute.xlu0 %6904
      %6907 = vset.pattern.permute.xlu0 3
      %6908 = vperm.xlu0 %6907, %v2750
      %v6909 = vpop.permute.xlu0 %6908
      %6911 = vset.pattern.permute.xlu0 3
      %6912 = vperm.xlu0 %6911, %v2751
      %v6913 = vpop.permute.xlu0 %6912
      %6915 = vset.pattern.permute.xlu0 3
      %6916 = vperm.xlu0 %6915, %v2752
      %v6917 = vpop.permute.xlu0 %6916
      %6919 = vset.pattern.permute.xlu0 3
      %6920 = vperm.xlu0 %6919, %v2753
      %v6921 = vpop.permute.xlu0 %6920
      %6923 = vset.pattern.permute.xlu0 3
      %6924 = vperm.xlu0 %6923, %v2754
      %v6925 = vpop.permute.xlu0 %6924
      %6927 = vset.pattern.permute.xlu0 3
      %6928 = vperm.xlu0 %6927, %v2755
      %v6929 = vpop.permute.xlu0 %6928
      %6931 = vset.pattern.permute.xlu0 3
      %6932 = vperm.xlu0 %6931, %v2756
      %v6933 = vpop.permute.xlu0 %6932
      %6935 = vset.pattern.permute.xlu0 3
      %6936 = vperm.xlu0 %6935, %v2757
      %v6937 = vpop.permute.xlu0 %6936
      %6939 = vset.pattern.permute.xlu0 3
      %6940 = vperm.xlu0 %6939, %v2758
      %v6941 = vpop.permute.xlu0 %6940
      %6943 = vset.pattern.permute.xlu0 3
      %6944 = vperm.xlu0 %6943, %v2759
      %v6945 = vpop.permute.xlu0 %6944
      %6947 = vset.pattern.permute.xlu0 3
      %6948 = vperm.xlu0 %6947, %v2760
      %v6949 = vpop.permute.xlu0 %6948
      %6951 = vset.pattern.permute.xlu0 3
      %6952 = vperm.xlu0 %6951, %v2761
      %v6953 = vpop.permute.xlu0 %6952
      %6955 = vset.pattern.permute.xlu0 3
      %6956 = vperm.xlu0 %6955, %v2762
      %v6957 = vpop.permute.xlu0 %6956
      %6959 = vset.pattern.permute.xlu0 3
      %6960 = vperm.xlu0 %6959, %v2763
      %v6961 = vpop.permute.xlu0 %6960
      %6963 = vset.pattern.permute.xlu0 3
      %6964 = vperm.xlu0 %6963, %v2764
      %v6965 = vpop.permute.xlu0 %6964
      %6967 = vset.pattern.permute.xlu0 3
      %6968 = vperm.xlu0 %6967, %v2765
      %v6969 = vpop.permute.xlu0 %6968
      %6971 = vset.pattern.permute.xlu0 3
      %6972 = vperm.xlu0 %6971, %v2766
      %v6973 = vpop.permute.xlu0 %6972
      %6975 = vset.pattern.permute.xlu0 3
      %6976 = vperm.xlu0 %6975, %v2767
      %v6977 = vpop.permute.xlu0 %6976
      %6979 = vset.pattern.permute.xlu0 3
      %6980 = vperm.xlu0 %6979, %v2768
      %v6981 = vpop.permute.xlu0 %6980
      %6983 = vset.pattern.permute.xlu0 3
      %6984 = vperm.xlu0 %6983, %v2769
      %v6985 = vpop.permute.xlu0 %6984
      %6987 = vset.pattern.permute.xlu0 3
      %6988 = vperm.xlu0 %6987, %v2770
      %v6989 = vpop.permute.xlu0 %6988
      %6991 = vset.pattern.permute.xlu0 3
      %6992 = vperm.xlu0 %6991, %v2771
      %v6993 = vpop.permute.xlu0 %6992
      %6995 = vset.pattern.permute.xlu0 3
      %6996 = vperm.xlu0 %6995, %v2772
      %v6997 = vpop.permute.xlu0 %6996
      %6999 = vset.pattern.permute.xlu0 3
      %7000 = vperm.xlu0 %6999, %v2773
      %v7001 = vpop.permute.xlu0 %7000
      %7003 = vset.pattern.permute.xlu0 3
      %7004 = vperm.xlu0 %7003, %v2774
      %v7005 = vpop.permute.xlu0 %7004
      %7007 = vset.pattern.permute.xlu0 3
      %7008 = vperm.xlu0 %7007, %v2775
      %v7009 = vpop.permute.xlu0 %7008
      %7011 = vset.pattern.permute.xlu0 3
      %7012 = vperm.xlu0 %7011, %v2776
      %v7013 = vpop.permute.xlu0 %7012
      %7015 = vset.pattern.permute.xlu0 3
      %7016 = vperm.xlu0 %7015, %v2777
      %v7017 = vpop.permute.xlu0 %7016
      %7019 = vset.pattern.permute.xlu0 3
      %7020 = vperm.xlu0 %7019, %v2778
      %v7021 = vpop.permute.xlu0 %7020
      %7023 = vset.pattern.permute.xlu0 3
      %7024 = vperm.xlu0 %7023, %v2779
      %v7025 = vpop.permute.xlu0 %7024
      %7027 = vset.pattern.permute.xlu0 3
      %7028 = vperm.xlu0 %7027, %v2780
      %v7029 = vpop.permute.xlu0 %7028
      %7031 = vset.pattern.permute.xlu0 3
      %7032 = vperm.xlu0 %7031, %v2781
      %v7033 = vpop.permute.xlu0 %7032
      %7035 = vset.pattern.permute.xlu0 3
      %7036 = vperm.xlu0 %7035, %v2782
      %v7037 = vpop.permute.xlu0 %7036
      %7039 = vset.pattern.permute.xlu0 3
      %7040 = vperm.xlu0 %7039, %v2783
      %v7041 = vpop.permute.xlu0 %7040
      %7043 = vset.pattern.permute.xlu0 3
      %7044 = vperm.xlu0 %7043, %v2784
      %v7045 = vpop.permute.xlu0 %7044
      %7047 = vset.pattern.permute.xlu0 3
      %7048 = vperm.xlu0 %7047, %v2785
      %v7049 = vpop.permute.xlu0 %7048
      %7051 = vset.pattern.permute.xlu0 3
      %7052 = vperm.xlu0 %7051, %v2786
      %v7053 = vpop.permute.xlu0 %7052
      %7055 = vset.pattern.permute.xlu0 3
      %7056 = vperm.xlu0 %7055, %v2787
      %v7057 = vpop.permute.xlu0 %7056
      %7059 = vset.pattern.permute.xlu0 3
      %7060 = vperm.xlu0 %7059, %v2788
      %v7061 = vpop.permute.xlu0 %7060
      %7063 = vset.pattern.permute.xlu0 3
      %7064 = vperm.xlu0 %7063, %v2789
      %v7065 = vpop.permute.xlu0 %7064
      %7067 = vset.pattern.permute.xlu0 3
      %7068 = vperm.xlu0 %7067, %v2790
      %v7069 = vpop.permute.xlu0 %7068
      %7071 = vset.pattern.permute.xlu0 3
      %7072 = vperm.xlu0 %7071, %v2791
      %v7073 = vpop.permute.xlu0 %7072
      %7075 = vset.pattern.permute.xlu0 3
      %7076 = vperm.xlu0 %7075, %v2792
      %v7077 = vpop.permute.xlu0 %7076
      %7079 = vset.pattern.permute.xlu0 3
      %7080 = vperm.xlu0 %7079, %v2793
      %v7081 = vpop.permute.xlu0 %7080
      %7083 = vset.pattern.permute.xlu0 3
      %7084 = vperm.xlu0 %7083, %v2794
      %v7085 = vpop.permute.xlu0 %7084
      %7087 = vset.pattern.permute.xlu0 3
      %7088 = vperm.xlu0 %7087, %v2795
      %v7089 = vpop.permute.xlu0 %7088
      %7091 = vset.pattern.permute.xlu0 3
      %7092 = vperm.xlu0 %7091, %v2796
      %v7093 = vpop.permute.xlu0 %7092
      %7095 = vset.pattern.permute.xlu0 3
      %7096 = vperm.xlu0 %7095, %v2797
      %v7097 = vpop.permute.xlu0 %7096
      %7099 = vset.pattern.permute.xlu0 3
      %7100 = vperm.xlu0 %7099, %v2798
      %v7101 = vpop.permute.xlu0 %7100
      %7103 = vset.pattern.permute.xlu0 3
      %7104 = vperm.xlu0 %7103, %v2799
      %v7105 = vpop.permute.xlu0 %7104
      %7107 = vset.pattern.permute.xlu0 3
      %7108 = vperm.xlu0 %7107, %v2800
      %v7109 = vpop.permute.xlu0 %7108
      %7111 = vset.pattern.permute.xlu0 3
      %7112 = vperm.xlu0 %7111, %v2801
      %v7113 = vpop.permute.xlu0 %7112
      %7115 = vset.pattern.permute.xlu0 3
      %7116 = vperm.xlu0 %7115, %v2802
      %v7117 = vpop.permute.xlu0 %7116
      %7119 = vset.pattern.permute.xlu0 3
      %7120 = vperm.xlu0 %7119, %v2803
      %v7121 = vpop.permute.xlu0 %7120
      %7123 = vset.pattern.permute.xlu0 3
      %7124 = vperm.xlu0 %7123, %v2804
      %v7125 = vpop.permute.xlu0 %7124
      %7127 = vset.pattern.permute.xlu0 3
      %7128 = vperm.xlu0 %7127, %v2805
      %v7129 = vpop.permute.xlu0 %7128
      %7131 = vset.pattern.permute.xlu0 3
      %7132 = vperm.xlu0 %7131, %v2806
      %v7133 = vpop.permute.xlu0 %7132
      %7135 = vset.pattern.permute.xlu0 3
      %7136 = vperm.xlu0 %7135, %v2807
      %v7137 = vpop.permute.xlu0 %7136
      %7139 = vset.pattern.permute.xlu0 3
      %7140 = vperm.xlu0 %7139, %v2808
      %v7141 = vpop.permute.xlu0 %7140
      %7143 = vset.pattern.permute.xlu0 3
      %7144 = vperm.xlu0 %7143, %v2809
      %v7145 = vpop.permute.xlu0 %7144
      %7147 = vset.pattern.permute.xlu0 3
      %7148 = vperm.xlu0 %7147, %v2810
      %v7149 = vpop.permute.xlu0 %7148
      %7151 = vset.pattern.permute.xlu0 3
      %7152 = vperm.xlu0 %7151, %v2811
      %v7153 = vpop.permute.xlu0 %7152
      %7155 = vset.pattern.permute.xlu0 3
      %7156 = vperm.xlu0 %7155, %v2812
      %v7157 = vpop.permute.xlu0 %7156
      %7159 = vset.pattern.permute.xlu0 3
      %7160 = vperm.xlu0 %7159, %v2813
      %v7161 = vpop.permute.xlu0 %7160
      %7163 = vset.pattern.permute.xlu0 3
      %7164 = vperm.xlu0 %7163, %v2814
      %v7165 = vpop.permute.xlu0 %7164
      %v7167 = vlaneseq
      %v7168 = vshrl.u32 %v7167, 7
      %v7169 = vsub.s32 3, %v7168
      %v7170 = vrot.slane %v174, %v7169
      %v7171 = vlaneseq
      %v7172 = vshrl.u32 %v7171, 7
      %v7173 = vsub.s32 3, %v7172
      %v7174 = vrot.slane %v175, %v7173
      %v7175 = vlaneseq
      %v7176 = vshrl.u32 %v7175, 7
      %v7177 = vsub.s32 3, %v7176
      %v7178 = vrot.slane %v176, %v7177
      %v7179 = vlaneseq
      %v7180 = vshrl.u32 %v7179, 7
      %v7181 = vsub.s32 3, %v7180
      %v7182 = vrot.slane %v177, %v7181
      %v7183 = vlaneseq
      %v7184 = vshrl.u32 %v7183, 7
      %v7185 = vsub.s32 3, %v7184
      %v7186 = vrot.slane %v178, %v7185
      %v7187 = vlaneseq
      %v7188 = vshrl.u32 %v7187, 7
      %v7189 = vsub.s32 3, %v7188
      %v7190 = vrot.slane %v179, %v7189
      %v7191 = vlaneseq
      %v7192 = vshrl.u32 %v7191, 7
      %v7193 = vsub.s32 3, %v7192
      %v7194 = vrot.slane %v180, %v7193
      %v7195 = vlaneseq
      %v7196 = vshrl.u32 %v7195, 7
      %v7197 = vsub.s32 3, %v7196
      %v7198 = vrot.slane %v181, %v7197
      %v7199 = vlaneseq
      %v7200 = vshrl.u32 %v7199, 7
      %v7201 = vsub.s32 3, %v7200
      %v7202 = vrot.slane %v182, %v7201
      %v7203 = vlaneseq
      %v7204 = vshrl.u32 %v7203, 7
      %v7205 = vsub.s32 3, %v7204
      %v7206 = vrot.slane %v183, %v7205
      %v7207 = vlaneseq
      %v7208 = vshrl.u32 %v7207, 7
      %v7209 = vsub.s32 3, %v7208
      %v7210 = vrot.slane %v184, %v7209
      %v7211 = vlaneseq
      %v7212 = vshrl.u32 %v7211, 7
      %v7213 = vsub.s32 3, %v7212
      %v7214 = vrot.slane %v185, %v7213
      %v7215 = vlaneseq
      %v7216 = vshrl.u32 %v7215, 7
      %v7217 = vsub.s32 3, %v7216
      %v7218 = vrot.slane %v186, %v7217
      %v7219 = vlaneseq
      %v7220 = vshrl.u32 %v7219, 7
      %v7221 = vsub.s32 3, %v7220
      %v7222 = vrot.slane %v187, %v7221
      %v7223 = vlaneseq
      %v7224 = vshrl.u32 %v7223, 7
      %v7225 = vsub.s32 3, %v7224
      %v7226 = vrot.slane %v188, %v7225
      %v7227 = vlaneseq
      %v7228 = vshrl.u32 %v7227, 7
      %v7229 = vsub.s32 3, %v7228
      %v7230 = vrot.slane %v189, %v7229
      %v7231 = vlaneseq
      %v7232 = vshrl.u32 %v7231, 7
      %v7233 = vsub.s32 3, %v7232
      %v7234 = vrot.slane %v190, %v7233
      %v7235 = vlaneseq
      %v7236 = vshrl.u32 %v7235, 7
      %v7237 = vsub.s32 3, %v7236
      %v7238 = vrot.slane %v191, %v7237
      %v7239 = vlaneseq
      %v7240 = vshrl.u32 %v7239, 7
      %v7241 = vsub.s32 3, %v7240
      %v7242 = vrot.slane %v192, %v7241
      %v7243 = vlaneseq
      %v7244 = vshrl.u32 %v7243, 7
      %v7245 = vsub.s32 3, %v7244
      %v7246 = vrot.slane %v193, %v7245
      %v7247 = vlaneseq
      %v7248 = vshrl.u32 %v7247, 7
      %v7249 = vsub.s32 3, %v7248
      %v7250 = vrot.slane %v194, %v7249
      %v7251 = vlaneseq
      %v7252 = vshrl.u32 %v7251, 7
      %v7253 = vsub.s32 3, %v7252
      %v7254 = vrot.slane %v195, %v7253
      %v7255 = vlaneseq
      %v7256 = vshrl.u32 %v7255, 7
      %v7257 = vsub.s32 3, %v7256
      %v7258 = vrot.slane %v196, %v7257
      %v7259 = vlaneseq
      %v7260 = vshrl.u32 %v7259, 7
      %v7261 = vsub.s32 3, %v7260
      %v7262 = vrot.slane %v197, %v7261
      %v7263 = vlaneseq
      %v7264 = vshrl.u32 %v7263, 7
      %v7265 = vsub.s32 3, %v7264
      %v7266 = vrot.slane %v198, %v7265
      %v7267 = vlaneseq
      %v7268 = vshrl.u32 %v7267, 7
      %v7269 = vsub.s32 3, %v7268
      %v7270 = vrot.slane %v199, %v7269
      %v7271 = vlaneseq
      %v7272 = vshrl.u32 %v7271, 7
      %v7273 = vsub.s32 3, %v7272
      %v7274 = vrot.slane %v200, %v7273
      %v7275 = vlaneseq
      %v7276 = vshrl.u32 %v7275, 7
      %v7277 = vsub.s32 3, %v7276
      %v7278 = vrot.slane %v201, %v7277
      %v7279 = vlaneseq
      %v7280 = vshrl.u32 %v7279, 7
      %v7281 = vsub.s32 3, %v7280
      %v7282 = vrot.slane %v202, %v7281
      %v7283 = vlaneseq
      %v7284 = vshrl.u32 %v7283, 7
      %v7285 = vsub.s32 3, %v7284
      %v7286 = vrot.slane %v203, %v7285
      %v7287 = vlaneseq
      %v7288 = vshrl.u32 %v7287, 7
      %v7289 = vsub.s32 3, %v7288
      %v7290 = vrot.slane %v204, %v7289
      %v7291 = vlaneseq
      %v7292 = vshrl.u32 %v7291, 7
      %v7293 = vsub.s32 3, %v7292
      %v7294 = vrot.slane %v205, %v7293
      %v7295 = vlaneseq
      %v7296 = vshrl.u32 %v7295, 7
      %v7297 = vsub.s32 3, %v7296
      %v7298 = vrot.slane %v206, %v7297
      %v7299 = vlaneseq
      %v7300 = vshrl.u32 %v7299, 7
      %v7301 = vsub.s32 3, %v7300
      %v7302 = vrot.slane %v207, %v7301
      %v7303 = vlaneseq
      %v7304 = vshrl.u32 %v7303, 7
      %v7305 = vsub.s32 3, %v7304
      %v7306 = vrot.slane %v208, %v7305
      %v7307 = vlaneseq
      %v7308 = vshrl.u32 %v7307, 7
      %v7309 = vsub.s32 3, %v7308
      %v7310 = vrot.slane %v209, %v7309
      %v7311 = vlaneseq
      %v7312 = vshrl.u32 %v7311, 7
      %v7313 = vsub.s32 3, %v7312
      %v7314 = vrot.slane %v210, %v7313
      %v7315 = vlaneseq
      %v7316 = vshrl.u32 %v7315, 7
      %v7317 = vsub.s32 3, %v7316
      %v7318 = vrot.slane %v211, %v7317
      %v7319 = vlaneseq
      %v7320 = vshrl.u32 %v7319, 7
      %v7321 = vsub.s32 3, %v7320
      %v7322 = vrot.slane %v212, %v7321
      %v7323 = vlaneseq
      %v7324 = vshrl.u32 %v7323, 7
      %v7325 = vsub.s32 3, %v7324
      %v7326 = vrot.slane %v213, %v7325
      %v7327 = vlaneseq
      %v7328 = vshrl.u32 %v7327, 7
      %v7329 = vsub.s32 3, %v7328
      %v7330 = vrot.slane %v214, %v7329
      %v7331 = vlaneseq
      %v7332 = vshrl.u32 %v7331, 7
      %v7333 = vsub.s32 3, %v7332
      %v7334 = vrot.slane %v215, %v7333
      %v7335 = vlaneseq
      %v7336 = vshrl.u32 %v7335, 7
      %v7337 = vsub.s32 3, %v7336
      %v7338 = vrot.slane %v216, %v7337
      %v7339 = vlaneseq
      %v7340 = vshrl.u32 %v7339, 7
      %v7341 = vsub.s32 3, %v7340
      %v7342 = vrot.slane %v217, %v7341
      %v7343 = vlaneseq
      %v7344 = vshrl.u32 %v7343, 7
      %v7345 = vsub.s32 3, %v7344
      %v7346 = vrot.slane %v218, %v7345
      %v7347 = vlaneseq
      %v7348 = vshrl.u32 %v7347, 7
      %v7349 = vsub.s32 3, %v7348
      %v7350 = vrot.slane %v219, %v7349
      %v7351 = vlaneseq
      %v7352 = vshrl.u32 %v7351, 7
      %v7353 = vsub.s32 3, %v7352
      %v7354 = vrot.slane %v220, %v7353
      %v7355 = vlaneseq
      %v7356 = vshrl.u32 %v7355, 7
      %v7357 = vsub.s32 3, %v7356
      %v7358 = vrot.slane %v221, %v7357
      %v7359 = vlaneseq
      %v7360 = vshrl.u32 %v7359, 7
      %v7361 = vsub.s32 3, %v7360
      %v7362 = vrot.slane %v222, %v7361
      %v7363 = vlaneseq
      %v7364 = vshrl.u32 %v7363, 7
      %v7365 = vsub.s32 3, %v7364
      %v7366 = vrot.slane %v223, %v7365
      %v7367 = vlaneseq
      %v7368 = vshrl.u32 %v7367, 7
      %v7369 = vsub.s32 3, %v7368
      %v7370 = vrot.slane %v224, %v7369
      %v7371 = vlaneseq
      %v7372 = vshrl.u32 %v7371, 7
      %v7373 = vsub.s32 3, %v7372
      %v7374 = vrot.slane %v225, %v7373
      %v7375 = vlaneseq
      %v7376 = vshrl.u32 %v7375, 7
      %v7377 = vsub.s32 3, %v7376
      %v7378 = vrot.slane %v226, %v7377
      %v7379 = vlaneseq
      %v7380 = vshrl.u32 %v7379, 7
      %v7381 = vsub.s32 3, %v7380
      %v7382 = vrot.slane %v227, %v7381
      %v7383 = vlaneseq
      %v7384 = vshrl.u32 %v7383, 7
      %v7385 = vsub.s32 3, %v7384
      %v7386 = vrot.slane %v228, %v7385
      %v7387 = vlaneseq
      %v7388 = vshrl.u32 %v7387, 7
      %v7389 = vsub.s32 3, %v7388
      %v7390 = vrot.slane %v229, %v7389
      %v7391 = vlaneseq
      %v7392 = vshrl.u32 %v7391, 7
      %v7393 = vsub.s32 3, %v7392
      %v7394 = vrot.slane %v230, %v7393
      %v7395 = vlaneseq
      %v7396 = vshrl.u32 %v7395, 7
      %v7397 = vsub.s32 3, %v7396
      %v7398 = vrot.slane %v231, %v7397
      %v7399 = vlaneseq
      %v7400 = vshrl.u32 %v7399, 7
      %v7401 = vsub.s32 3, %v7400
      %v7402 = vrot.slane %v232, %v7401
      %v7403 = vlaneseq
      %v7404 = vshrl.u32 %v7403, 7
      %v7405 = vsub.s32 3, %v7404
      %v7406 = vrot.slane %v233, %v7405
      %v7407 = vlaneseq
      %v7408 = vshrl.u32 %v7407, 7
      %v7409 = vsub.s32 3, %v7408
      %v7410 = vrot.slane %v234, %v7409
      %v7411 = vlaneseq
      %v7412 = vshrl.u32 %v7411, 7
      %v7413 = vsub.s32 3, %v7412
      %v7414 = vrot.slane %v235, %v7413
      %v7415 = vlaneseq
      %v7416 = vshrl.u32 %v7415, 7
      %v7417 = vsub.s32 3, %v7416
      %v7418 = vrot.slane %v236, %v7417
      %v7419 = vlaneseq
      %v7420 = vshrl.u32 %v7419, 7
      %v7421 = vsub.s32 3, %v7420
      %v7422 = vrot.slane %v237, %v7421
      %v7423 = vlaneseq
      %v7424 = vshrl.u32 %v7423, 7
      %v7425 = vsub.s32 3, %v7424
      %v7426 = vrot.slane %v238, %v7425
      %v7427 = vlaneseq
      %v7428 = vshrl.u32 %v7427, 7
      %v7429 = vsub.s32 3, %v7428
      %v7430 = vrot.slane %v239, %v7429
      %v7431 = vlaneseq
      %v7432 = vshrl.u32 %v7431, 7
      %v7433 = vsub.s32 3, %v7432
      %v7434 = vrot.slane %v240, %v7433
      %v7435 = vlaneseq
      %v7436 = vshrl.u32 %v7435, 7
      %v7437 = vsub.s32 3, %v7436
      %v7438 = vrot.slane %v241, %v7437
      %v7439 = vlaneseq
      %v7440 = vshrl.u32 %v7439, 7
      %v7441 = vsub.s32 3, %v7440
      %v7442 = vrot.slane %v242, %v7441
      %v7443 = vlaneseq
      %v7444 = vshrl.u32 %v7443, 7
      %v7445 = vsub.s32 3, %v7444
      %v7446 = vrot.slane %v243, %v7445
      %v7447 = vlaneseq
      %v7448 = vshrl.u32 %v7447, 7
      %v7449 = vsub.s32 3, %v7448
      %v7450 = vrot.slane %v244, %v7449
      %v7451 = vlaneseq
      %v7452 = vshrl.u32 %v7451, 7
      %v7453 = vsub.s32 3, %v7452
      %v7454 = vrot.slane %v245, %v7453
      %v7455 = vlaneseq
      %v7456 = vshrl.u32 %v7455, 7
      %v7457 = vsub.s32 3, %v7456
      %v7458 = vrot.slane %v246, %v7457
      %v7459 = vlaneseq
      %v7460 = vshrl.u32 %v7459, 7
      %v7461 = vsub.s32 3, %v7460
      %v7462 = vrot.slane %v247, %v7461
      %v7463 = vlaneseq
      %v7464 = vshrl.u32 %v7463, 7
      %v7465 = vsub.s32 3, %v7464
      %v7466 = vrot.slane %v248, %v7465
      %v7467 = vlaneseq
      %v7468 = vshrl.u32 %v7467, 7
      %v7469 = vsub.s32 3, %v7468
      %v7470 = vrot.slane %v249, %v7469
      %v7471 = vlaneseq
      %v7472 = vshrl.u32 %v7471, 7
      %v7473 = vsub.s32 3, %v7472
      %v7474 = vrot.slane %v250, %v7473
      %v7475 = vlaneseq
      %v7476 = vshrl.u32 %v7475, 7
      %v7477 = vsub.s32 3, %v7476
      %v7478 = vrot.slane %v251, %v7477
      %v7479 = vlaneseq
      %v7480 = vshrl.u32 %v7479, 7
      %v7481 = vsub.s32 3, %v7480
      %v7482 = vrot.slane %v252, %v7481
      %v7483 = vlaneseq
      %v7484 = vshrl.u32 %v7483, 7
      %v7485 = vsub.s32 3, %v7484
      %v7486 = vrot.slane %v253, %v7485
      %v7487 = vlaneseq
      %v7488 = vshrl.u32 %v7487, 7
      %v7489 = vsub.s32 3, %v7488
      %v7490 = vrot.slane %v254, %v7489
      %v7491 = vlaneseq
      %v7492 = vshrl.u32 %v7491, 7
      %v7493 = vsub.s32 3, %v7492
      %v7494 = vrot.slane %v255, %v7493
      %v7495 = vlaneseq
      %v7496 = vshrl.u32 %v7495, 7
      %v7497 = vsub.s32 3, %v7496
      %v7498 = vrot.slane %v256, %v7497
      %v7499 = vlaneseq
      %v7500 = vshrl.u32 %v7499, 7
      %v7501 = vsub.s32 3, %v7500
      %v7502 = vrot.slane %v257, %v7501
      %v7503 = vlaneseq
      %v7504 = vshrl.u32 %v7503, 7
      %v7505 = vsub.s32 3, %v7504
      %v7506 = vrot.slane %v258, %v7505
      %v7507 = vlaneseq
      %v7508 = vshrl.u32 %v7507, 7
      %v7509 = vsub.s32 3, %v7508
      %v7510 = vrot.slane %v259, %v7509
      %v7511 = vlaneseq
      %v7512 = vshrl.u32 %v7511, 7
      %v7513 = vsub.s32 3, %v7512
      %v7514 = vrot.slane %v260, %v7513
      %v7515 = vlaneseq
      %v7516 = vshrl.u32 %v7515, 7
      %v7517 = vsub.s32 3, %v7516
      %v7518 = vrot.slane %v261, %v7517
      %v7519 = vlaneseq
      %v7520 = vshrl.u32 %v7519, 7
      %v7521 = vsub.s32 3, %v7520
      %v7522 = vrot.slane %v262, %v7521
      %v7523 = vlaneseq
      %v7524 = vshrl.u32 %v7523, 7
      %v7525 = vsub.s32 3, %v7524
      %v7526 = vrot.slane %v263, %v7525
      %v7527 = vlaneseq
      %v7528 = vshrl.u32 %v7527, 7
      %v7529 = vsub.s32 3, %v7528
      %v7530 = vrot.slane %v264, %v7529
      %v7531 = vlaneseq
      %v7532 = vshrl.u32 %v7531, 7
      %v7533 = vsub.s32 3, %v7532
      %v7534 = vrot.slane %v265, %v7533
      %v7535 = vlaneseq
      %v7536 = vshrl.u32 %v7535, 7
      %v7537 = vsub.s32 3, %v7536
      %v7538 = vrot.slane %v266, %v7537
      %v7539 = vlaneseq
      %v7540 = vshrl.u32 %v7539, 7
      %v7541 = vsub.s32 3, %v7540
      %v7542 = vrot.slane %v267, %v7541
      %v7543 = vlaneseq
      %v7544 = vshrl.u32 %v7543, 7
      %v7545 = vsub.s32 3, %v7544
      %v7546 = vrot.slane %v268, %v7545
      %v7547 = vlaneseq
      %v7548 = vshrl.u32 %v7547, 7
      %v7549 = vsub.s32 3, %v7548
      %v7550 = vrot.slane %v269, %v7549
      %v7551 = vlaneseq
      %v7552 = vshrl.u32 %v7551, 7
      %v7553 = vsub.s32 3, %v7552
      %v7554 = vrot.slane %v270, %v7553
      %v7555 = vlaneseq
      %v7556 = vshrl.u32 %v7555, 7
      %v7557 = vsub.s32 3, %v7556
      %v7558 = vrot.slane %v271, %v7557
      %v7559 = vlaneseq
      %v7560 = vshrl.u32 %v7559, 7
      %v7561 = vsub.s32 3, %v7560
      %v7562 = vrot.slane %v272, %v7561
      %v7563 = vlaneseq
      %v7564 = vshrl.u32 %v7563, 7
      %v7565 = vsub.s32 3, %v7564
      %v7566 = vrot.slane %v273, %v7565
      %v7567 = vlaneseq
      %v7568 = vshrl.u32 %v7567, 7
      %v7569 = vsub.s32 3, %v7568
      %v7570 = vrot.slane %v274, %v7569
      %v7571 = vlaneseq
      %v7572 = vshrl.u32 %v7571, 7
      %v7573 = vsub.s32 3, %v7572
      %v7574 = vrot.slane %v275, %v7573
      %v7575 = vlaneseq
      %v7576 = vshrl.u32 %v7575, 7
      %v7577 = vsub.s32 3, %v7576
      %v7578 = vrot.slane %v276, %v7577
      %v7579 = vlaneseq
      %v7580 = vshrl.u32 %v7579, 7
      %v7581 = vsub.s32 3, %v7580
      %v7582 = vrot.slane %v277, %v7581
      %v7583 = vlaneseq
      %v7584 = vshrl.u32 %v7583, 7
      %v7585 = vsub.s32 3, %v7584
      %v7586 = vrot.slane %v278, %v7585
      %v7587 = vlaneseq
      %v7588 = vshrl.u32 %v7587, 7
      %v7589 = vsub.s32 3, %v7588
      %v7590 = vrot.slane %v279, %v7589
      %v7591 = vlaneseq
      %v7592 = vshrl.u32 %v7591, 7
      %v7593 = vsub.s32 3, %v7592
      %v7594 = vrot.slane %v280, %v7593
      %v7595 = vlaneseq
      %v7596 = vshrl.u32 %v7595, 7
      %v7597 = vsub.s32 3, %v7596
      %v7598 = vrot.slane %v281, %v7597
      %v7599 = vlaneseq
      %v7600 = vshrl.u32 %v7599, 7
      %v7601 = vsub.s32 3, %v7600
      %v7602 = vrot.slane %v282, %v7601
      %v7603 = vlaneseq
      %v7604 = vshrl.u32 %v7603, 7
      %v7605 = vsub.s32 3, %v7604
      %v7606 = vrot.slane %v283, %v7605
      %v7607 = vlaneseq
      %v7608 = vshrl.u32 %v7607, 7
      %v7609 = vsub.s32 3, %v7608
      %v7610 = vrot.slane %v284, %v7609
      %v7611 = vlaneseq
      %v7612 = vshrl.u32 %v7611, 7
      %v7613 = vsub.s32 3, %v7612
      %v7614 = vrot.slane %v285, %v7613
      %v7615 = vlaneseq
      %v7616 = vshrl.u32 %v7615, 7
      %v7617 = vsub.s32 3, %v7616
      %v7618 = vrot.slane %v286, %v7617
      %v7619 = vlaneseq
      %v7620 = vshrl.u32 %v7619, 7
      %v7621 = vsub.s32 3, %v7620
      %v7622 = vrot.slane %v287, %v7621
      %v7623 = vlaneseq
      %v7624 = vshrl.u32 %v7623, 7
      %v7625 = vsub.s32 3, %v7624
      %v7626 = vrot.slane %v288, %v7625
      %v7627 = vlaneseq
      %v7628 = vshrl.u32 %v7627, 7
      %v7629 = vsub.s32 3, %v7628
      %v7630 = vrot.slane %v289, %v7629
      %v7631 = vlaneseq
      %v7632 = vshrl.u32 %v7631, 7
      %v7633 = vsub.s32 3, %v7632
      %v7634 = vrot.slane %v290, %v7633
      %v7635 = vlaneseq
      %v7636 = vshrl.u32 %v7635, 7
      %v7637 = vsub.s32 3, %v7636
      %v7638 = vrot.slane %v291, %v7637
      %v7639 = vlaneseq
      %v7640 = vshrl.u32 %v7639, 7
      %v7641 = vsub.s32 3, %v7640
      %v7642 = vrot.slane %v292, %v7641
      %v7643 = vlaneseq
      %v7644 = vshrl.u32 %v7643, 7
      %v7645 = vsub.s32 3, %v7644
      %v7646 = vrot.slane %v293, %v7645
      %v7647 = vlaneseq
      %v7648 = vshrl.u32 %v7647, 7
      %v7649 = vsub.s32 3, %v7648
      %v7650 = vrot.slane %v294, %v7649
      %v7651 = vlaneseq
      %v7652 = vshrl.u32 %v7651, 7
      %v7653 = vsub.s32 3, %v7652
      %v7654 = vrot.slane %v295, %v7653
      %v7655 = vlaneseq
      %v7656 = vshrl.u32 %v7655, 7
      %v7657 = vsub.s32 3, %v7656
      %v7658 = vrot.slane %v296, %v7657
      %v7659 = vlaneseq
      %v7660 = vshrl.u32 %v7659, 7
      %v7661 = vsub.s32 3, %v7660
      %v7662 = vrot.slane %v297, %v7661
      %v7663 = vlaneseq
      %v7664 = vshrl.u32 %v7663, 7
      %v7665 = vsub.s32 3, %v7664
      %v7666 = vrot.slane %v298, %v7665
      %v7667 = vlaneseq
      %v7668 = vshrl.u32 %v7667, 7
      %v7669 = vsub.s32 3, %v7668
      %v7670 = vrot.slane %v299, %v7669
      %v7671 = vlaneseq
      %v7672 = vshrl.u32 %v7671, 7
      %v7673 = vsub.s32 3, %v7672
      %v7674 = vrot.slane %v300, %v7673
      %v7675 = vlaneseq
      %v7676 = vshrl.u32 %v7675, 7
      %v7677 = vsub.s32 3, %v7676
      %v7678 = vrot.slane %v301, %v7677
      %v7679 = vmul.f32 %v6657, %v7170
      %v7680 = vmul.f32 %v6661, %v7174
      %v7681 = vmul.f32 %v6665, %v7178
      %v7682 = vmul.f32 %v6669, %v7182
      %v7683 = vmul.f32 %v6673, %v7186
      %v7684 = vmul.f32 %v6677, %v7190
      %v7685 = vmul.f32 %v6681, %v7194
      %v7686 = vmul.f32 %v6685, %v7198
      %v7687 = vmul.f32 %v6689, %v7202
      %v7688 = vmul.f32 %v6693, %v7206
      %v7689 = vmul.f32 %v6697, %v7210
      %v7690 = vmul.f32 %v6701, %v7214
      %v7691 = vmul.f32 %v6705, %v7218
      %v7692 = vmul.f32 %v6709, %v7222
      %v7693 = vmul.f32 %v6713, %v7226
      %v7694 = vmul.f32 %v6717, %v7230
      %v7695 = vmul.f32 %v6721, %v7234
      %v7696 = vmul.f32 %v6725, %v7238
      %v7697 = vmul.f32 %v6729, %v7242
      %v7698 = vmul.f32 %v6733, %v7246
      %v7699 = vmul.f32 %v6737, %v7250
      %v7700 = vmul.f32 %v6741, %v7254
      %v7701 = vmul.f32 %v6745, %v7258
      %v7702 = vmul.f32 %v6749, %v7262
      %v7703 = vmul.f32 %v6753, %v7266
      %v7704 = vmul.f32 %v6757, %v7270
      %v7705 = vmul.f32 %v6761, %v7274
      %v7706 = vmul.f32 %v6765, %v7278
      %v7707 = vmul.f32 %v6769, %v7282
      %v7708 = vmul.f32 %v6773, %v7286
      %v7709 = vmul.f32 %v6777, %v7290
      %v7710 = vmul.f32 %v6781, %v7294
      %v7711 = vmul.f32 %v6785, %v7298
      %v7712 = vmul.f32 %v6789, %v7302
      %v7713 = vmul.f32 %v6793, %v7306
      %v7714 = vmul.f32 %v6797, %v7310
      %v7715 = vmul.f32 %v6801, %v7314
      %v7716 = vmul.f32 %v6805, %v7318
      %v7717 = vmul.f32 %v6809, %v7322
      %v7718 = vmul.f32 %v6813, %v7326
      %v7719 = vmul.f32 %v6817, %v7330
      %v7720 = vmul.f32 %v6821, %v7334
      %v7721 = vmul.f32 %v6825, %v7338
      %v7722 = vmul.f32 %v6829, %v7342
      %v7723 = vmul.f32 %v6833, %v7346
      %v7724 = vmul.f32 %v6837, %v7350
      %v7725 = vmul.f32 %v6841, %v7354
      %v7726 = vmul.f32 %v6845, %v7358
      %v7727 = vmul.f32 %v6849, %v7362
      %v7728 = vmul.f32 %v6853, %v7366
      %v7729 = vmul.f32 %v6857, %v7370
      %v7730 = vmul.f32 %v6861, %v7374
      %v7731 = vmul.f32 %v6865, %v7378
      %v7732 = vmul.f32 %v6869, %v7382
      %v7733 = vmul.f32 %v6873, %v7386
      %v7734 = vmul.f32 %v6877, %v7390
      %v7735 = vmul.f32 %v6881, %v7394
      %v7736 = vmul.f32 %v6885, %v7398
      %v7737 = vmul.f32 %v6889, %v7402
      %v7738 = vmul.f32 %v6893, %v7406
      %v7739 = vmul.f32 %v6897, %v7410
      %v7740 = vmul.f32 %v6901, %v7414
      %v7741 = vmul.f32 %v6905, %v7418
      %v7742 = vmul.f32 %v6909, %v7422
      %v7743 = vmul.f32 %v6913, %v7426
      %v7744 = vmul.f32 %v6917, %v7430
      %v7745 = vmul.f32 %v6921, %v7434
      %v7746 = vmul.f32 %v6925, %v7438
      %v7747 = vmul.f32 %v6929, %v7442
      %v7748 = vmul.f32 %v6933, %v7446
      %v7749 = vmul.f32 %v6937, %v7450
      %v7750 = vmul.f32 %v6941, %v7454
      %v7751 = vmul.f32 %v6945, %v7458
      %v7752 = vmul.f32 %v6949, %v7462
      %v7753 = vmul.f32 %v6953, %v7466
      %v7754 = vmul.f32 %v6957, %v7470
      %v7755 = vmul.f32 %v6961, %v7474
      %v7756 = vmul.f32 %v6965, %v7478
      %v7757 = vmul.f32 %v6969, %v7482
      %v7758 = vmul.f32 %v6973, %v7486
      %v7759 = vmul.f32 %v6977, %v7490
      %v7760 = vmul.f32 %v6981, %v7494
      %v7761 = vmul.f32 %v6985, %v7498
      %v7762 = vmul.f32 %v6989, %v7502
      %v7763 = vmul.f32 %v6993, %v7506
      %v7764 = vmul.f32 %v6997, %v7510
      %v7765 = vmul.f32 %v7001, %v7514
      %v7766 = vmul.f32 %v7005, %v7518
      %v7767 = vmul.f32 %v7009, %v7522
      %v7768 = vmul.f32 %v7013, %v7526
      %v7769 = vmul.f32 %v7017, %v7530
      %v7770 = vmul.f32 %v7021, %v7534
      %v7771 = vmul.f32 %v7025, %v7538
      %v7772 = vmul.f32 %v7029, %v7542
      %v7773 = vmul.f32 %v7033, %v7546
      %v7774 = vmul.f32 %v7037, %v7550
      %v7775 = vmul.f32 %v7041, %v7554
      %v7776 = vmul.f32 %v7045, %v7558
      %v7777 = vmul.f32 %v7049, %v7562
      %v7778 = vmul.f32 %v7053, %v7566
      %v7779 = vmul.f32 %v7057, %v7570
      %v7780 = vmul.f32 %v7061, %v7574
      %v7781 = vmul.f32 %v7065, %v7578
      %v7782 = vmul.f32 %v7069, %v7582
      %v7783 = vmul.f32 %v7073, %v7586
      %v7784 = vmul.f32 %v7077, %v7590
      %v7785 = vmul.f32 %v7081, %v7594
      %v7786 = vmul.f32 %v7085, %v7598
      %v7787 = vmul.f32 %v7089, %v7602
      %v7788 = vmul.f32 %v7093, %v7606
      %v7789 = vmul.f32 %v7097, %v7610
      %v7790 = vmul.f32 %v7101, %v7614
      %v7791 = vmul.f32 %v7105, %v7618
      %v7792 = vmul.f32 %v7109, %v7622
      %v7793 = vmul.f32 %v7113, %v7626
      %v7794 = vmul.f32 %v7117, %v7630
      %v7795 = vmul.f32 %v7121, %v7634
      %v7796 = vmul.f32 %v7125, %v7638
      %v7797 = vmul.f32 %v7129, %v7642
      %v7798 = vmul.f32 %v7133, %v7646
      %v7799 = vmul.f32 %v7137, %v7650
      %v7800 = vmul.f32 %v7141, %v7654
      %v7801 = vmul.f32 %v7145, %v7658
      %v7802 = vmul.f32 %v7149, %v7662
      %v7803 = vmul.f32 %v7153, %v7666
      %v7804 = vmul.f32 %v7157, %v7670
      %v7805 = vmul.f32 %v7161, %v7674
      %v7806 = vmul.f32 %v7165, %v7678
      %v7807 = vadd.f32 %v6527, %v7679
      %v7808 = vadd.f32 %v6528, %v7680
      %v7809 = vadd.f32 %v6529, %v7681
      %v7810 = vadd.f32 %v6530, %v7682
      %v7811 = vadd.f32 %v6531, %v7683
      %v7812 = vadd.f32 %v6532, %v7684
      %v7813 = vadd.f32 %v6533, %v7685
      %v7814 = vadd.f32 %v6534, %v7686
      %v7815 = vadd.f32 %v6535, %v7687
      %v7816 = vadd.f32 %v6536, %v7688
      %v7817 = vadd.f32 %v6537, %v7689
      %v7818 = vadd.f32 %v6538, %v7690
      %v7819 = vadd.f32 %v6539, %v7691
      %v7820 = vadd.f32 %v6540, %v7692
      %v7821 = vadd.f32 %v6541, %v7693
      %v7822 = vadd.f32 %v6542, %v7694
      %v7823 = vadd.f32 %v6543, %v7695
      %v7824 = vadd.f32 %v6544, %v7696
      %v7825 = vadd.f32 %v6545, %v7697
      %v7826 = vadd.f32 %v6546, %v7698
      %v7827 = vadd.f32 %v6547, %v7699
      %v7828 = vadd.f32 %v6548, %v7700
      %v7829 = vadd.f32 %v6549, %v7701
      %v7830 = vadd.f32 %v6550, %v7702
      %v7831 = vadd.f32 %v6551, %v7703
      %v7832 = vadd.f32 %v6552, %v7704
      %v7833 = vadd.f32 %v6553, %v7705
      %v7834 = vadd.f32 %v6554, %v7706
      %v7835 = vadd.f32 %v6555, %v7707
      %v7836 = vadd.f32 %v6556, %v7708
      %v7837 = vadd.f32 %v6557, %v7709
      %v7838 = vadd.f32 %v6558, %v7710
      %v7839 = vadd.f32 %v6559, %v7711
      %v7840 = vadd.f32 %v6560, %v7712
      %v7841 = vadd.f32 %v6561, %v7713
      %v7842 = vadd.f32 %v6562, %v7714
      %v7843 = vadd.f32 %v6563, %v7715
      %v7844 = vadd.f32 %v6564, %v7716
      %v7845 = vadd.f32 %v6565, %v7717
      %v7846 = vadd.f32 %v6566, %v7718
      %v7847 = vadd.f32 %v6567, %v7719
      %v7848 = vadd.f32 %v6568, %v7720
      %v7849 = vadd.f32 %v6569, %v7721
      %v7850 = vadd.f32 %v6570, %v7722
      %v7851 = vadd.f32 %v6571, %v7723
      %v7852 = vadd.f32 %v6572, %v7724
      %v7853 = vadd.f32 %v6573, %v7725
      %v7854 = vadd.f32 %v6574, %v7726
      %v7855 = vadd.f32 %v6575, %v7727
      %v7856 = vadd.f32 %v6576, %v7728
      %v7857 = vadd.f32 %v6577, %v7729
      %v7858 = vadd.f32 %v6578, %v7730
      %v7859 = vadd.f32 %v6579, %v7731
      %v7860 = vadd.f32 %v6580, %v7732
      %v7861 = vadd.f32 %v6581, %v7733
      %v7862 = vadd.f32 %v6582, %v7734
      %v7863 = vadd.f32 %v6583, %v7735
      %v7864 = vadd.f32 %v6584, %v7736
      %v7865 = vadd.f32 %v6585, %v7737
      %v7866 = vadd.f32 %v6586, %v7738
      %v7867 = vadd.f32 %v6587, %v7739
      %v7868 = vadd.f32 %v6588, %v7740
      %v7869 = vadd.f32 %v6589, %v7741
      %v7870 = vadd.f32 %v6590, %v7742
      %v7871 = vadd.f32 %v6591, %v7743
      %v7872 = vadd.f32 %v6592, %v7744
      %v7873 = vadd.f32 %v6593, %v7745
      %v7874 = vadd.f32 %v6594, %v7746
      %v7875 = vadd.f32 %v6595, %v7747
      %v7876 = vadd.f32 %v6596, %v7748
      %v7877 = vadd.f32 %v6597, %v7749
      %v7878 = vadd.f32 %v6598, %v7750
      %v7879 = vadd.f32 %v6599, %v7751
      %v7880 = vadd.f32 %v6600, %v7752
      %v7881 = vadd.f32 %v6601, %v7753
      %v7882 = vadd.f32 %v6602, %v7754
      %v7883 = vadd.f32 %v6603, %v7755
      %v7884 = vadd.f32 %v6604, %v7756
      %v7885 = vadd.f32 %v6605, %v7757
      %v7886 = vadd.f32 %v6606, %v7758
      %v7887 = vadd.f32 %v6607, %v7759
      %v7888 = vadd.f32 %v6608, %v7760
      %v7889 = vadd.f32 %v6609, %v7761
      %v7890 = vadd.f32 %v6610, %v7762
      %v7891 = vadd.f32 %v6611, %v7763
      %v7892 = vadd.f32 %v6612, %v7764
      %v7893 = vadd.f32 %v6613, %v7765
      %v7894 = vadd.f32 %v6614, %v7766
      %v7895 = vadd.f32 %v6615, %v7767
      %v7896 = vadd.f32 %v6616, %v7768
      %v7897 = vadd.f32 %v6617, %v7769
      %v7898 = vadd.f32 %v6618, %v7770
      %v7899 = vadd.f32 %v6619, %v7771
      %v7900 = vadd.f32 %v6620, %v7772
      %v7901 = vadd.f32 %v6621, %v7773
      %v7902 = vadd.f32 %v6622, %v7774
      %v7903 = vadd.f32 %v6623, %v7775
      %v7904 = vadd.f32 %v6624, %v7776
      %v7905 = vadd.f32 %v6625, %v7777
      %v7906 = vadd.f32 %v6626, %v7778
      %v7907 = vadd.f32 %v6627, %v7779
      %v7908 = vadd.f32 %v6628, %v7780
      %v7909 = vadd.f32 %v6629, %v7781
      %v7910 = vadd.f32 %v6630, %v7782
      %v7911 = vadd.f32 %v6631, %v7783
      %v7912 = vadd.f32 %v6632, %v7784
      %v7913 = vadd.f32 %v6633, %v7785
      %v7914 = vadd.f32 %v6634, %v7786
      %v7915 = vadd.f32 %v6635, %v7787
      %v7916 = vadd.f32 %v6636, %v7788
      %v7917 = vadd.f32 %v6637, %v7789
      %v7918 = vadd.f32 %v6638, %v7790
      %v7919 = vadd.f32 %v6639, %v7791
      %v7920 = vadd.f32 %v6640, %v7792
      %v7921 = vadd.f32 %v6641, %v7793
      %v7922 = vadd.f32 %v6642, %v7794
      %v7923 = vadd.f32 %v6643, %v7795
      %v7924 = vadd.f32 %v6644, %v7796
      %v7925 = vadd.f32 %v6645, %v7797
      %v7926 = vadd.f32 %v6646, %v7798
      %v7927 = vadd.f32 %v6647, %v7799
      %v7928 = vadd.f32 %v6648, %v7800
      %v7929 = vadd.f32 %v6649, %v7801
      %v7930 = vadd.f32 %v6650, %v7802
      %v7931 = vadd.f32 %v6651, %v7803
      %v7932 = vadd.f32 %v6652, %v7804
      %v7933 = vadd.f32 %v6653, %v7805
      %v7934 = vadd.f32 %v6654, %v7806
      %7935 = vset.pattern.permute.xlu0 4
      %7936 = vperm.xlu0 %7935, %v2687
      %v7937 = vpop.permute.xlu0 %7936
      %7939 = vset.pattern.permute.xlu0 4
      %7940 = vperm.xlu0 %7939, %v2688
      %v7941 = vpop.permute.xlu0 %7940
      %7943 = vset.pattern.permute.xlu0 4
      %7944 = vperm.xlu0 %7943, %v2689
      %v7945 = vpop.permute.xlu0 %7944
      %7947 = vset.pattern.permute.xlu0 4
      %7948 = vperm.xlu0 %7947, %v2690
      %v7949 = vpop.permute.xlu0 %7948
      %7951 = vset.pattern.permute.xlu0 4
      %7952 = vperm.xlu0 %7951, %v2691
      %v7953 = vpop.permute.xlu0 %7952
      %7955 = vset.pattern.permute.xlu0 4
      %7956 = vperm.xlu0 %7955, %v2692
      %v7957 = vpop.permute.xlu0 %7956
      %7959 = vset.pattern.permute.xlu0 4
      %7960 = vperm.xlu0 %7959, %v2693
      %v7961 = vpop.permute.xlu0 %7960
      %7963 = vset.pattern.permute.xlu0 4
      %7964 = vperm.xlu0 %7963, %v2694
      %v7965 = vpop.permute.xlu0 %7964
      %7967 = vset.pattern.permute.xlu0 4
      %7968 = vperm.xlu0 %7967, %v2695
      %v7969 = vpop.permute.xlu0 %7968
      %7971 = vset.pattern.permute.xlu0 4
      %7972 = vperm.xlu0 %7971, %v2696
      %v7973 = vpop.permute.xlu0 %7972
      %7975 = vset.pattern.permute.xlu0 4
      %7976 = vperm.xlu0 %7975, %v2697
      %v7977 = vpop.permute.xlu0 %7976
      %7979 = vset.pattern.permute.xlu0 4
      %7980 = vperm.xlu0 %7979, %v2698
      %v7981 = vpop.permute.xlu0 %7980
      %7983 = vset.pattern.permute.xlu0 4
      %7984 = vperm.xlu0 %7983, %v2699
      %v7985 = vpop.permute.xlu0 %7984
      %7987 = vset.pattern.permute.xlu0 4
      %7988 = vperm.xlu0 %7987, %v2700
      %v7989 = vpop.permute.xlu0 %7988
      %7991 = vset.pattern.permute.xlu0 4
      %7992 = vperm.xlu0 %7991, %v2701
      %v7993 = vpop.permute.xlu0 %7992
      %7995 = vset.pattern.permute.xlu0 4
      %7996 = vperm.xlu0 %7995, %v2702
      %v7997 = vpop.permute.xlu0 %7996
      %7999 = vset.pattern.permute.xlu0 4
      %8000 = vperm.xlu0 %7999, %v2703
      %v8001 = vpop.permute.xlu0 %8000
      %8003 = vset.pattern.permute.xlu0 4
      %8004 = vperm.xlu0 %8003, %v2704
      %v8005 = vpop.permute.xlu0 %8004
      %8007 = vset.pattern.permute.xlu0 4
      %8008 = vperm.xlu0 %8007, %v2705
      %v8009 = vpop.permute.xlu0 %8008
      %8011 = vset.pattern.permute.xlu0 4
      %8012 = vperm.xlu0 %8011, %v2706
      %v8013 = vpop.permute.xlu0 %8012
      %8015 = vset.pattern.permute.xlu0 4
      %8016 = vperm.xlu0 %8015, %v2707
      %v8017 = vpop.permute.xlu0 %8016
      %8019 = vset.pattern.permute.xlu0 4
      %8020 = vperm.xlu0 %8019, %v2708
      %v8021 = vpop.permute.xlu0 %8020
      %8023 = vset.pattern.permute.xlu0 4
      %8024 = vperm.xlu0 %8023, %v2709
      %v8025 = vpop.permute.xlu0 %8024
      %8027 = vset.pattern.permute.xlu0 4
      %8028 = vperm.xlu0 %8027, %v2710
      %v8029 = vpop.permute.xlu0 %8028
      %8031 = vset.pattern.permute.xlu0 4
      %8032 = vperm.xlu0 %8031, %v2711
      %v8033 = vpop.permute.xlu0 %8032
      %8035 = vset.pattern.permute.xlu0 4
      %8036 = vperm.xlu0 %8035, %v2712
      %v8037 = vpop.permute.xlu0 %8036
      %8039 = vset.pattern.permute.xlu0 4
      %8040 = vperm.xlu0 %8039, %v2713
      %v8041 = vpop.permute.xlu0 %8040
      %8043 = vset.pattern.permute.xlu0 4
      %8044 = vperm.xlu0 %8043, %v2714
      %v8045 = vpop.permute.xlu0 %8044
      %8047 = vset.pattern.permute.xlu0 4
      %8048 = vperm.xlu0 %8047, %v2715
      %v8049 = vpop.permute.xlu0 %8048
      %8051 = vset.pattern.permute.xlu0 4
      %8052 = vperm.xlu0 %8051, %v2716
      %v8053 = vpop.permute.xlu0 %8052
      %8055 = vset.pattern.permute.xlu0 4
      %8056 = vperm.xlu0 %8055, %v2717
      %v8057 = vpop.permute.xlu0 %8056
      %8059 = vset.pattern.permute.xlu0 4
      %8060 = vperm.xlu0 %8059, %v2718
      %v8061 = vpop.permute.xlu0 %8060
      %8063 = vset.pattern.permute.xlu0 4
      %8064 = vperm.xlu0 %8063, %v2719
      %v8065 = vpop.permute.xlu0 %8064
      %8067 = vset.pattern.permute.xlu0 4
      %8068 = vperm.xlu0 %8067, %v2720
      %v8069 = vpop.permute.xlu0 %8068
      %8071 = vset.pattern.permute.xlu0 4
      %8072 = vperm.xlu0 %8071, %v2721
      %v8073 = vpop.permute.xlu0 %8072
      %8075 = vset.pattern.permute.xlu0 4
      %8076 = vperm.xlu0 %8075, %v2722
      %v8077 = vpop.permute.xlu0 %8076
      %8079 = vset.pattern.permute.xlu0 4
      %8080 = vperm.xlu0 %8079, %v2723
      %v8081 = vpop.permute.xlu0 %8080
      %8083 = vset.pattern.permute.xlu0 4
      %8084 = vperm.xlu0 %8083, %v2724
      %v8085 = vpop.permute.xlu0 %8084
      %8087 = vset.pattern.permute.xlu0 4
      %8088 = vperm.xlu0 %8087, %v2725
      %v8089 = vpop.permute.xlu0 %8088
      %8091 = vset.pattern.permute.xlu0 4
      %8092 = vperm.xlu0 %8091, %v2726
      %v8093 = vpop.permute.xlu0 %8092
      %8095 = vset.pattern.permute.xlu0 4
      %8096 = vperm.xlu0 %8095, %v2727
      %v8097 = vpop.permute.xlu0 %8096
      %8099 = vset.pattern.permute.xlu0 4
      %8100 = vperm.xlu0 %8099, %v2728
      %v8101 = vpop.permute.xlu0 %8100
      %8103 = vset.pattern.permute.xlu0 4
      %8104 = vperm.xlu0 %8103, %v2729
      %v8105 = vpop.permute.xlu0 %8104
      %8107 = vset.pattern.permute.xlu0 4
      %8108 = vperm.xlu0 %8107, %v2730
      %v8109 = vpop.permute.xlu0 %8108
      %8111 = vset.pattern.permute.xlu0 4
      %8112 = vperm.xlu0 %8111, %v2731
      %v8113 = vpop.permute.xlu0 %8112
      %8115 = vset.pattern.permute.xlu0 4
      %8116 = vperm.xlu0 %8115, %v2732
      %v8117 = vpop.permute.xlu0 %8116
      %8119 = vset.pattern.permute.xlu0 4
      %8120 = vperm.xlu0 %8119, %v2733
      %v8121 = vpop.permute.xlu0 %8120
      %8123 = vset.pattern.permute.xlu0 4
      %8124 = vperm.xlu0 %8123, %v2734
      %v8125 = vpop.permute.xlu0 %8124
      %8127 = vset.pattern.permute.xlu0 4
      %8128 = vperm.xlu0 %8127, %v2735
      %v8129 = vpop.permute.xlu0 %8128
      %8131 = vset.pattern.permute.xlu0 4
      %8132 = vperm.xlu0 %8131, %v2736
      %v8133 = vpop.permute.xlu0 %8132
      %8135 = vset.pattern.permute.xlu0 4
      %8136 = vperm.xlu0 %8135, %v2737
      %v8137 = vpop.permute.xlu0 %8136
      %8139 = vset.pattern.permute.xlu0 4
      %8140 = vperm.xlu0 %8139, %v2738
      %v8141 = vpop.permute.xlu0 %8140
      %8143 = vset.pattern.permute.xlu0 4
      %8144 = vperm.xlu0 %8143, %v2739
      %v8145 = vpop.permute.xlu0 %8144
      %8147 = vset.pattern.permute.xlu0 4
      %8148 = vperm.xlu0 %8147, %v2740
      %v8149 = vpop.permute.xlu0 %8148
      %8151 = vset.pattern.permute.xlu0 4
      %8152 = vperm.xlu0 %8151, %v2741
      %v8153 = vpop.permute.xlu0 %8152
      %8155 = vset.pattern.permute.xlu0 4
      %8156 = vperm.xlu0 %8155, %v2742
      %v8157 = vpop.permute.xlu0 %8156
      %8159 = vset.pattern.permute.xlu0 4
      %8160 = vperm.xlu0 %8159, %v2743
      %v8161 = vpop.permute.xlu0 %8160
      %8163 = vset.pattern.permute.xlu0 4
      %8164 = vperm.xlu0 %8163, %v2744
      %v8165 = vpop.permute.xlu0 %8164
      %8167 = vset.pattern.permute.xlu0 4
      %8168 = vperm.xlu0 %8167, %v2745
      %v8169 = vpop.permute.xlu0 %8168
      %8171 = vset.pattern.permute.xlu0 4
      %8172 = vperm.xlu0 %8171, %v2746
      %v8173 = vpop.permute.xlu0 %8172
      %8175 = vset.pattern.permute.xlu0 4
      %8176 = vperm.xlu0 %8175, %v2747
      %v8177 = vpop.permute.xlu0 %8176
      %8179 = vset.pattern.permute.xlu0 4
      %8180 = vperm.xlu0 %8179, %v2748
      %v8181 = vpop.permute.xlu0 %8180
      %8183 = vset.pattern.permute.xlu0 4
      %8184 = vperm.xlu0 %8183, %v2749
      %v8185 = vpop.permute.xlu0 %8184
      %8187 = vset.pattern.permute.xlu0 4
      %8188 = vperm.xlu0 %8187, %v2750
      %v8189 = vpop.permute.xlu0 %8188
      %8191 = vset.pattern.permute.xlu0 4
      %8192 = vperm.xlu0 %8191, %v2751
      %v8193 = vpop.permute.xlu0 %8192
      %8195 = vset.pattern.permute.xlu0 4
      %8196 = vperm.xlu0 %8195, %v2752
      %v8197 = vpop.permute.xlu0 %8196
      %8199 = vset.pattern.permute.xlu0 4
      %8200 = vperm.xlu0 %8199, %v2753
      %v8201 = vpop.permute.xlu0 %8200
      %8203 = vset.pattern.permute.xlu0 4
      %8204 = vperm.xlu0 %8203, %v2754
      %v8205 = vpop.permute.xlu0 %8204
      %8207 = vset.pattern.permute.xlu0 4
      %8208 = vperm.xlu0 %8207, %v2755
      %v8209 = vpop.permute.xlu0 %8208
      %8211 = vset.pattern.permute.xlu0 4
      %8212 = vperm.xlu0 %8211, %v2756
      %v8213 = vpop.permute.xlu0 %8212
      %8215 = vset.pattern.permute.xlu0 4
      %8216 = vperm.xlu0 %8215, %v2757
      %v8217 = vpop.permute.xlu0 %8216
      %8219 = vset.pattern.permute.xlu0 4
      %8220 = vperm.xlu0 %8219, %v2758
      %v8221 = vpop.permute.xlu0 %8220
      %8223 = vset.pattern.permute.xlu0 4
      %8224 = vperm.xlu0 %8223, %v2759
      %v8225 = vpop.permute.xlu0 %8224
      %8227 = vset.pattern.permute.xlu0 4
      %8228 = vperm.xlu0 %8227, %v2760
      %v8229 = vpop.permute.xlu0 %8228
      %8231 = vset.pattern.permute.xlu0 4
      %8232 = vperm.xlu0 %8231, %v2761
      %v8233 = vpop.permute.xlu0 %8232
      %8235 = vset.pattern.permute.xlu0 4
      %8236 = vperm.xlu0 %8235, %v2762
      %v8237 = vpop.permute.xlu0 %8236
      %8239 = vset.pattern.permute.xlu0 4
      %8240 = vperm.xlu0 %8239, %v2763
      %v8241 = vpop.permute.xlu0 %8240
      %8243 = vset.pattern.permute.xlu0 4
      %8244 = vperm.xlu0 %8243, %v2764
      %v8245 = vpop.permute.xlu0 %8244
      %8247 = vset.pattern.permute.xlu0 4
      %8248 = vperm.xlu0 %8247, %v2765
      %v8249 = vpop.permute.xlu0 %8248
      %8251 = vset.pattern.permute.xlu0 4
      %8252 = vperm.xlu0 %8251, %v2766
      %v8253 = vpop.permute.xlu0 %8252
      %8255 = vset.pattern.permute.xlu0 4
      %8256 = vperm.xlu0 %8255, %v2767
      %v8257 = vpop.permute.xlu0 %8256
      %8259 = vset.pattern.permute.xlu0 4
      %8260 = vperm.xlu0 %8259, %v2768
      %v8261 = vpop.permute.xlu0 %8260
      %8263 = vset.pattern.permute.xlu0 4
      %8264 = vperm.xlu0 %8263, %v2769
      %v8265 = vpop.permute.xlu0 %8264
      %8267 = vset.pattern.permute.xlu0 4
      %8268 = vperm.xlu0 %8267, %v2770
      %v8269 = vpop.permute.xlu0 %8268
      %8271 = vset.pattern.permute.xlu0 4
      %8272 = vperm.xlu0 %8271, %v2771
      %v8273 = vpop.permute.xlu0 %8272
      %8275 = vset.pattern.permute.xlu0 4
      %8276 = vperm.xlu0 %8275, %v2772
      %v8277 = vpop.permute.xlu0 %8276
      %8279 = vset.pattern.permute.xlu0 4
      %8280 = vperm.xlu0 %8279, %v2773
      %v8281 = vpop.permute.xlu0 %8280
      %8283 = vset.pattern.permute.xlu0 4
      %8284 = vperm.xlu0 %8283, %v2774
      %v8285 = vpop.permute.xlu0 %8284
      %8287 = vset.pattern.permute.xlu0 4
      %8288 = vperm.xlu0 %8287, %v2775
      %v8289 = vpop.permute.xlu0 %8288
      %8291 = vset.pattern.permute.xlu0 4
      %8292 = vperm.xlu0 %8291, %v2776
      %v8293 = vpop.permute.xlu0 %8292
      %8295 = vset.pattern.permute.xlu0 4
      %8296 = vperm.xlu0 %8295, %v2777
      %v8297 = vpop.permute.xlu0 %8296
      %8299 = vset.pattern.permute.xlu0 4
      %8300 = vperm.xlu0 %8299, %v2778
      %v8301 = vpop.permute.xlu0 %8300
      %8303 = vset.pattern.permute.xlu0 4
      %8304 = vperm.xlu0 %8303, %v2779
      %v8305 = vpop.permute.xlu0 %8304
      %8307 = vset.pattern.permute.xlu0 4
      %8308 = vperm.xlu0 %8307, %v2780
      %v8309 = vpop.permute.xlu0 %8308
      %8311 = vset.pattern.permute.xlu0 4
      %8312 = vperm.xlu0 %8311, %v2781
      %v8313 = vpop.permute.xlu0 %8312
      %8315 = vset.pattern.permute.xlu0 4
      %8316 = vperm.xlu0 %8315, %v2782
      %v8317 = vpop.permute.xlu0 %8316
      %8319 = vset.pattern.permute.xlu0 4
      %8320 = vperm.xlu0 %8319, %v2783
      %v8321 = vpop.permute.xlu0 %8320
      %8323 = vset.pattern.permute.xlu0 4
      %8324 = vperm.xlu0 %8323, %v2784
      %v8325 = vpop.permute.xlu0 %8324
      %8327 = vset.pattern.permute.xlu0 4
      %8328 = vperm.xlu0 %8327, %v2785
      %v8329 = vpop.permute.xlu0 %8328
      %8331 = vset.pattern.permute.xlu0 4
      %8332 = vperm.xlu0 %8331, %v2786
      %v8333 = vpop.permute.xlu0 %8332
      %8335 = vset.pattern.permute.xlu0 4
      %8336 = vperm.xlu0 %8335, %v2787
      %v8337 = vpop.permute.xlu0 %8336
      %8339 = vset.pattern.permute.xlu0 4
      %8340 = vperm.xlu0 %8339, %v2788
      %v8341 = vpop.permute.xlu0 %8340
      %8343 = vset.pattern.permute.xlu0 4
      %8344 = vperm.xlu0 %8343, %v2789
      %v8345 = vpop.permute.xlu0 %8344
      %8347 = vset.pattern.permute.xlu0 4
      %8348 = vperm.xlu0 %8347, %v2790
      %v8349 = vpop.permute.xlu0 %8348
      %8351 = vset.pattern.permute.xlu0 4
      %8352 = vperm.xlu0 %8351, %v2791
      %v8353 = vpop.permute.xlu0 %8352
      %8355 = vset.pattern.permute.xlu0 4
      %8356 = vperm.xlu0 %8355, %v2792
      %v8357 = vpop.permute.xlu0 %8356
      %8359 = vset.pattern.permute.xlu0 4
      %8360 = vperm.xlu0 %8359, %v2793
      %v8361 = vpop.permute.xlu0 %8360
      %8363 = vset.pattern.permute.xlu0 4
      %8364 = vperm.xlu0 %8363, %v2794
      %v8365 = vpop.permute.xlu0 %8364
      %8367 = vset.pattern.permute.xlu0 4
      %8368 = vperm.xlu0 %8367, %v2795
      %v8369 = vpop.permute.xlu0 %8368
      %8371 = vset.pattern.permute.xlu0 4
      %8372 = vperm.xlu0 %8371, %v2796
      %v8373 = vpop.permute.xlu0 %8372
      %8375 = vset.pattern.permute.xlu0 4
      %8376 = vperm.xlu0 %8375, %v2797
      %v8377 = vpop.permute.xlu0 %8376
      %8379 = vset.pattern.permute.xlu0 4
      %8380 = vperm.xlu0 %8379, %v2798
      %v8381 = vpop.permute.xlu0 %8380
      %8383 = vset.pattern.permute.xlu0 4
      %8384 = vperm.xlu0 %8383, %v2799
      %v8385 = vpop.permute.xlu0 %8384
      %8387 = vset.pattern.permute.xlu0 4
      %8388 = vperm.xlu0 %8387, %v2800
      %v8389 = vpop.permute.xlu0 %8388
      %8391 = vset.pattern.permute.xlu0 4
      %8392 = vperm.xlu0 %8391, %v2801
      %v8393 = vpop.permute.xlu0 %8392
      %8395 = vset.pattern.permute.xlu0 4
      %8396 = vperm.xlu0 %8395, %v2802
      %v8397 = vpop.permute.xlu0 %8396
      %8399 = vset.pattern.permute.xlu0 4
      %8400 = vperm.xlu0 %8399, %v2803
      %v8401 = vpop.permute.xlu0 %8400
      %8403 = vset.pattern.permute.xlu0 4
      %8404 = vperm.xlu0 %8403, %v2804
      %v8405 = vpop.permute.xlu0 %8404
      %8407 = vset.pattern.permute.xlu0 4
      %8408 = vperm.xlu0 %8407, %v2805
      %v8409 = vpop.permute.xlu0 %8408
      %8411 = vset.pattern.permute.xlu0 4
      %8412 = vperm.xlu0 %8411, %v2806
      %v8413 = vpop.permute.xlu0 %8412
      %8415 = vset.pattern.permute.xlu0 4
      %8416 = vperm.xlu0 %8415, %v2807
      %v8417 = vpop.permute.xlu0 %8416
      %8419 = vset.pattern.permute.xlu0 4
      %8420 = vperm.xlu0 %8419, %v2808
      %v8421 = vpop.permute.xlu0 %8420
      %8423 = vset.pattern.permute.xlu0 4
      %8424 = vperm.xlu0 %8423, %v2809
      %v8425 = vpop.permute.xlu0 %8424
      %8427 = vset.pattern.permute.xlu0 4
      %8428 = vperm.xlu0 %8427, %v2810
      %v8429 = vpop.permute.xlu0 %8428
      %8431 = vset.pattern.permute.xlu0 4
      %8432 = vperm.xlu0 %8431, %v2811
      %v8433 = vpop.permute.xlu0 %8432
      %8435 = vset.pattern.permute.xlu0 4
      %8436 = vperm.xlu0 %8435, %v2812
      %v8437 = vpop.permute.xlu0 %8436
      %8439 = vset.pattern.permute.xlu0 4
      %8440 = vperm.xlu0 %8439, %v2813
      %v8441 = vpop.permute.xlu0 %8440
      %8443 = vset.pattern.permute.xlu0 4
      %8444 = vperm.xlu0 %8443, %v2814
      %v8445 = vpop.permute.xlu0 %8444
      %v8447 = vlaneseq
      %v8448 = vshrl.u32 %v8447, 7
      %v8449 = vsub.s32 4, %v8448
      %v8450 = vrot.slane %v174, %v8449
      %v8451 = vlaneseq
      %v8452 = vshrl.u32 %v8451, 7
      %v8453 = vsub.s32 4, %v8452
      %v8454 = vrot.slane %v175, %v8453
      %v8455 = vlaneseq
      %v8456 = vshrl.u32 %v8455, 7
      %v8457 = vsub.s32 4, %v8456
      %v8458 = vrot.slane %v176, %v8457
      %v8459 = vlaneseq
      %v8460 = vshrl.u32 %v8459, 7
      %v8461 = vsub.s32 4, %v8460
      %v8462 = vrot.slane %v177, %v8461
      %v8463 = vlaneseq
      %v8464 = vshrl.u32 %v8463, 7
      %v8465 = vsub.s32 4, %v8464
      %v8466 = vrot.slane %v178, %v8465
      %v8467 = vlaneseq
      %v8468 = vshrl.u32 %v8467, 7
      %v8469 = vsub.s32 4, %v8468
      %v8470 = vrot.slane %v179, %v8469
      %v8471 = vlaneseq
      %v8472 = vshrl.u32 %v8471, 7
      %v8473 = vsub.s32 4, %v8472
      %v8474 = vrot.slane %v180, %v8473
      %v8475 = vlaneseq
      %v8476 = vshrl.u32 %v8475, 7
      %v8477 = vsub.s32 4, %v8476
      %v8478 = vrot.slane %v181, %v8477
      %v8479 = vlaneseq
      %v8480 = vshrl.u32 %v8479, 7
      %v8481 = vsub.s32 4, %v8480
      %v8482 = vrot.slane %v182, %v8481
      %v8483 = vlaneseq
      %v8484 = vshrl.u32 %v8483, 7
      %v8485 = vsub.s32 4, %v8484
      %v8486 = vrot.slane %v183, %v8485
      %v8487 = vlaneseq
      %v8488 = vshrl.u32 %v8487, 7
      %v8489 = vsub.s32 4, %v8488
      %v8490 = vrot.slane %v184, %v8489
      %v8491 = vlaneseq
      %v8492 = vshrl.u32 %v8491, 7
      %v8493 = vsub.s32 4, %v8492
      %v8494 = vrot.slane %v185, %v8493
      %v8495 = vlaneseq
      %v8496 = vshrl.u32 %v8495, 7
      %v8497 = vsub.s32 4, %v8496
      %v8498 = vrot.slane %v186, %v8497
      %v8499 = vlaneseq
      %v8500 = vshrl.u32 %v8499, 7
      %v8501 = vsub.s32 4, %v8500
      %v8502 = vrot.slane %v187, %v8501
      %v8503 = vlaneseq
      %v8504 = vshrl.u32 %v8503, 7
      %v8505 = vsub.s32 4, %v8504
      %v8506 = vrot.slane %v188, %v8505
      %v8507 = vlaneseq
      %v8508 = vshrl.u32 %v8507, 7
      %v8509 = vsub.s32 4, %v8508
      %v8510 = vrot.slane %v189, %v8509
      %v8511 = vlaneseq
      %v8512 = vshrl.u32 %v8511, 7
      %v8513 = vsub.s32 4, %v8512
      %v8514 = vrot.slane %v190, %v8513
      %v8515 = vlaneseq
      %v8516 = vshrl.u32 %v8515, 7
      %v8517 = vsub.s32 4, %v8516
      %v8518 = vrot.slane %v191, %v8517
      %v8519 = vlaneseq
      %v8520 = vshrl.u32 %v8519, 7
      %v8521 = vsub.s32 4, %v8520
      %v8522 = vrot.slane %v192, %v8521
      %v8523 = vlaneseq
      %v8524 = vshrl.u32 %v8523, 7
      %v8525 = vsub.s32 4, %v8524
      %v8526 = vrot.slane %v193, %v8525
      %v8527 = vlaneseq
      %v8528 = vshrl.u32 %v8527, 7
      %v8529 = vsub.s32 4, %v8528
      %v8530 = vrot.slane %v194, %v8529
      %v8531 = vlaneseq
      %v8532 = vshrl.u32 %v8531, 7
      %v8533 = vsub.s32 4, %v8532
      %v8534 = vrot.slane %v195, %v8533
      %v8535 = vlaneseq
      %v8536 = vshrl.u32 %v8535, 7
      %v8537 = vsub.s32 4, %v8536
      %v8538 = vrot.slane %v196, %v8537
      %v8539 = vlaneseq
      %v8540 = vshrl.u32 %v8539, 7
      %v8541 = vsub.s32 4, %v8540
      %v8542 = vrot.slane %v197, %v8541
      %v8543 = vlaneseq
      %v8544 = vshrl.u32 %v8543, 7
      %v8545 = vsub.s32 4, %v8544
      %v8546 = vrot.slane %v198, %v8545
      %v8547 = vlaneseq
      %v8548 = vshrl.u32 %v8547, 7
      %v8549 = vsub.s32 4, %v8548
      %v8550 = vrot.slane %v199, %v8549
      %v8551 = vlaneseq
      %v8552 = vshrl.u32 %v8551, 7
      %v8553 = vsub.s32 4, %v8552
      %v8554 = vrot.slane %v200, %v8553
      %v8555 = vlaneseq
      %v8556 = vshrl.u32 %v8555, 7
      %v8557 = vsub.s32 4, %v8556
      %v8558 = vrot.slane %v201, %v8557
      %v8559 = vlaneseq
      %v8560 = vshrl.u32 %v8559, 7
      %v8561 = vsub.s32 4, %v8560
      %v8562 = vrot.slane %v202, %v8561
      %v8563 = vlaneseq
      %v8564 = vshrl.u32 %v8563, 7
      %v8565 = vsub.s32 4, %v8564
      %v8566 = vrot.slane %v203, %v8565
      %v8567 = vlaneseq
      %v8568 = vshrl.u32 %v8567, 7
      %v8569 = vsub.s32 4, %v8568
      %v8570 = vrot.slane %v204, %v8569
      %v8571 = vlaneseq
      %v8572 = vshrl.u32 %v8571, 7
      %v8573 = vsub.s32 4, %v8572
      %v8574 = vrot.slane %v205, %v8573
      %v8575 = vlaneseq
      %v8576 = vshrl.u32 %v8575, 7
      %v8577 = vsub.s32 4, %v8576
      %v8578 = vrot.slane %v206, %v8577
      %v8579 = vlaneseq
      %v8580 = vshrl.u32 %v8579, 7
      %v8581 = vsub.s32 4, %v8580
      %v8582 = vrot.slane %v207, %v8581
      %v8583 = vlaneseq
      %v8584 = vshrl.u32 %v8583, 7
      %v8585 = vsub.s32 4, %v8584
      %v8586 = vrot.slane %v208, %v8585
      %v8587 = vlaneseq
      %v8588 = vshrl.u32 %v8587, 7
      %v8589 = vsub.s32 4, %v8588
      %v8590 = vrot.slane %v209, %v8589
      %v8591 = vlaneseq
      %v8592 = vshrl.u32 %v8591, 7
      %v8593 = vsub.s32 4, %v8592
      %v8594 = vrot.slane %v210, %v8593
      %v8595 = vlaneseq
      %v8596 = vshrl.u32 %v8595, 7
      %v8597 = vsub.s32 4, %v8596
      %v8598 = vrot.slane %v211, %v8597
      %v8599 = vlaneseq
      %v8600 = vshrl.u32 %v8599, 7
      %v8601 = vsub.s32 4, %v8600
      %v8602 = vrot.slane %v212, %v8601
      %v8603 = vlaneseq
      %v8604 = vshrl.u32 %v8603, 7
      %v8605 = vsub.s32 4, %v8604
      %v8606 = vrot.slane %v213, %v8605
      %v8607 = vlaneseq
      %v8608 = vshrl.u32 %v8607, 7
      %v8609 = vsub.s32 4, %v8608
      %v8610 = vrot.slane %v214, %v8609
      %v8611 = vlaneseq
      %v8612 = vshrl.u32 %v8611, 7
      %v8613 = vsub.s32 4, %v8612
      %v8614 = vrot.slane %v215, %v8613
      %v8615 = vlaneseq
      %v8616 = vshrl.u32 %v8615, 7
      %v8617 = vsub.s32 4, %v8616
      %v8618 = vrot.slane %v216, %v8617
      %v8619 = vlaneseq
      %v8620 = vshrl.u32 %v8619, 7
      %v8621 = vsub.s32 4, %v8620
      %v8622 = vrot.slane %v217, %v8621
      %v8623 = vlaneseq
      %v8624 = vshrl.u32 %v8623, 7
      %v8625 = vsub.s32 4, %v8624
      %v8626 = vrot.slane %v218, %v8625
      %v8627 = vlaneseq
      %v8628 = vshrl.u32 %v8627, 7
      %v8629 = vsub.s32 4, %v8628
      %v8630 = vrot.slane %v219, %v8629
      %v8631 = vlaneseq
      %v8632 = vshrl.u32 %v8631, 7
      %v8633 = vsub.s32 4, %v8632
      %v8634 = vrot.slane %v220, %v8633
      %v8635 = vlaneseq
      %v8636 = vshrl.u32 %v8635, 7
      %v8637 = vsub.s32 4, %v8636
      %v8638 = vrot.slane %v221, %v8637
      %v8639 = vlaneseq
      %v8640 = vshrl.u32 %v8639, 7
      %v8641 = vsub.s32 4, %v8640
      %v8642 = vrot.slane %v222, %v8641
      %v8643 = vlaneseq
      %v8644 = vshrl.u32 %v8643, 7
      %v8645 = vsub.s32 4, %v8644
      %v8646 = vrot.slane %v223, %v8645
      %v8647 = vlaneseq
      %v8648 = vshrl.u32 %v8647, 7
      %v8649 = vsub.s32 4, %v8648
      %v8650 = vrot.slane %v224, %v8649
      %v8651 = vlaneseq
      %v8652 = vshrl.u32 %v8651, 7
      %v8653 = vsub.s32 4, %v8652
      %v8654 = vrot.slane %v225, %v8653
      %v8655 = vlaneseq
      %v8656 = vshrl.u32 %v8655, 7
      %v8657 = vsub.s32 4, %v8656
      %v8658 = vrot.slane %v226, %v8657
      %v8659 = vlaneseq
      %v8660 = vshrl.u32 %v8659, 7
      %v8661 = vsub.s32 4, %v8660
      %v8662 = vrot.slane %v227, %v8661
      %v8663 = vlaneseq
      %v8664 = vshrl.u32 %v8663, 7
      %v8665 = vsub.s32 4, %v8664
      %v8666 = vrot.slane %v228, %v8665
      %v8667 = vlaneseq
      %v8668 = vshrl.u32 %v8667, 7
      %v8669 = vsub.s32 4, %v8668
      %v8670 = vrot.slane %v229, %v8669
      %v8671 = vlaneseq
      %v8672 = vshrl.u32 %v8671, 7
      %v8673 = vsub.s32 4, %v8672
      %v8674 = vrot.slane %v230, %v8673
      %v8675 = vlaneseq
      %v8676 = vshrl.u32 %v8675, 7
      %v8677 = vsub.s32 4, %v8676
      %v8678 = vrot.slane %v231, %v8677
      %v8679 = vlaneseq
      %v8680 = vshrl.u32 %v8679, 7
      %v8681 = vsub.s32 4, %v8680
      %v8682 = vrot.slane %v232, %v8681
      %v8683 = vlaneseq
      %v8684 = vshrl.u32 %v8683, 7
      %v8685 = vsub.s32 4, %v8684
      %v8686 = vrot.slane %v233, %v8685
      %v8687 = vlaneseq
      %v8688 = vshrl.u32 %v8687, 7
      %v8689 = vsub.s32 4, %v8688
      %v8690 = vrot.slane %v234, %v8689
      %v8691 = vlaneseq
      %v8692 = vshrl.u32 %v8691, 7
      %v8693 = vsub.s32 4, %v8692
      %v8694 = vrot.slane %v235, %v8693
      %v8695 = vlaneseq
      %v8696 = vshrl.u32 %v8695, 7
      %v8697 = vsub.s32 4, %v8696
      %v8698 = vrot.slane %v236, %v8697
      %v8699 = vlaneseq
      %v8700 = vshrl.u32 %v8699, 7
      %v8701 = vsub.s32 4, %v8700
      %v8702 = vrot.slane %v237, %v8701
      %v8703 = vlaneseq
      %v8704 = vshrl.u32 %v8703, 7
      %v8705 = vsub.s32 4, %v8704
      %v8706 = vrot.slane %v238, %v8705
      %v8707 = vlaneseq
      %v8708 = vshrl.u32 %v8707, 7
      %v8709 = vsub.s32 4, %v8708
      %v8710 = vrot.slane %v239, %v8709
      %v8711 = vlaneseq
      %v8712 = vshrl.u32 %v8711, 7
      %v8713 = vsub.s32 4, %v8712
      %v8714 = vrot.slane %v240, %v8713
      %v8715 = vlaneseq
      %v8716 = vshrl.u32 %v8715, 7
      %v8717 = vsub.s32 4, %v8716
      %v8718 = vrot.slane %v241, %v8717
      %v8719 = vlaneseq
      %v8720 = vshrl.u32 %v8719, 7
      %v8721 = vsub.s32 4, %v8720
      %v8722 = vrot.slane %v242, %v8721
      %v8723 = vlaneseq
      %v8724 = vshrl.u32 %v8723, 7
      %v8725 = vsub.s32 4, %v8724
      %v8726 = vrot.slane %v243, %v8725
      %v8727 = vlaneseq
      %v8728 = vshrl.u32 %v8727, 7
      %v8729 = vsub.s32 4, %v8728
      %v8730 = vrot.slane %v244, %v8729
      %v8731 = vlaneseq
      %v8732 = vshrl.u32 %v8731, 7
      %v8733 = vsub.s32 4, %v8732
      %v8734 = vrot.slane %v245, %v8733
      %v8735 = vlaneseq
      %v8736 = vshrl.u32 %v8735, 7
      %v8737 = vsub.s32 4, %v8736
      %v8738 = vrot.slane %v246, %v8737
      %v8739 = vlaneseq
      %v8740 = vshrl.u32 %v8739, 7
      %v8741 = vsub.s32 4, %v8740
      %v8742 = vrot.slane %v247, %v8741
      %v8743 = vlaneseq
      %v8744 = vshrl.u32 %v8743, 7
      %v8745 = vsub.s32 4, %v8744
      %v8746 = vrot.slane %v248, %v8745
      %v8747 = vlaneseq
      %v8748 = vshrl.u32 %v8747, 7
      %v8749 = vsub.s32 4, %v8748
      %v8750 = vrot.slane %v249, %v8749
      %v8751 = vlaneseq
      %v8752 = vshrl.u32 %v8751, 7
      %v8753 = vsub.s32 4, %v8752
      %v8754 = vrot.slane %v250, %v8753
      %v8755 = vlaneseq
      %v8756 = vshrl.u32 %v8755, 7
      %v8757 = vsub.s32 4, %v8756
      %v8758 = vrot.slane %v251, %v8757
      %v8759 = vlaneseq
      %v8760 = vshrl.u32 %v8759, 7
      %v8761 = vsub.s32 4, %v8760
      %v8762 = vrot.slane %v252, %v8761
      %v8763 = vlaneseq
      %v8764 = vshrl.u32 %v8763, 7
      %v8765 = vsub.s32 4, %v8764
      %v8766 = vrot.slane %v253, %v8765
      %v8767 = vlaneseq
      %v8768 = vshrl.u32 %v8767, 7
      %v8769 = vsub.s32 4, %v8768
      %v8770 = vrot.slane %v254, %v8769
      %v8771 = vlaneseq
      %v8772 = vshrl.u32 %v8771, 7
      %v8773 = vsub.s32 4, %v8772
      %v8774 = vrot.slane %v255, %v8773
      %v8775 = vlaneseq
      %v8776 = vshrl.u32 %v8775, 7
      %v8777 = vsub.s32 4, %v8776
      %v8778 = vrot.slane %v256, %v8777
      %v8779 = vlaneseq
      %v8780 = vshrl.u32 %v8779, 7
      %v8781 = vsub.s32 4, %v8780
      %v8782 = vrot.slane %v257, %v8781
      %v8783 = vlaneseq
      %v8784 = vshrl.u32 %v8783, 7
      %v8785 = vsub.s32 4, %v8784
      %v8786 = vrot.slane %v258, %v8785
      %v8787 = vlaneseq
      %v8788 = vshrl.u32 %v8787, 7
      %v8789 = vsub.s32 4, %v8788
      %v8790 = vrot.slane %v259, %v8789
      %v8791 = vlaneseq
      %v8792 = vshrl.u32 %v8791, 7
      %v8793 = vsub.s32 4, %v8792
      %v8794 = vrot.slane %v260, %v8793
      %v8795 = vlaneseq
      %v8796 = vshrl.u32 %v8795, 7
      %v8797 = vsub.s32 4, %v8796
      %v8798 = vrot.slane %v261, %v8797
      %v8799 = vlaneseq
      %v8800 = vshrl.u32 %v8799, 7
      %v8801 = vsub.s32 4, %v8800
      %v8802 = vrot.slane %v262, %v8801
      %v8803 = vlaneseq
      %v8804 = vshrl.u32 %v8803, 7
      %v8805 = vsub.s32 4, %v8804
      %v8806 = vrot.slane %v263, %v8805
      %v8807 = vlaneseq
      %v8808 = vshrl.u32 %v8807, 7
      %v8809 = vsub.s32 4, %v8808
      %v8810 = vrot.slane %v264, %v8809
      %v8811 = vlaneseq
      %v8812 = vshrl.u32 %v8811, 7
      %v8813 = vsub.s32 4, %v8812
      %v8814 = vrot.slane %v265, %v8813
      %v8815 = vlaneseq
      %v8816 = vshrl.u32 %v8815, 7
      %v8817 = vsub.s32 4, %v8816
      %v8818 = vrot.slane %v266, %v8817
      %v8819 = vlaneseq
      %v8820 = vshrl.u32 %v8819, 7
      %v8821 = vsub.s32 4, %v8820
      %v8822 = vrot.slane %v267, %v8821
      %v8823 = vlaneseq
      %v8824 = vshrl.u32 %v8823, 7
      %v8825 = vsub.s32 4, %v8824
      %v8826 = vrot.slane %v268, %v8825
      %v8827 = vlaneseq
      %v8828 = vshrl.u32 %v8827, 7
      %v8829 = vsub.s32 4, %v8828
      %v8830 = vrot.slane %v269, %v8829
      %v8831 = vlaneseq
      %v8832 = vshrl.u32 %v8831, 7
      %v8833 = vsub.s32 4, %v8832
      %v8834 = vrot.slane %v270, %v8833
      %v8835 = vlaneseq
      %v8836 = vshrl.u32 %v8835, 7
      %v8837 = vsub.s32 4, %v8836
      %v8838 = vrot.slane %v271, %v8837
      %v8839 = vlaneseq
      %v8840 = vshrl.u32 %v8839, 7
      %v8841 = vsub.s32 4, %v8840
      %v8842 = vrot.slane %v272, %v8841
      %v8843 = vlaneseq
      %v8844 = vshrl.u32 %v8843, 7
      %v8845 = vsub.s32 4, %v8844
      %v8846 = vrot.slane %v273, %v8845
      %v8847 = vlaneseq
      %v8848 = vshrl.u32 %v8847, 7
      %v8849 = vsub.s32 4, %v8848
      %v8850 = vrot.slane %v274, %v8849
      %v8851 = vlaneseq
      %v8852 = vshrl.u32 %v8851, 7
      %v8853 = vsub.s32 4, %v8852
      %v8854 = vrot.slane %v275, %v8853
      %v8855 = vlaneseq
      %v8856 = vshrl.u32 %v8855, 7
      %v8857 = vsub.s32 4, %v8856
      %v8858 = vrot.slane %v276, %v8857
      %v8859 = vlaneseq
      %v8860 = vshrl.u32 %v8859, 7
      %v8861 = vsub.s32 4, %v8860
      %v8862 = vrot.slane %v277, %v8861
      %v8863 = vlaneseq
      %v8864 = vshrl.u32 %v8863, 7
      %v8865 = vsub.s32 4, %v8864
      %v8866 = vrot.slane %v278, %v8865
      %v8867 = vlaneseq
      %v8868 = vshrl.u32 %v8867, 7
      %v8869 = vsub.s32 4, %v8868
      %v8870 = vrot.slane %v279, %v8869
      %v8871 = vlaneseq
      %v8872 = vshrl.u32 %v8871, 7
      %v8873 = vsub.s32 4, %v8872
      %v8874 = vrot.slane %v280, %v8873
      %v8875 = vlaneseq
      %v8876 = vshrl.u32 %v8875, 7
      %v8877 = vsub.s32 4, %v8876
      %v8878 = vrot.slane %v281, %v8877
      %v8879 = vlaneseq
      %v8880 = vshrl.u32 %v8879, 7
      %v8881 = vsub.s32 4, %v8880
      %v8882 = vrot.slane %v282, %v8881
      %v8883 = vlaneseq
      %v8884 = vshrl.u32 %v8883, 7
      %v8885 = vsub.s32 4, %v8884
      %v8886 = vrot.slane %v283, %v8885
      %v8887 = vlaneseq
      %v8888 = vshrl.u32 %v8887, 7
      %v8889 = vsub.s32 4, %v8888
      %v8890 = vrot.slane %v284, %v8889
      %v8891 = vlaneseq
      %v8892 = vshrl.u32 %v8891, 7
      %v8893 = vsub.s32 4, %v8892
      %v8894 = vrot.slane %v285, %v8893
      %v8895 = vlaneseq
      %v8896 = vshrl.u32 %v8895, 7
      %v8897 = vsub.s32 4, %v8896
      %v8898 = vrot.slane %v286, %v8897
      %v8899 = vlaneseq
      %v8900 = vshrl.u32 %v8899, 7
      %v8901 = vsub.s32 4, %v8900
      %v8902 = vrot.slane %v287, %v8901
      %v8903 = vlaneseq
      %v8904 = vshrl.u32 %v8903, 7
      %v8905 = vsub.s32 4, %v8904
      %v8906 = vrot.slane %v288, %v8905
      %v8907 = vlaneseq
      %v8908 = vshrl.u32 %v8907, 7
      %v8909 = vsub.s32 4, %v8908
      %v8910 = vrot.slane %v289, %v8909
      %v8911 = vlaneseq
      %v8912 = vshrl.u32 %v8911, 7
      %v8913 = vsub.s32 4, %v8912
      %v8914 = vrot.slane %v290, %v8913
      %v8915 = vlaneseq
      %v8916 = vshrl.u32 %v8915, 7
      %v8917 = vsub.s32 4, %v8916
      %v8918 = vrot.slane %v291, %v8917
      %v8919 = vlaneseq
      %v8920 = vshrl.u32 %v8919, 7
      %v8921 = vsub.s32 4, %v8920
      %v8922 = vrot.slane %v292, %v8921
      %v8923 = vlaneseq
      %v8924 = vshrl.u32 %v8923, 7
      %v8925 = vsub.s32 4, %v8924
      %v8926 = vrot.slane %v293, %v8925
      %v8927 = vlaneseq
      %v8928 = vshrl.u32 %v8927, 7
      %v8929 = vsub.s32 4, %v8928
      %v8930 = vrot.slane %v294, %v8929
      %v8931 = vlaneseq
      %v8932 = vshrl.u32 %v8931, 7
      %v8933 = vsub.s32 4, %v8932
      %v8934 = vrot.slane %v295, %v8933
      %v8935 = vlaneseq
      %v8936 = vshrl.u32 %v8935, 7
      %v8937 = vsub.s32 4, %v8936
      %v8938 = vrot.slane %v296, %v8937
      %v8939 = vlaneseq
      %v8940 = vshrl.u32 %v8939, 7
      %v8941 = vsub.s32 4, %v8940
      %v8942 = vrot.slane %v297, %v8941
      %v8943 = vlaneseq
      %v8944 = vshrl.u32 %v8943, 7
      %v8945 = vsub.s32 4, %v8944
      %v8946 = vrot.slane %v298, %v8945
      %v8947 = vlaneseq
      %v8948 = vshrl.u32 %v8947, 7
      %v8949 = vsub.s32 4, %v8948
      %v8950 = vrot.slane %v299, %v8949
      %v8951 = vlaneseq
      %v8952 = vshrl.u32 %v8951, 7
      %v8953 = vsub.s32 4, %v8952
      %v8954 = vrot.slane %v300, %v8953
      %v8955 = vlaneseq
      %v8956 = vshrl.u32 %v8955, 7
      %v8957 = vsub.s32 4, %v8956
      %v8958 = vrot.slane %v301, %v8957
      %v8959 = vmul.f32 %v7937, %v8450
      %v8960 = vmul.f32 %v7941, %v8454
      %v8961 = vmul.f32 %v7945, %v8458
      %v8962 = vmul.f32 %v7949, %v8462
      %v8963 = vmul.f32 %v7953, %v8466
      %v8964 = vmul.f32 %v7957, %v8470
      %v8965 = vmul.f32 %v7961, %v8474
      %v8966 = vmul.f32 %v7965, %v8478
      %v8967 = vmul.f32 %v7969, %v8482
      %v8968 = vmul.f32 %v7973, %v8486
      %v8969 = vmul.f32 %v7977, %v8490
      %v8970 = vmul.f32 %v7981, %v8494
      %v8971 = vmul.f32 %v7985, %v8498
      %v8972 = vmul.f32 %v7989, %v8502
      %v8973 = vmul.f32 %v7993, %v8506
      %v8974 = vmul.f32 %v7997, %v8510
      %v8975 = vmul.f32 %v8001, %v8514
      %v8976 = vmul.f32 %v8005, %v8518
      %v8977 = vmul.f32 %v8009, %v8522
      %v8978 = vmul.f32 %v8013, %v8526
      %v8979 = vmul.f32 %v8017, %v8530
      %v8980 = vmul.f32 %v8021, %v8534
      %v8981 = vmul.f32 %v8025, %v8538
      %v8982 = vmul.f32 %v8029, %v8542
      %v8983 = vmul.f32 %v8033, %v8546
      %v8984 = vmul.f32 %v8037, %v8550
      %v8985 = vmul.f32 %v8041, %v8554
      %v8986 = vmul.f32 %v8045, %v8558
      %v8987 = vmul.f32 %v8049, %v8562
      %v8988 = vmul.f32 %v8053, %v8566
      %v8989 = vmul.f32 %v8057, %v8570
      %v8990 = vmul.f32 %v8061, %v8574
      %v8991 = vmul.f32 %v8065, %v8578
      %v8992 = vmul.f32 %v8069, %v8582
      %v8993 = vmul.f32 %v8073, %v8586
      %v8994 = vmul.f32 %v8077, %v8590
      %v8995 = vmul.f32 %v8081, %v8594
      %v8996 = vmul.f32 %v8085, %v8598
      %v8997 = vmul.f32 %v8089, %v8602
      %v8998 = vmul.f32 %v8093, %v8606
      %v8999 = vmul.f32 %v8097, %v8610
      %v9000 = vmul.f32 %v8101, %v8614
      %v9001 = vmul.f32 %v8105, %v8618
      %v9002 = vmul.f32 %v8109, %v8622
      %v9003 = vmul.f32 %v8113, %v8626
      %v9004 = vmul.f32 %v8117, %v8630
      %v9005 = vmul.f32 %v8121, %v8634
      %v9006 = vmul.f32 %v8125, %v8638
      %v9007 = vmul.f32 %v8129, %v8642
      %v9008 = vmul.f32 %v8133, %v8646
      %v9009 = vmul.f32 %v8137, %v8650
      %v9010 = vmul.f32 %v8141, %v8654
      %v9011 = vmul.f32 %v8145, %v8658
      %v9012 = vmul.f32 %v8149, %v8662
      %v9013 = vmul.f32 %v8153, %v8666
      %v9014 = vmul.f32 %v8157, %v8670
      %v9015 = vmul.f32 %v8161, %v8674
      %v9016 = vmul.f32 %v8165, %v8678
      %v9017 = vmul.f32 %v8169, %v8682
      %v9018 = vmul.f32 %v8173, %v8686
      %v9019 = vmul.f32 %v8177, %v8690
      %v9020 = vmul.f32 %v8181, %v8694
      %v9021 = vmul.f32 %v8185, %v8698
      %v9022 = vmul.f32 %v8189, %v8702
      %v9023 = vmul.f32 %v8193, %v8706
      %v9024 = vmul.f32 %v8197, %v8710
      %v9025 = vmul.f32 %v8201, %v8714
      %v9026 = vmul.f32 %v8205, %v8718
      %v9027 = vmul.f32 %v8209, %v8722
      %v9028 = vmul.f32 %v8213, %v8726
      %v9029 = vmul.f32 %v8217, %v8730
      %v9030 = vmul.f32 %v8221, %v8734
      %v9031 = vmul.f32 %v8225, %v8738
      %v9032 = vmul.f32 %v8229, %v8742
      %v9033 = vmul.f32 %v8233, %v8746
      %v9034 = vmul.f32 %v8237, %v8750
      %v9035 = vmul.f32 %v8241, %v8754
      %v9036 = vmul.f32 %v8245, %v8758
      %v9037 = vmul.f32 %v8249, %v8762
      %v9038 = vmul.f32 %v8253, %v8766
      %v9039 = vmul.f32 %v8257, %v8770
      %v9040 = vmul.f32 %v8261, %v8774
      %v9041 = vmul.f32 %v8265, %v8778
      %v9042 = vmul.f32 %v8269, %v8782
      %v9043 = vmul.f32 %v8273, %v8786
      %v9044 = vmul.f32 %v8277, %v8790
      %v9045 = vmul.f32 %v8281, %v8794
      %v9046 = vmul.f32 %v8285, %v8798
      %v9047 = vmul.f32 %v8289, %v8802
      %v9048 = vmul.f32 %v8293, %v8806
      %v9049 = vmul.f32 %v8297, %v8810
      %v9050 = vmul.f32 %v8301, %v8814
      %v9051 = vmul.f32 %v8305, %v8818
      %v9052 = vmul.f32 %v8309, %v8822
      %v9053 = vmul.f32 %v8313, %v8826
      %v9054 = vmul.f32 %v8317, %v8830
      %v9055 = vmul.f32 %v8321, %v8834
      %v9056 = vmul.f32 %v8325, %v8838
      %v9057 = vmul.f32 %v8329, %v8842
      %v9058 = vmul.f32 %v8333, %v8846
      %v9059 = vmul.f32 %v8337, %v8850
      %v9060 = vmul.f32 %v8341, %v8854
      %v9061 = vmul.f32 %v8345, %v8858
      %v9062 = vmul.f32 %v8349, %v8862
      %v9063 = vmul.f32 %v8353, %v8866
      %v9064 = vmul.f32 %v8357, %v8870
      %v9065 = vmul.f32 %v8361, %v8874
      %v9066 = vmul.f32 %v8365, %v8878
      %v9067 = vmul.f32 %v8369, %v8882
      %v9068 = vmul.f32 %v8373, %v8886
      %v9069 = vmul.f32 %v8377, %v8890
      %v9070 = vmul.f32 %v8381, %v8894
      %v9071 = vmul.f32 %v8385, %v8898
      %v9072 = vmul.f32 %v8389, %v8902
      %v9073 = vmul.f32 %v8393, %v8906
      %v9074 = vmul.f32 %v8397, %v8910
      %v9075 = vmul.f32 %v8401, %v8914
      %v9076 = vmul.f32 %v8405, %v8918
      %v9077 = vmul.f32 %v8409, %v8922
      %v9078 = vmul.f32 %v8413, %v8926
      %v9079 = vmul.f32 %v8417, %v8930
      %v9080 = vmul.f32 %v8421, %v8934
      %v9081 = vmul.f32 %v8425, %v8938
      %v9082 = vmul.f32 %v8429, %v8942
      %v9083 = vmul.f32 %v8433, %v8946
      %v9084 = vmul.f32 %v8437, %v8950
      %v9085 = vmul.f32 %v8441, %v8954
      %v9086 = vmul.f32 %v8445, %v8958
      %v9087 = vadd.f32 %v7807, %v8959
      %v9088 = vadd.f32 %v7808, %v8960
      %v9089 = vadd.f32 %v7809, %v8961
      %v9090 = vadd.f32 %v7810, %v8962
      %v9091 = vadd.f32 %v7811, %v8963
      %v9092 = vadd.f32 %v7812, %v8964
      %v9093 = vadd.f32 %v7813, %v8965
      %v9094 = vadd.f32 %v7814, %v8966
      %v9095 = vadd.f32 %v7815, %v8967
      %v9096 = vadd.f32 %v7816, %v8968
      %v9097 = vadd.f32 %v7817, %v8969
      %v9098 = vadd.f32 %v7818, %v8970
      %v9099 = vadd.f32 %v7819, %v8971
      %v9100 = vadd.f32 %v7820, %v8972
      %v9101 = vadd.f32 %v7821, %v8973
      %v9102 = vadd.f32 %v7822, %v8974
      %v9103 = vadd.f32 %v7823, %v8975
      %v9104 = vadd.f32 %v7824, %v8976
      %v9105 = vadd.f32 %v7825, %v8977
      %v9106 = vadd.f32 %v7826, %v8978
      %v9107 = vadd.f32 %v7827, %v8979
      %v9108 = vadd.f32 %v7828, %v8980
      %v9109 = vadd.f32 %v7829, %v8981
      %v9110 = vadd.f32 %v7830, %v8982
      %v9111 = vadd.f32 %v7831, %v8983
      %v9112 = vadd.f32 %v7832, %v8984
      %v9113 = vadd.f32 %v7833, %v8985
      %v9114 = vadd.f32 %v7834, %v8986
      %v9115 = vadd.f32 %v7835, %v8987
      %v9116 = vadd.f32 %v7836, %v8988
      %v9117 = vadd.f32 %v7837, %v8989
      %v9118 = vadd.f32 %v7838, %v8990
      %v9119 = vadd.f32 %v7839, %v8991
      %v9120 = vadd.f32 %v7840, %v8992
      %v9121 = vadd.f32 %v7841, %v8993
      %v9122 = vadd.f32 %v7842, %v8994
      %v9123 = vadd.f32 %v7843, %v8995
      %v9124 = vadd.f32 %v7844, %v8996
      %v9125 = vadd.f32 %v7845, %v8997
      %v9126 = vadd.f32 %v7846, %v8998
      %v9127 = vadd.f32 %v7847, %v8999
      %v9128 = vadd.f32 %v7848, %v9000
      %v9129 = vadd.f32 %v7849, %v9001
      %v9130 = vadd.f32 %v7850, %v9002
      %v9131 = vadd.f32 %v7851, %v9003
      %v9132 = vadd.f32 %v7852, %v9004
      %v9133 = vadd.f32 %v7853, %v9005
      %v9134 = vadd.f32 %v7854, %v9006
      %v9135 = vadd.f32 %v7855, %v9007
      %v9136 = vadd.f32 %v7856, %v9008
      %v9137 = vadd.f32 %v7857, %v9009
      %v9138 = vadd.f32 %v7858, %v9010
      %v9139 = vadd.f32 %v7859, %v9011
      %v9140 = vadd.f32 %v7860, %v9012
      %v9141 = vadd.f32 %v7861, %v9013
      %v9142 = vadd.f32 %v7862, %v9014
      %v9143 = vadd.f32 %v7863, %v9015
      %v9144 = vadd.f32 %v7864, %v9016
      %v9145 = vadd.f32 %v7865, %v9017
      %v9146 = vadd.f32 %v7866, %v9018
      %v9147 = vadd.f32 %v7867, %v9019
      %v9148 = vadd.f32 %v7868, %v9020
      %v9149 = vadd.f32 %v7869, %v9021
      %v9150 = vadd.f32 %v7870, %v9022
      %v9151 = vadd.f32 %v7871, %v9023
      %v9152 = vadd.f32 %v7872, %v9024
      %v9153 = vadd.f32 %v7873, %v9025
      %v9154 = vadd.f32 %v7874, %v9026
      %v9155 = vadd.f32 %v7875, %v9027
      %v9156 = vadd.f32 %v7876, %v9028
      %v9157 = vadd.f32 %v7877, %v9029
      %v9158 = vadd.f32 %v7878, %v9030
      %v9159 = vadd.f32 %v7879, %v9031
      %v9160 = vadd.f32 %v7880, %v9032
      %v9161 = vadd.f32 %v7881, %v9033
      %v9162 = vadd.f32 %v7882, %v9034
      %v9163 = vadd.f32 %v7883, %v9035
      %v9164 = vadd.f32 %v7884, %v9036
      %v9165 = vadd.f32 %v7885, %v9037
      %v9166 = vadd.f32 %v7886, %v9038
      %v9167 = vadd.f32 %v7887, %v9039
      %v9168 = vadd.f32 %v7888, %v9040
      %v9169 = vadd.f32 %v7889, %v9041
      %v9170 = vadd.f32 %v7890, %v9042
      %v9171 = vadd.f32 %v7891, %v9043
      %v9172 = vadd.f32 %v7892, %v9044
      %v9173 = vadd.f32 %v7893, %v9045
      %v9174 = vadd.f32 %v7894, %v9046
      %v9175 = vadd.f32 %v7895, %v9047
      %v9176 = vadd.f32 %v7896, %v9048
      %v9177 = vadd.f32 %v7897, %v9049
      %v9178 = vadd.f32 %v7898, %v9050
      %v9179 = vadd.f32 %v7899, %v9051
      %v9180 = vadd.f32 %v7900, %v9052
      %v9181 = vadd.f32 %v7901, %v9053
      %v9182 = vadd.f32 %v7902, %v9054
      %v9183 = vadd.f32 %v7903, %v9055
      %v9184 = vadd.f32 %v7904, %v9056
      %v9185 = vadd.f32 %v7905, %v9057
      %v9186 = vadd.f32 %v7906, %v9058
      %v9187 = vadd.f32 %v7907, %v9059
      %v9188 = vadd.f32 %v7908, %v9060
      %v9189 = vadd.f32 %v7909, %v9061
      %v9190 = vadd.f32 %v7910, %v9062
      %v9191 = vadd.f32 %v7911, %v9063
      %v9192 = vadd.f32 %v7912, %v9064
      %v9193 = vadd.f32 %v7913, %v9065
      %v9194 = vadd.f32 %v7914, %v9066
      %v9195 = vadd.f32 %v7915, %v9067
      %v9196 = vadd.f32 %v7916, %v9068
      %v9197 = vadd.f32 %v7917, %v9069
      %v9198 = vadd.f32 %v7918, %v9070
      %v9199 = vadd.f32 %v7919, %v9071
      %v9200 = vadd.f32 %v7920, %v9072
      %v9201 = vadd.f32 %v7921, %v9073
      %v9202 = vadd.f32 %v7922, %v9074
      %v9203 = vadd.f32 %v7923, %v9075
      %v9204 = vadd.f32 %v7924, %v9076
      %v9205 = vadd.f32 %v7925, %v9077
      %v9206 = vadd.f32 %v7926, %v9078
      %v9207 = vadd.f32 %v7927, %v9079
      %v9208 = vadd.f32 %v7928, %v9080
      %v9209 = vadd.f32 %v7929, %v9081
      %v9210 = vadd.f32 %v7930, %v9082
      %v9211 = vadd.f32 %v7931, %v9083
      %v9212 = vadd.f32 %v7932, %v9084
      %v9213 = vadd.f32 %v7933, %v9085
      %v9214 = vadd.f32 %v7934, %v9086
      %9215 = vset.pattern.permute.xlu0 5
      %9216 = vperm.xlu0 %9215, %v2687
      %v9217 = vpop.permute.xlu0 %9216
      %9219 = vset.pattern.permute.xlu0 5
      %9220 = vperm.xlu0 %9219, %v2688
      %v9221 = vpop.permute.xlu0 %9220
      %9223 = vset.pattern.permute.xlu0 5
      %9224 = vperm.xlu0 %9223, %v2689
      %v9225 = vpop.permute.xlu0 %9224
      %9227 = vset.pattern.permute.xlu0 5
      %9228 = vperm.xlu0 %9227, %v2690
      %v9229 = vpop.permute.xlu0 %9228
      %9231 = vset.pattern.permute.xlu0 5
      %9232 = vperm.xlu0 %9231, %v2691
      %v9233 = vpop.permute.xlu0 %9232
      %9235 = vset.pattern.permute.xlu0 5
      %9236 = vperm.xlu0 %9235, %v2692
      %v9237 = vpop.permute.xlu0 %9236
      %9239 = vset.pattern.permute.xlu0 5
      %9240 = vperm.xlu0 %9239, %v2693
      %v9241 = vpop.permute.xlu0 %9240
      %9243 = vset.pattern.permute.xlu0 5
      %9244 = vperm.xlu0 %9243, %v2694
      %v9245 = vpop.permute.xlu0 %9244
      %9247 = vset.pattern.permute.xlu0 5
      %9248 = vperm.xlu0 %9247, %v2695
      %v9249 = vpop.permute.xlu0 %9248
      %9251 = vset.pattern.permute.xlu0 5
      %9252 = vperm.xlu0 %9251, %v2696
      %v9253 = vpop.permute.xlu0 %9252
      %9255 = vset.pattern.permute.xlu0 5
      %9256 = vperm.xlu0 %9255, %v2697
      %v9257 = vpop.permute.xlu0 %9256
      %9259 = vset.pattern.permute.xlu0 5
      %9260 = vperm.xlu0 %9259, %v2698
      %v9261 = vpop.permute.xlu0 %9260
      %9263 = vset.pattern.permute.xlu0 5
      %9264 = vperm.xlu0 %9263, %v2699
      %v9265 = vpop.permute.xlu0 %9264
      %9267 = vset.pattern.permute.xlu0 5
      %9268 = vperm.xlu0 %9267, %v2700
      %v9269 = vpop.permute.xlu0 %9268
      %9271 = vset.pattern.permute.xlu0 5
      %9272 = vperm.xlu0 %9271, %v2701
      %v9273 = vpop.permute.xlu0 %9272
      %9275 = vset.pattern.permute.xlu0 5
      %9276 = vperm.xlu0 %9275, %v2702
      %v9277 = vpop.permute.xlu0 %9276
      %9279 = vset.pattern.permute.xlu0 5
      %9280 = vperm.xlu0 %9279, %v2703
      %v9281 = vpop.permute.xlu0 %9280
      %9283 = vset.pattern.permute.xlu0 5
      %9284 = vperm.xlu0 %9283, %v2704
      %v9285 = vpop.permute.xlu0 %9284
      %9287 = vset.pattern.permute.xlu0 5
      %9288 = vperm.xlu0 %9287, %v2705
      %v9289 = vpop.permute.xlu0 %9288
      %9291 = vset.pattern.permute.xlu0 5
      %9292 = vperm.xlu0 %9291, %v2706
      %v9293 = vpop.permute.xlu0 %9292
      %9295 = vset.pattern.permute.xlu0 5
      %9296 = vperm.xlu0 %9295, %v2707
      %v9297 = vpop.permute.xlu0 %9296
      %9299 = vset.pattern.permute.xlu0 5
      %9300 = vperm.xlu0 %9299, %v2708
      %v9301 = vpop.permute.xlu0 %9300
      %9303 = vset.pattern.permute.xlu0 5
      %9304 = vperm.xlu0 %9303, %v2709
      %v9305 = vpop.permute.xlu0 %9304
      %9307 = vset.pattern.permute.xlu0 5
      %9308 = vperm.xlu0 %9307, %v2710
      %v9309 = vpop.permute.xlu0 %9308
      %9311 = vset.pattern.permute.xlu0 5
      %9312 = vperm.xlu0 %9311, %v2711
      %v9313 = vpop.permute.xlu0 %9312
      %9315 = vset.pattern.permute.xlu0 5
      %9316 = vperm.xlu0 %9315, %v2712
      %v9317 = vpop.permute.xlu0 %9316
      %9319 = vset.pattern.permute.xlu0 5
      %9320 = vperm.xlu0 %9319, %v2713
      %v9321 = vpop.permute.xlu0 %9320
      %9323 = vset.pattern.permute.xlu0 5
      %9324 = vperm.xlu0 %9323, %v2714
      %v9325 = vpop.permute.xlu0 %9324
      %9327 = vset.pattern.permute.xlu0 5
      %9328 = vperm.xlu0 %9327, %v2715
      %v9329 = vpop.permute.xlu0 %9328
      %9331 = vset.pattern.permute.xlu0 5
      %9332 = vperm.xlu0 %9331, %v2716
      %v9333 = vpop.permute.xlu0 %9332
      %9335 = vset.pattern.permute.xlu0 5
      %9336 = vperm.xlu0 %9335, %v2717
      %v9337 = vpop.permute.xlu0 %9336
      %9339 = vset.pattern.permute.xlu0 5
      %9340 = vperm.xlu0 %9339, %v2718
      %v9341 = vpop.permute.xlu0 %9340
      %9343 = vset.pattern.permute.xlu0 5
      %9344 = vperm.xlu0 %9343, %v2719
      %v9345 = vpop.permute.xlu0 %9344
      %9347 = vset.pattern.permute.xlu0 5
      %9348 = vperm.xlu0 %9347, %v2720
      %v9349 = vpop.permute.xlu0 %9348
      %9351 = vset.pattern.permute.xlu0 5
      %9352 = vperm.xlu0 %9351, %v2721
      %v9353 = vpop.permute.xlu0 %9352
      %9355 = vset.pattern.permute.xlu0 5
      %9356 = vperm.xlu0 %9355, %v2722
      %v9357 = vpop.permute.xlu0 %9356
      %9359 = vset.pattern.permute.xlu0 5
      %9360 = vperm.xlu0 %9359, %v2723
      %v9361 = vpop.permute.xlu0 %9360
      %9363 = vset.pattern.permute.xlu0 5
      %9364 = vperm.xlu0 %9363, %v2724
      %v9365 = vpop.permute.xlu0 %9364
      %9367 = vset.pattern.permute.xlu0 5
      %9368 = vperm.xlu0 %9367, %v2725
      %v9369 = vpop.permute.xlu0 %9368
      %9371 = vset.pattern.permute.xlu0 5
      %9372 = vperm.xlu0 %9371, %v2726
      %v9373 = vpop.permute.xlu0 %9372
      %9375 = vset.pattern.permute.xlu0 5
      %9376 = vperm.xlu0 %9375, %v2727
      %v9377 = vpop.permute.xlu0 %9376
      %9379 = vset.pattern.permute.xlu0 5
      %9380 = vperm.xlu0 %9379, %v2728
      %v9381 = vpop.permute.xlu0 %9380
      %9383 = vset.pattern.permute.xlu0 5
      %9384 = vperm.xlu0 %9383, %v2729
      %v9385 = vpop.permute.xlu0 %9384
      %9387 = vset.pattern.permute.xlu0 5
      %9388 = vperm.xlu0 %9387, %v2730
      %v9389 = vpop.permute.xlu0 %9388
      %9391 = vset.pattern.permute.xlu0 5
      %9392 = vperm.xlu0 %9391, %v2731
      %v9393 = vpop.permute.xlu0 %9392
      %9395 = vset.pattern.permute.xlu0 5
      %9396 = vperm.xlu0 %9395, %v2732
      %v9397 = vpop.permute.xlu0 %9396
      %9399 = vset.pattern.permute.xlu0 5
      %9400 = vperm.xlu0 %9399, %v2733
      %v9401 = vpop.permute.xlu0 %9400
      %9403 = vset.pattern.permute.xlu0 5
      %9404 = vperm.xlu0 %9403, %v2734
      %v9405 = vpop.permute.xlu0 %9404
      %9407 = vset.pattern.permute.xlu0 5
      %9408 = vperm.xlu0 %9407, %v2735
      %v9409 = vpop.permute.xlu0 %9408
      %9411 = vset.pattern.permute.xlu0 5
      %9412 = vperm.xlu0 %9411, %v2736
      %v9413 = vpop.permute.xlu0 %9412
      %9415 = vset.pattern.permute.xlu0 5
      %9416 = vperm.xlu0 %9415, %v2737
      %v9417 = vpop.permute.xlu0 %9416
      %9419 = vset.pattern.permute.xlu0 5
      %9420 = vperm.xlu0 %9419, %v2738
      %v9421 = vpop.permute.xlu0 %9420
      %9423 = vset.pattern.permute.xlu0 5
      %9424 = vperm.xlu0 %9423, %v2739
      %v9425 = vpop.permute.xlu0 %9424
      %9427 = vset.pattern.permute.xlu0 5
      %9428 = vperm.xlu0 %9427, %v2740
      %v9429 = vpop.permute.xlu0 %9428
      %9431 = vset.pattern.permute.xlu0 5
      %9432 = vperm.xlu0 %9431, %v2741
      %v9433 = vpop.permute.xlu0 %9432
      %9435 = vset.pattern.permute.xlu0 5
      %9436 = vperm.xlu0 %9435, %v2742
      %v9437 = vpop.permute.xlu0 %9436
      %9439 = vset.pattern.permute.xlu0 5
      %9440 = vperm.xlu0 %9439, %v2743
      %v9441 = vpop.permute.xlu0 %9440
      %9443 = vset.pattern.permute.xlu0 5
      %9444 = vperm.xlu0 %9443, %v2744
      %v9445 = vpop.permute.xlu0 %9444
      %9447 = vset.pattern.permute.xlu0 5
      %9448 = vperm.xlu0 %9447, %v2745
      %v9449 = vpop.permute.xlu0 %9448
      %9451 = vset.pattern.permute.xlu0 5
      %9452 = vperm.xlu0 %9451, %v2746
      %v9453 = vpop.permute.xlu0 %9452
      %9455 = vset.pattern.permute.xlu0 5
      %9456 = vperm.xlu0 %9455, %v2747
      %v9457 = vpop.permute.xlu0 %9456
      %9459 = vset.pattern.permute.xlu0 5
      %9460 = vperm.xlu0 %9459, %v2748
      %v9461 = vpop.permute.xlu0 %9460
      %9463 = vset.pattern.permute.xlu0 5
      %9464 = vperm.xlu0 %9463, %v2749
      %v9465 = vpop.permute.xlu0 %9464
      %9467 = vset.pattern.permute.xlu0 5
      %9468 = vperm.xlu0 %9467, %v2750
      %v9469 = vpop.permute.xlu0 %9468
      %9471 = vset.pattern.permute.xlu0 5
      %9472 = vperm.xlu0 %9471, %v2751
      %v9473 = vpop.permute.xlu0 %9472
      %9475 = vset.pattern.permute.xlu0 5
      %9476 = vperm.xlu0 %9475, %v2752
      %v9477 = vpop.permute.xlu0 %9476
      %9479 = vset.pattern.permute.xlu0 5
      %9480 = vperm.xlu0 %9479, %v2753
      %v9481 = vpop.permute.xlu0 %9480
      %9483 = vset.pattern.permute.xlu0 5
      %9484 = vperm.xlu0 %9483, %v2754
      %v9485 = vpop.permute.xlu0 %9484
      %9487 = vset.pattern.permute.xlu0 5
      %9488 = vperm.xlu0 %9487, %v2755
      %v9489 = vpop.permute.xlu0 %9488
      %9491 = vset.pattern.permute.xlu0 5
      %9492 = vperm.xlu0 %9491, %v2756
      %v9493 = vpop.permute.xlu0 %9492
      %9495 = vset.pattern.permute.xlu0 5
      %9496 = vperm.xlu0 %9495, %v2757
      %v9497 = vpop.permute.xlu0 %9496
      %9499 = vset.pattern.permute.xlu0 5
      %9500 = vperm.xlu0 %9499, %v2758
      %v9501 = vpop.permute.xlu0 %9500
      %9503 = vset.pattern.permute.xlu0 5
      %9504 = vperm.xlu0 %9503, %v2759
      %v9505 = vpop.permute.xlu0 %9504
      %9507 = vset.pattern.permute.xlu0 5
      %9508 = vperm.xlu0 %9507, %v2760
      %v9509 = vpop.permute.xlu0 %9508
      %9511 = vset.pattern.permute.xlu0 5
      %9512 = vperm.xlu0 %9511, %v2761
      %v9513 = vpop.permute.xlu0 %9512
      %9515 = vset.pattern.permute.xlu0 5
      %9516 = vperm.xlu0 %9515, %v2762
      %v9517 = vpop.permute.xlu0 %9516
      %9519 = vset.pattern.permute.xlu0 5
      %9520 = vperm.xlu0 %9519, %v2763
      %v9521 = vpop.permute.xlu0 %9520
      %9523 = vset.pattern.permute.xlu0 5
      %9524 = vperm.xlu0 %9523, %v2764
      %v9525 = vpop.permute.xlu0 %9524
      %9527 = vset.pattern.permute.xlu0 5
      %9528 = vperm.xlu0 %9527, %v2765
      %v9529 = vpop.permute.xlu0 %9528
      %9531 = vset.pattern.permute.xlu0 5
      %9532 = vperm.xlu0 %9531, %v2766
      %v9533 = vpop.permute.xlu0 %9532
      %9535 = vset.pattern.permute.xlu0 5
      %9536 = vperm.xlu0 %9535, %v2767
      %v9537 = vpop.permute.xlu0 %9536
      %9539 = vset.pattern.permute.xlu0 5
      %9540 = vperm.xlu0 %9539, %v2768
      %v9541 = vpop.permute.xlu0 %9540
      %9543 = vset.pattern.permute.xlu0 5
      %9544 = vperm.xlu0 %9543, %v2769
      %v9545 = vpop.permute.xlu0 %9544
      %9547 = vset.pattern.permute.xlu0 5
      %9548 = vperm.xlu0 %9547, %v2770
      %v9549 = vpop.permute.xlu0 %9548
      %9551 = vset.pattern.permute.xlu0 5
      %9552 = vperm.xlu0 %9551, %v2771
      %v9553 = vpop.permute.xlu0 %9552
      %9555 = vset.pattern.permute.xlu0 5
      %9556 = vperm.xlu0 %9555, %v2772
      %v9557 = vpop.permute.xlu0 %9556
      %9559 = vset.pattern.permute.xlu0 5
      %9560 = vperm.xlu0 %9559, %v2773
      %v9561 = vpop.permute.xlu0 %9560
      %9563 = vset.pattern.permute.xlu0 5
      %9564 = vperm.xlu0 %9563, %v2774
      %v9565 = vpop.permute.xlu0 %9564
      %9567 = vset.pattern.permute.xlu0 5
      %9568 = vperm.xlu0 %9567, %v2775
      %v9569 = vpop.permute.xlu0 %9568
      %9571 = vset.pattern.permute.xlu0 5
      %9572 = vperm.xlu0 %9571, %v2776
      %v9573 = vpop.permute.xlu0 %9572
      %9575 = vset.pattern.permute.xlu0 5
      %9576 = vperm.xlu0 %9575, %v2777
      %v9577 = vpop.permute.xlu0 %9576
      %9579 = vset.pattern.permute.xlu0 5
      %9580 = vperm.xlu0 %9579, %v2778
      %v9581 = vpop.permute.xlu0 %9580
      %9583 = vset.pattern.permute.xlu0 5
      %9584 = vperm.xlu0 %9583, %v2779
      %v9585 = vpop.permute.xlu0 %9584
      %9587 = vset.pattern.permute.xlu0 5
      %9588 = vperm.xlu0 %9587, %v2780
      %v9589 = vpop.permute.xlu0 %9588
      %9591 = vset.pattern.permute.xlu0 5
      %9592 = vperm.xlu0 %9591, %v2781
      %v9593 = vpop.permute.xlu0 %9592
      %9595 = vset.pattern.permute.xlu0 5
      %9596 = vperm.xlu0 %9595, %v2782
      %v9597 = vpop.permute.xlu0 %9596
      %9599 = vset.pattern.permute.xlu0 5
      %9600 = vperm.xlu0 %9599, %v2783
      %v9601 = vpop.permute.xlu0 %9600
      %9603 = vset.pattern.permute.xlu0 5
      %9604 = vperm.xlu0 %9603, %v2784
      %v9605 = vpop.permute.xlu0 %9604
      %9607 = vset.pattern.permute.xlu0 5
      %9608 = vperm.xlu0 %9607, %v2785
      %v9609 = vpop.permute.xlu0 %9608
      %9611 = vset.pattern.permute.xlu0 5
      %9612 = vperm.xlu0 %9611, %v2786
      %v9613 = vpop.permute.xlu0 %9612
      %9615 = vset.pattern.permute.xlu0 5
      %9616 = vperm.xlu0 %9615, %v2787
      %v9617 = vpop.permute.xlu0 %9616
      %9619 = vset.pattern.permute.xlu0 5
      %9620 = vperm.xlu0 %9619, %v2788
      %v9621 = vpop.permute.xlu0 %9620
      %9623 = vset.pattern.permute.xlu0 5
      %9624 = vperm.xlu0 %9623, %v2789
      %v9625 = vpop.permute.xlu0 %9624
      %9627 = vset.pattern.permute.xlu0 5
      %9628 = vperm.xlu0 %9627, %v2790
      %v9629 = vpop.permute.xlu0 %9628
      %9631 = vset.pattern.permute.xlu0 5
      %9632 = vperm.xlu0 %9631, %v2791
      %v9633 = vpop.permute.xlu0 %9632
      %9635 = vset.pattern.permute.xlu0 5
      %9636 = vperm.xlu0 %9635, %v2792
      %v9637 = vpop.permute.xlu0 %9636
      %9639 = vset.pattern.permute.xlu0 5
      %9640 = vperm.xlu0 %9639, %v2793
      %v9641 = vpop.permute.xlu0 %9640
      %9643 = vset.pattern.permute.xlu0 5
      %9644 = vperm.xlu0 %9643, %v2794
      %v9645 = vpop.permute.xlu0 %9644
      %9647 = vset.pattern.permute.xlu0 5
      %9648 = vperm.xlu0 %9647, %v2795
      %v9649 = vpop.permute.xlu0 %9648
      %9651 = vset.pattern.permute.xlu0 5
      %9652 = vperm.xlu0 %9651, %v2796
      %v9653 = vpop.permute.xlu0 %9652
      %9655 = vset.pattern.permute.xlu0 5
      %9656 = vperm.xlu0 %9655, %v2797
      %v9657 = vpop.permute.xlu0 %9656
      %9659 = vset.pattern.permute.xlu0 5
      %9660 = vperm.xlu0 %9659, %v2798
      %v9661 = vpop.permute.xlu0 %9660
      %9663 = vset.pattern.permute.xlu0 5
      %9664 = vperm.xlu0 %9663, %v2799
      %v9665 = vpop.permute.xlu0 %9664
      %9667 = vset.pattern.permute.xlu0 5
      %9668 = vperm.xlu0 %9667, %v2800
      %v9669 = vpop.permute.xlu0 %9668
      %9671 = vset.pattern.permute.xlu0 5
      %9672 = vperm.xlu0 %9671, %v2801
      %v9673 = vpop.permute.xlu0 %9672
      %9675 = vset.pattern.permute.xlu0 5
      %9676 = vperm.xlu0 %9675, %v2802
      %v9677 = vpop.permute.xlu0 %9676
      %9679 = vset.pattern.permute.xlu0 5
      %9680 = vperm.xlu0 %9679, %v2803
      %v9681 = vpop.permute.xlu0 %9680
      %9683 = vset.pattern.permute.xlu0 5
      %9684 = vperm.xlu0 %9683, %v2804
      %v9685 = vpop.permute.xlu0 %9684
      %9687 = vset.pattern.permute.xlu0 5
      %9688 = vperm.xlu0 %9687, %v2805
      %v9689 = vpop.permute.xlu0 %9688
      %9691 = vset.pattern.permute.xlu0 5
      %9692 = vperm.xlu0 %9691, %v2806
      %v9693 = vpop.permute.xlu0 %9692
      %9695 = vset.pattern.permute.xlu0 5
      %9696 = vperm.xlu0 %9695, %v2807
      %v9697 = vpop.permute.xlu0 %9696
      %9699 = vset.pattern.permute.xlu0 5
      %9700 = vperm.xlu0 %9699, %v2808
      %v9701 = vpop.permute.xlu0 %9700
      %9703 = vset.pattern.permute.xlu0 5
      %9704 = vperm.xlu0 %9703, %v2809
      %v9705 = vpop.permute.xlu0 %9704
      %9707 = vset.pattern.permute.xlu0 5
      %9708 = vperm.xlu0 %9707, %v2810
      %v9709 = vpop.permute.xlu0 %9708
      %9711 = vset.pattern.permute.xlu0 5
      %9712 = vperm.xlu0 %9711, %v2811
      %v9713 = vpop.permute.xlu0 %9712
      %9715 = vset.pattern.permute.xlu0 5
      %9716 = vperm.xlu0 %9715, %v2812
      %v9717 = vpop.permute.xlu0 %9716
      %9719 = vset.pattern.permute.xlu0 5
      %9720 = vperm.xlu0 %9719, %v2813
      %v9721 = vpop.permute.xlu0 %9720
      %9723 = vset.pattern.permute.xlu0 5
      %9724 = vperm.xlu0 %9723, %v2814
      %v9725 = vpop.permute.xlu0 %9724
      %v9727 = vlaneseq
      %v9728 = vshrl.u32 %v9727, 7
      %v9729 = vsub.s32 5, %v9728
      %v9730 = vrot.slane %v174, %v9729
      %v9731 = vlaneseq
      %v9732 = vshrl.u32 %v9731, 7
      %v9733 = vsub.s32 5, %v9732
      %v9734 = vrot.slane %v175, %v9733
      %v9735 = vlaneseq
      %v9736 = vshrl.u32 %v9735, 7
      %v9737 = vsub.s32 5, %v9736
      %v9738 = vrot.slane %v176, %v9737
      %v9739 = vlaneseq
      %v9740 = vshrl.u32 %v9739, 7
      %v9741 = vsub.s32 5, %v9740
      %v9742 = vrot.slane %v177, %v9741
      %v9743 = vlaneseq
      %v9744 = vshrl.u32 %v9743, 7
      %v9745 = vsub.s32 5, %v9744
      %v9746 = vrot.slane %v178, %v9745
      %v9747 = vlaneseq
      %v9748 = vshrl.u32 %v9747, 7
      %v9749 = vsub.s32 5, %v9748
      %v9750 = vrot.slane %v179, %v9749
      %v9751 = vlaneseq
      %v9752 = vshrl.u32 %v9751, 7
      %v9753 = vsub.s32 5, %v9752
      %v9754 = vrot.slane %v180, %v9753
      %v9755 = vlaneseq
      %v9756 = vshrl.u32 %v9755, 7
      %v9757 = vsub.s32 5, %v9756
      %v9758 = vrot.slane %v181, %v9757
      %v9759 = vlaneseq
      %v9760 = vshrl.u32 %v9759, 7
      %v9761 = vsub.s32 5, %v9760
      %v9762 = vrot.slane %v182, %v9761
      %v9763 = vlaneseq
      %v9764 = vshrl.u32 %v9763, 7
      %v9765 = vsub.s32 5, %v9764
      %v9766 = vrot.slane %v183, %v9765
      %v9767 = vlaneseq
      %v9768 = vshrl.u32 %v9767, 7
      %v9769 = vsub.s32 5, %v9768
      %v9770 = vrot.slane %v184, %v9769
      %v9771 = vlaneseq
      %v9772 = vshrl.u32 %v9771, 7
      %v9773 = vsub.s32 5, %v9772
      %v9774 = vrot.slane %v185, %v9773
      %v9775 = vlaneseq
      %v9776 = vshrl.u32 %v9775, 7
      %v9777 = vsub.s32 5, %v9776
      %v9778 = vrot.slane %v186, %v9777
      %v9779 = vlaneseq
      %v9780 = vshrl.u32 %v9779, 7
      %v9781 = vsub.s32 5, %v9780
      %v9782 = vrot.slane %v187, %v9781
      %v9783 = vlaneseq
      %v9784 = vshrl.u32 %v9783, 7
      %v9785 = vsub.s32 5, %v9784
      %v9786 = vrot.slane %v188, %v9785
      %v9787 = vlaneseq
      %v9788 = vshrl.u32 %v9787, 7
      %v9789 = vsub.s32 5, %v9788
      %v9790 = vrot.slane %v189, %v9789
      %v9791 = vlaneseq
      %v9792 = vshrl.u32 %v9791, 7
      %v9793 = vsub.s32 5, %v9792
      %v9794 = vrot.slane %v190, %v9793
      %v9795 = vlaneseq
      %v9796 = vshrl.u32 %v9795, 7
      %v9797 = vsub.s32 5, %v9796
      %v9798 = vrot.slane %v191, %v9797
      %v9799 = vlaneseq
      %v9800 = vshrl.u32 %v9799, 7
      %v9801 = vsub.s32 5, %v9800
      %v9802 = vrot.slane %v192, %v9801
      %v9803 = vlaneseq
      %v9804 = vshrl.u32 %v9803, 7
      %v9805 = vsub.s32 5, %v9804
      %v9806 = vrot.slane %v193, %v9805
      %v9807 = vlaneseq
      %v9808 = vshrl.u32 %v9807, 7
      %v9809 = vsub.s32 5, %v9808
      %v9810 = vrot.slane %v194, %v9809
      %v9811 = vlaneseq
      %v9812 = vshrl.u32 %v9811, 7
      %v9813 = vsub.s32 5, %v9812
      %v9814 = vrot.slane %v195, %v9813
      %v9815 = vlaneseq
      %v9816 = vshrl.u32 %v9815, 7
      %v9817 = vsub.s32 5, %v9816
      %v9818 = vrot.slane %v196, %v9817
      %v9819 = vlaneseq
      %v9820 = vshrl.u32 %v9819, 7
      %v9821 = vsub.s32 5, %v9820
      %v9822 = vrot.slane %v197, %v9821
      %v9823 = vlaneseq
      %v9824 = vshrl.u32 %v9823, 7
      %v9825 = vsub.s32 5, %v9824
      %v9826 = vrot.slane %v198, %v9825
      %v9827 = vlaneseq
      %v9828 = vshrl.u32 %v9827, 7
      %v9829 = vsub.s32 5, %v9828
      %v9830 = vrot.slane %v199, %v9829
      %v9831 = vlaneseq
      %v9832 = vshrl.u32 %v9831, 7
      %v9833 = vsub.s32 5, %v9832
      %v9834 = vrot.slane %v200, %v9833
      %v9835 = vlaneseq
      %v9836 = vshrl.u32 %v9835, 7
      %v9837 = vsub.s32 5, %v9836
      %v9838 = vrot.slane %v201, %v9837
      %v9839 = vlaneseq
      %v9840 = vshrl.u32 %v9839, 7
      %v9841 = vsub.s32 5, %v9840
      %v9842 = vrot.slane %v202, %v9841
      %v9843 = vlaneseq
      %v9844 = vshrl.u32 %v9843, 7
      %v9845 = vsub.s32 5, %v9844
      %v9846 = vrot.slane %v203, %v9845
      %v9847 = vlaneseq
      %v9848 = vshrl.u32 %v9847, 7
      %v9849 = vsub.s32 5, %v9848
      %v9850 = vrot.slane %v204, %v9849
      %v9851 = vlaneseq
      %v9852 = vshrl.u32 %v9851, 7
      %v9853 = vsub.s32 5, %v9852
      %v9854 = vrot.slane %v205, %v9853
      %v9855 = vlaneseq
      %v9856 = vshrl.u32 %v9855, 7
      %v9857 = vsub.s32 5, %v9856
      %v9858 = vrot.slane %v206, %v9857
      %v9859 = vlaneseq
      %v9860 = vshrl.u32 %v9859, 7
      %v9861 = vsub.s32 5, %v9860
      %v9862 = vrot.slane %v207, %v9861
      %v9863 = vlaneseq
      %v9864 = vshrl.u32 %v9863, 7
      %v9865 = vsub.s32 5, %v9864
      %v9866 = vrot.slane %v208, %v9865
      %v9867 = vlaneseq
      %v9868 = vshrl.u32 %v9867, 7
      %v9869 = vsub.s32 5, %v9868
      %v9870 = vrot.slane %v209, %v9869
      %v9871 = vlaneseq
      %v9872 = vshrl.u32 %v9871, 7
      %v9873 = vsub.s32 5, %v9872
      %v9874 = vrot.slane %v210, %v9873
      %v9875 = vlaneseq
      %v9876 = vshrl.u32 %v9875, 7
      %v9877 = vsub.s32 5, %v9876
      %v9878 = vrot.slane %v211, %v9877
      %v9879 = vlaneseq
      %v9880 = vshrl.u32 %v9879, 7
      %v9881 = vsub.s32 5, %v9880
      %v9882 = vrot.slane %v212, %v9881
      %v9883 = vlaneseq
      %v9884 = vshrl.u32 %v9883, 7
      %v9885 = vsub.s32 5, %v9884
      %v9886 = vrot.slane %v213, %v9885
      %v9887 = vlaneseq
      %v9888 = vshrl.u32 %v9887, 7
      %v9889 = vsub.s32 5, %v9888
      %v9890 = vrot.slane %v214, %v9889
      %v9891 = vlaneseq
      %v9892 = vshrl.u32 %v9891, 7
      %v9893 = vsub.s32 5, %v9892
      %v9894 = vrot.slane %v215, %v9893
      %v9895 = vlaneseq
      %v9896 = vshrl.u32 %v9895, 7
      %v9897 = vsub.s32 5, %v9896
      %v9898 = vrot.slane %v216, %v9897
      %v9899 = vlaneseq
      %v9900 = vshrl.u32 %v9899, 7
      %v9901 = vsub.s32 5, %v9900
      %v9902 = vrot.slane %v217, %v9901
      %v9903 = vlaneseq
      %v9904 = vshrl.u32 %v9903, 7
      %v9905 = vsub.s32 5, %v9904
      %v9906 = vrot.slane %v218, %v9905
      %v9907 = vlaneseq
      %v9908 = vshrl.u32 %v9907, 7
      %v9909 = vsub.s32 5, %v9908
      %v9910 = vrot.slane %v219, %v9909
      %v9911 = vlaneseq
      %v9912 = vshrl.u32 %v9911, 7
      %v9913 = vsub.s32 5, %v9912
      %v9914 = vrot.slane %v220, %v9913
      %v9915 = vlaneseq
      %v9916 = vshrl.u32 %v9915, 7
      %v9917 = vsub.s32 5, %v9916
      %v9918 = vrot.slane %v221, %v9917
      %v9919 = vlaneseq
      %v9920 = vshrl.u32 %v9919, 7
      %v9921 = vsub.s32 5, %v9920
      %v9922 = vrot.slane %v222, %v9921
      %v9923 = vlaneseq
      %v9924 = vshrl.u32 %v9923, 7
      %v9925 = vsub.s32 5, %v9924
      %v9926 = vrot.slane %v223, %v9925
      %v9927 = vlaneseq
      %v9928 = vshrl.u32 %v9927, 7
      %v9929 = vsub.s32 5, %v9928
      %v9930 = vrot.slane %v224, %v9929
      %v9931 = vlaneseq
      %v9932 = vshrl.u32 %v9931, 7
      %v9933 = vsub.s32 5, %v9932
      %v9934 = vrot.slane %v225, %v9933
      %v9935 = vlaneseq
      %v9936 = vshrl.u32 %v9935, 7
      %v9937 = vsub.s32 5, %v9936
      %v9938 = vrot.slane %v226, %v9937
      %v9939 = vlaneseq
      %v9940 = vshrl.u32 %v9939, 7
      %v9941 = vsub.s32 5, %v9940
      %v9942 = vrot.slane %v227, %v9941
      %v9943 = vlaneseq
      %v9944 = vshrl.u32 %v9943, 7
      %v9945 = vsub.s32 5, %v9944
      %v9946 = vrot.slane %v228, %v9945
      %v9947 = vlaneseq
      %v9948 = vshrl.u32 %v9947, 7
      %v9949 = vsub.s32 5, %v9948
      %v9950 = vrot.slane %v229, %v9949
      %v9951 = vlaneseq
      %v9952 = vshrl.u32 %v9951, 7
      %v9953 = vsub.s32 5, %v9952
      %v9954 = vrot.slane %v230, %v9953
      %v9955 = vlaneseq
      %v9956 = vshrl.u32 %v9955, 7
      %v9957 = vsub.s32 5, %v9956
      %v9958 = vrot.slane %v231, %v9957
      %v9959 = vlaneseq
      %v9960 = vshrl.u32 %v9959, 7
      %v9961 = vsub.s32 5, %v9960
      %v9962 = vrot.slane %v232, %v9961
      %v9963 = vlaneseq
      %v9964 = vshrl.u32 %v9963, 7
      %v9965 = vsub.s32 5, %v9964
      %v9966 = vrot.slane %v233, %v9965
      %v9967 = vlaneseq
      %v9968 = vshrl.u32 %v9967, 7
      %v9969 = vsub.s32 5, %v9968
      %v9970 = vrot.slane %v234, %v9969
      %v9971 = vlaneseq
      %v9972 = vshrl.u32 %v9971, 7
      %v9973 = vsub.s32 5, %v9972
      %v9974 = vrot.slane %v235, %v9973
      %v9975 = vlaneseq
      %v9976 = vshrl.u32 %v9975, 7
      %v9977 = vsub.s32 5, %v9976
      %v9978 = vrot.slane %v236, %v9977
      %v9979 = vlaneseq
      %v9980 = vshrl.u32 %v9979, 7
      %v9981 = vsub.s32 5, %v9980
      %v9982 = vrot.slane %v237, %v9981
      %v9983 = vlaneseq
      %v9984 = vshrl.u32 %v9983, 7
      %v9985 = vsub.s32 5, %v9984
      %v9986 = vrot.slane %v238, %v9985
      %v9987 = vlaneseq
      %v9988 = vshrl.u32 %v9987, 7
      %v9989 = vsub.s32 5, %v9988
      %v9990 = vrot.slane %v239, %v9989
      %v9991 = vlaneseq
      %v9992 = vshrl.u32 %v9991, 7
      %v9993 = vsub.s32 5, %v9992
      %v9994 = vrot.slane %v240, %v9993
      %v9995 = vlaneseq
      %v9996 = vshrl.u32 %v9995, 7
      %v9997 = vsub.s32 5, %v9996
      %v9998 = vrot.slane %v241, %v9997
      %v9999 = vlaneseq
      %v10000 = vshrl.u32 %v9999, 7
      %v10001 = vsub.s32 5, %v10000
      %v10002 = vrot.slane %v242, %v10001
      %v10003 = vlaneseq
      %v10004 = vshrl.u32 %v10003, 7
      %v10005 = vsub.s32 5, %v10004
      %v10006 = vrot.slane %v243, %v10005
      %v10007 = vlaneseq
      %v10008 = vshrl.u32 %v10007, 7
      %v10009 = vsub.s32 5, %v10008
      %v10010 = vrot.slane %v244, %v10009
      %v10011 = vlaneseq
      %v10012 = vshrl.u32 %v10011, 7
      %v10013 = vsub.s32 5, %v10012
      %v10014 = vrot.slane %v245, %v10013
      %v10015 = vlaneseq
      %v10016 = vshrl.u32 %v10015, 7
      %v10017 = vsub.s32 5, %v10016
      %v10018 = vrot.slane %v246, %v10017
      %v10019 = vlaneseq
      %v10020 = vshrl.u32 %v10019, 7
      %v10021 = vsub.s32 5, %v10020
      %v10022 = vrot.slane %v247, %v10021
      %v10023 = vlaneseq
      %v10024 = vshrl.u32 %v10023, 7
      %v10025 = vsub.s32 5, %v10024
      %v10026 = vrot.slane %v248, %v10025
      %v10027 = vlaneseq
      %v10028 = vshrl.u32 %v10027, 7
      %v10029 = vsub.s32 5, %v10028
      %v10030 = vrot.slane %v249, %v10029
      %v10031 = vlaneseq
      %v10032 = vshrl.u32 %v10031, 7
      %v10033 = vsub.s32 5, %v10032
      %v10034 = vrot.slane %v250, %v10033
      %v10035 = vlaneseq
      %v10036 = vshrl.u32 %v10035, 7
      %v10037 = vsub.s32 5, %v10036
      %v10038 = vrot.slane %v251, %v10037
      %v10039 = vlaneseq
      %v10040 = vshrl.u32 %v10039, 7
      %v10041 = vsub.s32 5, %v10040
      %v10042 = vrot.slane %v252, %v10041
      %v10043 = vlaneseq
      %v10044 = vshrl.u32 %v10043, 7
      %v10045 = vsub.s32 5, %v10044
      %v10046 = vrot.slane %v253, %v10045
      %v10047 = vlaneseq
      %v10048 = vshrl.u32 %v10047, 7
      %v10049 = vsub.s32 5, %v10048
      %v10050 = vrot.slane %v254, %v10049
      %v10051 = vlaneseq
      %v10052 = vshrl.u32 %v10051, 7
      %v10053 = vsub.s32 5, %v10052
      %v10054 = vrot.slane %v255, %v10053
      %v10055 = vlaneseq
      %v10056 = vshrl.u32 %v10055, 7
      %v10057 = vsub.s32 5, %v10056
      %v10058 = vrot.slane %v256, %v10057
      %v10059 = vlaneseq
      %v10060 = vshrl.u32 %v10059, 7
      %v10061 = vsub.s32 5, %v10060
      %v10062 = vrot.slane %v257, %v10061
      %v10063 = vlaneseq
      %v10064 = vshrl.u32 %v10063, 7
      %v10065 = vsub.s32 5, %v10064
      %v10066 = vrot.slane %v258, %v10065
      %v10067 = vlaneseq
      %v10068 = vshrl.u32 %v10067, 7
      %v10069 = vsub.s32 5, %v10068
      %v10070 = vrot.slane %v259, %v10069
      %v10071 = vlaneseq
      %v10072 = vshrl.u32 %v10071, 7
      %v10073 = vsub.s32 5, %v10072
      %v10074 = vrot.slane %v260, %v10073
      %v10075 = vlaneseq
      %v10076 = vshrl.u32 %v10075, 7
      %v10077 = vsub.s32 5, %v10076
      %v10078 = vrot.slane %v261, %v10077
      %v10079 = vlaneseq
      %v10080 = vshrl.u32 %v10079, 7
      %v10081 = vsub.s32 5, %v10080
      %v10082 = vrot.slane %v262, %v10081
      %v10083 = vlaneseq
      %v10084 = vshrl.u32 %v10083, 7
      %v10085 = vsub.s32 5, %v10084
      %v10086 = vrot.slane %v263, %v10085
      %v10087 = vlaneseq
      %v10088 = vshrl.u32 %v10087, 7
      %v10089 = vsub.s32 5, %v10088
      %v10090 = vrot.slane %v264, %v10089
      %v10091 = vlaneseq
      %v10092 = vshrl.u32 %v10091, 7
      %v10093 = vsub.s32 5, %v10092
      %v10094 = vrot.slane %v265, %v10093
      %v10095 = vlaneseq
      %v10096 = vshrl.u32 %v10095, 7
      %v10097 = vsub.s32 5, %v10096
      %v10098 = vrot.slane %v266, %v10097
      %v10099 = vlaneseq
      %v10100 = vshrl.u32 %v10099, 7
      %v10101 = vsub.s32 5, %v10100
      %v10102 = vrot.slane %v267, %v10101
      %v10103 = vlaneseq
      %v10104 = vshrl.u32 %v10103, 7
      %v10105 = vsub.s32 5, %v10104
      %v10106 = vrot.slane %v268, %v10105
      %v10107 = vlaneseq
      %v10108 = vshrl.u32 %v10107, 7
      %v10109 = vsub.s32 5, %v10108
      %v10110 = vrot.slane %v269, %v10109
      %v10111 = vlaneseq
      %v10112 = vshrl.u32 %v10111, 7
      %v10113 = vsub.s32 5, %v10112
      %v10114 = vrot.slane %v270, %v10113
      %v10115 = vlaneseq
      %v10116 = vshrl.u32 %v10115, 7
      %v10117 = vsub.s32 5, %v10116
      %v10118 = vrot.slane %v271, %v10117
      %v10119 = vlaneseq
      %v10120 = vshrl.u32 %v10119, 7
      %v10121 = vsub.s32 5, %v10120
      %v10122 = vrot.slane %v272, %v10121
      %v10123 = vlaneseq
      %v10124 = vshrl.u32 %v10123, 7
      %v10125 = vsub.s32 5, %v10124
      %v10126 = vrot.slane %v273, %v10125
      %v10127 = vlaneseq
      %v10128 = vshrl.u32 %v10127, 7
      %v10129 = vsub.s32 5, %v10128
      %v10130 = vrot.slane %v274, %v10129
      %v10131 = vlaneseq
      %v10132 = vshrl.u32 %v10131, 7
      %v10133 = vsub.s32 5, %v10132
      %v10134 = vrot.slane %v275, %v10133
      %v10135 = vlaneseq
      %v10136 = vshrl.u32 %v10135, 7
      %v10137 = vsub.s32 5, %v10136
      %v10138 = vrot.slane %v276, %v10137
      %v10139 = vlaneseq
      %v10140 = vshrl.u32 %v10139, 7
      %v10141 = vsub.s32 5, %v10140
      %v10142 = vrot.slane %v277, %v10141
      %v10143 = vlaneseq
      %v10144 = vshrl.u32 %v10143, 7
      %v10145 = vsub.s32 5, %v10144
      %v10146 = vrot.slane %v278, %v10145
      %v10147 = vlaneseq
      %v10148 = vshrl.u32 %v10147, 7
      %v10149 = vsub.s32 5, %v10148
      %v10150 = vrot.slane %v279, %v10149
      %v10151 = vlaneseq
      %v10152 = vshrl.u32 %v10151, 7
      %v10153 = vsub.s32 5, %v10152
      %v10154 = vrot.slane %v280, %v10153
      %v10155 = vlaneseq
      %v10156 = vshrl.u32 %v10155, 7
      %v10157 = vsub.s32 5, %v10156
      %v10158 = vrot.slane %v281, %v10157
      %v10159 = vlaneseq
      %v10160 = vshrl.u32 %v10159, 7
      %v10161 = vsub.s32 5, %v10160
      %v10162 = vrot.slane %v282, %v10161
      %v10163 = vlaneseq
      %v10164 = vshrl.u32 %v10163, 7
      %v10165 = vsub.s32 5, %v10164
      %v10166 = vrot.slane %v283, %v10165
      %v10167 = vlaneseq
      %v10168 = vshrl.u32 %v10167, 7
      %v10169 = vsub.s32 5, %v10168
      %v10170 = vrot.slane %v284, %v10169
      %v10171 = vlaneseq
      %v10172 = vshrl.u32 %v10171, 7
      %v10173 = vsub.s32 5, %v10172
      %v10174 = vrot.slane %v285, %v10173
      %v10175 = vlaneseq
      %v10176 = vshrl.u32 %v10175, 7
      %v10177 = vsub.s32 5, %v10176
      %v10178 = vrot.slane %v286, %v10177
      %v10179 = vlaneseq
      %v10180 = vshrl.u32 %v10179, 7
      %v10181 = vsub.s32 5, %v10180
      %v10182 = vrot.slane %v287, %v10181
      %v10183 = vlaneseq
      %v10184 = vshrl.u32 %v10183, 7
      %v10185 = vsub.s32 5, %v10184
      %v10186 = vrot.slane %v288, %v10185
      %v10187 = vlaneseq
      %v10188 = vshrl.u32 %v10187, 7
      %v10189 = vsub.s32 5, %v10188
      %v10190 = vrot.slane %v289, %v10189
      %v10191 = vlaneseq
      %v10192 = vshrl.u32 %v10191, 7
      %v10193 = vsub.s32 5, %v10192
      %v10194 = vrot.slane %v290, %v10193
      %v10195 = vlaneseq
      %v10196 = vshrl.u32 %v10195, 7
      %v10197 = vsub.s32 5, %v10196
      %v10198 = vrot.slane %v291, %v10197
      %v10199 = vlaneseq
      %v10200 = vshrl.u32 %v10199, 7
      %v10201 = vsub.s32 5, %v10200
      %v10202 = vrot.slane %v292, %v10201
      %v10203 = vlaneseq
      %v10204 = vshrl.u32 %v10203, 7
      %v10205 = vsub.s32 5, %v10204
      %v10206 = vrot.slane %v293, %v10205
      %v10207 = vlaneseq
      %v10208 = vshrl.u32 %v10207, 7
      %v10209 = vsub.s32 5, %v10208
      %v10210 = vrot.slane %v294, %v10209
      %v10211 = vlaneseq
      %v10212 = vshrl.u32 %v10211, 7
      %v10213 = vsub.s32 5, %v10212
      %v10214 = vrot.slane %v295, %v10213
      %v10215 = vlaneseq
      %v10216 = vshrl.u32 %v10215, 7
      %v10217 = vsub.s32 5, %v10216
      %v10218 = vrot.slane %v296, %v10217
      %v10219 = vlaneseq
      %v10220 = vshrl.u32 %v10219, 7
      %v10221 = vsub.s32 5, %v10220
      %v10222 = vrot.slane %v297, %v10221
      %v10223 = vlaneseq
      %v10224 = vshrl.u32 %v10223, 7
      %v10225 = vsub.s32 5, %v10224
      %v10226 = vrot.slane %v298, %v10225
      %v10227 = vlaneseq
      %v10228 = vshrl.u32 %v10227, 7
      %v10229 = vsub.s32 5, %v10228
      %v10230 = vrot.slane %v299, %v10229
      %v10231 = vlaneseq
      %v10232 = vshrl.u32 %v10231, 7
      %v10233 = vsub.s32 5, %v10232
      %v10234 = vrot.slane %v300, %v10233
      %v10235 = vlaneseq
      %v10236 = vshrl.u32 %v10235, 7
      %v10237 = vsub.s32 5, %v10236
      %v10238 = vrot.slane %v301, %v10237
      %v10239 = vmul.f32 %v9217, %v9730
      %v10240 = vmul.f32 %v9221, %v9734
      %v10241 = vmul.f32 %v9225, %v9738
      %v10242 = vmul.f32 %v9229, %v9742
      %v10243 = vmul.f32 %v9233, %v9746
      %v10244 = vmul.f32 %v9237, %v9750
      %v10245 = vmul.f32 %v9241, %v9754
      %v10246 = vmul.f32 %v9245, %v9758
      %v10247 = vmul.f32 %v9249, %v9762
      %v10248 = vmul.f32 %v9253, %v9766
      %v10249 = vmul.f32 %v9257, %v9770
      %v10250 = vmul.f32 %v9261, %v9774
      %v10251 = vmul.f32 %v9265, %v9778
      %v10252 = vmul.f32 %v9269, %v9782
      %v10253 = vmul.f32 %v9273, %v9786
      %v10254 = vmul.f32 %v9277, %v9790
      %v10255 = vmul.f32 %v9281, %v9794
      %v10256 = vmul.f32 %v9285, %v9798
      %v10257 = vmul.f32 %v9289, %v9802
      %v10258 = vmul.f32 %v9293, %v9806
      %v10259 = vmul.f32 %v9297, %v9810
      %v10260 = vmul.f32 %v9301, %v9814
      %v10261 = vmul.f32 %v9305, %v9818
      %v10262 = vmul.f32 %v9309, %v9822
      %v10263 = vmul.f32 %v9313, %v9826
      %v10264 = vmul.f32 %v9317, %v9830
      %v10265 = vmul.f32 %v9321, %v9834
      %v10266 = vmul.f32 %v9325, %v9838
      %v10267 = vmul.f32 %v9329, %v9842
      %v10268 = vmul.f32 %v9333, %v9846
      %v10269 = vmul.f32 %v9337, %v9850
      %v10270 = vmul.f32 %v9341, %v9854
      %v10271 = vmul.f32 %v9345, %v9858
      %v10272 = vmul.f32 %v9349, %v9862
      %v10273 = vmul.f32 %v9353, %v9866
      %v10274 = vmul.f32 %v9357, %v9870
      %v10275 = vmul.f32 %v9361, %v9874
      %v10276 = vmul.f32 %v9365, %v9878
      %v10277 = vmul.f32 %v9369, %v9882
      %v10278 = vmul.f32 %v9373, %v9886
      %v10279 = vmul.f32 %v9377, %v9890
      %v10280 = vmul.f32 %v9381, %v9894
      %v10281 = vmul.f32 %v9385, %v9898
      %v10282 = vmul.f32 %v9389, %v9902
      %v10283 = vmul.f32 %v9393, %v9906
      %v10284 = vmul.f32 %v9397, %v9910
      %v10285 = vmul.f32 %v9401, %v9914
      %v10286 = vmul.f32 %v9405, %v9918
      %v10287 = vmul.f32 %v9409, %v9922
      %v10288 = vmul.f32 %v9413, %v9926
      %v10289 = vmul.f32 %v9417, %v9930
      %v10290 = vmul.f32 %v9421, %v9934
      %v10291 = vmul.f32 %v9425, %v9938
      %v10292 = vmul.f32 %v9429, %v9942
      %v10293 = vmul.f32 %v9433, %v9946
      %v10294 = vmul.f32 %v9437, %v9950
      %v10295 = vmul.f32 %v9441, %v9954
      %v10296 = vmul.f32 %v9445, %v9958
      %v10297 = vmul.f32 %v9449, %v9962
      %v10298 = vmul.f32 %v9453, %v9966
      %v10299 = vmul.f32 %v9457, %v9970
      %v10300 = vmul.f32 %v9461, %v9974
      %v10301 = vmul.f32 %v9465, %v9978
      %v10302 = vmul.f32 %v9469, %v9982
      %v10303 = vmul.f32 %v9473, %v9986
      %v10304 = vmul.f32 %v9477, %v9990
      %v10305 = vmul.f32 %v9481, %v9994
      %v10306 = vmul.f32 %v9485, %v9998
      %v10307 = vmul.f32 %v9489, %v10002
      %v10308 = vmul.f32 %v9493, %v10006
      %v10309 = vmul.f32 %v9497, %v10010
      %v10310 = vmul.f32 %v9501, %v10014
      %v10311 = vmul.f32 %v9505, %v10018
      %v10312 = vmul.f32 %v9509, %v10022
      %v10313 = vmul.f32 %v9513, %v10026
      %v10314 = vmul.f32 %v9517, %v10030
      %v10315 = vmul.f32 %v9521, %v10034
      %v10316 = vmul.f32 %v9525, %v10038
      %v10317 = vmul.f32 %v9529, %v10042
      %v10318 = vmul.f32 %v9533, %v10046
      %v10319 = vmul.f32 %v9537, %v10050
      %v10320 = vmul.f32 %v9541, %v10054
      %v10321 = vmul.f32 %v9545, %v10058
      %v10322 = vmul.f32 %v9549, %v10062
      %v10323 = vmul.f32 %v9553, %v10066
      %v10324 = vmul.f32 %v9557, %v10070
      %v10325 = vmul.f32 %v9561, %v10074
      %v10326 = vmul.f32 %v9565, %v10078
      %v10327 = vmul.f32 %v9569, %v10082
      %v10328 = vmul.f32 %v9573, %v10086
      %v10329 = vmul.f32 %v9577, %v10090
      %v10330 = vmul.f32 %v9581, %v10094
      %v10331 = vmul.f32 %v9585, %v10098
      %v10332 = vmul.f32 %v9589, %v10102
      %v10333 = vmul.f32 %v9593, %v10106
      %v10334 = vmul.f32 %v9597, %v10110
      %v10335 = vmul.f32 %v9601, %v10114
      %v10336 = vmul.f32 %v9605, %v10118
      %v10337 = vmul.f32 %v9609, %v10122
      %v10338 = vmul.f32 %v9613, %v10126
      %v10339 = vmul.f32 %v9617, %v10130
      %v10340 = vmul.f32 %v9621, %v10134
      %v10341 = vmul.f32 %v9625, %v10138
      %v10342 = vmul.f32 %v9629, %v10142
      %v10343 = vmul.f32 %v9633, %v10146
      %v10344 = vmul.f32 %v9637, %v10150
      %v10345 = vmul.f32 %v9641, %v10154
      %v10346 = vmul.f32 %v9645, %v10158
      %v10347 = vmul.f32 %v9649, %v10162
      %v10348 = vmul.f32 %v9653, %v10166
      %v10349 = vmul.f32 %v9657, %v10170
      %v10350 = vmul.f32 %v9661, %v10174
      %v10351 = vmul.f32 %v9665, %v10178
      %v10352 = vmul.f32 %v9669, %v10182
      %v10353 = vmul.f32 %v9673, %v10186
      %v10354 = vmul.f32 %v9677, %v10190
      %v10355 = vmul.f32 %v9681, %v10194
      %v10356 = vmul.f32 %v9685, %v10198
      %v10357 = vmul.f32 %v9689, %v10202
      %v10358 = vmul.f32 %v9693, %v10206
      %v10359 = vmul.f32 %v9697, %v10210
      %v10360 = vmul.f32 %v9701, %v10214
      %v10361 = vmul.f32 %v9705, %v10218
      %v10362 = vmul.f32 %v9709, %v10222
      %v10363 = vmul.f32 %v9713, %v10226
      %v10364 = vmul.f32 %v9717, %v10230
      %v10365 = vmul.f32 %v9721, %v10234
      %v10366 = vmul.f32 %v9725, %v10238
      %v10367 = vadd.f32 %v9087, %v10239
      %v10368 = vadd.f32 %v9088, %v10240
      %v10369 = vadd.f32 %v9089, %v10241
      %v10370 = vadd.f32 %v9090, %v10242
      %v10371 = vadd.f32 %v9091, %v10243
      %v10372 = vadd.f32 %v9092, %v10244
      %v10373 = vadd.f32 %v9093, %v10245
      %v10374 = vadd.f32 %v9094, %v10246
      %v10375 = vadd.f32 %v9095, %v10247
      %v10376 = vadd.f32 %v9096, %v10248
      %v10377 = vadd.f32 %v9097, %v10249
      %v10378 = vadd.f32 %v9098, %v10250
      %v10379 = vadd.f32 %v9099, %v10251
      %v10380 = vadd.f32 %v9100, %v10252
      %v10381 = vadd.f32 %v9101, %v10253
      %v10382 = vadd.f32 %v9102, %v10254
      %v10383 = vadd.f32 %v9103, %v10255
      %v10384 = vadd.f32 %v9104, %v10256
      %v10385 = vadd.f32 %v9105, %v10257
      %v10386 = vadd.f32 %v9106, %v10258
      %v10387 = vadd.f32 %v9107, %v10259
      %v10388 = vadd.f32 %v9108, %v10260
      %v10389 = vadd.f32 %v9109, %v10261
      %v10390 = vadd.f32 %v9110, %v10262
      %v10391 = vadd.f32 %v9111, %v10263
      %v10392 = vadd.f32 %v9112, %v10264
      %v10393 = vadd.f32 %v9113, %v10265
      %v10394 = vadd.f32 %v9114, %v10266
      %v10395 = vadd.f32 %v9115, %v10267
      %v10396 = vadd.f32 %v9116, %v10268
      %v10397 = vadd.f32 %v9117, %v10269
      %v10398 = vadd.f32 %v9118, %v10270
      %v10399 = vadd.f32 %v9119, %v10271
      %v10400 = vadd.f32 %v9120, %v10272
      %v10401 = vadd.f32 %v9121, %v10273
      %v10402 = vadd.f32 %v9122, %v10274
      %v10403 = vadd.f32 %v9123, %v10275
      %v10404 = vadd.f32 %v9124, %v10276
      %v10405 = vadd.f32 %v9125, %v10277
      %v10406 = vadd.f32 %v9126, %v10278
      %v10407 = vadd.f32 %v9127, %v10279
      %v10408 = vadd.f32 %v9128, %v10280
      %v10409 = vadd.f32 %v9129, %v10281
      %v10410 = vadd.f32 %v9130, %v10282
      %v10411 = vadd.f32 %v9131, %v10283
      %v10412 = vadd.f32 %v9132, %v10284
      %v10413 = vadd.f32 %v9133, %v10285
      %v10414 = vadd.f32 %v9134, %v10286
      %v10415 = vadd.f32 %v9135, %v10287
      %v10416 = vadd.f32 %v9136, %v10288
      %v10417 = vadd.f32 %v9137, %v10289
      %v10418 = vadd.f32 %v9138, %v10290
      %v10419 = vadd.f32 %v9139, %v10291
      %v10420 = vadd.f32 %v9140, %v10292
      %v10421 = vadd.f32 %v9141, %v10293
      %v10422 = vadd.f32 %v9142, %v10294
      %v10423 = vadd.f32 %v9143, %v10295
      %v10424 = vadd.f32 %v9144, %v10296
      %v10425 = vadd.f32 %v9145, %v10297
      %v10426 = vadd.f32 %v9146, %v10298
      %v10427 = vadd.f32 %v9147, %v10299
      %v10428 = vadd.f32 %v9148, %v10300
      %v10429 = vadd.f32 %v9149, %v10301
      %v10430 = vadd.f32 %v9150, %v10302
      %v10431 = vadd.f32 %v9151, %v10303
      %v10432 = vadd.f32 %v9152, %v10304
      %v10433 = vadd.f32 %v9153, %v10305
      %v10434 = vadd.f32 %v9154, %v10306
      %v10435 = vadd.f32 %v9155, %v10307
      %v10436 = vadd.f32 %v9156, %v10308
      %v10437 = vadd.f32 %v9157, %v10309
      %v10438 = vadd.f32 %v9158, %v10310
      %v10439 = vadd.f32 %v9159, %v10311
      %v10440 = vadd.f32 %v9160, %v10312
      %v10441 = vadd.f32 %v9161, %v10313
      %v10442 = vadd.f32 %v9162, %v10314
      %v10443 = vadd.f32 %v9163, %v10315
      %v10444 = vadd.f32 %v9164, %v10316
      %v10445 = vadd.f32 %v9165, %v10317
      %v10446 = vadd.f32 %v9166, %v10318
      %v10447 = vadd.f32 %v9167, %v10319
      %v10448 = vadd.f32 %v9168, %v10320
      %v10449 = vadd.f32 %v9169, %v10321
      %v10450 = vadd.f32 %v9170, %v10322
      %v10451 = vadd.f32 %v9171, %v10323
      %v10452 = vadd.f32 %v9172, %v10324
      %v10453 = vadd.f32 %v9173, %v10325
      %v10454 = vadd.f32 %v9174, %v10326
      %v10455 = vadd.f32 %v9175, %v10327
      %v10456 = vadd.f32 %v9176, %v10328
      %v10457 = vadd.f32 %v9177, %v10329
      %v10458 = vadd.f32 %v9178, %v10330
      %v10459 = vadd.f32 %v9179, %v10331
      %v10460 = vadd.f32 %v9180, %v10332
      %v10461 = vadd.f32 %v9181, %v10333
      %v10462 = vadd.f32 %v9182, %v10334
      %v10463 = vadd.f32 %v9183, %v10335
      %v10464 = vadd.f32 %v9184, %v10336
      %v10465 = vadd.f32 %v9185, %v10337
      %v10466 = vadd.f32 %v9186, %v10338
      %v10467 = vadd.f32 %v9187, %v10339
      %v10468 = vadd.f32 %v9188, %v10340
      %v10469 = vadd.f32 %v9189, %v10341
      %v10470 = vadd.f32 %v9190, %v10342
      %v10471 = vadd.f32 %v9191, %v10343
      %v10472 = vadd.f32 %v9192, %v10344
      %v10473 = vadd.f32 %v9193, %v10345
      %v10474 = vadd.f32 %v9194, %v10346
      %v10475 = vadd.f32 %v9195, %v10347
      %v10476 = vadd.f32 %v9196, %v10348
      %v10477 = vadd.f32 %v9197, %v10349
      %v10478 = vadd.f32 %v9198, %v10350
      %v10479 = vadd.f32 %v9199, %v10351
      %v10480 = vadd.f32 %v9200, %v10352
      %v10481 = vadd.f32 %v9201, %v10353
      %v10482 = vadd.f32 %v9202, %v10354
      %v10483 = vadd.f32 %v9203, %v10355
      %v10484 = vadd.f32 %v9204, %v10356
      %v10485 = vadd.f32 %v9205, %v10357
      %v10486 = vadd.f32 %v9206, %v10358
      %v10487 = vadd.f32 %v9207, %v10359
      %v10488 = vadd.f32 %v9208, %v10360
      %v10489 = vadd.f32 %v9209, %v10361
      %v10490 = vadd.f32 %v9210, %v10362
      %v10491 = vadd.f32 %v9211, %v10363
      %v10492 = vadd.f32 %v9212, %v10364
      %v10493 = vadd.f32 %v9213, %v10365
      %v10494 = vadd.f32 %v9214, %v10366
      %10495 = vset.pattern.permute.xlu0 6
      %10496 = vperm.xlu0 %10495, %v2687
      %v10497 = vpop.permute.xlu0 %10496
      %10499 = vset.pattern.permute.xlu0 6
      %10500 = vperm.xlu0 %10499, %v2688
      %v10501 = vpop.permute.xlu0 %10500
      %10503 = vset.pattern.permute.xlu0 6
      %10504 = vperm.xlu0 %10503, %v2689
      %v10505 = vpop.permute.xlu0 %10504
      %10507 = vset.pattern.permute.xlu0 6
      %10508 = vperm.xlu0 %10507, %v2690
      %v10509 = vpop.permute.xlu0 %10508
      %10511 = vset.pattern.permute.xlu0 6
      %10512 = vperm.xlu0 %10511, %v2691
      %v10513 = vpop.permute.xlu0 %10512
      %10515 = vset.pattern.permute.xlu0 6
      %10516 = vperm.xlu0 %10515, %v2692
      %v10517 = vpop.permute.xlu0 %10516
      %10519 = vset.pattern.permute.xlu0 6
      %10520 = vperm.xlu0 %10519, %v2693
      %v10521 = vpop.permute.xlu0 %10520
      %10523 = vset.pattern.permute.xlu0 6
      %10524 = vperm.xlu0 %10523, %v2694
      %v10525 = vpop.permute.xlu0 %10524
      %10527 = vset.pattern.permute.xlu0 6
      %10528 = vperm.xlu0 %10527, %v2695
      %v10529 = vpop.permute.xlu0 %10528
      %10531 = vset.pattern.permute.xlu0 6
      %10532 = vperm.xlu0 %10531, %v2696
      %v10533 = vpop.permute.xlu0 %10532
      %10535 = vset.pattern.permute.xlu0 6
      %10536 = vperm.xlu0 %10535, %v2697
      %v10537 = vpop.permute.xlu0 %10536
      %10539 = vset.pattern.permute.xlu0 6
      %10540 = vperm.xlu0 %10539, %v2698
      %v10541 = vpop.permute.xlu0 %10540
      %10543 = vset.pattern.permute.xlu0 6
      %10544 = vperm.xlu0 %10543, %v2699
      %v10545 = vpop.permute.xlu0 %10544
      %10547 = vset.pattern.permute.xlu0 6
      %10548 = vperm.xlu0 %10547, %v2700
      %v10549 = vpop.permute.xlu0 %10548
      %10551 = vset.pattern.permute.xlu0 6
      %10552 = vperm.xlu0 %10551, %v2701
      %v10553 = vpop.permute.xlu0 %10552
      %10555 = vset.pattern.permute.xlu0 6
      %10556 = vperm.xlu0 %10555, %v2702
      %v10557 = vpop.permute.xlu0 %10556
      %10559 = vset.pattern.permute.xlu0 6
      %10560 = vperm.xlu0 %10559, %v2703
      %v10561 = vpop.permute.xlu0 %10560
      %10563 = vset.pattern.permute.xlu0 6
      %10564 = vperm.xlu0 %10563, %v2704
      %v10565 = vpop.permute.xlu0 %10564
      %10567 = vset.pattern.permute.xlu0 6
      %10568 = vperm.xlu0 %10567, %v2705
      %v10569 = vpop.permute.xlu0 %10568
      %10571 = vset.pattern.permute.xlu0 6
      %10572 = vperm.xlu0 %10571, %v2706
      %v10573 = vpop.permute.xlu0 %10572
      %10575 = vset.pattern.permute.xlu0 6
      %10576 = vperm.xlu0 %10575, %v2707
      %v10577 = vpop.permute.xlu0 %10576
      %10579 = vset.pattern.permute.xlu0 6
      %10580 = vperm.xlu0 %10579, %v2708
      %v10581 = vpop.permute.xlu0 %10580
      %10583 = vset.pattern.permute.xlu0 6
      %10584 = vperm.xlu0 %10583, %v2709
      %v10585 = vpop.permute.xlu0 %10584
      %10587 = vset.pattern.permute.xlu0 6
      %10588 = vperm.xlu0 %10587, %v2710
      %v10589 = vpop.permute.xlu0 %10588
      %10591 = vset.pattern.permute.xlu0 6
      %10592 = vperm.xlu0 %10591, %v2711
      %v10593 = vpop.permute.xlu0 %10592
      %10595 = vset.pattern.permute.xlu0 6
      %10596 = vperm.xlu0 %10595, %v2712
      %v10597 = vpop.permute.xlu0 %10596
      %10599 = vset.pattern.permute.xlu0 6
      %10600 = vperm.xlu0 %10599, %v2713
      %v10601 = vpop.permute.xlu0 %10600
      %10603 = vset.pattern.permute.xlu0 6
      %10604 = vperm.xlu0 %10603, %v2714
      %v10605 = vpop.permute.xlu0 %10604
      %10607 = vset.pattern.permute.xlu0 6
      %10608 = vperm.xlu0 %10607, %v2715
      %v10609 = vpop.permute.xlu0 %10608
      %10611 = vset.pattern.permute.xlu0 6
      %10612 = vperm.xlu0 %10611, %v2716
      %v10613 = vpop.permute.xlu0 %10612
      %10615 = vset.pattern.permute.xlu0 6
      %10616 = vperm.xlu0 %10615, %v2717
      %v10617 = vpop.permute.xlu0 %10616
      %10619 = vset.pattern.permute.xlu0 6
      %10620 = vperm.xlu0 %10619, %v2718
      %v10621 = vpop.permute.xlu0 %10620
      %10623 = vset.pattern.permute.xlu0 6
      %10624 = vperm.xlu0 %10623, %v2719
      %v10625 = vpop.permute.xlu0 %10624
      %10627 = vset.pattern.permute.xlu0 6
      %10628 = vperm.xlu0 %10627, %v2720
      %v10629 = vpop.permute.xlu0 %10628
      %10631 = vset.pattern.permute.xlu0 6
      %10632 = vperm.xlu0 %10631, %v2721
      %v10633 = vpop.permute.xlu0 %10632
      %10635 = vset.pattern.permute.xlu0 6
      %10636 = vperm.xlu0 %10635, %v2722
      %v10637 = vpop.permute.xlu0 %10636
      %10639 = vset.pattern.permute.xlu0 6
      %10640 = vperm.xlu0 %10639, %v2723
      %v10641 = vpop.permute.xlu0 %10640
      %10643 = vset.pattern.permute.xlu0 6
      %10644 = vperm.xlu0 %10643, %v2724
      %v10645 = vpop.permute.xlu0 %10644
      %10647 = vset.pattern.permute.xlu0 6
      %10648 = vperm.xlu0 %10647, %v2725
      %v10649 = vpop.permute.xlu0 %10648
      %10651 = vset.pattern.permute.xlu0 6
      %10652 = vperm.xlu0 %10651, %v2726
      %v10653 = vpop.permute.xlu0 %10652
      %10655 = vset.pattern.permute.xlu0 6
      %10656 = vperm.xlu0 %10655, %v2727
      %v10657 = vpop.permute.xlu0 %10656
      %10659 = vset.pattern.permute.xlu0 6
      %10660 = vperm.xlu0 %10659, %v2728
      %v10661 = vpop.permute.xlu0 %10660
      %10663 = vset.pattern.permute.xlu0 6
      %10664 = vperm.xlu0 %10663, %v2729
      %v10665 = vpop.permute.xlu0 %10664
      %10667 = vset.pattern.permute.xlu0 6
      %10668 = vperm.xlu0 %10667, %v2730
      %v10669 = vpop.permute.xlu0 %10668
      %10671 = vset.pattern.permute.xlu0 6
      %10672 = vperm.xlu0 %10671, %v2731
      %v10673 = vpop.permute.xlu0 %10672
      %10675 = vset.pattern.permute.xlu0 6
      %10676 = vperm.xlu0 %10675, %v2732
      %v10677 = vpop.permute.xlu0 %10676
      %10679 = vset.pattern.permute.xlu0 6
      %10680 = vperm.xlu0 %10679, %v2733
      %v10681 = vpop.permute.xlu0 %10680
      %10683 = vset.pattern.permute.xlu0 6
      %10684 = vperm.xlu0 %10683, %v2734
      %v10685 = vpop.permute.xlu0 %10684
      %10687 = vset.pattern.permute.xlu0 6
      %10688 = vperm.xlu0 %10687, %v2735
      %v10689 = vpop.permute.xlu0 %10688
      %10691 = vset.pattern.permute.xlu0 6
      %10692 = vperm.xlu0 %10691, %v2736
      %v10693 = vpop.permute.xlu0 %10692
      %10695 = vset.pattern.permute.xlu0 6
      %10696 = vperm.xlu0 %10695, %v2737
      %v10697 = vpop.permute.xlu0 %10696
      %10699 = vset.pattern.permute.xlu0 6
      %10700 = vperm.xlu0 %10699, %v2738
      %v10701 = vpop.permute.xlu0 %10700
      %10703 = vset.pattern.permute.xlu0 6
      %10704 = vperm.xlu0 %10703, %v2739
      %v10705 = vpop.permute.xlu0 %10704
      %10707 = vset.pattern.permute.xlu0 6
      %10708 = vperm.xlu0 %10707, %v2740
      %v10709 = vpop.permute.xlu0 %10708
      %10711 = vset.pattern.permute.xlu0 6
      %10712 = vperm.xlu0 %10711, %v2741
      %v10713 = vpop.permute.xlu0 %10712
      %10715 = vset.pattern.permute.xlu0 6
      %10716 = vperm.xlu0 %10715, %v2742
      %v10717 = vpop.permute.xlu0 %10716
      %10719 = vset.pattern.permute.xlu0 6
      %10720 = vperm.xlu0 %10719, %v2743
      %v10721 = vpop.permute.xlu0 %10720
      %10723 = vset.pattern.permute.xlu0 6
      %10724 = vperm.xlu0 %10723, %v2744
      %v10725 = vpop.permute.xlu0 %10724
      %10727 = vset.pattern.permute.xlu0 6
      %10728 = vperm.xlu0 %10727, %v2745
      %v10729 = vpop.permute.xlu0 %10728
      %10731 = vset.pattern.permute.xlu0 6
      %10732 = vperm.xlu0 %10731, %v2746
      %v10733 = vpop.permute.xlu0 %10732
      %10735 = vset.pattern.permute.xlu0 6
      %10736 = vperm.xlu0 %10735, %v2747
      %v10737 = vpop.permute.xlu0 %10736
      %10739 = vset.pattern.permute.xlu0 6
      %10740 = vperm.xlu0 %10739, %v2748
      %v10741 = vpop.permute.xlu0 %10740
      %10743 = vset.pattern.permute.xlu0 6
      %10744 = vperm.xlu0 %10743, %v2749
      %v10745 = vpop.permute.xlu0 %10744
      %10747 = vset.pattern.permute.xlu0 6
      %10748 = vperm.xlu0 %10747, %v2750
      %v10749 = vpop.permute.xlu0 %10748
      %10751 = vset.pattern.permute.xlu0 6
      %10752 = vperm.xlu0 %10751, %v2751
      %v10753 = vpop.permute.xlu0 %10752
      %10755 = vset.pattern.permute.xlu0 6
      %10756 = vperm.xlu0 %10755, %v2752
      %v10757 = vpop.permute.xlu0 %10756
      %10759 = vset.pattern.permute.xlu0 6
      %10760 = vperm.xlu0 %10759, %v2753
      %v10761 = vpop.permute.xlu0 %10760
      %10763 = vset.pattern.permute.xlu0 6
      %10764 = vperm.xlu0 %10763, %v2754
      %v10765 = vpop.permute.xlu0 %10764
      %10767 = vset.pattern.permute.xlu0 6
      %10768 = vperm.xlu0 %10767, %v2755
      %v10769 = vpop.permute.xlu0 %10768
      %10771 = vset.pattern.permute.xlu0 6
      %10772 = vperm.xlu0 %10771, %v2756
      %v10773 = vpop.permute.xlu0 %10772
      %10775 = vset.pattern.permute.xlu0 6
      %10776 = vperm.xlu0 %10775, %v2757
      %v10777 = vpop.permute.xlu0 %10776
      %10779 = vset.pattern.permute.xlu0 6
      %10780 = vperm.xlu0 %10779, %v2758
      %v10781 = vpop.permute.xlu0 %10780
      %10783 = vset.pattern.permute.xlu0 6
      %10784 = vperm.xlu0 %10783, %v2759
      %v10785 = vpop.permute.xlu0 %10784
      %10787 = vset.pattern.permute.xlu0 6
      %10788 = vperm.xlu0 %10787, %v2760
      %v10789 = vpop.permute.xlu0 %10788
      %10791 = vset.pattern.permute.xlu0 6
      %10792 = vperm.xlu0 %10791, %v2761
      %v10793 = vpop.permute.xlu0 %10792
      %10795 = vset.pattern.permute.xlu0 6
      %10796 = vperm.xlu0 %10795, %v2762
      %v10797 = vpop.permute.xlu0 %10796
      %10799 = vset.pattern.permute.xlu0 6
      %10800 = vperm.xlu0 %10799, %v2763
      %v10801 = vpop.permute.xlu0 %10800
      %10803 = vset.pattern.permute.xlu0 6
      %10804 = vperm.xlu0 %10803, %v2764
      %v10805 = vpop.permute.xlu0 %10804
      %10807 = vset.pattern.permute.xlu0 6
      %10808 = vperm.xlu0 %10807, %v2765
      %v10809 = vpop.permute.xlu0 %10808
      %10811 = vset.pattern.permute.xlu0 6
      %10812 = vperm.xlu0 %10811, %v2766
      %v10813 = vpop.permute.xlu0 %10812
      %10815 = vset.pattern.permute.xlu0 6
      %10816 = vperm.xlu0 %10815, %v2767
      %v10817 = vpop.permute.xlu0 %10816
      %10819 = vset.pattern.permute.xlu0 6
      %10820 = vperm.xlu0 %10819, %v2768
      %v10821 = vpop.permute.xlu0 %10820
      %10823 = vset.pattern.permute.xlu0 6
      %10824 = vperm.xlu0 %10823, %v2769
      %v10825 = vpop.permute.xlu0 %10824
      %10827 = vset.pattern.permute.xlu0 6
      %10828 = vperm.xlu0 %10827, %v2770
      %v10829 = vpop.permute.xlu0 %10828
      %10831 = vset.pattern.permute.xlu0 6
      %10832 = vperm.xlu0 %10831, %v2771
      %v10833 = vpop.permute.xlu0 %10832
      %10835 = vset.pattern.permute.xlu0 6
      %10836 = vperm.xlu0 %10835, %v2772
      %v10837 = vpop.permute.xlu0 %10836
      %10839 = vset.pattern.permute.xlu0 6
      %10840 = vperm.xlu0 %10839, %v2773
      %v10841 = vpop.permute.xlu0 %10840
      %10843 = vset.pattern.permute.xlu0 6
      %10844 = vperm.xlu0 %10843, %v2774
      %v10845 = vpop.permute.xlu0 %10844
      %10847 = vset.pattern.permute.xlu0 6
      %10848 = vperm.xlu0 %10847, %v2775
      %v10849 = vpop.permute.xlu0 %10848
      %10851 = vset.pattern.permute.xlu0 6
      %10852 = vperm.xlu0 %10851, %v2776
      %v10853 = vpop.permute.xlu0 %10852
      %10855 = vset.pattern.permute.xlu0 6
      %10856 = vperm.xlu0 %10855, %v2777
      %v10857 = vpop.permute.xlu0 %10856
      %10859 = vset.pattern.permute.xlu0 6
      %10860 = vperm.xlu0 %10859, %v2778
      %v10861 = vpop.permute.xlu0 %10860
      %10863 = vset.pattern.permute.xlu0 6
      %10864 = vperm.xlu0 %10863, %v2779
      %v10865 = vpop.permute.xlu0 %10864
      %10867 = vset.pattern.permute.xlu0 6
      %10868 = vperm.xlu0 %10867, %v2780
      %v10869 = vpop.permute.xlu0 %10868
      %10871 = vset.pattern.permute.xlu0 6
      %10872 = vperm.xlu0 %10871, %v2781
      %v10873 = vpop.permute.xlu0 %10872
      %10875 = vset.pattern.permute.xlu0 6
      %10876 = vperm.xlu0 %10875, %v2782
      %v10877 = vpop.permute.xlu0 %10876
      %10879 = vset.pattern.permute.xlu0 6
      %10880 = vperm.xlu0 %10879, %v2783
      %v10881 = vpop.permute.xlu0 %10880
      %10883 = vset.pattern.permute.xlu0 6
      %10884 = vperm.xlu0 %10883, %v2784
      %v10885 = vpop.permute.xlu0 %10884
      %10887 = vset.pattern.permute.xlu0 6
      %10888 = vperm.xlu0 %10887, %v2785
      %v10889 = vpop.permute.xlu0 %10888
      %10891 = vset.pattern.permute.xlu0 6
      %10892 = vperm.xlu0 %10891, %v2786
      %v10893 = vpop.permute.xlu0 %10892
      %10895 = vset.pattern.permute.xlu0 6
      %10896 = vperm.xlu0 %10895, %v2787
      %v10897 = vpop.permute.xlu0 %10896
      %10899 = vset.pattern.permute.xlu0 6
      %10900 = vperm.xlu0 %10899, %v2788
      %v10901 = vpop.permute.xlu0 %10900
      %10903 = vset.pattern.permute.xlu0 6
      %10904 = vperm.xlu0 %10903, %v2789
      %v10905 = vpop.permute.xlu0 %10904
      %10907 = vset.pattern.permute.xlu0 6
      %10908 = vperm.xlu0 %10907, %v2790
      %v10909 = vpop.permute.xlu0 %10908
      %10911 = vset.pattern.permute.xlu0 6
      %10912 = vperm.xlu0 %10911, %v2791
      %v10913 = vpop.permute.xlu0 %10912
      %10915 = vset.pattern.permute.xlu0 6
      %10916 = vperm.xlu0 %10915, %v2792
      %v10917 = vpop.permute.xlu0 %10916
      %10919 = vset.pattern.permute.xlu0 6
      %10920 = vperm.xlu0 %10919, %v2793
      %v10921 = vpop.permute.xlu0 %10920
      %10923 = vset.pattern.permute.xlu0 6
      %10924 = vperm.xlu0 %10923, %v2794
      %v10925 = vpop.permute.xlu0 %10924
      %10927 = vset.pattern.permute.xlu0 6
      %10928 = vperm.xlu0 %10927, %v2795
      %v10929 = vpop.permute.xlu0 %10928
      %10931 = vset.pattern.permute.xlu0 6
      %10932 = vperm.xlu0 %10931, %v2796
      %v10933 = vpop.permute.xlu0 %10932
      %10935 = vset.pattern.permute.xlu0 6
      %10936 = vperm.xlu0 %10935, %v2797
      %v10937 = vpop.permute.xlu0 %10936
      %10939 = vset.pattern.permute.xlu0 6
      %10940 = vperm.xlu0 %10939, %v2798
      %v10941 = vpop.permute.xlu0 %10940
      %10943 = vset.pattern.permute.xlu0 6
      %10944 = vperm.xlu0 %10943, %v2799
      %v10945 = vpop.permute.xlu0 %10944
      %10947 = vset.pattern.permute.xlu0 6
      %10948 = vperm.xlu0 %10947, %v2800
      %v10949 = vpop.permute.xlu0 %10948
      %10951 = vset.pattern.permute.xlu0 6
      %10952 = vperm.xlu0 %10951, %v2801
      %v10953 = vpop.permute.xlu0 %10952
      %10955 = vset.pattern.permute.xlu0 6
      %10956 = vperm.xlu0 %10955, %v2802
      %v10957 = vpop.permute.xlu0 %10956
      %10959 = vset.pattern.permute.xlu0 6
      %10960 = vperm.xlu0 %10959, %v2803
      %v10961 = vpop.permute.xlu0 %10960
      %10963 = vset.pattern.permute.xlu0 6
      %10964 = vperm.xlu0 %10963, %v2804
      %v10965 = vpop.permute.xlu0 %10964
      %10967 = vset.pattern.permute.xlu0 6
      %10968 = vperm.xlu0 %10967, %v2805
      %v10969 = vpop.permute.xlu0 %10968
      %10971 = vset.pattern.permute.xlu0 6
      %10972 = vperm.xlu0 %10971, %v2806
      %v10973 = vpop.permute.xlu0 %10972
      %10975 = vset.pattern.permute.xlu0 6
      %10976 = vperm.xlu0 %10975, %v2807
      %v10977 = vpop.permute.xlu0 %10976
      %10979 = vset.pattern.permute.xlu0 6
      %10980 = vperm.xlu0 %10979, %v2808
      %v10981 = vpop.permute.xlu0 %10980
      %10983 = vset.pattern.permute.xlu0 6
      %10984 = vperm.xlu0 %10983, %v2809
      %v10985 = vpop.permute.xlu0 %10984
      %10987 = vset.pattern.permute.xlu0 6
      %10988 = vperm.xlu0 %10987, %v2810
      %v10989 = vpop.permute.xlu0 %10988
      %10991 = vset.pattern.permute.xlu0 6
      %10992 = vperm.xlu0 %10991, %v2811
      %v10993 = vpop.permute.xlu0 %10992
      %10995 = vset.pattern.permute.xlu0 6
      %10996 = vperm.xlu0 %10995, %v2812
      %v10997 = vpop.permute.xlu0 %10996
      %10999 = vset.pattern.permute.xlu0 6
      %11000 = vperm.xlu0 %10999, %v2813
      %v11001 = vpop.permute.xlu0 %11000
      %11003 = vset.pattern.permute.xlu0 6
      %11004 = vperm.xlu0 %11003, %v2814
      %v11005 = vpop.permute.xlu0 %11004
      %v11007 = vlaneseq
      %v11008 = vshrl.u32 %v11007, 7
      %v11009 = vsub.s32 6, %v11008
      %v11010 = vrot.slane %v174, %v11009
      %v11011 = vlaneseq
      %v11012 = vshrl.u32 %v11011, 7
      %v11013 = vsub.s32 6, %v11012
      %v11014 = vrot.slane %v175, %v11013
      %v11015 = vlaneseq
      %v11016 = vshrl.u32 %v11015, 7
      %v11017 = vsub.s32 6, %v11016
      %v11018 = vrot.slane %v176, %v11017
      %v11019 = vlaneseq
      %v11020 = vshrl.u32 %v11019, 7
      %v11021 = vsub.s32 6, %v11020
      %v11022 = vrot.slane %v177, %v11021
      %v11023 = vlaneseq
      %v11024 = vshrl.u32 %v11023, 7
      %v11025 = vsub.s32 6, %v11024
      %v11026 = vrot.slane %v178, %v11025
      %v11027 = vlaneseq
      %v11028 = vshrl.u32 %v11027, 7
      %v11029 = vsub.s32 6, %v11028
      %v11030 = vrot.slane %v179, %v11029
      %v11031 = vlaneseq
      %v11032 = vshrl.u32 %v11031, 7
      %v11033 = vsub.s32 6, %v11032
      %v11034 = vrot.slane %v180, %v11033
      %v11035 = vlaneseq
      %v11036 = vshrl.u32 %v11035, 7
      %v11037 = vsub.s32 6, %v11036
      %v11038 = vrot.slane %v181, %v11037
      %v11039 = vlaneseq
      %v11040 = vshrl.u32 %v11039, 7
      %v11041 = vsub.s32 6, %v11040
      %v11042 = vrot.slane %v182, %v11041
      %v11043 = vlaneseq
      %v11044 = vshrl.u32 %v11043, 7
      %v11045 = vsub.s32 6, %v11044
      %v11046 = vrot.slane %v183, %v11045
      %v11047 = vlaneseq
      %v11048 = vshrl.u32 %v11047, 7
      %v11049 = vsub.s32 6, %v11048
      %v11050 = vrot.slane %v184, %v11049
      %v11051 = vlaneseq
      %v11052 = vshrl.u32 %v11051, 7
      %v11053 = vsub.s32 6, %v11052
      %v11054 = vrot.slane %v185, %v11053
      %v11055 = vlaneseq
      %v11056 = vshrl.u32 %v11055, 7
      %v11057 = vsub.s32 6, %v11056
      %v11058 = vrot.slane %v186, %v11057
      %v11059 = vlaneseq
      %v11060 = vshrl.u32 %v11059, 7
      %v11061 = vsub.s32 6, %v11060
      %v11062 = vrot.slane %v187, %v11061
      %v11063 = vlaneseq
      %v11064 = vshrl.u32 %v11063, 7
      %v11065 = vsub.s32 6, %v11064
      %v11066 = vrot.slane %v188, %v11065
      %v11067 = vlaneseq
      %v11068 = vshrl.u32 %v11067, 7
      %v11069 = vsub.s32 6, %v11068
      %v11070 = vrot.slane %v189, %v11069
      %v11071 = vlaneseq
      %v11072 = vshrl.u32 %v11071, 7
      %v11073 = vsub.s32 6, %v11072
      %v11074 = vrot.slane %v190, %v11073
      %v11075 = vlaneseq
      %v11076 = vshrl.u32 %v11075, 7
      %v11077 = vsub.s32 6, %v11076
      %v11078 = vrot.slane %v191, %v11077
      %v11079 = vlaneseq
      %v11080 = vshrl.u32 %v11079, 7
      %v11081 = vsub.s32 6, %v11080
      %v11082 = vrot.slane %v192, %v11081
      %v11083 = vlaneseq
      %v11084 = vshrl.u32 %v11083, 7
      %v11085 = vsub.s32 6, %v11084
      %v11086 = vrot.slane %v193, %v11085
      %v11087 = vlaneseq
      %v11088 = vshrl.u32 %v11087, 7
      %v11089 = vsub.s32 6, %v11088
      %v11090 = vrot.slane %v194, %v11089
      %v11091 = vlaneseq
      %v11092 = vshrl.u32 %v11091, 7
      %v11093 = vsub.s32 6, %v11092
      %v11094 = vrot.slane %v195, %v11093
      %v11095 = vlaneseq
      %v11096 = vshrl.u32 %v11095, 7
      %v11097 = vsub.s32 6, %v11096
      %v11098 = vrot.slane %v196, %v11097
      %v11099 = vlaneseq
      %v11100 = vshrl.u32 %v11099, 7
      %v11101 = vsub.s32 6, %v11100
      %v11102 = vrot.slane %v197, %v11101
      %v11103 = vlaneseq
      %v11104 = vshrl.u32 %v11103, 7
      %v11105 = vsub.s32 6, %v11104
      %v11106 = vrot.slane %v198, %v11105
      %v11107 = vlaneseq
      %v11108 = vshrl.u32 %v11107, 7
      %v11109 = vsub.s32 6, %v11108
      %v11110 = vrot.slane %v199, %v11109
      %v11111 = vlaneseq
      %v11112 = vshrl.u32 %v11111, 7
      %v11113 = vsub.s32 6, %v11112
      %v11114 = vrot.slane %v200, %v11113
      %v11115 = vlaneseq
      %v11116 = vshrl.u32 %v11115, 7
      %v11117 = vsub.s32 6, %v11116
      %v11118 = vrot.slane %v201, %v11117
      %v11119 = vlaneseq
      %v11120 = vshrl.u32 %v11119, 7
      %v11121 = vsub.s32 6, %v11120
      %v11122 = vrot.slane %v202, %v11121
      %v11123 = vlaneseq
      %v11124 = vshrl.u32 %v11123, 7
      %v11125 = vsub.s32 6, %v11124
      %v11126 = vrot.slane %v203, %v11125
      %v11127 = vlaneseq
      %v11128 = vshrl.u32 %v11127, 7
      %v11129 = vsub.s32 6, %v11128
      %v11130 = vrot.slane %v204, %v11129
      %v11131 = vlaneseq
      %v11132 = vshrl.u32 %v11131, 7
      %v11133 = vsub.s32 6, %v11132
      %v11134 = vrot.slane %v205, %v11133
      %v11135 = vlaneseq
      %v11136 = vshrl.u32 %v11135, 7
      %v11137 = vsub.s32 6, %v11136
      %v11138 = vrot.slane %v206, %v11137
      %v11139 = vlaneseq
      %v11140 = vshrl.u32 %v11139, 7
      %v11141 = vsub.s32 6, %v11140
      %v11142 = vrot.slane %v207, %v11141
      %v11143 = vlaneseq
      %v11144 = vshrl.u32 %v11143, 7
      %v11145 = vsub.s32 6, %v11144
      %v11146 = vrot.slane %v208, %v11145
      %v11147 = vlaneseq
      %v11148 = vshrl.u32 %v11147, 7
      %v11149 = vsub.s32 6, %v11148
      %v11150 = vrot.slane %v209, %v11149
      %v11151 = vlaneseq
      %v11152 = vshrl.u32 %v11151, 7
      %v11153 = vsub.s32 6, %v11152
      %v11154 = vrot.slane %v210, %v11153
      %v11155 = vlaneseq
      %v11156 = vshrl.u32 %v11155, 7
      %v11157 = vsub.s32 6, %v11156
      %v11158 = vrot.slane %v211, %v11157
      %v11159 = vlaneseq
      %v11160 = vshrl.u32 %v11159, 7
      %v11161 = vsub.s32 6, %v11160
      %v11162 = vrot.slane %v212, %v11161
      %v11163 = vlaneseq
      %v11164 = vshrl.u32 %v11163, 7
      %v11165 = vsub.s32 6, %v11164
      %v11166 = vrot.slane %v213, %v11165
      %v11167 = vlaneseq
      %v11168 = vshrl.u32 %v11167, 7
      %v11169 = vsub.s32 6, %v11168
      %v11170 = vrot.slane %v214, %v11169
      %v11171 = vlaneseq
      %v11172 = vshrl.u32 %v11171, 7
      %v11173 = vsub.s32 6, %v11172
      %v11174 = vrot.slane %v215, %v11173
      %v11175 = vlaneseq
      %v11176 = vshrl.u32 %v11175, 7
      %v11177 = vsub.s32 6, %v11176
      %v11178 = vrot.slane %v216, %v11177
      %v11179 = vlaneseq
      %v11180 = vshrl.u32 %v11179, 7
      %v11181 = vsub.s32 6, %v11180
      %v11182 = vrot.slane %v217, %v11181
      %v11183 = vlaneseq
      %v11184 = vshrl.u32 %v11183, 7
      %v11185 = vsub.s32 6, %v11184
      %v11186 = vrot.slane %v218, %v11185
      %v11187 = vlaneseq
      %v11188 = vshrl.u32 %v11187, 7
      %v11189 = vsub.s32 6, %v11188
      %v11190 = vrot.slane %v219, %v11189
      %v11191 = vlaneseq
      %v11192 = vshrl.u32 %v11191, 7
      %v11193 = vsub.s32 6, %v11192
      %v11194 = vrot.slane %v220, %v11193
      %v11195 = vlaneseq
      %v11196 = vshrl.u32 %v11195, 7
      %v11197 = vsub.s32 6, %v11196
      %v11198 = vrot.slane %v221, %v11197
      %v11199 = vlaneseq
      %v11200 = vshrl.u32 %v11199, 7
      %v11201 = vsub.s32 6, %v11200
      %v11202 = vrot.slane %v222, %v11201
      %v11203 = vlaneseq
      %v11204 = vshrl.u32 %v11203, 7
      %v11205 = vsub.s32 6, %v11204
      %v11206 = vrot.slane %v223, %v11205
      %v11207 = vlaneseq
      %v11208 = vshrl.u32 %v11207, 7
      %v11209 = vsub.s32 6, %v11208
      %v11210 = vrot.slane %v224, %v11209
      %v11211 = vlaneseq
      %v11212 = vshrl.u32 %v11211, 7
      %v11213 = vsub.s32 6, %v11212
      %v11214 = vrot.slane %v225, %v11213
      %v11215 = vlaneseq
      %v11216 = vshrl.u32 %v11215, 7
      %v11217 = vsub.s32 6, %v11216
      %v11218 = vrot.slane %v226, %v11217
      %v11219 = vlaneseq
      %v11220 = vshrl.u32 %v11219, 7
      %v11221 = vsub.s32 6, %v11220
      %v11222 = vrot.slane %v227, %v11221
      %v11223 = vlaneseq
      %v11224 = vshrl.u32 %v11223, 7
      %v11225 = vsub.s32 6, %v11224
      %v11226 = vrot.slane %v228, %v11225
      %v11227 = vlaneseq
      %v11228 = vshrl.u32 %v11227, 7
      %v11229 = vsub.s32 6, %v11228
      %v11230 = vrot.slane %v229, %v11229
      %v11231 = vlaneseq
      %v11232 = vshrl.u32 %v11231, 7
      %v11233 = vsub.s32 6, %v11232
      %v11234 = vrot.slane %v230, %v11233
      %v11235 = vlaneseq
      %v11236 = vshrl.u32 %v11235, 7
      %v11237 = vsub.s32 6, %v11236
      %v11238 = vrot.slane %v231, %v11237
      %v11239 = vlaneseq
      %v11240 = vshrl.u32 %v11239, 7
      %v11241 = vsub.s32 6, %v11240
      %v11242 = vrot.slane %v232, %v11241
      %v11243 = vlaneseq
      %v11244 = vshrl.u32 %v11243, 7
      %v11245 = vsub.s32 6, %v11244
      %v11246 = vrot.slane %v233, %v11245
      %v11247 = vlaneseq
      %v11248 = vshrl.u32 %v11247, 7
      %v11249 = vsub.s32 6, %v11248
      %v11250 = vrot.slane %v234, %v11249
      %v11251 = vlaneseq
      %v11252 = vshrl.u32 %v11251, 7
      %v11253 = vsub.s32 6, %v11252
      %v11254 = vrot.slane %v235, %v11253
      %v11255 = vlaneseq
      %v11256 = vshrl.u32 %v11255, 7
      %v11257 = vsub.s32 6, %v11256
      %v11258 = vrot.slane %v236, %v11257
      %v11259 = vlaneseq
      %v11260 = vshrl.u32 %v11259, 7
      %v11261 = vsub.s32 6, %v11260
      %v11262 = vrot.slane %v237, %v11261
      %v11263 = vlaneseq
      %v11264 = vshrl.u32 %v11263, 7
      %v11265 = vsub.s32 6, %v11264
      %v11266 = vrot.slane %v238, %v11265
      %v11267 = vlaneseq
      %v11268 = vshrl.u32 %v11267, 7
      %v11269 = vsub.s32 6, %v11268
      %v11270 = vrot.slane %v239, %v11269
      %v11271 = vlaneseq
      %v11272 = vshrl.u32 %v11271, 7
      %v11273 = vsub.s32 6, %v11272
      %v11274 = vrot.slane %v240, %v11273
      %v11275 = vlaneseq
      %v11276 = vshrl.u32 %v11275, 7
      %v11277 = vsub.s32 6, %v11276
      %v11278 = vrot.slane %v241, %v11277
      %v11279 = vlaneseq
      %v11280 = vshrl.u32 %v11279, 7
      %v11281 = vsub.s32 6, %v11280
      %v11282 = vrot.slane %v242, %v11281
      %v11283 = vlaneseq
      %v11284 = vshrl.u32 %v11283, 7
      %v11285 = vsub.s32 6, %v11284
      %v11286 = vrot.slane %v243, %v11285
      %v11287 = vlaneseq
      %v11288 = vshrl.u32 %v11287, 7
      %v11289 = vsub.s32 6, %v11288
      %v11290 = vrot.slane %v244, %v11289
      %v11291 = vlaneseq
      %v11292 = vshrl.u32 %v11291, 7
      %v11293 = vsub.s32 6, %v11292
      %v11294 = vrot.slane %v245, %v11293
      %v11295 = vlaneseq
      %v11296 = vshrl.u32 %v11295, 7
      %v11297 = vsub.s32 6, %v11296
      %v11298 = vrot.slane %v246, %v11297
      %v11299 = vlaneseq
      %v11300 = vshrl.u32 %v11299, 7
      %v11301 = vsub.s32 6, %v11300
      %v11302 = vrot.slane %v247, %v11301
      %v11303 = vlaneseq
      %v11304 = vshrl.u32 %v11303, 7
      %v11305 = vsub.s32 6, %v11304
      %v11306 = vrot.slane %v248, %v11305
      %v11307 = vlaneseq
      %v11308 = vshrl.u32 %v11307, 7
      %v11309 = vsub.s32 6, %v11308
      %v11310 = vrot.slane %v249, %v11309
      %v11311 = vlaneseq
      %v11312 = vshrl.u32 %v11311, 7
      %v11313 = vsub.s32 6, %v11312
      %v11314 = vrot.slane %v250, %v11313
      %v11315 = vlaneseq
      %v11316 = vshrl.u32 %v11315, 7
      %v11317 = vsub.s32 6, %v11316
      %v11318 = vrot.slane %v251, %v11317
      %v11319 = vlaneseq
      %v11320 = vshrl.u32 %v11319, 7
      %v11321 = vsub.s32 6, %v11320
      %v11322 = vrot.slane %v252, %v11321
      %v11323 = vlaneseq
      %v11324 = vshrl.u32 %v11323, 7
      %v11325 = vsub.s32 6, %v11324
      %v11326 = vrot.slane %v253, %v11325
      %v11327 = vlaneseq
      %v11328 = vshrl.u32 %v11327, 7
      %v11329 = vsub.s32 6, %v11328
      %v11330 = vrot.slane %v254, %v11329
      %v11331 = vlaneseq
      %v11332 = vshrl.u32 %v11331, 7
      %v11333 = vsub.s32 6, %v11332
      %v11334 = vrot.slane %v255, %v11333
      %v11335 = vlaneseq
      %v11336 = vshrl.u32 %v11335, 7
      %v11337 = vsub.s32 6, %v11336
      %v11338 = vrot.slane %v256, %v11337
      %v11339 = vlaneseq
      %v11340 = vshrl.u32 %v11339, 7
      %v11341 = vsub.s32 6, %v11340
      %v11342 = vrot.slane %v257, %v11341
      %v11343 = vlaneseq
      %v11344 = vshrl.u32 %v11343, 7
      %v11345 = vsub.s32 6, %v11344
      %v11346 = vrot.slane %v258, %v11345
      %v11347 = vlaneseq
      %v11348 = vshrl.u32 %v11347, 7
      %v11349 = vsub.s32 6, %v11348
      %v11350 = vrot.slane %v259, %v11349
      %v11351 = vlaneseq
      %v11352 = vshrl.u32 %v11351, 7
      %v11353 = vsub.s32 6, %v11352
      %v11354 = vrot.slane %v260, %v11353
      %v11355 = vlaneseq
      %v11356 = vshrl.u32 %v11355, 7
      %v11357 = vsub.s32 6, %v11356
      %v11358 = vrot.slane %v261, %v11357
      %v11359 = vlaneseq
      %v11360 = vshrl.u32 %v11359, 7
      %v11361 = vsub.s32 6, %v11360
      %v11362 = vrot.slane %v262, %v11361
      %v11363 = vlaneseq
      %v11364 = vshrl.u32 %v11363, 7
      %v11365 = vsub.s32 6, %v11364
      %v11366 = vrot.slane %v263, %v11365
      %v11367 = vlaneseq
      %v11368 = vshrl.u32 %v11367, 7
      %v11369 = vsub.s32 6, %v11368
      %v11370 = vrot.slane %v264, %v11369
      %v11371 = vlaneseq
      %v11372 = vshrl.u32 %v11371, 7
      %v11373 = vsub.s32 6, %v11372
      %v11374 = vrot.slane %v265, %v11373
      %v11375 = vlaneseq
      %v11376 = vshrl.u32 %v11375, 7
      %v11377 = vsub.s32 6, %v11376
      %v11378 = vrot.slane %v266, %v11377
      %v11379 = vlaneseq
      %v11380 = vshrl.u32 %v11379, 7
      %v11381 = vsub.s32 6, %v11380
      %v11382 = vrot.slane %v267, %v11381
      %v11383 = vlaneseq
      %v11384 = vshrl.u32 %v11383, 7
      %v11385 = vsub.s32 6, %v11384
      %v11386 = vrot.slane %v268, %v11385
      %v11387 = vlaneseq
      %v11388 = vshrl.u32 %v11387, 7
      %v11389 = vsub.s32 6, %v11388
      %v11390 = vrot.slane %v269, %v11389
      %v11391 = vlaneseq
      %v11392 = vshrl.u32 %v11391, 7
      %v11393 = vsub.s32 6, %v11392
      %v11394 = vrot.slane %v270, %v11393
      %v11395 = vlaneseq
      %v11396 = vshrl.u32 %v11395, 7
      %v11397 = vsub.s32 6, %v11396
      %v11398 = vrot.slane %v271, %v11397
      %v11399 = vlaneseq
      %v11400 = vshrl.u32 %v11399, 7
      %v11401 = vsub.s32 6, %v11400
      %v11402 = vrot.slane %v272, %v11401
      %v11403 = vlaneseq
      %v11404 = vshrl.u32 %v11403, 7
      %v11405 = vsub.s32 6, %v11404
      %v11406 = vrot.slane %v273, %v11405
      %v11407 = vlaneseq
      %v11408 = vshrl.u32 %v11407, 7
      %v11409 = vsub.s32 6, %v11408
      %v11410 = vrot.slane %v274, %v11409
      %v11411 = vlaneseq
      %v11412 = vshrl.u32 %v11411, 7
      %v11413 = vsub.s32 6, %v11412
      %v11414 = vrot.slane %v275, %v11413
      %v11415 = vlaneseq
      %v11416 = vshrl.u32 %v11415, 7
      %v11417 = vsub.s32 6, %v11416
      %v11418 = vrot.slane %v276, %v11417
      %v11419 = vlaneseq
      %v11420 = vshrl.u32 %v11419, 7
      %v11421 = vsub.s32 6, %v11420
      %v11422 = vrot.slane %v277, %v11421
      %v11423 = vlaneseq
      %v11424 = vshrl.u32 %v11423, 7
      %v11425 = vsub.s32 6, %v11424
      %v11426 = vrot.slane %v278, %v11425
      %v11427 = vlaneseq
      %v11428 = vshrl.u32 %v11427, 7
      %v11429 = vsub.s32 6, %v11428
      %v11430 = vrot.slane %v279, %v11429
      %v11431 = vlaneseq
      %v11432 = vshrl.u32 %v11431, 7
      %v11433 = vsub.s32 6, %v11432
      %v11434 = vrot.slane %v280, %v11433
      %v11435 = vlaneseq
      %v11436 = vshrl.u32 %v11435, 7
      %v11437 = vsub.s32 6, %v11436
      %v11438 = vrot.slane %v281, %v11437
      %v11439 = vlaneseq
      %v11440 = vshrl.u32 %v11439, 7
      %v11441 = vsub.s32 6, %v11440
      %v11442 = vrot.slane %v282, %v11441
      %v11443 = vlaneseq
      %v11444 = vshrl.u32 %v11443, 7
      %v11445 = vsub.s32 6, %v11444
      %v11446 = vrot.slane %v283, %v11445
      %v11447 = vlaneseq
      %v11448 = vshrl.u32 %v11447, 7
      %v11449 = vsub.s32 6, %v11448
      %v11450 = vrot.slane %v284, %v11449
      %v11451 = vlaneseq
      %v11452 = vshrl.u32 %v11451, 7
      %v11453 = vsub.s32 6, %v11452
      %v11454 = vrot.slane %v285, %v11453
      %v11455 = vlaneseq
      %v11456 = vshrl.u32 %v11455, 7
      %v11457 = vsub.s32 6, %v11456
      %v11458 = vrot.slane %v286, %v11457
      %v11459 = vlaneseq
      %v11460 = vshrl.u32 %v11459, 7
      %v11461 = vsub.s32 6, %v11460
      %v11462 = vrot.slane %v287, %v11461
      %v11463 = vlaneseq
      %v11464 = vshrl.u32 %v11463, 7
      %v11465 = vsub.s32 6, %v11464
      %v11466 = vrot.slane %v288, %v11465
      %v11467 = vlaneseq
      %v11468 = vshrl.u32 %v11467, 7
      %v11469 = vsub.s32 6, %v11468
      %v11470 = vrot.slane %v289, %v11469
      %v11471 = vlaneseq
      %v11472 = vshrl.u32 %v11471, 7
      %v11473 = vsub.s32 6, %v11472
      %v11474 = vrot.slane %v290, %v11473
      %v11475 = vlaneseq
      %v11476 = vshrl.u32 %v11475, 7
      %v11477 = vsub.s32 6, %v11476
      %v11478 = vrot.slane %v291, %v11477
      %v11479 = vlaneseq
      %v11480 = vshrl.u32 %v11479, 7
      %v11481 = vsub.s32 6, %v11480
      %v11482 = vrot.slane %v292, %v11481
      %v11483 = vlaneseq
      %v11484 = vshrl.u32 %v11483, 7
      %v11485 = vsub.s32 6, %v11484
      %v11486 = vrot.slane %v293, %v11485
      %v11487 = vlaneseq
      %v11488 = vshrl.u32 %v11487, 7
      %v11489 = vsub.s32 6, %v11488
      %v11490 = vrot.slane %v294, %v11489
      %v11491 = vlaneseq
      %v11492 = vshrl.u32 %v11491, 7
      %v11493 = vsub.s32 6, %v11492
      %v11494 = vrot.slane %v295, %v11493
      %v11495 = vlaneseq
      %v11496 = vshrl.u32 %v11495, 7
      %v11497 = vsub.s32 6, %v11496
      %v11498 = vrot.slane %v296, %v11497
      %v11499 = vlaneseq
      %v11500 = vshrl.u32 %v11499, 7
      %v11501 = vsub.s32 6, %v11500
      %v11502 = vrot.slane %v297, %v11501
      %v11503 = vlaneseq
      %v11504 = vshrl.u32 %v11503, 7
      %v11505 = vsub.s32 6, %v11504
      %v11506 = vrot.slane %v298, %v11505
      %v11507 = vlaneseq
      %v11508 = vshrl.u32 %v11507, 7
      %v11509 = vsub.s32 6, %v11508
      %v11510 = vrot.slane %v299, %v11509
      %v11511 = vlaneseq
      %v11512 = vshrl.u32 %v11511, 7
      %v11513 = vsub.s32 6, %v11512
      %v11514 = vrot.slane %v300, %v11513
      %v11515 = vlaneseq
      %v11516 = vshrl.u32 %v11515, 7
      %v11517 = vsub.s32 6, %v11516
      %v11518 = vrot.slane %v301, %v11517
      %v11519 = vmul.f32 %v10497, %v11010
      %v11520 = vmul.f32 %v10501, %v11014
      %v11521 = vmul.f32 %v10505, %v11018
      %v11522 = vmul.f32 %v10509, %v11022
      %v11523 = vmul.f32 %v10513, %v11026
      %v11524 = vmul.f32 %v10517, %v11030
      %v11525 = vmul.f32 %v10521, %v11034
      %v11526 = vmul.f32 %v10525, %v11038
      %v11527 = vmul.f32 %v10529, %v11042
      %v11528 = vmul.f32 %v10533, %v11046
      %v11529 = vmul.f32 %v10537, %v11050
      %v11530 = vmul.f32 %v10541, %v11054
      %v11531 = vmul.f32 %v10545, %v11058
      %v11532 = vmul.f32 %v10549, %v11062
      %v11533 = vmul.f32 %v10553, %v11066
      %v11534 = vmul.f32 %v10557, %v11070
      %v11535 = vmul.f32 %v10561, %v11074
      %v11536 = vmul.f32 %v10565, %v11078
      %v11537 = vmul.f32 %v10569, %v11082
      %v11538 = vmul.f32 %v10573, %v11086
      %v11539 = vmul.f32 %v10577, %v11090
      %v11540 = vmul.f32 %v10581, %v11094
      %v11541 = vmul.f32 %v10585, %v11098
      %v11542 = vmul.f32 %v10589, %v11102
      %v11543 = vmul.f32 %v10593, %v11106
      %v11544 = vmul.f32 %v10597, %v11110
      %v11545 = vmul.f32 %v10601, %v11114
      %v11546 = vmul.f32 %v10605, %v11118
      %v11547 = vmul.f32 %v10609, %v11122
      %v11548 = vmul.f32 %v10613, %v11126
      %v11549 = vmul.f32 %v10617, %v11130
      %v11550 = vmul.f32 %v10621, %v11134
      %v11551 = vmul.f32 %v10625, %v11138
      %v11552 = vmul.f32 %v10629, %v11142
      %v11553 = vmul.f32 %v10633, %v11146
      %v11554 = vmul.f32 %v10637, %v11150
      %v11555 = vmul.f32 %v10641, %v11154
      %v11556 = vmul.f32 %v10645, %v11158
      %v11557 = vmul.f32 %v10649, %v11162
      %v11558 = vmul.f32 %v10653, %v11166
      %v11559 = vmul.f32 %v10657, %v11170
      %v11560 = vmul.f32 %v10661, %v11174
      %v11561 = vmul.f32 %v10665, %v11178
      %v11562 = vmul.f32 %v10669, %v11182
      %v11563 = vmul.f32 %v10673, %v11186
      %v11564 = vmul.f32 %v10677, %v11190
      %v11565 = vmul.f32 %v10681, %v11194
      %v11566 = vmul.f32 %v10685, %v11198
      %v11567 = vmul.f32 %v10689, %v11202
      %v11568 = vmul.f32 %v10693, %v11206
      %v11569 = vmul.f32 %v10697, %v11210
      %v11570 = vmul.f32 %v10701, %v11214
      %v11571 = vmul.f32 %v10705, %v11218
      %v11572 = vmul.f32 %v10709, %v11222
      %v11573 = vmul.f32 %v10713, %v11226
      %v11574 = vmul.f32 %v10717, %v11230
      %v11575 = vmul.f32 %v10721, %v11234
      %v11576 = vmul.f32 %v10725, %v11238
      %v11577 = vmul.f32 %v10729, %v11242
      %v11578 = vmul.f32 %v10733, %v11246
      %v11579 = vmul.f32 %v10737, %v11250
      %v11580 = vmul.f32 %v10741, %v11254
      %v11581 = vmul.f32 %v10745, %v11258
      %v11582 = vmul.f32 %v10749, %v11262
      %v11583 = vmul.f32 %v10753, %v11266
      %v11584 = vmul.f32 %v10757, %v11270
      %v11585 = vmul.f32 %v10761, %v11274
      %v11586 = vmul.f32 %v10765, %v11278
      %v11587 = vmul.f32 %v10769, %v11282
      %v11588 = vmul.f32 %v10773, %v11286
      %v11589 = vmul.f32 %v10777, %v11290
      %v11590 = vmul.f32 %v10781, %v11294
      %v11591 = vmul.f32 %v10785, %v11298
      %v11592 = vmul.f32 %v10789, %v11302
      %v11593 = vmul.f32 %v10793, %v11306
      %v11594 = vmul.f32 %v10797, %v11310
      %v11595 = vmul.f32 %v10801, %v11314
      %v11596 = vmul.f32 %v10805, %v11318
      %v11597 = vmul.f32 %v10809, %v11322
      %v11598 = vmul.f32 %v10813, %v11326
      %v11599 = vmul.f32 %v10817, %v11330
      %v11600 = vmul.f32 %v10821, %v11334
      %v11601 = vmul.f32 %v10825, %v11338
      %v11602 = vmul.f32 %v10829, %v11342
      %v11603 = vmul.f32 %v10833, %v11346
      %v11604 = vmul.f32 %v10837, %v11350
      %v11605 = vmul.f32 %v10841, %v11354
      %v11606 = vmul.f32 %v10845, %v11358
      %v11607 = vmul.f32 %v10849, %v11362
      %v11608 = vmul.f32 %v10853, %v11366
      %v11609 = vmul.f32 %v10857, %v11370
      %v11610 = vmul.f32 %v10861, %v11374
      %v11611 = vmul.f32 %v10865, %v11378
      %v11612 = vmul.f32 %v10869, %v11382
      %v11613 = vmul.f32 %v10873, %v11386
      %v11614 = vmul.f32 %v10877, %v11390
      %v11615 = vmul.f32 %v10881, %v11394
      %v11616 = vmul.f32 %v10885, %v11398
      %v11617 = vmul.f32 %v10889, %v11402
      %v11618 = vmul.f32 %v10893, %v11406
      %v11619 = vmul.f32 %v10897, %v11410
      %v11620 = vmul.f32 %v10901, %v11414
      %v11621 = vmul.f32 %v10905, %v11418
      %v11622 = vmul.f32 %v10909, %v11422
      %v11623 = vmul.f32 %v10913, %v11426
      %v11624 = vmul.f32 %v10917, %v11430
      %v11625 = vmul.f32 %v10921, %v11434
      %v11626 = vmul.f32 %v10925, %v11438
      %v11627 = vmul.f32 %v10929, %v11442
      %v11628 = vmul.f32 %v10933, %v11446
      %v11629 = vmul.f32 %v10937, %v11450
      %v11630 = vmul.f32 %v10941, %v11454
      %v11631 = vmul.f32 %v10945, %v11458
      %v11632 = vmul.f32 %v10949, %v11462
      %v11633 = vmul.f32 %v10953, %v11466
      %v11634 = vmul.f32 %v10957, %v11470
      %v11635 = vmul.f32 %v10961, %v11474
      %v11636 = vmul.f32 %v10965, %v11478
      %v11637 = vmul.f32 %v10969, %v11482
      %v11638 = vmul.f32 %v10973, %v11486
      %v11639 = vmul.f32 %v10977, %v11490
      %v11640 = vmul.f32 %v10981, %v11494
      %v11641 = vmul.f32 %v10985, %v11498
      %v11642 = vmul.f32 %v10989, %v11502
      %v11643 = vmul.f32 %v10993, %v11506
      %v11644 = vmul.f32 %v10997, %v11510
      %v11645 = vmul.f32 %v11001, %v11514
      %v11646 = vmul.f32 %v11005, %v11518
      %v11647 = vadd.f32 %v10367, %v11519
      %v11648 = vadd.f32 %v10368, %v11520
      %v11649 = vadd.f32 %v10369, %v11521
      %v11650 = vadd.f32 %v10370, %v11522
      %v11651 = vadd.f32 %v10371, %v11523
      %v11652 = vadd.f32 %v10372, %v11524
      %v11653 = vadd.f32 %v10373, %v11525
      %v11654 = vadd.f32 %v10374, %v11526
      %v11655 = vadd.f32 %v10375, %v11527
      %v11656 = vadd.f32 %v10376, %v11528
      %v11657 = vadd.f32 %v10377, %v11529
      %v11658 = vadd.f32 %v10378, %v11530
      %v11659 = vadd.f32 %v10379, %v11531
      %v11660 = vadd.f32 %v10380, %v11532
      %v11661 = vadd.f32 %v10381, %v11533
      %v11662 = vadd.f32 %v10382, %v11534
      %v11663 = vadd.f32 %v10383, %v11535
      %v11664 = vadd.f32 %v10384, %v11536
      %v11665 = vadd.f32 %v10385, %v11537
      %v11666 = vadd.f32 %v10386, %v11538
      %v11667 = vadd.f32 %v10387, %v11539
      %v11668 = vadd.f32 %v10388, %v11540
      %v11669 = vadd.f32 %v10389, %v11541
      %v11670 = vadd.f32 %v10390, %v11542
      %v11671 = vadd.f32 %v10391, %v11543
      %v11672 = vadd.f32 %v10392, %v11544
      %v11673 = vadd.f32 %v10393, %v11545
      %v11674 = vadd.f32 %v10394, %v11546
      %v11675 = vadd.f32 %v10395, %v11547
      %v11676 = vadd.f32 %v10396, %v11548
      %v11677 = vadd.f32 %v10397, %v11549
      %v11678 = vadd.f32 %v10398, %v11550
      %v11679 = vadd.f32 %v10399, %v11551
      %v11680 = vadd.f32 %v10400, %v11552
      %v11681 = vadd.f32 %v10401, %v11553
      %v11682 = vadd.f32 %v10402, %v11554
      %v11683 = vadd.f32 %v10403, %v11555
      %v11684 = vadd.f32 %v10404, %v11556
      %v11685 = vadd.f32 %v10405, %v11557
      %v11686 = vadd.f32 %v10406, %v11558
      %v11687 = vadd.f32 %v10407, %v11559
      %v11688 = vadd.f32 %v10408, %v11560
      %v11689 = vadd.f32 %v10409, %v11561
      %v11690 = vadd.f32 %v10410, %v11562
      %v11691 = vadd.f32 %v10411, %v11563
      %v11692 = vadd.f32 %v10412, %v11564
      %v11693 = vadd.f32 %v10413, %v11565
      %v11694 = vadd.f32 %v10414, %v11566
      %v11695 = vadd.f32 %v10415, %v11567
      %v11696 = vadd.f32 %v10416, %v11568
      %v11697 = vadd.f32 %v10417, %v11569
      %v11698 = vadd.f32 %v10418, %v11570
      %v11699 = vadd.f32 %v10419, %v11571
      %v11700 = vadd.f32 %v10420, %v11572
      %v11701 = vadd.f32 %v10421, %v11573
      %v11702 = vadd.f32 %v10422, %v11574
      %v11703 = vadd.f32 %v10423, %v11575
      %v11704 = vadd.f32 %v10424, %v11576
      %v11705 = vadd.f32 %v10425, %v11577
      %v11706 = vadd.f32 %v10426, %v11578
      %v11707 = vadd.f32 %v10427, %v11579
      %v11708 = vadd.f32 %v10428, %v11580
      %v11709 = vadd.f32 %v10429, %v11581
      %v11710 = vadd.f32 %v10430, %v11582
      %v11711 = vadd.f32 %v10431, %v11583
      %v11712 = vadd.f32 %v10432, %v11584
      %v11713 = vadd.f32 %v10433, %v11585
      %v11714 = vadd.f32 %v10434, %v11586
      %v11715 = vadd.f32 %v10435, %v11587
      %v11716 = vadd.f32 %v10436, %v11588
      %v11717 = vadd.f32 %v10437, %v11589
      %v11718 = vadd.f32 %v10438, %v11590
      %v11719 = vadd.f32 %v10439, %v11591
      %v11720 = vadd.f32 %v10440, %v11592
      %v11721 = vadd.f32 %v10441, %v11593
      %v11722 = vadd.f32 %v10442, %v11594
      %v11723 = vadd.f32 %v10443, %v11595
      %v11724 = vadd.f32 %v10444, %v11596
      %v11725 = vadd.f32 %v10445, %v11597
      %v11726 = vadd.f32 %v10446, %v11598
      %v11727 = vadd.f32 %v10447, %v11599
      %v11728 = vadd.f32 %v10448, %v11600
      %v11729 = vadd.f32 %v10449, %v11601
      %v11730 = vadd.f32 %v10450, %v11602
      %v11731 = vadd.f32 %v10451, %v11603
      %v11732 = vadd.f32 %v10452, %v11604
      %v11733 = vadd.f32 %v10453, %v11605
      %v11734 = vadd.f32 %v10454, %v11606
      %v11735 = vadd.f32 %v10455, %v11607
      %v11736 = vadd.f32 %v10456, %v11608
      %v11737 = vadd.f32 %v10457, %v11609
      %v11738 = vadd.f32 %v10458, %v11610
      %v11739 = vadd.f32 %v10459, %v11611
      %v11740 = vadd.f32 %v10460, %v11612
      %v11741 = vadd.f32 %v10461, %v11613
      %v11742 = vadd.f32 %v10462, %v11614
      %v11743 = vadd.f32 %v10463, %v11615
      %v11744 = vadd.f32 %v10464, %v11616
      %v11745 = vadd.f32 %v10465, %v11617
      %v11746 = vadd.f32 %v10466, %v11618
      %v11747 = vadd.f32 %v10467, %v11619
      %v11748 = vadd.f32 %v10468, %v11620
      %v11749 = vadd.f32 %v10469, %v11621
      %v11750 = vadd.f32 %v10470, %v11622
      %v11751 = vadd.f32 %v10471, %v11623
      %v11752 = vadd.f32 %v10472, %v11624
      %v11753 = vadd.f32 %v10473, %v11625
      %v11754 = vadd.f32 %v10474, %v11626
      %v11755 = vadd.f32 %v10475, %v11627
      %v11756 = vadd.f32 %v10476, %v11628
      %v11757 = vadd.f32 %v10477, %v11629
      %v11758 = vadd.f32 %v10478, %v11630
      %v11759 = vadd.f32 %v10479, %v11631
      %v11760 = vadd.f32 %v10480, %v11632
      %v11761 = vadd.f32 %v10481, %v11633
      %v11762 = vadd.f32 %v10482, %v11634
      %v11763 = vadd.f32 %v10483, %v11635
      %v11764 = vadd.f32 %v10484, %v11636
      %v11765 = vadd.f32 %v10485, %v11637
      %v11766 = vadd.f32 %v10486, %v11638
      %v11767 = vadd.f32 %v10487, %v11639
      %v11768 = vadd.f32 %v10488, %v11640
      %v11769 = vadd.f32 %v10489, %v11641
      %v11770 = vadd.f32 %v10490, %v11642
      %v11771 = vadd.f32 %v10491, %v11643
      %v11772 = vadd.f32 %v10492, %v11644
      %v11773 = vadd.f32 %v10493, %v11645
      %v11774 = vadd.f32 %v10494, %v11646
      %11775 = vset.pattern.permute.xlu0 7
      %11776 = vperm.xlu0 %11775, %v2687
      %v11777 = vpop.permute.xlu0 %11776
      %11779 = vset.pattern.permute.xlu0 7
      %11780 = vperm.xlu0 %11779, %v2688
      %v11781 = vpop.permute.xlu0 %11780
      %11783 = vset.pattern.permute.xlu0 7
      %11784 = vperm.xlu0 %11783, %v2689
      %v11785 = vpop.permute.xlu0 %11784
      %11787 = vset.pattern.permute.xlu0 7
      %11788 = vperm.xlu0 %11787, %v2690
      %v11789 = vpop.permute.xlu0 %11788
      %11791 = vset.pattern.permute.xlu0 7
      %11792 = vperm.xlu0 %11791, %v2691
      %v11793 = vpop.permute.xlu0 %11792
      %11795 = vset.pattern.permute.xlu0 7
      %11796 = vperm.xlu0 %11795, %v2692
      %v11797 = vpop.permute.xlu0 %11796
      %11799 = vset.pattern.permute.xlu0 7
      %11800 = vperm.xlu0 %11799, %v2693
      %v11801 = vpop.permute.xlu0 %11800
      %11803 = vset.pattern.permute.xlu0 7
      %11804 = vperm.xlu0 %11803, %v2694
      %v11805 = vpop.permute.xlu0 %11804
      %11807 = vset.pattern.permute.xlu0 7
      %11808 = vperm.xlu0 %11807, %v2695
      %v11809 = vpop.permute.xlu0 %11808
      %11811 = vset.pattern.permute.xlu0 7
      %11812 = vperm.xlu0 %11811, %v2696
      %v11813 = vpop.permute.xlu0 %11812
      %11815 = vset.pattern.permute.xlu0 7
      %11816 = vperm.xlu0 %11815, %v2697
      %v11817 = vpop.permute.xlu0 %11816
      %11819 = vset.pattern.permute.xlu0 7
      %11820 = vperm.xlu0 %11819, %v2698
      %v11821 = vpop.permute.xlu0 %11820
      %11823 = vset.pattern.permute.xlu0 7
      %11824 = vperm.xlu0 %11823, %v2699
      %v11825 = vpop.permute.xlu0 %11824
      %11827 = vset.pattern.permute.xlu0 7
      %11828 = vperm.xlu0 %11827, %v2700
      %v11829 = vpop.permute.xlu0 %11828
      %11831 = vset.pattern.permute.xlu0 7
      %11832 = vperm.xlu0 %11831, %v2701
      %v11833 = vpop.permute.xlu0 %11832
      %11835 = vset.pattern.permute.xlu0 7
      %11836 = vperm.xlu0 %11835, %v2702
      %v11837 = vpop.permute.xlu0 %11836
      %11839 = vset.pattern.permute.xlu0 7
      %11840 = vperm.xlu0 %11839, %v2703
      %v11841 = vpop.permute.xlu0 %11840
      %11843 = vset.pattern.permute.xlu0 7
      %11844 = vperm.xlu0 %11843, %v2704
      %v11845 = vpop.permute.xlu0 %11844
      %11847 = vset.pattern.permute.xlu0 7
      %11848 = vperm.xlu0 %11847, %v2705
      %v11849 = vpop.permute.xlu0 %11848
      %11851 = vset.pattern.permute.xlu0 7
      %11852 = vperm.xlu0 %11851, %v2706
      %v11853 = vpop.permute.xlu0 %11852
      %11855 = vset.pattern.permute.xlu0 7
      %11856 = vperm.xlu0 %11855, %v2707
      %v11857 = vpop.permute.xlu0 %11856
      %11859 = vset.pattern.permute.xlu0 7
      %11860 = vperm.xlu0 %11859, %v2708
      %v11861 = vpop.permute.xlu0 %11860
      %11863 = vset.pattern.permute.xlu0 7
      %11864 = vperm.xlu0 %11863, %v2709
      %v11865 = vpop.permute.xlu0 %11864
      %11867 = vset.pattern.permute.xlu0 7
      %11868 = vperm.xlu0 %11867, %v2710
      %v11869 = vpop.permute.xlu0 %11868
      %11871 = vset.pattern.permute.xlu0 7
      %11872 = vperm.xlu0 %11871, %v2711
      %v11873 = vpop.permute.xlu0 %11872
      %11875 = vset.pattern.permute.xlu0 7
      %11876 = vperm.xlu0 %11875, %v2712
      %v11877 = vpop.permute.xlu0 %11876
      %11879 = vset.pattern.permute.xlu0 7
      %11880 = vperm.xlu0 %11879, %v2713
      %v11881 = vpop.permute.xlu0 %11880
      %11883 = vset.pattern.permute.xlu0 7
      %11884 = vperm.xlu0 %11883, %v2714
      %v11885 = vpop.permute.xlu0 %11884
      %11887 = vset.pattern.permute.xlu0 7
      %11888 = vperm.xlu0 %11887, %v2715
      %v11889 = vpop.permute.xlu0 %11888
      %11891 = vset.pattern.permute.xlu0 7
      %11892 = vperm.xlu0 %11891, %v2716
      %v11893 = vpop.permute.xlu0 %11892
      %11895 = vset.pattern.permute.xlu0 7
      %11896 = vperm.xlu0 %11895, %v2717
      %v11897 = vpop.permute.xlu0 %11896
      %11899 = vset.pattern.permute.xlu0 7
      %11900 = vperm.xlu0 %11899, %v2718
      %v11901 = vpop.permute.xlu0 %11900
      %11903 = vset.pattern.permute.xlu0 7
      %11904 = vperm.xlu0 %11903, %v2719
      %v11905 = vpop.permute.xlu0 %11904
      %11907 = vset.pattern.permute.xlu0 7
      %11908 = vperm.xlu0 %11907, %v2720
      %v11909 = vpop.permute.xlu0 %11908
      %11911 = vset.pattern.permute.xlu0 7
      %11912 = vperm.xlu0 %11911, %v2721
      %v11913 = vpop.permute.xlu0 %11912
      %11915 = vset.pattern.permute.xlu0 7
      %11916 = vperm.xlu0 %11915, %v2722
      %v11917 = vpop.permute.xlu0 %11916
      %11919 = vset.pattern.permute.xlu0 7
      %11920 = vperm.xlu0 %11919, %v2723
      %v11921 = vpop.permute.xlu0 %11920
      %11923 = vset.pattern.permute.xlu0 7
      %11924 = vperm.xlu0 %11923, %v2724
      %v11925 = vpop.permute.xlu0 %11924
      %11927 = vset.pattern.permute.xlu0 7
      %11928 = vperm.xlu0 %11927, %v2725
      %v11929 = vpop.permute.xlu0 %11928
      %11931 = vset.pattern.permute.xlu0 7
      %11932 = vperm.xlu0 %11931, %v2726
      %v11933 = vpop.permute.xlu0 %11932
      %11935 = vset.pattern.permute.xlu0 7
      %11936 = vperm.xlu0 %11935, %v2727
      %v11937 = vpop.permute.xlu0 %11936
      %11939 = vset.pattern.permute.xlu0 7
      %11940 = vperm.xlu0 %11939, %v2728
      %v11941 = vpop.permute.xlu0 %11940
      %11943 = vset.pattern.permute.xlu0 7
      %11944 = vperm.xlu0 %11943, %v2729
      %v11945 = vpop.permute.xlu0 %11944
      %11947 = vset.pattern.permute.xlu0 7
      %11948 = vperm.xlu0 %11947, %v2730
      %v11949 = vpop.permute.xlu0 %11948
      %11951 = vset.pattern.permute.xlu0 7
      %11952 = vperm.xlu0 %11951, %v2731
      %v11953 = vpop.permute.xlu0 %11952
      %11955 = vset.pattern.permute.xlu0 7
      %11956 = vperm.xlu0 %11955, %v2732
      %v11957 = vpop.permute.xlu0 %11956
      %11959 = vset.pattern.permute.xlu0 7
      %11960 = vperm.xlu0 %11959, %v2733
      %v11961 = vpop.permute.xlu0 %11960
      %11963 = vset.pattern.permute.xlu0 7
      %11964 = vperm.xlu0 %11963, %v2734
      %v11965 = vpop.permute.xlu0 %11964
      %11967 = vset.pattern.permute.xlu0 7
      %11968 = vperm.xlu0 %11967, %v2735
      %v11969 = vpop.permute.xlu0 %11968
      %11971 = vset.pattern.permute.xlu0 7
      %11972 = vperm.xlu0 %11971, %v2736
      %v11973 = vpop.permute.xlu0 %11972
      %11975 = vset.pattern.permute.xlu0 7
      %11976 = vperm.xlu0 %11975, %v2737
      %v11977 = vpop.permute.xlu0 %11976
      %11979 = vset.pattern.permute.xlu0 7
      %11980 = vperm.xlu0 %11979, %v2738
      %v11981 = vpop.permute.xlu0 %11980
      %11983 = vset.pattern.permute.xlu0 7
      %11984 = vperm.xlu0 %11983, %v2739
      %v11985 = vpop.permute.xlu0 %11984
      %11987 = vset.pattern.permute.xlu0 7
      %11988 = vperm.xlu0 %11987, %v2740
      %v11989 = vpop.permute.xlu0 %11988
      %11991 = vset.pattern.permute.xlu0 7
      %11992 = vperm.xlu0 %11991, %v2741
      %v11993 = vpop.permute.xlu0 %11992
      %11995 = vset.pattern.permute.xlu0 7
      %11996 = vperm.xlu0 %11995, %v2742
      %v11997 = vpop.permute.xlu0 %11996
      %11999 = vset.pattern.permute.xlu0 7
      %12000 = vperm.xlu0 %11999, %v2743
      %v12001 = vpop.permute.xlu0 %12000
      %12003 = vset.pattern.permute.xlu0 7
      %12004 = vperm.xlu0 %12003, %v2744
      %v12005 = vpop.permute.xlu0 %12004
      %12007 = vset.pattern.permute.xlu0 7
      %12008 = vperm.xlu0 %12007, %v2745
      %v12009 = vpop.permute.xlu0 %12008
      %12011 = vset.pattern.permute.xlu0 7
      %12012 = vperm.xlu0 %12011, %v2746
      %v12013 = vpop.permute.xlu0 %12012
      %12015 = vset.pattern.permute.xlu0 7
      %12016 = vperm.xlu0 %12015, %v2747
      %v12017 = vpop.permute.xlu0 %12016
      %12019 = vset.pattern.permute.xlu0 7
      %12020 = vperm.xlu0 %12019, %v2748
      %v12021 = vpop.permute.xlu0 %12020
      %12023 = vset.pattern.permute.xlu0 7
      %12024 = vperm.xlu0 %12023, %v2749
      %v12025 = vpop.permute.xlu0 %12024
      %12027 = vset.pattern.permute.xlu0 7
      %12028 = vperm.xlu0 %12027, %v2750
      %v12029 = vpop.permute.xlu0 %12028
      %12031 = vset.pattern.permute.xlu0 7
      %12032 = vperm.xlu0 %12031, %v2751
      %v12033 = vpop.permute.xlu0 %12032
      %12035 = vset.pattern.permute.xlu0 7
      %12036 = vperm.xlu0 %12035, %v2752
      %v12037 = vpop.permute.xlu0 %12036
      %12039 = vset.pattern.permute.xlu0 7
      %12040 = vperm.xlu0 %12039, %v2753
      %v12041 = vpop.permute.xlu0 %12040
      %12043 = vset.pattern.permute.xlu0 7
      %12044 = vperm.xlu0 %12043, %v2754
      %v12045 = vpop.permute.xlu0 %12044
      %12047 = vset.pattern.permute.xlu0 7
      %12048 = vperm.xlu0 %12047, %v2755
      %v12049 = vpop.permute.xlu0 %12048
      %12051 = vset.pattern.permute.xlu0 7
      %12052 = vperm.xlu0 %12051, %v2756
      %v12053 = vpop.permute.xlu0 %12052
      %12055 = vset.pattern.permute.xlu0 7
      %12056 = vperm.xlu0 %12055, %v2757
      %v12057 = vpop.permute.xlu0 %12056
      %12059 = vset.pattern.permute.xlu0 7
      %12060 = vperm.xlu0 %12059, %v2758
      %v12061 = vpop.permute.xlu0 %12060
      %12063 = vset.pattern.permute.xlu0 7
      %12064 = vperm.xlu0 %12063, %v2759
      %v12065 = vpop.permute.xlu0 %12064
      %12067 = vset.pattern.permute.xlu0 7
      %12068 = vperm.xlu0 %12067, %v2760
      %v12069 = vpop.permute.xlu0 %12068
      %12071 = vset.pattern.permute.xlu0 7
      %12072 = vperm.xlu0 %12071, %v2761
      %v12073 = vpop.permute.xlu0 %12072
      %12075 = vset.pattern.permute.xlu0 7
      %12076 = vperm.xlu0 %12075, %v2762
      %v12077 = vpop.permute.xlu0 %12076
      %12079 = vset.pattern.permute.xlu0 7
      %12080 = vperm.xlu0 %12079, %v2763
      %v12081 = vpop.permute.xlu0 %12080
      %12083 = vset.pattern.permute.xlu0 7
      %12084 = vperm.xlu0 %12083, %v2764
      %v12085 = vpop.permute.xlu0 %12084
      %12087 = vset.pattern.permute.xlu0 7
      %12088 = vperm.xlu0 %12087, %v2765
      %v12089 = vpop.permute.xlu0 %12088
      %12091 = vset.pattern.permute.xlu0 7
      %12092 = vperm.xlu0 %12091, %v2766
      %v12093 = vpop.permute.xlu0 %12092
      %12095 = vset.pattern.permute.xlu0 7
      %12096 = vperm.xlu0 %12095, %v2767
      %v12097 = vpop.permute.xlu0 %12096
      %12099 = vset.pattern.permute.xlu0 7
      %12100 = vperm.xlu0 %12099, %v2768
      %v12101 = vpop.permute.xlu0 %12100
      %12103 = vset.pattern.permute.xlu0 7
      %12104 = vperm.xlu0 %12103, %v2769
      %v12105 = vpop.permute.xlu0 %12104
      %12107 = vset.pattern.permute.xlu0 7
      %12108 = vperm.xlu0 %12107, %v2770
      %v12109 = vpop.permute.xlu0 %12108
      %12111 = vset.pattern.permute.xlu0 7
      %12112 = vperm.xlu0 %12111, %v2771
      %v12113 = vpop.permute.xlu0 %12112
      %12115 = vset.pattern.permute.xlu0 7
      %12116 = vperm.xlu0 %12115, %v2772
      %v12117 = vpop.permute.xlu0 %12116
      %12119 = vset.pattern.permute.xlu0 7
      %12120 = vperm.xlu0 %12119, %v2773
      %v12121 = vpop.permute.xlu0 %12120
      %12123 = vset.pattern.permute.xlu0 7
      %12124 = vperm.xlu0 %12123, %v2774
      %v12125 = vpop.permute.xlu0 %12124
      %12127 = vset.pattern.permute.xlu0 7
      %12128 = vperm.xlu0 %12127, %v2775
      %v12129 = vpop.permute.xlu0 %12128
      %12131 = vset.pattern.permute.xlu0 7
      %12132 = vperm.xlu0 %12131, %v2776
      %v12133 = vpop.permute.xlu0 %12132
      %12135 = vset.pattern.permute.xlu0 7
      %12136 = vperm.xlu0 %12135, %v2777
      %v12137 = vpop.permute.xlu0 %12136
      %12139 = vset.pattern.permute.xlu0 7
      %12140 = vperm.xlu0 %12139, %v2778
      %v12141 = vpop.permute.xlu0 %12140
      %12143 = vset.pattern.permute.xlu0 7
      %12144 = vperm.xlu0 %12143, %v2779
      %v12145 = vpop.permute.xlu0 %12144
      %12147 = vset.pattern.permute.xlu0 7
      %12148 = vperm.xlu0 %12147, %v2780
      %v12149 = vpop.permute.xlu0 %12148
      %12151 = vset.pattern.permute.xlu0 7
      %12152 = vperm.xlu0 %12151, %v2781
      %v12153 = vpop.permute.xlu0 %12152
      %12155 = vset.pattern.permute.xlu0 7
      %12156 = vperm.xlu0 %12155, %v2782
      %v12157 = vpop.permute.xlu0 %12156
      %12159 = vset.pattern.permute.xlu0 7
      %12160 = vperm.xlu0 %12159, %v2783
      %v12161 = vpop.permute.xlu0 %12160
      %12163 = vset.pattern.permute.xlu0 7
      %12164 = vperm.xlu0 %12163, %v2784
      %v12165 = vpop.permute.xlu0 %12164
      %12167 = vset.pattern.permute.xlu0 7
      %12168 = vperm.xlu0 %12167, %v2785
      %v12169 = vpop.permute.xlu0 %12168
      %12171 = vset.pattern.permute.xlu0 7
      %12172 = vperm.xlu0 %12171, %v2786
      %v12173 = vpop.permute.xlu0 %12172
      %12175 = vset.pattern.permute.xlu0 7
      %12176 = vperm.xlu0 %12175, %v2787
      %v12177 = vpop.permute.xlu0 %12176
      %12179 = vset.pattern.permute.xlu0 7
      %12180 = vperm.xlu0 %12179, %v2788
      %v12181 = vpop.permute.xlu0 %12180
      %12183 = vset.pattern.permute.xlu0 7
      %12184 = vperm.xlu0 %12183, %v2789
      %v12185 = vpop.permute.xlu0 %12184
      %12187 = vset.pattern.permute.xlu0 7
      %12188 = vperm.xlu0 %12187, %v2790
      %v12189 = vpop.permute.xlu0 %12188
      %12191 = vset.pattern.permute.xlu0 7
      %12192 = vperm.xlu0 %12191, %v2791
      %v12193 = vpop.permute.xlu0 %12192
      %12195 = vset.pattern.permute.xlu0 7
      %12196 = vperm.xlu0 %12195, %v2792
      %v12197 = vpop.permute.xlu0 %12196
      %12199 = vset.pattern.permute.xlu0 7
      %12200 = vperm.xlu0 %12199, %v2793
      %v12201 = vpop.permute.xlu0 %12200
      %12203 = vset.pattern.permute.xlu0 7
      %12204 = vperm.xlu0 %12203, %v2794
      %v12205 = vpop.permute.xlu0 %12204
      %12207 = vset.pattern.permute.xlu0 7
      %12208 = vperm.xlu0 %12207, %v2795
      %v12209 = vpop.permute.xlu0 %12208
      %12211 = vset.pattern.permute.xlu0 7
      %12212 = vperm.xlu0 %12211, %v2796
      %v12213 = vpop.permute.xlu0 %12212
      %12215 = vset.pattern.permute.xlu0 7
      %12216 = vperm.xlu0 %12215, %v2797
      %v12217 = vpop.permute.xlu0 %12216
      %12219 = vset.pattern.permute.xlu0 7
      %12220 = vperm.xlu0 %12219, %v2798
      %v12221 = vpop.permute.xlu0 %12220
      %12223 = vset.pattern.permute.xlu0 7
      %12224 = vperm.xlu0 %12223, %v2799
      %v12225 = vpop.permute.xlu0 %12224
      %12227 = vset.pattern.permute.xlu0 7
      %12228 = vperm.xlu0 %12227, %v2800
      %v12229 = vpop.permute.xlu0 %12228
      %12231 = vset.pattern.permute.xlu0 7
      %12232 = vperm.xlu0 %12231, %v2801
      %v12233 = vpop.permute.xlu0 %12232
      %12235 = vset.pattern.permute.xlu0 7
      %12236 = vperm.xlu0 %12235, %v2802
      %v12237 = vpop.permute.xlu0 %12236
      %12239 = vset.pattern.permute.xlu0 7
      %12240 = vperm.xlu0 %12239, %v2803
      %v12241 = vpop.permute.xlu0 %12240
      %12243 = vset.pattern.permute.xlu0 7
      %12244 = vperm.xlu0 %12243, %v2804
      %v12245 = vpop.permute.xlu0 %12244
      %12247 = vset.pattern.permute.xlu0 7
      %12248 = vperm.xlu0 %12247, %v2805
      %v12249 = vpop.permute.xlu0 %12248
      %12251 = vset.pattern.permute.xlu0 7
      %12252 = vperm.xlu0 %12251, %v2806
      %v12253 = vpop.permute.xlu0 %12252
      %12255 = vset.pattern.permute.xlu0 7
      %12256 = vperm.xlu0 %12255, %v2807
      %v12257 = vpop.permute.xlu0 %12256
      %12259 = vset.pattern.permute.xlu0 7
      %12260 = vperm.xlu0 %12259, %v2808
      %v12261 = vpop.permute.xlu0 %12260
      %12263 = vset.pattern.permute.xlu0 7
      %12264 = vperm.xlu0 %12263, %v2809
      %v12265 = vpop.permute.xlu0 %12264
      %12267 = vset.pattern.permute.xlu0 7
      %12268 = vperm.xlu0 %12267, %v2810
      %v12269 = vpop.permute.xlu0 %12268
      %12271 = vset.pattern.permute.xlu0 7
      %12272 = vperm.xlu0 %12271, %v2811
      %v12273 = vpop.permute.xlu0 %12272
      %12275 = vset.pattern.permute.xlu0 7
      %12276 = vperm.xlu0 %12275, %v2812
      %v12277 = vpop.permute.xlu0 %12276
      %12279 = vset.pattern.permute.xlu0 7
      %12280 = vperm.xlu0 %12279, %v2813
      %v12281 = vpop.permute.xlu0 %12280
      %12283 = vset.pattern.permute.xlu0 7
      %12284 = vperm.xlu0 %12283, %v2814
      %v12285 = vpop.permute.xlu0 %12284
      %v12287 = vlaneseq
      %v12288 = vshrl.u32 %v12287, 7
      %v12289 = vsub.s32 7, %v12288
      %v12290 = vrot.slane %v174, %v12289
      %v12291 = vlaneseq
      %v12292 = vshrl.u32 %v12291, 7
      %v12293 = vsub.s32 7, %v12292
      %v12294 = vrot.slane %v175, %v12293
      %v12295 = vlaneseq
      %v12296 = vshrl.u32 %v12295, 7
      %v12297 = vsub.s32 7, %v12296
      %v12298 = vrot.slane %v176, %v12297
      %v12299 = vlaneseq
      %v12300 = vshrl.u32 %v12299, 7
      %v12301 = vsub.s32 7, %v12300
      %v12302 = vrot.slane %v177, %v12301
      %v12303 = vlaneseq
      %v12304 = vshrl.u32 %v12303, 7
      %v12305 = vsub.s32 7, %v12304
      %v12306 = vrot.slane %v178, %v12305
      %v12307 = vlaneseq
      %v12308 = vshrl.u32 %v12307, 7
      %v12309 = vsub.s32 7, %v12308
      %v12310 = vrot.slane %v179, %v12309
      %v12311 = vlaneseq
      %v12312 = vshrl.u32 %v12311, 7
      %v12313 = vsub.s32 7, %v12312
      %v12314 = vrot.slane %v180, %v12313
      %v12315 = vlaneseq
      %v12316 = vshrl.u32 %v12315, 7
      %v12317 = vsub.s32 7, %v12316
      %v12318 = vrot.slane %v181, %v12317
      %v12319 = vlaneseq
      %v12320 = vshrl.u32 %v12319, 7
      %v12321 = vsub.s32 7, %v12320
      %v12322 = vrot.slane %v182, %v12321
      %v12323 = vlaneseq
      %v12324 = vshrl.u32 %v12323, 7
      %v12325 = vsub.s32 7, %v12324
      %v12326 = vrot.slane %v183, %v12325
      %v12327 = vlaneseq
      %v12328 = vshrl.u32 %v12327, 7
      %v12329 = vsub.s32 7, %v12328
      %v12330 = vrot.slane %v184, %v12329
      %v12331 = vlaneseq
      %v12332 = vshrl.u32 %v12331, 7
      %v12333 = vsub.s32 7, %v12332
      %v12334 = vrot.slane %v185, %v12333
      %v12335 = vlaneseq
      %v12336 = vshrl.u32 %v12335, 7
      %v12337 = vsub.s32 7, %v12336
      %v12338 = vrot.slane %v186, %v12337
      %v12339 = vlaneseq
      %v12340 = vshrl.u32 %v12339, 7
      %v12341 = vsub.s32 7, %v12340
      %v12342 = vrot.slane %v187, %v12341
      %v12343 = vlaneseq
      %v12344 = vshrl.u32 %v12343, 7
      %v12345 = vsub.s32 7, %v12344
      %v12346 = vrot.slane %v188, %v12345
      %v12347 = vlaneseq
      %v12348 = vshrl.u32 %v12347, 7
      %v12349 = vsub.s32 7, %v12348
      %v12350 = vrot.slane %v189, %v12349
      %v12351 = vlaneseq
      %v12352 = vshrl.u32 %v12351, 7
      %v12353 = vsub.s32 7, %v12352
      %v12354 = vrot.slane %v190, %v12353
      %v12355 = vlaneseq
      %v12356 = vshrl.u32 %v12355, 7
      %v12357 = vsub.s32 7, %v12356
      %v12358 = vrot.slane %v191, %v12357
      %v12359 = vlaneseq
      %v12360 = vshrl.u32 %v12359, 7
      %v12361 = vsub.s32 7, %v12360
      %v12362 = vrot.slane %v192, %v12361
      %v12363 = vlaneseq
      %v12364 = vshrl.u32 %v12363, 7
      %v12365 = vsub.s32 7, %v12364
      %v12366 = vrot.slane %v193, %v12365
      %v12367 = vlaneseq
      %v12368 = vshrl.u32 %v12367, 7
      %v12369 = vsub.s32 7, %v12368
      %v12370 = vrot.slane %v194, %v12369
      %v12371 = vlaneseq
      %v12372 = vshrl.u32 %v12371, 7
      %v12373 = vsub.s32 7, %v12372
      %v12374 = vrot.slane %v195, %v12373
      %v12375 = vlaneseq
      %v12376 = vshrl.u32 %v12375, 7
      %v12377 = vsub.s32 7, %v12376
      %v12378 = vrot.slane %v196, %v12377
      %v12379 = vlaneseq
      %v12380 = vshrl.u32 %v12379, 7
      %v12381 = vsub.s32 7, %v12380
      %v12382 = vrot.slane %v197, %v12381
      %v12383 = vlaneseq
      %v12384 = vshrl.u32 %v12383, 7
      %v12385 = vsub.s32 7, %v12384
      %v12386 = vrot.slane %v198, %v12385
      %v12387 = vlaneseq
      %v12388 = vshrl.u32 %v12387, 7
      %v12389 = vsub.s32 7, %v12388
      %v12390 = vrot.slane %v199, %v12389
      %v12391 = vlaneseq
      %v12392 = vshrl.u32 %v12391, 7
      %v12393 = vsub.s32 7, %v12392
      %v12394 = vrot.slane %v200, %v12393
      %v12395 = vlaneseq
      %v12396 = vshrl.u32 %v12395, 7
      %v12397 = vsub.s32 7, %v12396
      %v12398 = vrot.slane %v201, %v12397
      %v12399 = vlaneseq
      %v12400 = vshrl.u32 %v12399, 7
      %v12401 = vsub.s32 7, %v12400
      %v12402 = vrot.slane %v202, %v12401
      %v12403 = vlaneseq
      %v12404 = vshrl.u32 %v12403, 7
      %v12405 = vsub.s32 7, %v12404
      %v12406 = vrot.slane %v203, %v12405
      %v12407 = vlaneseq
      %v12408 = vshrl.u32 %v12407, 7
      %v12409 = vsub.s32 7, %v12408
      %v12410 = vrot.slane %v204, %v12409
      %v12411 = vlaneseq
      %v12412 = vshrl.u32 %v12411, 7
      %v12413 = vsub.s32 7, %v12412
      %v12414 = vrot.slane %v205, %v12413
      %v12415 = vlaneseq
      %v12416 = vshrl.u32 %v12415, 7
      %v12417 = vsub.s32 7, %v12416
      %v12418 = vrot.slane %v206, %v12417
      %v12419 = vlaneseq
      %v12420 = vshrl.u32 %v12419, 7
      %v12421 = vsub.s32 7, %v12420
      %v12422 = vrot.slane %v207, %v12421
      %v12423 = vlaneseq
      %v12424 = vshrl.u32 %v12423, 7
      %v12425 = vsub.s32 7, %v12424
      %v12426 = vrot.slane %v208, %v12425
      %v12427 = vlaneseq
      %v12428 = vshrl.u32 %v12427, 7
      %v12429 = vsub.s32 7, %v12428
      %v12430 = vrot.slane %v209, %v12429
      %v12431 = vlaneseq
      %v12432 = vshrl.u32 %v12431, 7
      %v12433 = vsub.s32 7, %v12432
      %v12434 = vrot.slane %v210, %v12433
      %v12435 = vlaneseq
      %v12436 = vshrl.u32 %v12435, 7
      %v12437 = vsub.s32 7, %v12436
      %v12438 = vrot.slane %v211, %v12437
      %v12439 = vlaneseq
      %v12440 = vshrl.u32 %v12439, 7
      %v12441 = vsub.s32 7, %v12440
      %v12442 = vrot.slane %v212, %v12441
      %v12443 = vlaneseq
      %v12444 = vshrl.u32 %v12443, 7
      %v12445 = vsub.s32 7, %v12444
      %v12446 = vrot.slane %v213, %v12445
      %v12447 = vlaneseq
      %v12448 = vshrl.u32 %v12447, 7
      %v12449 = vsub.s32 7, %v12448
      %v12450 = vrot.slane %v214, %v12449
      %v12451 = vlaneseq
      %v12452 = vshrl.u32 %v12451, 7
      %v12453 = vsub.s32 7, %v12452
      %v12454 = vrot.slane %v215, %v12453
      %v12455 = vlaneseq
      %v12456 = vshrl.u32 %v12455, 7
      %v12457 = vsub.s32 7, %v12456
      %v12458 = vrot.slane %v216, %v12457
      %v12459 = vlaneseq
      %v12460 = vshrl.u32 %v12459, 7
      %v12461 = vsub.s32 7, %v12460
      %v12462 = vrot.slane %v217, %v12461
      %v12463 = vlaneseq
      %v12464 = vshrl.u32 %v12463, 7
      %v12465 = vsub.s32 7, %v12464
      %v12466 = vrot.slane %v218, %v12465
      %v12467 = vlaneseq
      %v12468 = vshrl.u32 %v12467, 7
      %v12469 = vsub.s32 7, %v12468
      %v12470 = vrot.slane %v219, %v12469
      %v12471 = vlaneseq
      %v12472 = vshrl.u32 %v12471, 7
      %v12473 = vsub.s32 7, %v12472
      %v12474 = vrot.slane %v220, %v12473
      %v12475 = vlaneseq
      %v12476 = vshrl.u32 %v12475, 7
      %v12477 = vsub.s32 7, %v12476
      %v12478 = vrot.slane %v221, %v12477
      %v12479 = vlaneseq
      %v12480 = vshrl.u32 %v12479, 7
      %v12481 = vsub.s32 7, %v12480
      %v12482 = vrot.slane %v222, %v12481
      %v12483 = vlaneseq
      %v12484 = vshrl.u32 %v12483, 7
      %v12485 = vsub.s32 7, %v12484
      %v12486 = vrot.slane %v223, %v12485
      %v12487 = vlaneseq
      %v12488 = vshrl.u32 %v12487, 7
      %v12489 = vsub.s32 7, %v12488
      %v12490 = vrot.slane %v224, %v12489
      %v12491 = vlaneseq
      %v12492 = vshrl.u32 %v12491, 7
      %v12493 = vsub.s32 7, %v12492
      %v12494 = vrot.slane %v225, %v12493
      %v12495 = vlaneseq
      %v12496 = vshrl.u32 %v12495, 7
      %v12497 = vsub.s32 7, %v12496
      %v12498 = vrot.slane %v226, %v12497
      %v12499 = vlaneseq
      %v12500 = vshrl.u32 %v12499, 7
      %v12501 = vsub.s32 7, %v12500
      %v12502 = vrot.slane %v227, %v12501
      %v12503 = vlaneseq
      %v12504 = vshrl.u32 %v12503, 7
      %v12505 = vsub.s32 7, %v12504
      %v12506 = vrot.slane %v228, %v12505
      %v12507 = vlaneseq
      %v12508 = vshrl.u32 %v12507, 7
      %v12509 = vsub.s32 7, %v12508
      %v12510 = vrot.slane %v229, %v12509
      %v12511 = vlaneseq
      %v12512 = vshrl.u32 %v12511, 7
      %v12513 = vsub.s32 7, %v12512
      %v12514 = vrot.slane %v230, %v12513
      %v12515 = vlaneseq
      %v12516 = vshrl.u32 %v12515, 7
      %v12517 = vsub.s32 7, %v12516
      %v12518 = vrot.slane %v231, %v12517
      %v12519 = vlaneseq
      %v12520 = vshrl.u32 %v12519, 7
      %v12521 = vsub.s32 7, %v12520
      %v12522 = vrot.slane %v232, %v12521
      %v12523 = vlaneseq
      %v12524 = vshrl.u32 %v12523, 7
      %v12525 = vsub.s32 7, %v12524
      %v12526 = vrot.slane %v233, %v12525
      %v12527 = vlaneseq
      %v12528 = vshrl.u32 %v12527, 7
      %v12529 = vsub.s32 7, %v12528
      %v12530 = vrot.slane %v234, %v12529
      %v12531 = vlaneseq
      %v12532 = vshrl.u32 %v12531, 7
      %v12533 = vsub.s32 7, %v12532
      %v12534 = vrot.slane %v235, %v12533
      %v12535 = vlaneseq
      %v12536 = vshrl.u32 %v12535, 7
      %v12537 = vsub.s32 7, %v12536
      %v12538 = vrot.slane %v236, %v12537
      %v12539 = vlaneseq
      %v12540 = vshrl.u32 %v12539, 7
      %v12541 = vsub.s32 7, %v12540
      %v12542 = vrot.slane %v237, %v12541
      %v12543 = vlaneseq
      %v12544 = vshrl.u32 %v12543, 7
      %v12545 = vsub.s32 7, %v12544
      %v12546 = vrot.slane %v238, %v12545
      %v12547 = vlaneseq
      %v12548 = vshrl.u32 %v12547, 7
      %v12549 = vsub.s32 7, %v12548
      %v12550 = vrot.slane %v239, %v12549
      %v12551 = vlaneseq
      %v12552 = vshrl.u32 %v12551, 7
      %v12553 = vsub.s32 7, %v12552
      %v12554 = vrot.slane %v240, %v12553
      %v12555 = vlaneseq
      %v12556 = vshrl.u32 %v12555, 7
      %v12557 = vsub.s32 7, %v12556
      %v12558 = vrot.slane %v241, %v12557
      %v12559 = vlaneseq
      %v12560 = vshrl.u32 %v12559, 7
      %v12561 = vsub.s32 7, %v12560
      %v12562 = vrot.slane %v242, %v12561
      %v12563 = vlaneseq
      %v12564 = vshrl.u32 %v12563, 7
      %v12565 = vsub.s32 7, %v12564
      %v12566 = vrot.slane %v243, %v12565
      %v12567 = vlaneseq
      %v12568 = vshrl.u32 %v12567, 7
      %v12569 = vsub.s32 7, %v12568
      %v12570 = vrot.slane %v244, %v12569
      %v12571 = vlaneseq
      %v12572 = vshrl.u32 %v12571, 7
      %v12573 = vsub.s32 7, %v12572
      %v12574 = vrot.slane %v245, %v12573
      %v12575 = vlaneseq
      %v12576 = vshrl.u32 %v12575, 7
      %v12577 = vsub.s32 7, %v12576
      %v12578 = vrot.slane %v246, %v12577
      %v12579 = vlaneseq
      %v12580 = vshrl.u32 %v12579, 7
      %v12581 = vsub.s32 7, %v12580
      %v12582 = vrot.slane %v247, %v12581
      %v12583 = vlaneseq
      %v12584 = vshrl.u32 %v12583, 7
      %v12585 = vsub.s32 7, %v12584
      %v12586 = vrot.slane %v248, %v12585
      %v12587 = vlaneseq
      %v12588 = vshrl.u32 %v12587, 7
      %v12589 = vsub.s32 7, %v12588
      %v12590 = vrot.slane %v249, %v12589
      %v12591 = vlaneseq
      %v12592 = vshrl.u32 %v12591, 7
      %v12593 = vsub.s32 7, %v12592
      %v12594 = vrot.slane %v250, %v12593
      %v12595 = vlaneseq
      %v12596 = vshrl.u32 %v12595, 7
      %v12597 = vsub.s32 7, %v12596
      %v12598 = vrot.slane %v251, %v12597
      %v12599 = vlaneseq
      %v12600 = vshrl.u32 %v12599, 7
      %v12601 = vsub.s32 7, %v12600
      %v12602 = vrot.slane %v252, %v12601
      %v12603 = vlaneseq
      %v12604 = vshrl.u32 %v12603, 7
      %v12605 = vsub.s32 7, %v12604
      %v12606 = vrot.slane %v253, %v12605
      %v12607 = vlaneseq
      %v12608 = vshrl.u32 %v12607, 7
      %v12609 = vsub.s32 7, %v12608
      %v12610 = vrot.slane %v254, %v12609
      %v12611 = vlaneseq
      %v12612 = vshrl.u32 %v12611, 7
      %v12613 = vsub.s32 7, %v12612
      %v12614 = vrot.slane %v255, %v12613
      %v12615 = vlaneseq
      %v12616 = vshrl.u32 %v12615, 7
      %v12617 = vsub.s32 7, %v12616
      %v12618 = vrot.slane %v256, %v12617
      %v12619 = vlaneseq
      %v12620 = vshrl.u32 %v12619, 7
      %v12621 = vsub.s32 7, %v12620
      %v12622 = vrot.slane %v257, %v12621
      %v12623 = vlaneseq
      %v12624 = vshrl.u32 %v12623, 7
      %v12625 = vsub.s32 7, %v12624
      %v12626 = vrot.slane %v258, %v12625
      %v12627 = vlaneseq
      %v12628 = vshrl.u32 %v12627, 7
      %v12629 = vsub.s32 7, %v12628
      %v12630 = vrot.slane %v259, %v12629
      %v12631 = vlaneseq
      %v12632 = vshrl.u32 %v12631, 7
      %v12633 = vsub.s32 7, %v12632
      %v12634 = vrot.slane %v260, %v12633
      %v12635 = vlaneseq
      %v12636 = vshrl.u32 %v12635, 7
      %v12637 = vsub.s32 7, %v12636
      %v12638 = vrot.slane %v261, %v12637
      %v12639 = vlaneseq
      %v12640 = vshrl.u32 %v12639, 7
      %v12641 = vsub.s32 7, %v12640
      %v12642 = vrot.slane %v262, %v12641
      %v12643 = vlaneseq
      %v12644 = vshrl.u32 %v12643, 7
      %v12645 = vsub.s32 7, %v12644
      %v12646 = vrot.slane %v263, %v12645
      %v12647 = vlaneseq
      %v12648 = vshrl.u32 %v12647, 7
      %v12649 = vsub.s32 7, %v12648
      %v12650 = vrot.slane %v264, %v12649
      %v12651 = vlaneseq
      %v12652 = vshrl.u32 %v12651, 7
      %v12653 = vsub.s32 7, %v12652
      %v12654 = vrot.slane %v265, %v12653
      %v12655 = vlaneseq
      %v12656 = vshrl.u32 %v12655, 7
      %v12657 = vsub.s32 7, %v12656
      %v12658 = vrot.slane %v266, %v12657
      %v12659 = vlaneseq
      %v12660 = vshrl.u32 %v12659, 7
      %v12661 = vsub.s32 7, %v12660
      %v12662 = vrot.slane %v267, %v12661
      %v12663 = vlaneseq
      %v12664 = vshrl.u32 %v12663, 7
      %v12665 = vsub.s32 7, %v12664
      %v12666 = vrot.slane %v268, %v12665
      %v12667 = vlaneseq
      %v12668 = vshrl.u32 %v12667, 7
      %v12669 = vsub.s32 7, %v12668
      %v12670 = vrot.slane %v269, %v12669
      %v12671 = vlaneseq
      %v12672 = vshrl.u32 %v12671, 7
      %v12673 = vsub.s32 7, %v12672
      %v12674 = vrot.slane %v270, %v12673
      %v12675 = vlaneseq
      %v12676 = vshrl.u32 %v12675, 7
      %v12677 = vsub.s32 7, %v12676
      %v12678 = vrot.slane %v271, %v12677
      %v12679 = vlaneseq
      %v12680 = vshrl.u32 %v12679, 7
      %v12681 = vsub.s32 7, %v12680
      %v12682 = vrot.slane %v272, %v12681
      %v12683 = vlaneseq
      %v12684 = vshrl.u32 %v12683, 7
      %v12685 = vsub.s32 7, %v12684
      %v12686 = vrot.slane %v273, %v12685
      %v12687 = vlaneseq
      %v12688 = vshrl.u32 %v12687, 7
      %v12689 = vsub.s32 7, %v12688
      %v12690 = vrot.slane %v274, %v12689
      %v12691 = vlaneseq
      %v12692 = vshrl.u32 %v12691, 7
      %v12693 = vsub.s32 7, %v12692
      %v12694 = vrot.slane %v275, %v12693
      %v12695 = vlaneseq
      %v12696 = vshrl.u32 %v12695, 7
      %v12697 = vsub.s32 7, %v12696
      %v12698 = vrot.slane %v276, %v12697
      %v12699 = vlaneseq
      %v12700 = vshrl.u32 %v12699, 7
      %v12701 = vsub.s32 7, %v12700
      %v12702 = vrot.slane %v277, %v12701
      %v12703 = vlaneseq
      %v12704 = vshrl.u32 %v12703, 7
      %v12705 = vsub.s32 7, %v12704
      %v12706 = vrot.slane %v278, %v12705
      %v12707 = vlaneseq
      %v12708 = vshrl.u32 %v12707, 7
      %v12709 = vsub.s32 7, %v12708
      %v12710 = vrot.slane %v279, %v12709
      %v12711 = vlaneseq
      %v12712 = vshrl.u32 %v12711, 7
      %v12713 = vsub.s32 7, %v12712
      %v12714 = vrot.slane %v280, %v12713
      %v12715 = vlaneseq
      %v12716 = vshrl.u32 %v12715, 7
      %v12717 = vsub.s32 7, %v12716
      %v12718 = vrot.slane %v281, %v12717
      %v12719 = vlaneseq
      %v12720 = vshrl.u32 %v12719, 7
      %v12721 = vsub.s32 7, %v12720
      %v12722 = vrot.slane %v282, %v12721
      %v12723 = vlaneseq
      %v12724 = vshrl.u32 %v12723, 7
      %v12725 = vsub.s32 7, %v12724
      %v12726 = vrot.slane %v283, %v12725
      %v12727 = vlaneseq
      %v12728 = vshrl.u32 %v12727, 7
      %v12729 = vsub.s32 7, %v12728
      %v12730 = vrot.slane %v284, %v12729
      %v12731 = vlaneseq
      %v12732 = vshrl.u32 %v12731, 7
      %v12733 = vsub.s32 7, %v12732
      %v12734 = vrot.slane %v285, %v12733
      %v12735 = vlaneseq
      %v12736 = vshrl.u32 %v12735, 7
      %v12737 = vsub.s32 7, %v12736
      %v12738 = vrot.slane %v286, %v12737
      %v12739 = vlaneseq
      %v12740 = vshrl.u32 %v12739, 7
      %v12741 = vsub.s32 7, %v12740
      %v12742 = vrot.slane %v287, %v12741
      %v12743 = vlaneseq
      %v12744 = vshrl.u32 %v12743, 7
      %v12745 = vsub.s32 7, %v12744
      %v12746 = vrot.slane %v288, %v12745
      %v12747 = vlaneseq
      %v12748 = vshrl.u32 %v12747, 7
      %v12749 = vsub.s32 7, %v12748
      %v12750 = vrot.slane %v289, %v12749
      %v12751 = vlaneseq
      %v12752 = vshrl.u32 %v12751, 7
      %v12753 = vsub.s32 7, %v12752
      %v12754 = vrot.slane %v290, %v12753
      %v12755 = vlaneseq
      %v12756 = vshrl.u32 %v12755, 7
      %v12757 = vsub.s32 7, %v12756
      %v12758 = vrot.slane %v291, %v12757
      %v12759 = vlaneseq
      %v12760 = vshrl.u32 %v12759, 7
      %v12761 = vsub.s32 7, %v12760
      %v12762 = vrot.slane %v292, %v12761
      %v12763 = vlaneseq
      %v12764 = vshrl.u32 %v12763, 7
      %v12765 = vsub.s32 7, %v12764
      %v12766 = vrot.slane %v293, %v12765
      %v12767 = vlaneseq
      %v12768 = vshrl.u32 %v12767, 7
      %v12769 = vsub.s32 7, %v12768
      %v12770 = vrot.slane %v294, %v12769
      %v12771 = vlaneseq
      %v12772 = vshrl.u32 %v12771, 7
      %v12773 = vsub.s32 7, %v12772
      %v12774 = vrot.slane %v295, %v12773
      %v12775 = vlaneseq
      %v12776 = vshrl.u32 %v12775, 7
      %v12777 = vsub.s32 7, %v12776
      %v12778 = vrot.slane %v296, %v12777
      %v12779 = vlaneseq
      %v12780 = vshrl.u32 %v12779, 7
      %v12781 = vsub.s32 7, %v12780
      %v12782 = vrot.slane %v297, %v12781
      %v12783 = vlaneseq
      %v12784 = vshrl.u32 %v12783, 7
      %v12785 = vsub.s32 7, %v12784
      %v12786 = vrot.slane %v298, %v12785
      %v12787 = vlaneseq
      %v12788 = vshrl.u32 %v12787, 7
      %v12789 = vsub.s32 7, %v12788
      %v12790 = vrot.slane %v299, %v12789
      %v12791 = vlaneseq
      %v12792 = vshrl.u32 %v12791, 7
      %v12793 = vsub.s32 7, %v12792
      %v12794 = vrot.slane %v300, %v12793
      %v12795 = vlaneseq
      %v12796 = vshrl.u32 %v12795, 7
      %v12797 = vsub.s32 7, %v12796
      %v12798 = vrot.slane %v301, %v12797
      %v12799 = vmul.f32 %v11777, %v12290
      %v12800 = vmul.f32 %v11781, %v12294
      %v12801 = vmul.f32 %v11785, %v12298
      %v12802 = vmul.f32 %v11789, %v12302
      %v12803 = vmul.f32 %v11793, %v12306
      %v12804 = vmul.f32 %v11797, %v12310
      %v12805 = vmul.f32 %v11801, %v12314
      %v12806 = vmul.f32 %v11805, %v12318
      %v12807 = vmul.f32 %v11809, %v12322
      %v12808 = vmul.f32 %v11813, %v12326
      %v12809 = vmul.f32 %v11817, %v12330
      %v12810 = vmul.f32 %v11821, %v12334
      %v12811 = vmul.f32 %v11825, %v12338
      %v12812 = vmul.f32 %v11829, %v12342
      %v12813 = vmul.f32 %v11833, %v12346
      %v12814 = vmul.f32 %v11837, %v12350
      %v12815 = vmul.f32 %v11841, %v12354
      %v12816 = vmul.f32 %v11845, %v12358
      %v12817 = vmul.f32 %v11849, %v12362
      %v12818 = vmul.f32 %v11853, %v12366
      %v12819 = vmul.f32 %v11857, %v12370
      %v12820 = vmul.f32 %v11861, %v12374
      %v12821 = vmul.f32 %v11865, %v12378
      %v12822 = vmul.f32 %v11869, %v12382
      %v12823 = vmul.f32 %v11873, %v12386
      %v12824 = vmul.f32 %v11877, %v12390
      %v12825 = vmul.f32 %v11881, %v12394
      %v12826 = vmul.f32 %v11885, %v12398
      %v12827 = vmul.f32 %v11889, %v12402
      %v12828 = vmul.f32 %v11893, %v12406
      %v12829 = vmul.f32 %v11897, %v12410
      %v12830 = vmul.f32 %v11901, %v12414
      %v12831 = vmul.f32 %v11905, %v12418
      %v12832 = vmul.f32 %v11909, %v12422
      %v12833 = vmul.f32 %v11913, %v12426
      %v12834 = vmul.f32 %v11917, %v12430
      %v12835 = vmul.f32 %v11921, %v12434
      %v12836 = vmul.f32 %v11925, %v12438
      %v12837 = vmul.f32 %v11929, %v12442
      %v12838 = vmul.f32 %v11933, %v12446
      %v12839 = vmul.f32 %v11937, %v12450
      %v12840 = vmul.f32 %v11941, %v12454
      %v12841 = vmul.f32 %v11945, %v12458
      %v12842 = vmul.f32 %v11949, %v12462
      %v12843 = vmul.f32 %v11953, %v12466
      %v12844 = vmul.f32 %v11957, %v12470
      %v12845 = vmul.f32 %v11961, %v12474
      %v12846 = vmul.f32 %v11965, %v12478
      %v12847 = vmul.f32 %v11969, %v12482
      %v12848 = vmul.f32 %v11973, %v12486
      %v12849 = vmul.f32 %v11977, %v12490
      %v12850 = vmul.f32 %v11981, %v12494
      %v12851 = vmul.f32 %v11985, %v12498
      %v12852 = vmul.f32 %v11989, %v12502
      %v12853 = vmul.f32 %v11993, %v12506
      %v12854 = vmul.f32 %v11997, %v12510
      %v12855 = vmul.f32 %v12001, %v12514
      %v12856 = vmul.f32 %v12005, %v12518
      %v12857 = vmul.f32 %v12009, %v12522
      %v12858 = vmul.f32 %v12013, %v12526
      %v12859 = vmul.f32 %v12017, %v12530
      %v12860 = vmul.f32 %v12021, %v12534
      %v12861 = vmul.f32 %v12025, %v12538
      %v12862 = vmul.f32 %v12029, %v12542
      %v12863 = vmul.f32 %v12033, %v12546
      %v12864 = vmul.f32 %v12037, %v12550
      %v12865 = vmul.f32 %v12041, %v12554
      %v12866 = vmul.f32 %v12045, %v12558
      %v12867 = vmul.f32 %v12049, %v12562
      %v12868 = vmul.f32 %v12053, %v12566
      %v12869 = vmul.f32 %v12057, %v12570
      %v12870 = vmul.f32 %v12061, %v12574
      %v12871 = vmul.f32 %v12065, %v12578
      %v12872 = vmul.f32 %v12069, %v12582
      %v12873 = vmul.f32 %v12073, %v12586
      %v12874 = vmul.f32 %v12077, %v12590
      %v12875 = vmul.f32 %v12081, %v12594
      %v12876 = vmul.f32 %v12085, %v12598
      %v12877 = vmul.f32 %v12089, %v12602
      %v12878 = vmul.f32 %v12093, %v12606
      %v12879 = vmul.f32 %v12097, %v12610
      %v12880 = vmul.f32 %v12101, %v12614
      %v12881 = vmul.f32 %v12105, %v12618
      %v12882 = vmul.f32 %v12109, %v12622
      %v12883 = vmul.f32 %v12113, %v12626
      %v12884 = vmul.f32 %v12117, %v12630
      %v12885 = vmul.f32 %v12121, %v12634
      %v12886 = vmul.f32 %v12125, %v12638
      %v12887 = vmul.f32 %v12129, %v12642
      %v12888 = vmul.f32 %v12133, %v12646
      %v12889 = vmul.f32 %v12137, %v12650
      %v12890 = vmul.f32 %v12141, %v12654
      %v12891 = vmul.f32 %v12145, %v12658
      %v12892 = vmul.f32 %v12149, %v12662
      %v12893 = vmul.f32 %v12153, %v12666
      %v12894 = vmul.f32 %v12157, %v12670
      %v12895 = vmul.f32 %v12161, %v12674
      %v12896 = vmul.f32 %v12165, %v12678
      %v12897 = vmul.f32 %v12169, %v12682
      %v12898 = vmul.f32 %v12173, %v12686
      %v12899 = vmul.f32 %v12177, %v12690
      %v12900 = vmul.f32 %v12181, %v12694
      %v12901 = vmul.f32 %v12185, %v12698
      %v12902 = vmul.f32 %v12189, %v12702
      %v12903 = vmul.f32 %v12193, %v12706
      %v12904 = vmul.f32 %v12197, %v12710
      %v12905 = vmul.f32 %v12201, %v12714
      %v12906 = vmul.f32 %v12205, %v12718
      %v12907 = vmul.f32 %v12209, %v12722
      %v12908 = vmul.f32 %v12213, %v12726
      %v12909 = vmul.f32 %v12217, %v12730
      %v12910 = vmul.f32 %v12221, %v12734
      %v12911 = vmul.f32 %v12225, %v12738
      %v12912 = vmul.f32 %v12229, %v12742
      %v12913 = vmul.f32 %v12233, %v12746
      %v12914 = vmul.f32 %v12237, %v12750
      %v12915 = vmul.f32 %v12241, %v12754
      %v12916 = vmul.f32 %v12245, %v12758
      %v12917 = vmul.f32 %v12249, %v12762
      %v12918 = vmul.f32 %v12253, %v12766
      %v12919 = vmul.f32 %v12257, %v12770
      %v12920 = vmul.f32 %v12261, %v12774
      %v12921 = vmul.f32 %v12265, %v12778
      %v12922 = vmul.f32 %v12269, %v12782
      %v12923 = vmul.f32 %v12273, %v12786
      %v12924 = vmul.f32 %v12277, %v12790
      %v12925 = vmul.f32 %v12281, %v12794
      %v12926 = vmul.f32 %v12285, %v12798
      %v12927 = vadd.f32 %v11647, %v12799
      %v12928 = vadd.f32 %v11648, %v12800
      %v12929 = vadd.f32 %v11649, %v12801
      %v12930 = vadd.f32 %v11650, %v12802
      %v12931 = vadd.f32 %v11651, %v12803
      %v12932 = vadd.f32 %v11652, %v12804
      %v12933 = vadd.f32 %v11653, %v12805
      %v12934 = vadd.f32 %v11654, %v12806
      %v12935 = vadd.f32 %v11655, %v12807
      %v12936 = vadd.f32 %v11656, %v12808
      %v12937 = vadd.f32 %v11657, %v12809
      %v12938 = vadd.f32 %v11658, %v12810
      %v12939 = vadd.f32 %v11659, %v12811
      %v12940 = vadd.f32 %v11660, %v12812
      %v12941 = vadd.f32 %v11661, %v12813
      %v12942 = vadd.f32 %v11662, %v12814
      %v12943 = vadd.f32 %v11663, %v12815
      %v12944 = vadd.f32 %v11664, %v12816
      %v12945 = vadd.f32 %v11665, %v12817
      %v12946 = vadd.f32 %v11666, %v12818
      %v12947 = vadd.f32 %v11667, %v12819
      %v12948 = vadd.f32 %v11668, %v12820
      %v12949 = vadd.f32 %v11669, %v12821
      %v12950 = vadd.f32 %v11670, %v12822
      %v12951 = vadd.f32 %v11671, %v12823
      %v12952 = vadd.f32 %v11672, %v12824
      %v12953 = vadd.f32 %v11673, %v12825
      %v12954 = vadd.f32 %v11674, %v12826
      %v12955 = vadd.f32 %v11675, %v12827
      %v12956 = vadd.f32 %v11676, %v12828
      %v12957 = vadd.f32 %v11677, %v12829
      %v12958 = vadd.f32 %v11678, %v12830
      %v12959 = vadd.f32 %v11679, %v12831
      %v12960 = vadd.f32 %v11680, %v12832
      %v12961 = vadd.f32 %v11681, %v12833
      %v12962 = vadd.f32 %v11682, %v12834
      %v12963 = vadd.f32 %v11683, %v12835
      %v12964 = vadd.f32 %v11684, %v12836
      %v12965 = vadd.f32 %v11685, %v12837
      %v12966 = vadd.f32 %v11686, %v12838
      %v12967 = vadd.f32 %v11687, %v12839
      %v12968 = vadd.f32 %v11688, %v12840
      %v12969 = vadd.f32 %v11689, %v12841
      %v12970 = vadd.f32 %v11690, %v12842
      %v12971 = vadd.f32 %v11691, %v12843
      %v12972 = vadd.f32 %v11692, %v12844
      %v12973 = vadd.f32 %v11693, %v12845
      %v12974 = vadd.f32 %v11694, %v12846
      %v12975 = vadd.f32 %v11695, %v12847
      %v12976 = vadd.f32 %v11696, %v12848
      %v12977 = vadd.f32 %v11697, %v12849
      %v12978 = vadd.f32 %v11698, %v12850
      %v12979 = vadd.f32 %v11699, %v12851
      %v12980 = vadd.f32 %v11700, %v12852
      %v12981 = vadd.f32 %v11701, %v12853
      %v12982 = vadd.f32 %v11702, %v12854
      %v12983 = vadd.f32 %v11703, %v12855
      %v12984 = vadd.f32 %v11704, %v12856
      %v12985 = vadd.f32 %v11705, %v12857
      %v12986 = vadd.f32 %v11706, %v12858
      %v12987 = vadd.f32 %v11707, %v12859
      %v12988 = vadd.f32 %v11708, %v12860
      %v12989 = vadd.f32 %v11709, %v12861
      %v12990 = vadd.f32 %v11710, %v12862
      %v12991 = vadd.f32 %v11711, %v12863
      %v12992 = vadd.f32 %v11712, %v12864
      %v12993 = vadd.f32 %v11713, %v12865
      %v12994 = vadd.f32 %v11714, %v12866
      %v12995 = vadd.f32 %v11715, %v12867
      %v12996 = vadd.f32 %v11716, %v12868
      %v12997 = vadd.f32 %v11717, %v12869
      %v12998 = vadd.f32 %v11718, %v12870
      %v12999 = vadd.f32 %v11719, %v12871
      %v13000 = vadd.f32 %v11720, %v12872
      %v13001 = vadd.f32 %v11721, %v12873
      %v13002 = vadd.f32 %v11722, %v12874
      %v13003 = vadd.f32 %v11723, %v12875
      %v13004 = vadd.f32 %v11724, %v12876
      %v13005 = vadd.f32 %v11725, %v12877
      %v13006 = vadd.f32 %v11726, %v12878
      %v13007 = vadd.f32 %v11727, %v12879
      %v13008 = vadd.f32 %v11728, %v12880
      %v13009 = vadd.f32 %v11729, %v12881
      %v13010 = vadd.f32 %v11730, %v12882
      %v13011 = vadd.f32 %v11731, %v12883
      %v13012 = vadd.f32 %v11732, %v12884
      %v13013 = vadd.f32 %v11733, %v12885
      %v13014 = vadd.f32 %v11734, %v12886
      %v13015 = vadd.f32 %v11735, %v12887
      %v13016 = vadd.f32 %v11736, %v12888
      %v13017 = vadd.f32 %v11737, %v12889
      %v13018 = vadd.f32 %v11738, %v12890
      %v13019 = vadd.f32 %v11739, %v12891
      %v13020 = vadd.f32 %v11740, %v12892
      %v13021 = vadd.f32 %v11741, %v12893
      %v13022 = vadd.f32 %v11742, %v12894
      %v13023 = vadd.f32 %v11743, %v12895
      %v13024 = vadd.f32 %v11744, %v12896
      %v13025 = vadd.f32 %v11745, %v12897
      %v13026 = vadd.f32 %v11746, %v12898
      %v13027 = vadd.f32 %v11747, %v12899
      %v13028 = vadd.f32 %v11748, %v12900
      %v13029 = vadd.f32 %v11749, %v12901
      %v13030 = vadd.f32 %v11750, %v12902
      %v13031 = vadd.f32 %v11751, %v12903
      %v13032 = vadd.f32 %v11752, %v12904
      %v13033 = vadd.f32 %v11753, %v12905
      %v13034 = vadd.f32 %v11754, %v12906
      %v13035 = vadd.f32 %v11755, %v12907
      %v13036 = vadd.f32 %v11756, %v12908
      %v13037 = vadd.f32 %v11757, %v12909
      %v13038 = vadd.f32 %v11758, %v12910
      %v13039 = vadd.f32 %v11759, %v12911
      %v13040 = vadd.f32 %v11760, %v12912
      %v13041 = vadd.f32 %v11761, %v12913
      %v13042 = vadd.f32 %v11762, %v12914
      %v13043 = vadd.f32 %v11763, %v12915
      %v13044 = vadd.f32 %v11764, %v12916
      %v13045 = vadd.f32 %v11765, %v12917
      %v13046 = vadd.f32 %v11766, %v12918
      %v13047 = vadd.f32 %v11767, %v12919
      %v13048 = vadd.f32 %v11768, %v12920
      %v13049 = vadd.f32 %v11769, %v12921
      %v13050 = vadd.f32 %v11770, %v12922
      %v13051 = vadd.f32 %v11771, %v12923
      %v13052 = vadd.f32 %v11772, %v12924
      %v13053 = vadd.f32 %v11773, %v12925
      %v13054 = vadd.f32 %v11774, %v12926
      %13055 = vst.msk [vmem:[%s172] sm:$0xff] %vm316, %v12927
      %13056 = vst.msk [vmem:[%s172 + $0x8] sm:$0xff] %vm316, %v12928
      %13057 = vst.msk [vmem:[%s172 + $0x10] sm:$0xff] %vm316, %v12929
      %13058 = vst.msk [vmem:[%s172 + $0x18] sm:$0xff] %vm316, %v12930
      %13059 = vst.msk [vmem:[%s172 + $0x20] sm:$0xff] %vm316, %v12931
      %13060 = vst.msk [vmem:[%s172 + $0x28] sm:$0xff] %vm316, %v12932
      %13061 = vst.msk [vmem:[%s172 + $0x30] sm:$0xff] %vm316, %v12933
      %13062 = vst.msk [vmem:[%s172 + $0x38] sm:$0xff] %vm316, %v12934
      %13063 = vst.msk [vmem:[%s172 + $0x40] sm:$0xff] %vm316, %v12935
      %13064 = vst.msk [vmem:[%s172 + $0x48] sm:$0xff] %vm316, %v12936
      %13065 = vst.msk [vmem:[%s172 + $0x50] sm:$0xff] %vm316, %v12937
      %13066 = vst.msk [vmem:[%s172 + $0x58] sm:$0xff] %vm316, %v12938
      %13067 = vst.msk [vmem:[%s172 + $0x60] sm:$0xff] %vm316, %v12939
      %13068 = vst.msk [vmem:[%s172 + $0x68] sm:$0xff] %vm316, %v12940
      %13069 = vst.msk [vmem:[%s172 + $0x70] sm:$0xff] %vm316, %v12941
      %13070 = vst.msk [vmem:[%s172 + $0x78] sm:$0xff] %vm316, %v12942
      %13071 = vst.msk [vmem:[%s172 + $0x80] sm:$0xff] %vm316, %v12943
      %13072 = vst.msk [vmem:[%s172 + $0x88] sm:$0xff] %vm316, %v12944
      %13073 = vst.msk [vmem:[%s172 + $0x90] sm:$0xff] %vm316, %v12945
      %13074 = vst.msk [vmem:[%s172 + $0x98] sm:$0xff] %vm316, %v12946
      %13075 = vst.msk [vmem:[%s172 + $0xa0] sm:$0xff] %vm316, %v12947
      %13076 = vst.msk [vmem:[%s172 + $0xa8] sm:$0xff] %vm316, %v12948
      %13077 = vst.msk [vmem:[%s172 + $0xb0] sm:$0xff] %vm316, %v12949
      %13078 = vst.msk [vmem:[%s172 + $0xb8] sm:$0xff] %vm316, %v12950
      %13079 = vst.msk [vmem:[%s172 + $0xc0] sm:$0xff] %vm316, %v12951
      %13080 = vst.msk [vmem:[%s172 + $0xc8] sm:$0xff] %vm316, %v12952
      %13081 = vst.msk [vmem:[%s172 + $0xd0] sm:$0xff] %vm316, %v12953
      %13082 = vst.msk [vmem:[%s172 + $0xd8] sm:$0xff] %vm316, %v12954
      %13083 = vst.msk [vmem:[%s172 + $0xe0] sm:$0xff] %vm316, %v12955
      %13084 = vst.msk [vmem:[%s172 + $0xe8] sm:$0xff] %vm316, %v12956
      %13085 = vst.msk [vmem:[%s172 + $0xf0] sm:$0xff] %vm316, %v12957
      %13086 = vst.msk [vmem:[%s172 + $0xf8] sm:$0xff] %vm316, %v12958
      %13087 = vst.msk [vmem:[%s172 + $0x100] sm:$0xff] %vm316, %v12959
      %13088 = vst.msk [vmem:[%s172 + $0x108] sm:$0xff] %vm316, %v12960
      %13089 = vst.msk [vmem:[%s172 + $0x110] sm:$0xff] %vm316, %v12961
      %13090 = vst.msk [vmem:[%s172 + $0x118] sm:$0xff] %vm316, %v12962
      %13091 = vst.msk [vmem:[%s172 + $0x120] sm:$0xff] %vm316, %v12963
      %13092 = vst.msk [vmem:[%s172 + $0x128] sm:$0xff] %vm316, %v12964
      %13093 = vst.msk [vmem:[%s172 + $0x130] sm:$0xff] %vm316, %v12965
      %13094 = vst.msk [vmem:[%s172 + $0x138] sm:$0xff] %vm316, %v12966
      %13095 = vst.msk [vmem:[%s172 + $0x140] sm:$0xff] %vm316, %v12967
      %13096 = vst.msk [vmem:[%s172 + $0x148] sm:$0xff] %vm316, %v12968
      %13097 = vst.msk [vmem:[%s172 + $0x150] sm:$0xff] %vm316, %v12969
      %13098 = vst.msk [vmem:[%s172 + $0x158] sm:$0xff] %vm316, %v12970
      %13099 = vst.msk [vmem:[%s172 + $0x160] sm:$0xff] %vm316, %v12971
      %13100 = vst.msk [vmem:[%s172 + $0x168] sm:$0xff] %vm316, %v12972
      %13101 = vst.msk [vmem:[%s172 + $0x170] sm:$0xff] %vm316, %v12973
      %13102 = vst.msk [vmem:[%s172 + $0x178] sm:$0xff] %vm316, %v12974
      %13103 = vst.msk [vmem:[%s172 + $0x180] sm:$0xff] %vm316, %v12975
      %13104 = vst.msk [vmem:[%s172 + $0x188] sm:$0xff] %vm316, %v12976
      %13105 = vst.msk [vmem:[%s172 + $0x190] sm:$0xff] %vm316, %v12977
      %13106 = vst.msk [vmem:[%s172 + $0x198] sm:$0xff] %vm316, %v12978
      %13107 = vst.msk [vmem:[%s172 + $0x1a0] sm:$0xff] %vm316, %v12979
      %13108 = vst.msk [vmem:[%s172 + $0x1a8] sm:$0xff] %vm316, %v12980
      %13109 = vst.msk [vmem:[%s172 + $0x1b0] sm:$0xff] %vm316, %v12981
      %13110 = vst.msk [vmem:[%s172 + $0x1b8] sm:$0xff] %vm316, %v12982
      %13111 = vst.msk [vmem:[%s172 + $0x1c0] sm:$0xff] %vm316, %v12983
      %13112 = vst.msk [vmem:[%s172 + $0x1c8] sm:$0xff] %vm316, %v12984
      %13113 = vst.msk [vmem:[%s172 + $0x1d0] sm:$0xff] %vm316, %v12985
      %13114 = vst.msk [vmem:[%s172 + $0x1d8] sm:$0xff] %vm316, %v12986
      %13115 = vst.msk [vmem:[%s172 + $0x1e0] sm:$0xff] %vm316, %v12987
      %13116 = vst.msk [vmem:[%s172 + $0x1e8] sm:$0xff] %vm316, %v12988
      %13117 = vst.msk [vmem:[%s172 + $0x1f0] sm:$0xff] %vm316, %v12989
      %13118 = vst.msk [vmem:[%s172 + $0x1f8] sm:$0xff] %vm316, %v12990
      %13119 = vst.msk [vmem:[%s172 + $0x200] sm:$0xff] %vm316, %v12991
      %13120 = vst.msk [vmem:[%s172 + $0x208] sm:$0xff] %vm316, %v12992
      %13121 = vst.msk [vmem:[%s172 + $0x210] sm:$0xff] %vm316, %v12993
      %13122 = vst.msk [vmem:[%s172 + $0x218] sm:$0xff] %vm316, %v12994
      %13123 = vst.msk [vmem:[%s172 + $0x220] sm:$0xff] %vm316, %v12995
      %13124 = vst.msk [vmem:[%s172 + $0x228] sm:$0xff] %vm316, %v12996
      %13125 = vst.msk [vmem:[%s172 + $0x230] sm:$0xff] %vm316, %v12997
      %13126 = vst.msk [vmem:[%s172 + $0x238] sm:$0xff] %vm316, %v12998
      %13127 = vst.msk [vmem:[%s172 + $0x240] sm:$0xff] %vm316, %v12999
      %13128 = vst.msk [vmem:[%s172 + $0x248] sm:$0xff] %vm316, %v13000
      %13129 = vst.msk [vmem:[%s172 + $0x250] sm:$0xff] %vm316, %v13001
      %13130 = vst.msk [vmem:[%s172 + $0x258] sm:$0xff] %vm316, %v13002
      %13131 = vst.msk [vmem:[%s172 + $0x260] sm:$0xff] %vm316, %v13003
      %13132 = vst.msk [vmem:[%s172 + $0x268] sm:$0xff] %vm316, %v13004
      %13133 = vst.msk [vmem:[%s172 + $0x270] sm:$0xff] %vm316, %v13005
      %13134 = vst.msk [vmem:[%s172 + $0x278] sm:$0xff] %vm316, %v13006
      %13135 = vst.msk [vmem:[%s172 + $0x280] sm:$0xff] %vm316, %v13007
      %13136 = vst.msk [vmem:[%s172 + $0x288] sm:$0xff] %vm316, %v13008
      %13137 = vst.msk [vmem:[%s172 + $0x290] sm:$0xff] %vm316, %v13009
      %13138 = vst.msk [vmem:[%s172 + $0x298] sm:$0xff] %vm316, %v13010
      %13139 = vst.msk [vmem:[%s172 + $0x2a0] sm:$0xff] %vm316, %v13011
      %13140 = vst.msk [vmem:[%s172 + $0x2a8] sm:$0xff] %vm316, %v13012
      %13141 = vst.msk [vmem:[%s172 + $0x2b0] sm:$0xff] %vm316, %v13013
      %13142 = vst.msk [vmem:[%s172 + $0x2b8] sm:$0xff] %vm316, %v13014
      %13143 = vst.msk [vmem:[%s172 + $0x2c0] sm:$0xff] %vm316, %v13015
      %13144 = vst.msk [vmem:[%s172 + $0x2c8] sm:$0xff] %vm316, %v13016
      %13145 = vst.msk [vmem:[%s172 + $0x2d0] sm:$0xff] %vm316, %v13017
      %13146 = vst.msk [vmem:[%s172 + $0x2d8] sm:$0xff] %vm316, %v13018
      %13147 = vst.msk [vmem:[%s172 + $0x2e0] sm:$0xff] %vm316, %v13019
      %13148 = vst.msk [vmem:[%s172 + $0x2e8] sm:$0xff] %vm316, %v13020
      %13149 = vst.msk [vmem:[%s172 + $0x2f0] sm:$0xff] %vm316, %v13021
      %13150 = vst.msk [vmem:[%s172 + $0x2f8] sm:$0xff] %vm316, %v13022
      %13151 = vst.msk [vmem:[%s172 + $0x300] sm:$0xff] %vm316, %v13023
      %13152 = vst.msk [vmem:[%s172 + $0x308] sm:$0xff] %vm316, %v13024
      %13153 = vst.msk [vmem:[%s172 + $0x310] sm:$0xff] %vm316, %v13025
      %13154 = vst.msk [vmem:[%s172 + $0x318] sm:$0xff] %vm316, %v13026
      %13155 = vst.msk [vmem:[%s172 + $0x320] sm:$0xff] %vm316, %v13027
      %13156 = vst.msk [vmem:[%s172 + $0x328] sm:$0xff] %vm316, %v13028
      %13157 = vst.msk [vmem:[%s172 + $0x330] sm:$0xff] %vm316, %v13029
      %13158 = vst.msk [vmem:[%s172 + $0x338] sm:$0xff] %vm316, %v13030
      %13159 = vst.msk [vmem:[%s172 + $0x340] sm:$0xff] %vm316, %v13031
      %13160 = vst.msk [vmem:[%s172 + $0x348] sm:$0xff] %vm316, %v13032
      %13161 = vst.msk [vmem:[%s172 + $0x350] sm:$0xff] %vm316, %v13033
      %13162 = vst.msk [vmem:[%s172 + $0x358] sm:$0xff] %vm316, %v13034
      %13163 = vst.msk [vmem:[%s172 + $0x360] sm:$0xff] %vm316, %v13035
      %13164 = vst.msk [vmem:[%s172 + $0x368] sm:$0xff] %vm316, %v13036
      %13165 = vst.msk [vmem:[%s172 + $0x370] sm:$0xff] %vm316, %v13037
      %13166 = vst.msk [vmem:[%s172 + $0x378] sm:$0xff] %vm316, %v13038
      %13167 = vst.msk [vmem:[%s172 + $0x380] sm:$0xff] %vm316, %v13039
      %13168 = vst.msk [vmem:[%s172 + $0x388] sm:$0xff] %vm316, %v13040
      %13169 = vst.msk [vmem:[%s172 + $0x390] sm:$0xff] %vm316, %v13041
      %13170 = vst.msk [vmem:[%s172 + $0x398] sm:$0xff] %vm316, %v13042
      %13171 = vst.msk [vmem:[%s172 + $0x3a0] sm:$0xff] %vm316, %v13043
      %13172 = vst.msk [vmem:[%s172 + $0x3a8] sm:$0xff] %vm316, %v13044
      %13173 = vst.msk [vmem:[%s172 + $0x3b0] sm:$0xff] %vm316, %v13045
      %13174 = vst.msk [vmem:[%s172 + $0x3b8] sm:$0xff] %vm316, %v13046
      %13175 = vst.msk [vmem:[%s172 + $0x3c0] sm:$0xff] %vm316, %v13047
      %13176 = vst.msk [vmem:[%s172 + $0x3c8] sm:$0xff] %vm316, %v13048
      %13177 = vst.msk [vmem:[%s172 + $0x3d0] sm:$0xff] %vm316, %v13049
      %13178 = vst.msk [vmem:[%s172 + $0x3d8] sm:$0xff] %vm316, %v13050
      %13179 = vst.msk [vmem:[%s172 + $0x3e0] sm:$0xff] %vm316, %v13051
      %13180 = vst.msk [vmem:[%s172 + $0x3e8] sm:$0xff] %vm316, %v13052
      %13181 = vst.msk [vmem:[%s172 + $0x3f0] sm:$0xff] %vm316, %v13053
      %13182 = vst.msk [vmem:[%s172 + $0x3f8] sm:$0xff] %vm316, %v13054
      %s13183 = smul.u32 128, %s14
      %p13184 = scmp.lt.s32.totalorder %s13183, 255
      %s13185 = scalar_select %p13184, %s13183, 255
      %s13186 = smul.addr %s13185, 8
      %s13187 = scalar_lea.vmem %s3, %s13186
      // Predicated region
      $region33: #{tpu_custom_call.1} parent=31 // pred_check
        %p13188 = pneg %p100
      $region34: #{tpu_custom_call.1} parent=31 // pred_check_branch
        %13190 = sbr.rel (%p13188) target = $region36
      $region35: #{tpu_custom_call.1} parent=31 // pred_region
        %s13191 = smul.u32 128, %s14
      $region36: #{tpu_custom_call.1} parent=31 // pred_fallthru
        _
    $region32: #{tpu_custom_call.1} parent=5 // pred_fallthru
      _
    %p13192 = scmp.le.s32.totalorder 2, %s9
    // Predicated region
    $region37: #{tpu_custom_call.1} parent=5 // pred_check
      %p13193 = pneg %p13192
    $region38: #{tpu_custom_call.1} parent=5 // pred_check_branch
      %13195 = sbr.rel (%p13193) target = $region40
    $region39: #{tpu_custom_call.1} parent=5 // pred_region
      %s13196 = ssub.s32 %s9, 2
      // Predicated region
      $region41: #{tpu_custom_call.1} parent=39 // pred_check
        %p13197 = pneg %p106
      $region42: #{tpu_custom_call.1} parent=39 // pred_check_branch
        %13199 = sbr.rel (%p13197) target = $region44
      $region43: #{tpu_custom_call.1} parent=39 // pred_region
        %s13200 = smul.u32 128, %s15
        %p13201 = scmp.lt.s32.totalorder %s13200, 255
        %s13202 = scalar_select %p13201, %s13200, 255
        %s13203 = smul.addr %s13202, 8
        %s13204 = scalar_lea.vmem %s3, %s13203
      $region44: #{tpu_custom_call.1} parent=39 // pred_fallthru
        _
    $region40: #{tpu_custom_call.1} parent=5 // pred_fallthru
      _
  $region6: #{tpu_custom_call.1} parent=0 // loop_footer
    %s13 = sadd.s32 1, %s9
  $region7: #{tpu_custom_call.1} parent=0 // loop_footer_branch
    %8 = sbr.rel target = $region3
  $region8: #{tpu_custom_call.1} parent=0 // loop_exit
    _

</llo_original>
